<compile_context>
chip_gen: v6e
topology: v6e:2x2x1
jax: 0.10.0
libtpu: 0.0.40
codegen_flags: <defaults>
</compile_context>

<pallas_src>
import math
import functools

import jax
import jax.numpy as jnp
from jax.experimental import pallas as pl
from jax.experimental.pallas import tpu as pltpu

# ----- model hyper-parameters (small, but consistent with the module's constraints) -----
HIDDEN = 128          # must be divisible by 32 (GroupNorm(32, hidden))
TIME_EMBED = 32       # even, so the sinusoidal embedding has cos/sin halves
NUM_GROUPS = 32
NUM_RES_BLOCKS = 2
EPS = 1e-5            # nn.GroupNorm default
INV_SQRT2 = 1.0 / math.sqrt(2.0)


def resnet_kernel(num_res_blocks, xt_ref, w_in_ref, proj2_ref, w_ref, v_ref, out_ref):
    """One batch tile of ResNet.forward. All packed weights live in VMEM across grid steps.

    xt_ref:    (tile_n, time_embed+input_dim) bf16  -- [timestep_embedding | x] natural width.
    w_in_ref:  (time_embed+input_dim, 2H) bf16      -- block layout [W_t0 | W_xmap] (fused).
    proj2_ref: (2H, 2H) bf16                        -- blockdiag(P, P) GroupNorm projector.
    w_ref:     (NW, H, H) bf16                      -- packed square linear weights (h @ W + b).
    v_ref:     (NV, H) f32                          -- packed biases / gammas / betas.
    """
    f32, bf16 = jnp.float32, jnp.bfloat16
    hidden = out_ref.shape[1]

    def silu(a):                       # bf16 in, bf16 out (native on v6e/v7x VPU/EUP)
        return a * jax.nn.sigmoid(a)

    def linear(h_bf, wi, vi):
        # bf16 MXU matmul, f32 accumulation + bias add, single downcast -> bf16 carry.
        return (jnp.dot(h_bf, w_ref[wi], preferred_element_type=f32) + v_ref[vi]).astype(bf16)

    def group_norm(h_bf, gi, bi):
        # [h | h*h] @ blockdiag(P, P): one 256-wide bf16 matmul, explicit f32 accumulation.
        stats_in = jnp.concatenate([h_bf, h_bf * h_bf], axis=-1)            # (N, 2H) bf16
        stats = jnp.dot(stats_in, proj2_ref[...], preferred_element_type=f32)
        mean = stats[:, :hidden]                                            # f32
        var = jnp.maximum(stats[:, hidden:] - mean * mean, 0.0)             # clamp cancellation
        scale = v_ref[gi] * jax.lax.rsqrt(var + EPS)                        # gamma * rsqrt (f32)
        shift = v_ref[bi] - mean * scale
        return (h_bf.astype(f32) * scale + shift).astype(bf16)

    # ---- fused first layer: [temb | x] @ [W_t0 ; W_xmap]  (one K=48, N=256 MXU pass) ----
    fused = jnp.dot(xt_ref[...], w_in_ref[...], preferred_element_type=f32)  # (N, 2H) f32
    t = silu((fused[:, :hidden] + v_ref[0]).astype(bf16))   # t_module Linear0 -> SiLU
    h = (fused[:, hidden:] + v_ref[1]).astype(bf16)         # x_module.map

    # ---- t_module tail: Linear1 ----
    t_out = linear(t, 0, 2)
    # TODO(synk): t_module.Linear1 could be paired with res-block-0 linear0 into a 256-wide
    # block-diagonal matmul for one more fused MXU pass; skipped to keep the loop uniform.

    # ---- x_module (FCnet) residual blocks ----
    for b in range(num_res_blocks):
        wbase = 1 + 3 * b
        vbase = 3 + 5 * b
        r = group_norm(h, vbase, vbase + 1)
        for l in range(3):
            r = silu(linear(r, wbase + l, vbase + 2 + l))
        h = (h + r) * INV_SQRT2                              # stays bf16

    # ---- head: GroupNorm -> (Linear, SiLU) x2 -> Linear ----
    wbase = 1 + 3 * num_res_blocks
    vbase = 3 + 5 * num_res_blocks
    y = group_norm(h + t_out, vbase, vbase + 1)
    y = silu(linear(y, wbase + 0, vbase + 2))
    y = silu(linear(y, wbase + 1, vbase + 3))
    # Final linear: lane-dense 128-wide bf16 store (wrapper slices to output_dim).
    out_ref[...] = (jnp.dot(y, w_ref[wbase + 2], preferred_element_type=f32)
                    + v_ref[vbase + 4]).astype(jnp.bfloat16)


def timestep_embedding(t, dim, max_period=10000.0):
    """Sinusoidal timestep embedding, [cos | sin] ordering, freqs = exp(-ln(P)*k/half).

    NOTE: some reference implementations use [sin | cos] or (half - 1) in the denominator;
    adjust here if the project's timestep_embedding differs.
    """
    half = dim // 2
    freqs = jnp.exp(-math.log(max_period) * jnp.arange(half, dtype=jnp.float32) / half)
    args = t.astype(jnp.float32)[:, None] * freqs[None, :]
    return jnp.concatenate([jnp.cos(args), jnp.sin(args)], axis=-1)


def resnet_forward(x, t, params, *, output_dim, tile_n=256, hidden=HIDDEN,
                   time_embed_dim=TIME_EMBED, num_res_blocks=NUM_RES_BLOCKS):
    n, _ = x.shape
    n_pad = pl.cdiv(n, tile_n) * tile_n

    # Natural-width fused input [timestep_embedding(t) | x] stored as bf16 (the kernel feeds
    # it straight into a bf16 MXU matmul) -> minimal HBM traffic, no 128-wide padded arrays.
    t_emb = timestep_embedding(t, time_embed_dim)                      # (n, time_embed) f32
    xt = jnp.concatenate([t_emb, x.astype(jnp.float32)], axis=-1).astype(jnp.bfloat16)
    xt = jnp.pad(xt, ((0, n_pad - n), (0, 0)))                         # pad batch rows only
    k_in = xt.shape[1]

    w_in, proj2 = params["w_in"], params["proj2"]
    packed_w, packed_v = params["packed_w"], params["packed_v"]
    grid = (n_pad // tile_n,)

    out = pl.pallas_call(
        functools.partial(resnet_kernel, num_res_blocks),
        out_shape=jax.ShapeDtypeStruct((n_pad, hidden), jnp.bfloat16),
        grid=grid,
        in_specs=[
            pl.BlockSpec((tile_n, k_in), lambda i: (i, 0)),        # [temb | x] tile
            pl.BlockSpec(w_in.shape, lambda i: (0, 0)),            # fused first-layer weight
            pl.BlockSpec(proj2.shape, lambda i: (0, 0)),           # blockdiag GroupNorm projector
            pl.BlockSpec(packed_w.shape, lambda i: (0, 0, 0)),     # packed square weights
            pl.BlockSpec(packed_v.shape, lambda i: (0, 0)),        # packed biases/gammas/betas
        ],
        out_specs=pl.BlockSpec((tile_n, hidden), lambda i: (i, 0)),
        compiler_params=pltpu.CompilerParams(
            dimension_semantics=("parallel",),   # shard batch tiles across TCs on v7x
        ),
    )(xt, w_in, proj2, packed_w, packed_v)

    return out[:n, :output_dim].astype(jnp.float32)


def init_params(key, input_dim, output_dim, hidden=HIDDEN, time_embed_dim=TIME_EMBED,
                num_groups=NUM_GROUPS, num_res_blocks=NUM_RES_BLOCKS):
    """Deterministic synthetic parameters, packed in kernel-index order.

    w_in  (time_embed+input_dim, 2H) bf16: rows [:time_embed] x cols [:H]   = t_module.Linear0
                                           rows [time_embed:] x cols [H:2H] = x_module.map
    proj2 (2H, 2H) bf16: blockdiag(P, P), P[i,j] = 1/group_size if same group (exactly 0/0.25).
    packed_w (NW, H, H) bf16:
      0: t_module.Linear1 ; 1+3b+l: res block b linear l ; 1+3B+{0,1,2}: out_module linears
      (the last out weight is column-zero-padded from output_dim to H).
    packed_v (NV, H) f32:
      0: b_t0, 1: b_xmap, 2: b_t1 ; 3+5b+{0,1}: block-b GroupNorm gamma/beta,
      3+5b+{2,3,4}: block-b linear biases ; 3+5B+{0,1}: final GroupNorm gamma/beta,
      3+5B+{2,3,4}: out_module biases (last zero-padded).
    """
    keys = iter(jax.random.split(key, 64))

    def lin_w(in_d, out_d):
        return 0.02 * jax.random.normal(next(keys), (in_d, out_d), jnp.float32)

    def lin_b(out_d):
        return 0.02 * jax.random.normal(next(keys), (out_d,), jnp.float32)

    # Fused first-layer weight: [temb | x] @ w_in = [t_module.Linear0(temb) | x_module.map(x)].
    w_t0, b_t0 = lin_w(time_embed_dim, hidden), lin_b(hidden)
    w_xmap, b_xmap = lin_w(input_dim, hidden), lin_b(hidden)
    w_in = jnp.zeros((time_embed_dim + input_dim, 2 * hidden), jnp.float32)
    w_in = w_in.at[:time_embed_dim, :hidden].set(w_t0)
    w_in = w_in.at[time_embed_dim:, hidden:].set(w_xmap)

    ws, vs = [], []
    vs.append(b_t0)
    vs.append(b_xmap)
    # t_module Linear1
    ws.append(lin_w(hidden, hidden)); vs.append(lin_b(hidden))
    # residual blocks
    for _ in range(num_res_blocks):
        vs.append(jnp.ones((hidden,), jnp.float32))       # GroupNorm gamma (default init)
        vs.append(jnp.zeros((hidden,), jnp.float32))      # GroupNorm beta
        for _ in range(3):
            ws.append(lin_w(hidden, hidden)); vs.append(lin_b(hidden))
    # final GroupNorm
    vs.append(jnp.ones((hidden,), jnp.float32))
    vs.append(jnp.zeros((hidden,), jnp.float32))
    # out_module
    ws.append(lin_w(hidden, hidden)); vs.append(lin_b(hidden))
    ws.append(lin_w(hidden, hidden)); vs.append(lin_b(hidden))
    w_last, b_last = lin_w(hidden, output_dim), lin_b(output_dim)
    ws.append(jnp.zeros((hidden, hidden), jnp.float32).at[:, :output_dim].set(w_last))
    vs.append(jnp.zeros((hidden,), jnp.float32).at[:output_dim].set(b_last))

    # Blockdiag GroupNorm averaging projector.
    gs = hidden // num_groups
    same = (jnp.arange(hidden)[:, None] // gs) == (jnp.arange(hidden)[None, :] // gs)
    proj = same.astype(jnp.float32) / float(gs)
    proj2 = jnp.zeros((2 * hidden, 2 * hidden), jnp.float32)
    proj2 = proj2.at[:hidden, :hidden].set(proj).at[hidden:, hidden:].set(proj)

    return dict(
        w_in=w_in.astype(jnp.bfloat16),
        proj2=proj2.astype(jnp.bfloat16),
        packed_w=jnp.stack(ws).astype(jnp.bfloat16),
        packed_v=jnp.stack(vs),                           # f32
    )


if __name__ == "__main__":
    key = jax.random.PRNGKey(0)
    kx, kt, kp = jax.random.split(key, 3)

    batch, input_dim, output_dim = 512, 16, 8
    x = jax.random.normal(kx, (batch, input_dim), jnp.float32)
    t = 100.0 * jax.random.uniform(kt, (batch,), jnp.float32)

    params = init_params(kp, input_dim, output_dim)
    out = resnet_forward(x, t, params, output_dim=output_dim, tile_n=256)
    jax.block_until_ready(out)
    assert out.shape == (batch, output_dim)
    assert bool(jnp.all(jnp.isfinite(out)))
    print("KERNEL_OK")
</pallas_src>

<mosaic_0001>
module attributes {stable_mosaic.version = 11 : i64} {
  func.func @resnet_kernel(%arg0: i32, %arg1: memref<256x48xbf16, #tpu.memory_space<vmem>>, %arg2: memref<48x256xbf16, #tpu.memory_space<vmem>>, %arg3: memref<256x256xbf16, #tpu.memory_space<vmem>>, %arg4: memref<10x128x128xbf16, #tpu.memory_space<vmem>>, %arg5: memref<18x128xf32, #tpu.memory_space<vmem>>, %arg6: memref<256x128xbf16, #tpu.memory_space<vmem>>) attributes {dimension_semantics = [#tpu.dimension_semantics<parallel>], iteration_bounds = array<i64: 2>, scalar_prefetch = 0 : i64, scratch_operands = 0 : i64, tpu.core_type = #tpu.core_type<tc>, window_params = [{transform_indices = @transform_0, window_bounds = array<i64: 256, 48>}, {pipeline_mode = #tpu.pipeline_mode<synchronous>, transform_indices = @transform_1, window_bounds = array<i64: 48, 256>}, {pipeline_mode = #tpu.pipeline_mode<synchronous>, transform_indices = @transform_2, window_bounds = array<i64: 256, 256>}, {pipeline_mode = #tpu.pipeline_mode<synchronous>, transform_indices = @transform_3, window_bounds = array<i64: 10, 128, 128>}, {pipeline_mode = #tpu.pipeline_mode<synchronous>, transform_indices = @transform_4, window_bounds = array<i64: 18, 128>}, {transform_indices = @transform_5, window_bounds = array<i64: 256, 128>}]} {
    %c0 = arith.constant 0 : index
    %c0_0 = arith.constant 0 : index
    %0 = vector.load %arg1[%c0, %c0_0] : memref<256x48xbf16, #tpu.memory_space<vmem>>, vector<256x48xbf16>
    %c0_1 = arith.constant 0 : index
    %c0_2 = arith.constant 0 : index
    %1 = vector.load %arg2[%c0_1, %c0_2] : memref<48x256xbf16, #tpu.memory_space<vmem>>, vector<48x256xbf16>
    %cst = arith.constant dense<0.000000e+00> : vector<256x256xf32>
    %2 = tpu.matmul %0, %1, %cst {dimension_numbers = #tpu.dot_dimension_numbers<[1], [0], [0], [1], [0, 0, 1, 1], [], []>} : vector<256x48xbf16>, vector<48x256xbf16>, vector<256x256xf32> -> vector<256x256xf32>
    %3 = vector.extract_strided_slice %2 {offsets = [0, 0], sizes = [256, 128], strides = [1, 1]} : vector<256x256xf32> to vector<256x128xf32>
    %c0_3 = arith.constant 0 : index
    %c0_4 = arith.constant 0 : index
    %4 = vector.load %arg5[%c0_3, %c0_4] : memref<18x128xf32, #tpu.memory_space<vmem>>, vector<1x128xf32>
    %5 = vector.shape_cast %4 : vector<1x128xf32> to vector<128xf32>
    %6 = vector.shape_cast %5 : vector<128xf32> to vector<1x128xf32>
    %7 = vector.broadcast %6 : vector<1x128xf32> to vector<256x128xf32>
    %8 = arith.addf %3, %7 : vector<256x128xf32>
    %9 = arith.truncf %8 : vector<256x128xf32> to vector<256x128xbf16>
    %10 = arith.negf %9 : vector<256x128xbf16>
    %11 = math.exp %10 : vector<256x128xbf16>
    %cst_5 = arith.constant 1.000000e+00 : bf16
    %12 = vector.broadcast %cst_5 : bf16 to vector<256x128xbf16>
    %13 = arith.addf %12, %11 : vector<256x128xbf16>
    %14 = arith.divf %12, %13 : vector<256x128xbf16>
    %15 = arith.mulf %9, %14 : vector<256x128xbf16>
    %16 = vector.extract_strided_slice %2 {offsets = [0, 128], sizes = [256, 128], strides = [1, 1]} : vector<256x256xf32> to vector<256x128xf32>
    %c1 = arith.constant 1 : index
    %c0_6 = arith.constant 0 : index
    %17 = vector.load %arg5[%c1, %c0_6] : memref<18x128xf32, #tpu.memory_space<vmem>>, vector<1x128xf32>
    %18 = vector.shape_cast %17 : vector<1x128xf32> to vector<128xf32>
    %19 = vector.shape_cast %18 : vector<128xf32> to vector<1x128xf32>
    %20 = vector.broadcast %19 : vector<1x128xf32> to vector<256x128xf32>
    %21 = arith.addf %16, %20 : vector<256x128xf32>
    %22 = arith.truncf %21 : vector<256x128xf32> to vector<256x128xbf16>
    %c0_7 = arith.constant 0 : index
    %c0_8 = arith.constant 0 : index
    %c0_9 = arith.constant 0 : index
    %23 = vector.load %arg4[%c0_7, %c0_8, %c0_9] : memref<10x128x128xbf16, #tpu.memory_space<vmem>>, vector<1x128x128xbf16>
    %24 = vector.shape_cast %23 : vector<1x128x128xbf16> to vector<128x128xbf16>
    %cst_10 = arith.constant dense<0.000000e+00> : vector<256x128xf32>
    %25 = tpu.matmul %15, %24, %cst_10 {dimension_numbers = #tpu.dot_dimension_numbers<[1], [0], [0], [1], [0, 0, 1, 1], [], []>} : vector<256x128xbf16>, vector<128x128xbf16>, vector<256x128xf32> -> vector<256x128xf32>
    %c2 = arith.constant 2 : index
    %c0_11 = arith.constant 0 : index
    %26 = vector.load %arg5[%c2, %c0_11] : memref<18x128xf32, #tpu.memory_space<vmem>>, vector<1x128xf32>
    %27 = vector.shape_cast %26 : vector<1x128xf32> to vector<128xf32>
    %28 = vector.shape_cast %27 : vector<128xf32> to vector<1x128xf32>
    %29 = vector.broadcast %28 : vector<1x128xf32> to vector<256x128xf32>
    %30 = arith.addf %25, %29 : vector<256x128xf32>
    %31 = arith.truncf %30 : vector<256x128xf32> to vector<256x128xbf16>
    %32 = arith.mulf %22, %22 : vector<256x128xbf16>
    %33 = tpu.concatenate %22, %32 in 1 : vector<256x128xbf16>, vector<256x128xbf16> -> vector<256x256xbf16>
    %c0_12 = arith.constant 0 : index
    %c0_13 = arith.constant 0 : index
    %34 = vector.load %arg3[%c0_12, %c0_13] : memref<256x256xbf16, #tpu.memory_space<vmem>>, vector<256x256xbf16>
    %cst_14 = arith.constant dense<0.000000e+00> : vector<256x256xf32>
    %35 = tpu.matmul %33, %34, %cst_14 {dimension_numbers = #tpu.dot_dimension_numbers<[1], [0], [0], [1], [0, 0, 1, 1], [], []>} : vector<256x256xbf16>, vector<256x256xbf16>, vector<256x256xf32> -> vector<256x256xf32>
    %36 = vector.extract_strided_slice %35 {offsets = [0, 0], sizes = [256, 128], strides = [1, 1]} : vector<256x256xf32> to vector<256x128xf32>
    %37 = vector.extract_strided_slice %35 {offsets = [0, 128], sizes = [256, 128], strides = [1, 1]} : vector<256x256xf32> to vector<256x128xf32>
    %38 = arith.mulf %36, %36 : vector<256x128xf32>
    %39 = arith.subf %37, %38 : vector<256x128xf32>
    %cst_15 = arith.constant 0.000000e+00 : f32
    %40 = vector.broadcast %cst_15 : f32 to vector<256x128xf32>
    %41 = arith.maximumf %39, %40 : vector<256x128xf32>
    %c3 = arith.constant 3 : index
    %c0_16 = arith.constant 0 : index
    %42 = vector.load %arg5[%c3, %c0_16] : memref<18x128xf32, #tpu.memory_space<vmem>>, vector<1x128xf32>
    %43 = vector.shape_cast %42 : vector<1x128xf32> to vector<128xf32>
    %cst_17 = arith.constant 9.99999974E-6 : f32
    %44 = vector.broadcast %cst_17 : f32 to vector<256x128xf32>
    %45 = arith.addf %41, %44 : vector<256x128xf32>
    %46 = math.rsqrt %45 : vector<256x128xf32>
    %47 = vector.shape_cast %43 : vector<128xf32> to vector<1x128xf32>
    %48 = vector.broadcast %47 : vector<1x128xf32> to vector<256x128xf32>
    %49 = arith.mulf %48, %46 : vector<256x128xf32>
    %c4 = arith.constant 4 : index
    %c0_18 = arith.constant 0 : index
    %50 = vector.load %arg5[%c4, %c0_18] : memref<18x128xf32, #tpu.memory_space<vmem>>, vector<1x128xf32>
    %51 = vector.shape_cast %50 : vector<1x128xf32> to vector<128xf32>
    %52 = arith.mulf %36, %49 : vector<256x128xf32>
    %53 = vector.shape_cast %51 : vector<128xf32> to vector<1x128xf32>
    %54 = vector.broadcast %53 : vector<1x128xf32> to vector<256x128xf32>
    %55 = arith.subf %54, %52 : vector<256x128xf32>
    %56 = arith.extf %22 : vector<256x128xbf16> to vector<256x128xf32>
    %57 = arith.mulf %56, %49 : vector<256x128xf32>
    %58 = arith.addf %57, %55 : vector<256x128xf32>
    %59 = arith.truncf %58 : vector<256x128xf32> to vector<256x128xbf16>
    %c1_19 = arith.constant 1 : index
    %c0_20 = arith.constant 0 : index
    %c0_21 = arith.constant 0 : index
    %60 = vector.load %arg4[%c1_19, %c0_20, %c0_21] : memref<10x128x128xbf16, #tpu.memory_space<vmem>>, vector<1x128x128xbf16>
    %61 = vector.shape_cast %60 : vector<1x128x128xbf16> to vector<128x128xbf16>
    %cst_22 = arith.constant dense<0.000000e+00> : vector<256x128xf32>
    %62 = tpu.matmul %59, %61, %cst_22 {dimension_numbers = #tpu.dot_dimension_numbers<[1], [0], [0], [1], [0, 0, 1, 1], [], []>} : vector<256x128xbf16>, vector<128x128xbf16>, vector<256x128xf32> -> vector<256x128xf32>
    %c5 = arith.constant 5 : index
    %c0_23 = arith.constant 0 : index
    %63 = vector.load %arg5[%c5, %c0_23] : memref<18x128xf32, #tpu.memory_space<vmem>>, vector<1x128xf32>
    %64 = vector.shape_cast %63 : vector<1x128xf32> to vector<128xf32>
    %65 = vector.shape_cast %64 : vector<128xf32> to vector<1x128xf32>
    %66 = vector.broadcast %65 : vector<1x128xf32> to vector<256x128xf32>
    %67 = arith.addf %62, %66 : vector<256x128xf32>
    %68 = arith.truncf %67 : vector<256x128xf32> to vector<256x128xbf16>
    %69 = arith.negf %68 : vector<256x128xbf16>
    %70 = math.exp %69 : vector<256x128xbf16>
    %cst_24 = arith.constant 1.000000e+00 : bf16
    %71 = vector.broadcast %cst_24 : bf16 to vector<256x128xbf16>
    %72 = arith.addf %71, %70 : vector<256x128xbf16>
    %73 = arith.divf %71, %72 : vector<256x128xbf16>
    %74 = arith.mulf %68, %73 : vector<256x128xbf16>
    %c2_25 = arith.constant 2 : index
    %c0_26 = arith.constant 0 : index
    %c0_27 = arith.constant 0 : index
    %75 = vector.load %arg4[%c2_25, %c0_26, %c0_27] : memref<10x128x128xbf16, #tpu.memory_space<vmem>>, vector<1x128x128xbf16>
    %76 = vector.shape_cast %75 : vector<1x128x128xbf16> to vector<128x128xbf16>
    %cst_28 = arith.constant dense<0.000000e+00> : vector<256x128xf32>
    %77 = tpu.matmul %74, %76, %cst_28 {dimension_numbers = #tpu.dot_dimension_numbers<[1], [0], [0], [1], [0, 0, 1, 1], [], []>} : vector<256x128xbf16>, vector<128x128xbf16>, vector<256x128xf32> -> vector<256x128xf32>
    %c6 = arith.constant 6 : index
    %c0_29 = arith.constant 0 : index
    %78 = vector.load %arg5[%c6, %c0_29] : memref<18x128xf32, #tpu.memory_space<vmem>>, vector<1x128xf32>
    %79 = vector.shape_cast %78 : vector<1x128xf32> to vector<128xf32>
    %80 = vector.shape_cast %79 : vector<128xf32> to vector<1x128xf32>
    %81 = vector.broadcast %80 : vector<1x128xf32> to vector<256x128xf32>
    %82 = arith.addf %77, %81 : vector<256x128xf32>
    %83 = arith.truncf %82 : vector<256x128xf32> to vector<256x128xbf16>
    %84 = arith.negf %83 : vector<256x128xbf16>
    %85 = math.exp %84 : vector<256x128xbf16>
    %cst_30 = arith.constant 1.000000e+00 : bf16
    %86 = vector.broadcast %cst_30 : bf16 to vector<256x128xbf16>
    %87 = arith.addf %86, %85 : vector<256x128xbf16>
    %88 = arith.divf %86, %87 : vector<256x128xbf16>
    %89 = arith.mulf %83, %88 : vector<256x128xbf16>
    %c3_31 = arith.constant 3 : index
    %c0_32 = arith.constant 0 : index
    %c0_33 = arith.constant 0 : index
    %90 = vector.load %arg4[%c3_31, %c0_32, %c0_33] : memref<10x128x128xbf16, #tpu.memory_space<vmem>>, vector<1x128x128xbf16>
    %91 = vector.shape_cast %90 : vector<1x128x128xbf16> to vector<128x128xbf16>
    %cst_34 = arith.constant dense<0.000000e+00> : vector<256x128xf32>
    %92 = tpu.matmul %89, %91, %cst_34 {dimension_numbers = #tpu.dot_dimension_numbers<[1], [0], [0], [1], [0, 0, 1, 1], [], []>} : vector<256x128xbf16>, vector<128x128xbf16>, vector<256x128xf32> -> vector<256x128xf32>
    %c7 = arith.constant 7 : index
    %c0_35 = arith.constant 0 : index
    %93 = vector.load %arg5[%c7, %c0_35] : memref<18x128xf32, #tpu.memory_space<vmem>>, vector<1x128xf32>
    %94 = vector.shape_cast %93 : vector<1x128xf32> to vector<128xf32>
    %95 = vector.shape_cast %94 : vector<128xf32> to vector<1x128xf32>
    %96 = vector.broadcast %95 : vector<1x128xf32> to vector<256x128xf32>
    %97 = arith.addf %92, %96 : vector<256x128xf32>
    %98 = arith.truncf %97 : vector<256x128xf32> to vector<256x128xbf16>
    %99 = arith.negf %98 : vector<256x128xbf16>
    %100 = math.exp %99 : vector<256x128xbf16>
    %cst_36 = arith.constant 1.000000e+00 : bf16
    %101 = vector.broadcast %cst_36 : bf16 to vector<256x128xbf16>
    %102 = arith.addf %101, %100 : vector<256x128xbf16>
    %103 = arith.divf %101, %102 : vector<256x128xbf16>
    %104 = arith.mulf %98, %103 : vector<256x128xbf16>
    %105 = arith.addf %22, %104 : vector<256x128xbf16>
    %cst_37 = arith.constant 7.070310e-01 : bf16
    %106 = vector.broadcast %cst_37 : bf16 to vector<256x128xbf16>
    %107 = arith.mulf %105, %106 : vector<256x128xbf16>
    %108 = arith.mulf %107, %107 : vector<256x128xbf16>
    %109 = tpu.concatenate %107, %108 in 1 : vector<256x128xbf16>, vector<256x128xbf16> -> vector<256x256xbf16>
    %c0_38 = arith.constant 0 : index
    %c0_39 = arith.constant 0 : index
    %110 = vector.load %arg3[%c0_38, %c0_39] : memref<256x256xbf16, #tpu.memory_space<vmem>>, vector<256x256xbf16>
    %cst_40 = arith.constant dense<0.000000e+00> : vector<256x256xf32>
    %111 = tpu.matmul %109, %110, %cst_40 {dimension_numbers = #tpu.dot_dimension_numbers<[1], [0], [0], [1], [0, 0, 1, 1], [], []>} : vector<256x256xbf16>, vector<256x256xbf16>, vector<256x256xf32> -> vector<256x256xf32>
    %112 = vector.extract_strided_slice %111 {offsets = [0, 0], sizes = [256, 128], strides = [1, 1]} : vector<256x256xf32> to vector<256x128xf32>
    %113 = vector.extract_strided_slice %111 {offsets = [0, 128], sizes = [256, 128], strides = [1, 1]} : vector<256x256xf32> to vector<256x128xf32>
    %114 = arith.mulf %112, %112 : vector<256x128xf32>
    %115 = arith.subf %113, %114 : vector<256x128xf32>
    %cst_41 = arith.constant 0.000000e+00 : f32
    %116 = vector.broadcast %cst_41 : f32 to vector<256x128xf32>
    %117 = arith.maximumf %115, %116 : vector<256x128xf32>
    %c8 = arith.constant 8 : index
    %c0_42 = arith.constant 0 : index
    %118 = vector.load %arg5[%c8, %c0_42] : memref<18x128xf32, #tpu.memory_space<vmem>>, vector<1x128xf32>
    %119 = vector.shape_cast %118 : vector<1x128xf32> to vector<128xf32>
    %cst_43 = arith.constant 9.99999974E-6 : f32
    %120 = vector.broadcast %cst_43 : f32 to vector<256x128xf32>
    %121 = arith.addf %117, %120 : vector<256x128xf32>
    %122 = math.rsqrt %121 : vector<256x128xf32>
    %123 = vector.shape_cast %119 : vector<128xf32> to vector<1x128xf32>
    %124 = vector.broadcast %123 : vector<1x128xf32> to vector<256x128xf32>
    %125 = arith.mulf %124, %122 : vector<256x128xf32>
    %c9 = arith.constant 9 : index
    %c0_44 = arith.constant 0 : index
    %126 = vector.load %arg5[%c9, %c0_44] : memref<18x128xf32, #tpu.memory_space<vmem>>, vector<1x128xf32>
    %127 = vector.shape_cast %126 : vector<1x128xf32> to vector<128xf32>
    %128 = arith.mulf %112, %125 : vector<256x128xf32>
    %129 = vector.shape_cast %127 : vector<128xf32> to vector<1x128xf32>
    %130 = vector.broadcast %129 : vector<1x128xf32> to vector<256x128xf32>
    %131 = arith.subf %130, %128 : vector<256x128xf32>
    %132 = arith.extf %107 : vector<256x128xbf16> to vector<256x128xf32>
    %133 = arith.mulf %132, %125 : vector<256x128xf32>
    %134 = arith.addf %133, %131 : vector<256x128xf32>
    %135 = arith.truncf %134 : vector<256x128xf32> to vector<256x128xbf16>
    %c4_45 = arith.constant 4 : index
    %c0_46 = arith.constant 0 : index
    %c0_47 = arith.constant 0 : index
    %136 = vector.load %arg4[%c4_45, %c0_46, %c0_47] : memref<10x128x128xbf16, #tpu.memory_space<vmem>>, vector<1x128x128xbf16>
    %137 = vector.shape_cast %136 : vector<1x128x128xbf16> to vector<128x128xbf16>
    %cst_48 = arith.constant dense<0.000000e+00> : vector<256x128xf32>
    %138 = tpu.matmul %135, %137, %cst_48 {dimension_numbers = #tpu.dot_dimension_numbers<[1], [0], [0], [1], [0, 0, 1, 1], [], []>} : vector<256x128xbf16>, vector<128x128xbf16>, vector<256x128xf32> -> vector<256x128xf32>
    %c10 = arith.constant 10 : index
    %c0_49 = arith.constant 0 : index
    %139 = vector.load %arg5[%c10, %c0_49] : memref<18x128xf32, #tpu.memory_space<vmem>>, vector<1x128xf32>
    %140 = vector.shape_cast %139 : vector<1x128xf32> to vector<128xf32>
    %141 = vector.shape_cast %140 : vector<128xf32> to vector<1x128xf32>
    %142 = vector.broadcast %141 : vector<1x128xf32> to vector<256x128xf32>
    %143 = arith.addf %138, %142 : vector<256x128xf32>
    %144 = arith.truncf %143 : vector<256x128xf32> to vector<256x128xbf16>
    %145 = arith.negf %144 : vector<256x128xbf16>
    %146 = math.exp %145 : vector<256x128xbf16>
    %cst_50 = arith.constant 1.000000e+00 : bf16
    %147 = vector.broadcast %cst_50 : bf16 to vector<256x128xbf16>
    %148 = arith.addf %147, %146 : vector<256x128xbf16>
    %149 = arith.divf %147, %148 : vector<256x128xbf16>
    %150 = arith.mulf %144, %149 : vector<256x128xbf16>
    %c5_51 = arith.constant 5 : index
    %c0_52 = arith.constant 0 : index
    %c0_53 = arith.constant 0 : index
    %151 = vector.load %arg4[%c5_51, %c0_52, %c0_53] : memref<10x128x128xbf16, #tpu.memory_space<vmem>>, vector<1x128x128xbf16>
    %152 = vector.shape_cast %151 : vector<1x128x128xbf16> to vector<128x128xbf16>
    %cst_54 = arith.constant dense<0.000000e+00> : vector<256x128xf32>
    %153 = tpu.matmul %150, %152, %cst_54 {dimension_numbers = #tpu.dot_dimension_numbers<[1], [0], [0], [1], [0, 0, 1, 1], [], []>} : vector<256x128xbf16>, vector<128x128xbf16>, vector<256x128xf32> -> vector<256x128xf32>
    %c11 = arith.constant 11 : index
    %c0_55 = arith.constant 0 : index
    %154 = vector.load %arg5[%c11, %c0_55] : memref<18x128xf32, #tpu.memory_space<vmem>>, vector<1x128xf32>
    %155 = vector.shape_cast %154 : vector<1x128xf32> to vector<128xf32>
    %156 = vector.shape_cast %155 : vector<128xf32> to vector<1x128xf32>
    %157 = vector.broadcast %156 : vector<1x128xf32> to vector<256x128xf32>
    %158 = arith.addf %153, %157 : vector<256x128xf32>
    %159 = arith.truncf %158 : vector<256x128xf32> to vector<256x128xbf16>
    %160 = arith.negf %159 : vector<256x128xbf16>
    %161 = math.exp %160 : vector<256x128xbf16>
    %cst_56 = arith.constant 1.000000e+00 : bf16
    %162 = vector.broadcast %cst_56 : bf16 to vector<256x128xbf16>
    %163 = arith.addf %162, %161 : vector<256x128xbf16>
    %164 = arith.divf %162, %163 : vector<256x128xbf16>
    %165 = arith.mulf %159, %164 : vector<256x128xbf16>
    %c6_57 = arith.constant 6 : index
    %c0_58 = arith.constant 0 : index
    %c0_59 = arith.constant 0 : index
    %166 = vector.load %arg4[%c6_57, %c0_58, %c0_59] : memref<10x128x128xbf16, #tpu.memory_space<vmem>>, vector<1x128x128xbf16>
    %167 = vector.shape_cast %166 : vector<1x128x128xbf16> to vector<128x128xbf16>
    %cst_60 = arith.constant dense<0.000000e+00> : vector<256x128xf32>
    %168 = tpu.matmul %165, %167, %cst_60 {dimension_numbers = #tpu.dot_dimension_numbers<[1], [0], [0], [1], [0, 0, 1, 1], [], []>} : vector<256x128xbf16>, vector<128x128xbf16>, vector<256x128xf32> -> vector<256x128xf32>
    %c12 = arith.constant 12 : index
    %c0_61 = arith.constant 0 : index
    %169 = vector.load %arg5[%c12, %c0_61] : memref<18x128xf32, #tpu.memory_space<vmem>>, vector<1x128xf32>
    %170 = vector.shape_cast %169 : vector<1x128xf32> to vector<128xf32>
    %171 = vector.shape_cast %170 : vector<128xf32> to vector<1x128xf32>
    %172 = vector.broadcast %171 : vector<1x128xf32> to vector<256x128xf32>
    %173 = arith.addf %168, %172 : vector<256x128xf32>
    %174 = arith.truncf %173 : vector<256x128xf32> to vector<256x128xbf16>
    %175 = arith.negf %174 : vector<256x128xbf16>
    %176 = math.exp %175 : vector<256x128xbf16>
    %cst_62 = arith.constant 1.000000e+00 : bf16
    %177 = vector.broadcast %cst_62 : bf16 to vector<256x128xbf16>
    %178 = arith.addf %177, %176 : vector<256x128xbf16>
    %179 = arith.divf %177, %178 : vector<256x128xbf16>
    %180 = arith.mulf %174, %179 : vector<256x128xbf16>
    %181 = arith.addf %107, %180 : vector<256x128xbf16>
    %cst_63 = arith.constant 7.070310e-01 : bf16
    %182 = vector.broadcast %cst_63 : bf16 to vector<256x128xbf16>
    %183 = arith.mulf %181, %182 : vector<256x128xbf16>
    %184 = arith.addf %183, %31 : vector<256x128xbf16>
    %185 = arith.mulf %184, %184 : vector<256x128xbf16>
    %186 = tpu.concatenate %184, %185 in 1 : vector<256x128xbf16>, vector<256x128xbf16> -> vector<256x256xbf16>
    %c0_64 = arith.constant 0 : index
    %c0_65 = arith.constant 0 : index
    %187 = vector.load %arg3[%c0_64, %c0_65] : memref<256x256xbf16, #tpu.memory_space<vmem>>, vector<256x256xbf16>
    %cst_66 = arith.constant dense<0.000000e+00> : vector<256x256xf32>
    %188 = tpu.matmul %186, %187, %cst_66 {dimension_numbers = #tpu.dot_dimension_numbers<[1], [0], [0], [1], [0, 0, 1, 1], [], []>} : vector<256x256xbf16>, vector<256x256xbf16>, vector<256x256xf32> -> vector<256x256xf32>
    %189 = vector.extract_strided_slice %188 {offsets = [0, 0], sizes = [256, 128], strides = [1, 1]} : vector<256x256xf32> to vector<256x128xf32>
    %190 = vector.extract_strided_slice %188 {offsets = [0, 128], sizes = [256, 128], strides = [1, 1]} : vector<256x256xf32> to vector<256x128xf32>
    %191 = arith.mulf %189, %189 : vector<256x128xf32>
    %192 = arith.subf %190, %191 : vector<256x128xf32>
    %cst_67 = arith.constant 0.000000e+00 : f32
    %193 = vector.broadcast %cst_67 : f32 to vector<256x128xf32>
    %194 = arith.maximumf %192, %193 : vector<256x128xf32>
    %c13 = arith.constant 13 : index
    %c0_68 = arith.constant 0 : index
    %195 = vector.load %arg5[%c13, %c0_68] : memref<18x128xf32, #tpu.memory_space<vmem>>, vector<1x128xf32>
    %196 = vector.shape_cast %195 : vector<1x128xf32> to vector<128xf32>
    %cst_69 = arith.constant 9.99999974E-6 : f32
    %197 = vector.broadcast %cst_69 : f32 to vector<256x128xf32>
    %198 = arith.addf %194, %197 : vector<256x128xf32>
    %199 = math.rsqrt %198 : vector<256x128xf32>
    %200 = vector.shape_cast %196 : vector<128xf32> to vector<1x128xf32>
    %201 = vector.broadcast %200 : vector<1x128xf32> to vector<256x128xf32>
    %202 = arith.mulf %201, %199 : vector<256x128xf32>
    %c14 = arith.constant 14 : index
    %c0_70 = arith.constant 0 : index
    %203 = vector.load %arg5[%c14, %c0_70] : memref<18x128xf32, #tpu.memory_space<vmem>>, vector<1x128xf32>
    %204 = vector.shape_cast %203 : vector<1x128xf32> to vector<128xf32>
    %205 = arith.mulf %189, %202 : vector<256x128xf32>
    %206 = vector.shape_cast %204 : vector<128xf32> to vector<1x128xf32>
    %207 = vector.broadcast %206 : vector<1x128xf32> to vector<256x128xf32>
    %208 = arith.subf %207, %205 : vector<256x128xf32>
    %209 = arith.extf %184 : vector<256x128xbf16> to vector<256x128xf32>
    %210 = arith.mulf %209, %202 : vector<256x128xf32>
    %211 = arith.addf %210, %208 : vector<256x128xf32>
    %212 = arith.truncf %211 : vector<256x128xf32> to vector<256x128xbf16>
    %c7_71 = arith.constant 7 : index
    %c0_72 = arith.constant 0 : index
    %c0_73 = arith.constant 0 : index
    %213 = vector.load %arg4[%c7_71, %c0_72, %c0_73] : memref<10x128x128xbf16, #tpu.memory_space<vmem>>, vector<1x128x128xbf16>
    %214 = vector.shape_cast %213 : vector<1x128x128xbf16> to vector<128x128xbf16>
    %cst_74 = arith.constant dense<0.000000e+00> : vector<256x128xf32>
    %215 = tpu.matmul %212, %214, %cst_74 {dimension_numbers = #tpu.dot_dimension_numbers<[1], [0], [0], [1], [0, 0, 1, 1], [], []>} : vector<256x128xbf16>, vector<128x128xbf16>, vector<256x128xf32> -> vector<256x128xf32>
    %c15 = arith.constant 15 : index
    %c0_75 = arith.constant 0 : index
    %216 = vector.load %arg5[%c15, %c0_75] : memref<18x128xf32, #tpu.memory_space<vmem>>, vector<1x128xf32>
    %217 = vector.shape_cast %216 : vector<1x128xf32> to vector<128xf32>
    %218 = vector.shape_cast %217 : vector<128xf32> to vector<1x128xf32>
    %219 = vector.broadcast %218 : vector<1x128xf32> to vector<256x128xf32>
    %220 = arith.addf %215, %219 : vector<256x128xf32>
    %221 = arith.truncf %220 : vector<256x128xf32> to vector<256x128xbf16>
    %222 = arith.negf %221 : vector<256x128xbf16>
    %223 = math.exp %222 : vector<256x128xbf16>
    %cst_76 = arith.constant 1.000000e+00 : bf16
    %224 = vector.broadcast %cst_76 : bf16 to vector<256x128xbf16>
    %225 = arith.addf %224, %223 : vector<256x128xbf16>
    %226 = arith.divf %224, %225 : vector<256x128xbf16>
    %227 = arith.mulf %221, %226 : vector<256x128xbf16>
    %c8_77 = arith.constant 8 : index
    %c0_78 = arith.constant 0 : index
    %c0_79 = arith.constant 0 : index
    %228 = vector.load %arg4[%c8_77, %c0_78, %c0_79] : memref<10x128x128xbf16, #tpu.memory_space<vmem>>, vector<1x128x128xbf16>
    %229 = vector.shape_cast %228 : vector<1x128x128xbf16> to vector<128x128xbf16>
    %cst_80 = arith.constant dense<0.000000e+00> : vector<256x128xf32>
    %230 = tpu.matmul %227, %229, %cst_80 {dimension_numbers = #tpu.dot_dimension_numbers<[1], [0], [0], [1], [0, 0, 1, 1], [], []>} : vector<256x128xbf16>, vector<128x128xbf16>, vector<256x128xf32> -> vector<256x128xf32>
    %c16 = arith.constant 16 : index
    %c0_81 = arith.constant 0 : index
    %231 = vector.load %arg5[%c16, %c0_81] : memref<18x128xf32, #tpu.memory_space<vmem>>, vector<1x128xf32>
    %232 = vector.shape_cast %231 : vector<1x128xf32> to vector<128xf32>
    %233 = vector.shape_cast %232 : vector<128xf32> to vector<1x128xf32>
    %234 = vector.broadcast %233 : vector<1x128xf32> to vector<256x128xf32>
    %235 = arith.addf %230, %234 : vector<256x128xf32>
    %236 = arith.truncf %235 : vector<256x128xf32> to vector<256x128xbf16>
    %237 = arith.negf %236 : vector<256x128xbf16>
    %238 = math.exp %237 : vector<256x128xbf16>
    %cst_82 = arith.constant 1.000000e+00 : bf16
    %239 = vector.broadcast %cst_82 : bf16 to vector<256x128xbf16>
    %240 = arith.addf %239, %238 : vector<256x128xbf16>
    %241 = arith.divf %239, %240 : vector<256x128xbf16>
    %242 = arith.mulf %236, %241 : vector<256x128xbf16>
    %c9_83 = arith.constant 9 : index
    %c0_84 = arith.constant 0 : index
    %c0_85 = arith.constant 0 : index
    %243 = vector.load %arg4[%c9_83, %c0_84, %c0_85] : memref<10x128x128xbf16, #tpu.memory_space<vmem>>, vector<1x128x128xbf16>
    %244 = vector.shape_cast %243 : vector<1x128x128xbf16> to vector<128x128xbf16>
    %cst_86 = arith.constant dense<0.000000e+00> : vector<256x128xf32>
    %245 = tpu.matmul %242, %244, %cst_86 {dimension_numbers = #tpu.dot_dimension_numbers<[1], [0], [0], [1], [0, 0, 1, 1], [], []>} : vector<256x128xbf16>, vector<128x128xbf16>, vector<256x128xf32> -> vector<256x128xf32>
    %c17 = arith.constant 17 : index
    %c0_87 = arith.constant 0 : index
    %246 = vector.load %arg5[%c17, %c0_87] : memref<18x128xf32, #tpu.memory_space<vmem>>, vector<1x128xf32>
    %247 = vector.shape_cast %246 : vector<1x128xf32> to vector<128xf32>
    %248 = vector.shape_cast %247 : vector<128xf32> to vector<1x128xf32>
    %249 = vector.broadcast %248 : vector<1x128xf32> to vector<256x128xf32>
    %250 = arith.addf %245, %249 : vector<256x128xf32>
    %251 = arith.truncf %250 : vector<256x128xf32> to vector<256x128xbf16>
    %c0_88 = arith.constant 0 : index
    %c0_89 = arith.constant 0 : index
    %252 = vector.load %arg6[%c0_88, %c0_89] : memref<256x128xbf16, #tpu.memory_space<vmem>>, vector<256x128xbf16>
    tpu.vector_store %arg6[%c0_88, %c0_89], %251 {strides = array<i32>} : memref<256x128xbf16, #tpu.memory_space<vmem>>, vector<256x128xbf16>,
    return
  }
  func.func @transform_0(%arg0: i32) -> (i32, i32) {
    %c0_i32 = arith.constant 0 : i32
    %c0_i32_0 = arith.constant 0 : i32
    return %arg0, %c0_i32 : i32, i32
  }
  func.func @transform_1(%arg0: i32) -> (i32, i32) {
    %c0_i32 = arith.constant 0 : i32
    %c0_i32_0 = arith.constant 0 : i32
    %c0_i32_1 = arith.constant 0 : i32
    return %c0_i32, %c0_i32_0 : i32, i32
  }
  func.func @transform_2(%arg0: i32) -> (i32, i32) {
    %c0_i32 = arith.constant 0 : i32
    %c0_i32_0 = arith.constant 0 : i32
    %c0_i32_1 = arith.constant 0 : i32
    return %c0_i32, %c0_i32_0 : i32, i32
  }
  func.func @transform_3(%arg0: i32) -> (i32, i32, i32) {
    %c0_i32 = arith.constant 0 : i32
    %c0_i32_0 = arith.constant 0 : i32
    %c0_i32_1 = arith.constant 0 : i32
    %c0_i32_2 = arith.constant 0 : i32
    return %c0_i32, %c0_i32_0, %c0_i32_1 : i32, i32, i32
  }
  func.func @transform_4(%arg0: i32) -> (i32, i32) {
    %c0_i32 = arith.constant 0 : i32
    %c0_i32_0 = arith.constant 0 : i32
    %c0_i32_1 = arith.constant 0 : i32
    return %c0_i32, %c0_i32_0 : i32, i32
  }
  func.func @transform_5(%arg0: i32) -> (i32, i32) {
    %c0_i32 = arith.constant 0 : i32
    %c0_i32_0 = arith.constant 0 : i32
    return %arg0, %c0_i32 : i32, i32
  }
}

</mosaic_0001>

<llo_original>
// kernel: tpu_custom_call.1
$region0: #{tpu_custom_call.1}
  #allocation0 [shape = 'u32[]', space=smem, size = 0x4, offset = 0x4, fixed_abs, tag = 'smem constant byte address 0x4 - core index']
  #allocation1 [shape = 'u32[144,128]{1,0:T(1,128)}', space=vmem, size = 0x12000, scoped, tag = 'internal scratch']
  %s0 = inlined_call_operand.vmem [shape: bf16[512,48], index: 0, kind: input, shape index: {}]
  %s1 = inlined_call_operand.vmem [shape: bf16[48,256], index: 1, kind: input, shape index: {}]
  %s2 = inlined_call_operand.vmem [shape: bf16[256,256], index: 2, kind: input, shape index: {}]
  %s3 = inlined_call_operand.hbm [shape: bf16[10,128,128], index: 3, kind: input, shape index: {}]
  %s4 = inlined_call_operand.vmem [shape: f32[18,128], index: 4, kind: input, shape index: {}]
  %s5 = inlined_call_operand.hbm [shape: bf16[512,128], index: 5, kind: output, shape index: {}]
  %s6 = sld [smem:[#allocation0]]
  $region57: #{tpu_custom_call.1} parent=0
    _
  %s8 = ssub.s32 1, %s6
  %s9 = scalar_select 0, %s8, %s6
  $region1: #{tpu_custom_call.1} parent=0
    #allocation2 [shape = 'u8[327680]{0}', space=vmem, size = 0x50000, scoped, tag = 'input window, operand 3, single buffered']
    #allocation3 [shape = 's32[2]{0}', space=sflag, size = 0x8, scoped, tag = 'scoped memory for tpu_custom_call.1']
    #allocation4 [shape = 's32[2]{0}', space=sflag, size = 0x8, scoped, tag = 'scoped memory for tpu_custom_call.1']
    #allocation5 [shape = 'u8[131072]{0}', space=vmem, size = 0x20000, scoped, tag = 'output window, operand 0']
    %10 = vsyncpa [#allocation3], 0
    %11 = vsyncpa [#allocation4], 0
    %s12 = scalar_lea.sflag [#allocation4], 1
    %13 = vsyncpa %s12, 0
    loop: start=0, step=1, limit=4
    $region2: #{tpu_custom_call.1} parent=1 // loop_pre_header
      _
    $region3: #{tpu_custom_call.1} parent=1 // loop_header
      %s15 = sphi 0, %s19
      %p16 = scmp.ge.s32.totalorder %s15, 4
      %s25 = sphi 0, %s27
      %s28 = sphi 0, %s25
      %s29 = sphi 0, %s28
      %s45 = sphi 0, %s29
      %s49 = sphi 0, %s49
      %s51 = sphi 0, %s49
      %s52 = sphi 0, %s51
      %s66 = sphi 0, %s52
      %s70 = sphi 0, %s70
      %s72 = sphi 0, %s70
      %s73 = sphi 0, %s72
      %s87 = sphi 0, %s73
      %s91 = sphi 0, %s91
      %s93 = sphi 0, %s91
      %s94 = sphi 0, %s93
      %s108 = sphi 0, %s94
      %s112 = sphi 0, %s112
      %s114 = sphi 0, %s112
      %s115 = sphi 0, %s114
      %s129 = sphi 0, %s115
      %s135 = sphi 0, %s137
      %s138 = sphi 0, %s135
      %s139 = sphi 0, %s138
      %s155 = sphi 0, %s139
    $region4: #{tpu_custom_call.1} parent=1 // loop_header_branch
      %18 = sbr.rel (%p16) target = $region8
    $region5: #{tpu_custom_call.1} parent=1 // loop_body
      %s20 = ssub.s32 %s15, 1
      %s21 = ssub.s32 %s15, 2
      %s22 = sadd.s32 %s15, 1
      %s23 = ssub.s32 %s15, %s22
      %p24 = scmp.eq.s32.totalorder %s23, 0
      %s26 = sadd.s32 %s25, 1
      %s27 = scalar_select %p24, %s25, %s26
      %p30 = pneg %p24
      %p31 = scmp.eq.s32.totalorder %s15, 1
      %p32 = por %p30, %p31
      %p33 = scmp.ne.s32.totalorder %s25, %s28
      %p34 = scmp.eq.s32.totalorder %s15, 0
      %p35 = por %p33, %p34
      %p36 = scmp.ne.s32.totalorder %s25, %s28
      %p37 = scmp.eq.s32.totalorder %s20, 1
      %p38 = por %p36, %p37
      %p39 = scmp.ne.s32.totalorder %s28, %s29
      %p40 = scmp.eq.s32.totalorder %s20, 0
      %p41 = por %p39, %p40
      %p42 = scmp.ne.s32.totalorder %s28, %s29
      %p43 = scmp.eq.s32.totalorder %s21, 1
      %p44 = por %p42, %p43
      %p46 = scmp.ne.s32.totalorder %s29, %s45
      %p47 = scmp.eq.s32.totalorder %s21, 0
      %p48 = por %p46, %p47
      %s50 = sadd.s32 %s49, 1
      %p53 = scmp.eq.s32.totalorder %s15, 1
      %p54 = scmp.ne.s32.totalorder %s49, %s51
      %p55 = scmp.eq.s32.totalorder %s15, 0
      %p56 = por %p54, %p55
      %p57 = scmp.ne.s32.totalorder %s49, %s51
      %p58 = scmp.eq.s32.totalorder %s20, 1
      %p59 = por %p57, %p58
      %p60 = scmp.ne.s32.totalorder %s51, %s52
      %p61 = scmp.eq.s32.totalorder %s20, 0
      %p62 = por %p60, %p61
      %p63 = scmp.ne.s32.totalorder %s51, %s52
      %p64 = scmp.eq.s32.totalorder %s21, 1
      %p65 = por %p63, %p64
      %p67 = scmp.ne.s32.totalorder %s52, %s66
      %p68 = scmp.eq.s32.totalorder %s21, 0
      %p69 = por %p67, %p68
      %s71 = sadd.s32 %s70, 1
      %p74 = scmp.eq.s32.totalorder %s15, 1
      %p75 = scmp.ne.s32.totalorder %s70, %s72
      %p76 = scmp.eq.s32.totalorder %s15, 0
      %p77 = por %p75, %p76
      %p78 = scmp.ne.s32.totalorder %s70, %s72
      %p79 = scmp.eq.s32.totalorder %s20, 1
      %p80 = por %p78, %p79
      %p81 = scmp.ne.s32.totalorder %s72, %s73
      %p82 = scmp.eq.s32.totalorder %s20, 0
      %p83 = por %p81, %p82
      %p84 = scmp.ne.s32.totalorder %s72, %s73
      %p85 = scmp.eq.s32.totalorder %s21, 1
      %p86 = por %p84, %p85
      %p88 = scmp.ne.s32.totalorder %s73, %s87
      %p89 = scmp.eq.s32.totalorder %s21, 0
      %p90 = por %p88, %p89
      %s92 = sadd.s32 %s91, 1
      %p95 = scmp.eq.s32.totalorder %s15, 1
      %p96 = scmp.ne.s32.totalorder %s91, %s93
      %p97 = scmp.eq.s32.totalorder %s15, 0
      %p98 = por %p96, %p97
      %p99 = scmp.ne.s32.totalorder %s91, %s93
      %p100 = scmp.eq.s32.totalorder %s20, 1
      %p101 = por %p99, %p100
      %p102 = scmp.ne.s32.totalorder %s93, %s94
      %p103 = scmp.eq.s32.totalorder %s20, 0
      %p104 = por %p102, %p103
      %p105 = scmp.ne.s32.totalorder %s93, %s94
      %p106 = scmp.eq.s32.totalorder %s21, 1
      %p107 = por %p105, %p106
      %p109 = scmp.ne.s32.totalorder %s94, %s108
      %p110 = scmp.eq.s32.totalorder %s21, 0
      %p111 = por %p109, %p110
      %s113 = sadd.s32 %s112, 1
      %p116 = scmp.eq.s32.totalorder %s15, 1
      %p117 = scmp.ne.s32.totalorder %s112, %s114
      %p118 = scmp.eq.s32.totalorder %s15, 0
      %p119 = por %p117, %p118
      %p120 = scmp.ne.s32.totalorder %s112, %s114
      %p121 = scmp.eq.s32.totalorder %s20, 1
      %p122 = por %p120, %p121
      %p123 = scmp.ne.s32.totalorder %s114, %s115
      %p124 = scmp.eq.s32.totalorder %s20, 0
      %p125 = por %p123, %p124
      %p126 = scmp.ne.s32.totalorder %s114, %s115
      %p127 = scmp.eq.s32.totalorder %s21, 1
      %p128 = por %p126, %p127
      %p130 = scmp.ne.s32.totalorder %s115, %s129
      %p131 = scmp.eq.s32.totalorder %s21, 0
      %p132 = por %p130, %p131
      %s133 = ssub.s32 %s15, %s22
      %p134 = scmp.eq.s32.totalorder %s133, 0
      %s136 = sadd.s32 %s135, 1
      %s137 = scalar_select %p134, %s135, %s136
      %p140 = pneg %p134
      %p141 = scmp.eq.s32.totalorder %s15, 1
      %p142 = por %p140, %p141
      %p143 = scmp.ne.s32.totalorder %s135, %s138
      %p144 = scmp.eq.s32.totalorder %s15, 0
      %p145 = por %p143, %p144
      %p146 = scmp.ne.s32.totalorder %s135, %s138
      %p147 = scmp.eq.s32.totalorder %s20, 1
      %p148 = por %p146, %p147
      %p149 = scmp.ne.s32.totalorder %s138, %s139
      %p150 = scmp.eq.s32.totalorder %s20, 0
      %p151 = por %p149, %p150
      %p152 = scmp.ne.s32.totalorder %s138, %s139
      %p153 = scmp.eq.s32.totalorder %s21, 1
      %p154 = por %p152, %p153
      %p156 = scmp.ne.s32.totalorder %s139, %s155
      %p157 = scmp.eq.s32.totalorder %s21, 0
      %p158 = por %p156, %p157
      %p159 = scmp.le.s32.totalorder 1, %s15
      %p160 = scmp.lt.s32.totalorder %s15, 3
      %p161 = pnand %p159, %p160
      %p162 = pneg %p161
      // Predicated region
      $region9: #{tpu_custom_call.1} parent=5 // pred_check
        _
      $region10: #{tpu_custom_call.1} parent=5 // pred_check_branch
        %164 = sbr.rel (%p161) target = $region12
      $region11: #{tpu_custom_call.1} parent=5 // pred_region
        %s165 = ssub.s32 %s15, 1
        // Predicated region
        $region13: #{tpu_custom_call.1} parent=11 // pred_check
          %p166 = pneg %p62
        $region14: #{tpu_custom_call.1} parent=11 // pred_check_branch
          %168 = sbr.rel (%p166) target = $region16
        $region15: #{tpu_custom_call.1} parent=11 // pred_region
          _
        $region16: #{tpu_custom_call.1} parent=11 // pred_fallthru
          _
        // Predicated region
        $region17: #{tpu_custom_call.1} parent=11 // pred_check
          %p169 = pneg %p83
        $region18: #{tpu_custom_call.1} parent=11 // pred_check_branch
          %171 = sbr.rel (%p169) target = $region20
        $region19: #{tpu_custom_call.1} parent=11 // pred_region
          _
        $region20: #{tpu_custom_call.1} parent=11 // pred_fallthru
          _
        // Predicated region
        $region21: #{tpu_custom_call.1} parent=11 // pred_check
          %p172 = pneg %p104
        $region22: #{tpu_custom_call.1} parent=11 // pred_check_branch
          %174 = sbr.rel (%p172) target = $region24
        $region23: #{tpu_custom_call.1} parent=11 // pred_region
          %s176 = ssub.s32 10240, 10240
          %177 = vsyncadd [#allocation3], %s176
          %s178 = sshll.u32 [#allocation2], 4
          %s179 = int_to_ptr.vmem [resolvable:$true] %s178
          %184 = dma.hbm_to_vmem [thread:$0]  %s3, 10240, %s179, [#allocation3], 64, 64, 4
        $region24: #{tpu_custom_call.1} parent=11 // pred_fallthru
          _
        // Predicated region
        $region25: #{tpu_custom_call.1} parent=11 // pred_check
          %p185 = pneg %p125
        $region26: #{tpu_custom_call.1} parent=11 // pred_check_branch
          %187 = sbr.rel (%p185) target = $region28
        $region27: #{tpu_custom_call.1} parent=11 // pred_region
          _
        $region28: #{tpu_custom_call.1} parent=11 // pred_fallthru
          _
      $region12: #{tpu_custom_call.1} parent=5 // pred_fallthru
        _
      %p188 = scmp.lt.s32.totalorder %s15, 2
      // Predicated region
      $region29: #{tpu_custom_call.1} parent=5 // pred_check
        %p189 = pneg %p188
      $region30: #{tpu_custom_call.1} parent=5 // pred_check_branch
        %191 = sbr.rel (%p189) target = $region32
      $region31: #{tpu_custom_call.1} parent=5 // pred_region
        // Predicated region
        $region33: #{tpu_custom_call.1} parent=31 // pred_check
          %p192 = pneg %p35
        $region34: #{tpu_custom_call.1} parent=31 // pred_check_branch
          %194 = sbr.rel (%p192) target = $region36
        $region35: #{tpu_custom_call.1} parent=31 // pred_region
          %s195 = smul.u32 32, %s15
          %p196 = scmp.lt.s32.totalorder %s195, 63
          %s197 = scalar_select %p196, %s195, 63
          %s198 = smul.addr %s197, 4
          %s199 = scalar_lea.vmem %s0, %s198
          %s200 = smul.u32 32, %s15
        $region36: #{tpu_custom_call.1} parent=31 // pred_fallthru
          _
      $region32: #{tpu_custom_call.1} parent=5 // pred_fallthru
        _
      %p201 = scmp.le.s32.totalorder 1, %s15
      %p202 = scmp.lt.s32.totalorder %s15, 3
      %p203 = pnand %p201, %p202
      %p204 = pneg %p203
      // Predicated region
      $region37: #{tpu_custom_call.1} parent=5 // pred_check
        _
      $region38: #{tpu_custom_call.1} parent=5 // pred_check_branch
        %206 = sbr.rel (%p203) target = $region40
      $region39: #{tpu_custom_call.1} parent=5 // pred_region
        %s207 = ssub.s32 %s15, 1
        // Predicated region
        $region41: #{tpu_custom_call.1} parent=39 // pred_check
          %p208 = pneg %p104
        $region42: #{tpu_custom_call.1} parent=39 // pred_check_branch
          %210 = sbr.rel (%p208) target = $region44
        $region43: #{tpu_custom_call.1} parent=39 // pred_region
          %211 = dma.done [#allocation3], 10240
        $region44: #{tpu_custom_call.1} parent=39 // pred_fallthru
          _
        %s212 = smul.u32 32, %s20
        %p213 = scmp.lt.s32.totalorder %s212, 63
        %s214 = scalar_select %p213, %s212, 63
        %s215 = smul.addr %s214, 4
        %s216 = scalar_lea.vmem %s0, %s215
        %p217 = pneg %p41
        %p218 = pneg %p38
        %p219 = pneg %p62
        %p220 = pneg %p59
        %p221 = pneg %p83
        %p222 = pneg %p80
        %p223 = pneg %p104
        %p224 = pneg %p101
        %p225 = pneg %p125
        %p226 = pneg %p122
        %p227 = pneg %p151
        %p228 = pneg %p148
        %s229 = sand.u32 %s138, 1
        %s230 = scalar_lea.sflag [#allocation4], %s229
        %s231 = sand.u32 %s138, 1
        %s232 = smul.addr %s231, 128
        %s233 = scalar_lea.vmem [#allocation5], %s232
        %s234 = smul.u32 32, %s20
        %p235 = scmp.lt.s32.totalorder %s234, 63
        %s236 = scalar_select %p235, %s234, 63
        %s237 = smul.addr %s236, 4
        %s238 = scalar_lea.vmem %s0, %s237
        %s239 = smul.u32 32, %s20
        %s240 = smul.u32 32, %s20
        %v244 = vld [vmem:[%s238] sm:$0xf]
        %v245 = vld [vmem:[%s238 + $0x4] sm:$0xf]
        %v246 = vld [vmem:[%s238 + $0x8] sm:$0xf]
        %v247 = vld [vmem:[%s238 + $0xc] sm:$0xf]
        %v248 = vld [vmem:[%s238 + $0x10] sm:$0xf]
        %v249 = vld [vmem:[%s238 + $0x14] sm:$0xf]
        %v250 = vld [vmem:[%s238 + $0x18] sm:$0xf]
        %v251 = vld [vmem:[%s238 + $0x1c] sm:$0xf]
        %v252 = vld [vmem:[%s238 + $0x20] sm:$0xf]
        %v253 = vld [vmem:[%s238 + $0x24] sm:$0xf]
        %v254 = vld [vmem:[%s238 + $0x28] sm:$0xf]
        %v255 = vld [vmem:[%s238 + $0x2c] sm:$0xf]
        %v256 = vld [vmem:[%s238 + $0x30] sm:$0xf]
        %v257 = vld [vmem:[%s238 + $0x34] sm:$0xf]
        %v258 = vld [vmem:[%s238 + $0x38] sm:$0xf]
        %v259 = vld [vmem:[%s238 + $0x3c] sm:$0xf]
        %v260 = vld [vmem:[%s238 + $0x40] sm:$0xf]
        %v261 = vld [vmem:[%s238 + $0x44] sm:$0xf]
        %v262 = vld [vmem:[%s238 + $0x48] sm:$0xf]
        %v263 = vld [vmem:[%s238 + $0x4c] sm:$0xf]
        %v264 = vld [vmem:[%s238 + $0x50] sm:$0xf]
        %v265 = vld [vmem:[%s238 + $0x54] sm:$0xf]
        %v266 = vld [vmem:[%s238 + $0x58] sm:$0xf]
        %v267 = vld [vmem:[%s238 + $0x5c] sm:$0xf]
        %v268 = vld [vmem:[%s238 + $0x60] sm:$0xf]
        %v269 = vld [vmem:[%s238 + $0x64] sm:$0xf]
        %v270 = vld [vmem:[%s238 + $0x68] sm:$0xf]
        %v271 = vld [vmem:[%s238 + $0x6c] sm:$0xf]
        %v272 = vld [vmem:[%s238 + $0x70] sm:$0xf]
        %v273 = vld [vmem:[%s238 + $0x74] sm:$0xf]
        %v274 = vld [vmem:[%s238 + $0x78] sm:$0xf]
        %v275 = vld [vmem:[%s238 + $0x7c] sm:$0xf]
        %v276 = vld [vmem:[%s1] sm:$0xff]
        %v277 = vld [vmem:[%s1 + $0x8] sm:$0xff]
        %v278 = vld [vmem:[%s1 + $0x10] sm:$0xff]
        %v279 = vld [vmem:[%s1 + $0x18] sm:$0xff]
        %v280 = vld [vmem:[%s1 + $0x20] sm:$0xff]
        %v281 = vld [vmem:[%s1 + $0x28] sm:$0xff]
        %v314 = vunpack.c.l.b16 %v244
        %v315 = vunpack.c.l.b16 %v245
        %v316 = vunpack.c.l.b16 %v246
        %v317 = vunpack.c.l.b16 %v247
        %v318 = vunpack.c.l.b16 %v248
        %v319 = vunpack.c.l.b16 %v249
        %v320 = vunpack.c.l.b16 %v250
        %v321 = vunpack.c.l.b16 %v251
        %v322 = vunpack.c.l.b16 %v252
        %v323 = vunpack.c.l.b16 %v253
        %v324 = vunpack.c.l.b16 %v254
        %v325 = vunpack.c.l.b16 %v255
        %v326 = vunpack.c.l.b16 %v256
        %v327 = vunpack.c.l.b16 %v257
        %v328 = vunpack.c.l.b16 %v258
        %v329 = vunpack.c.l.b16 %v259
        %v330 = vunpack.c.l.b16 %v260
        %v331 = vunpack.c.l.b16 %v261
        %v332 = vunpack.c.l.b16 %v262
        %v333 = vunpack.c.l.b16 %v263
        %v334 = vunpack.c.l.b16 %v264
        %v335 = vunpack.c.l.b16 %v265
        %v336 = vunpack.c.l.b16 %v266
        %v337 = vunpack.c.l.b16 %v267
        %v338 = vunpack.c.l.b16 %v268
        %v339 = vunpack.c.l.b16 %v269
        %v340 = vunpack.c.l.b16 %v270
        %v341 = vunpack.c.l.b16 %v271
        %v342 = vunpack.c.l.b16 %v272
        %v343 = vunpack.c.l.b16 %v273
        %v344 = vunpack.c.l.b16 %v274
        %v345 = vunpack.c.l.b16 %v275
        %v346 = vpack.c.b16 %v315, %v314
        %v347 = vpack.c.b16 %v317, %v316
        %v348 = vpack.c.b16 %v319, %v318
        %v349 = vpack.c.b16 %v321, %v320
        %v350 = vpack.c.b16 %v323, %v322
        %v351 = vpack.c.b16 %v325, %v324
        %v352 = vpack.c.b16 %v327, %v326
        %v353 = vpack.c.b16 %v329, %v328
        %v354 = vpack.c.b16 %v331, %v330
        %v355 = vpack.c.b16 %v333, %v332
        %v356 = vpack.c.b16 %v335, %v334
        %v357 = vpack.c.b16 %v337, %v336
        %v358 = vpack.c.b16 %v339, %v338
        %v359 = vpack.c.b16 %v341, %v340
        %v360 = vpack.c.b16 %v343, %v342
        %v361 = vpack.c.b16 %v345, %v344
        %v368 = vunpack.c.l.b16 %v276
        %v369 = vunpack.c.h.b16 %v276
        %v370 = vunpack.c.l.b16 %v277
        %v371 = vunpack.c.h.b16 %v277
        %v372 = vunpack.c.l.b16 %v278
        %v373 = vunpack.c.h.b16 %v278
        %v374 = vunpack.c.l.b16 %v279
        %v375 = vunpack.c.h.b16 %v279
        %v376 = vunpack.c.l.b16 %v280
        %v377 = vunpack.c.h.b16 %v280
        %v378 = vunpack.c.l.b16 %v281
        %v379 = vunpack.c.h.b16 %v281
        %v380 = vpack.c.b16 %v370, %v368
        %v381 = vpack.c.b16 %v371, %v369
        %v382 = vpack.c.b16 %v374, %v372
        %v383 = vpack.c.b16 %v375, %v373
        %v384 = vpack.c.b16 %v378, %v376
        %v385 = vpack.c.b16 %v379, %v377
        %vm392 = vcmask 392192
        %v394 = vsel %vm392, %v346, 0
        %v397 = vsel %vm392, %v347, 0
        %v400 = vsel %vm392, %v348, 0
        %v403 = vsel %vm392, %v349, 0
        %v406 = vsel %vm392, %v350, 0
        %v409 = vsel %vm392, %v351, 0
        %v412 = vsel %vm392, %v352, 0
        %v415 = vsel %vm392, %v353, 0
        %v418 = vsel %vm392, %v354, 0
        %v421 = vsel %vm392, %v355, 0
        %v424 = vsel %vm392, %v356, 0
        %v427 = vsel %vm392, %v357, 0
        %v430 = vsel %vm392, %v358, 0
        %v433 = vsel %vm392, %v359, 0
        %v436 = vsel %vm392, %v360, 0
        %v439 = vsel %vm392, %v361, 0
        %441 = vmatprep.subr.bf16.mxu0 0
        %442 = vmatpush1.bf16.msra.mxu0 0
        %443 = vmatprep.subr.bf16.mxu0 0
        %444 = vmatpush1.bf16.msra.mxu0 0
        %445 = vmatprep.subr.bf16.mxu0 0
        %446 = vmatpush1.bf16.msra.mxu0 0
        %447 = vmatprep.subr.bf16.mxu0 0
        %448 = vmatpush1.bf16.msra.mxu0 0
        %449 = vmatprep.subr.bf16.mxu0 0
        %450 = vmatpush1.bf16.msra.mxu0 0
        %451 = vmatprep.subr.bf16.mxu0 %v385
        %452 = vmatpush1.bf16.msra.mxu0 %v384
        %453 = vmatprep.subr.bf16.mxu0 %v383
        %454 = vmatpush1.bf16.msra.mxu0 %v382
        %455 = vmatprep.subr.bf16.mxu0 %v381
        %456 = vmatpush1.bf16.msra.mxu0 %v380
        %457 = vmatprep.subr.bf16.mxu0 0
        %458 = vmatpush2.bf16.msra.mxu0 0
        %459 = vmatprep.subr.bf16.mxu0 0
        %460 = vmatpush2.bf16.msra.mxu0 0
        %461 = vmatprep.subr.bf16.mxu0 0
        %462 = vmatpush2.bf16.msra.mxu0 0
        %463 = vmatprep.subr.bf16.mxu0 0
        %464 = vmatpush2.bf16.msra.mxu0 0
        %465 = vmatprep.subr.bf16.mxu0 0
        %466 = vmatpush2.bf16.msra.mxu0 0
        %467 = vmatprep.subr.bf16.mxu0 0
        %468 = vmatpush2.bf16.msra.mxu0 0
        %469 = vmatprep.subr.bf16.mxu0 0
        %470 = vmatpush2.bf16.msra.mxu0 0
        %471 = vmatprep.subr.bf16.mxu0 0
        %472 = vmatpush2.bf16.msra.mxu0 0
        %473 = vmatprep.mubr.bf16.mxu0 0
        %474 = vmatmul.mubr.bf16.gmra.mxu0 %v394
        %v475 = vpop.f32.mrf.mxu0
        %v476 = vadd.f32 0.0, %v475
        %v477 = vpop.f32.mrf.mxu0
        %v478 = vadd.f32 0.0, %v477
        %v479 = vpop.f32.mrf.mxu0
        %v480 = vadd.f32 0.0, %v479
        %v481 = vpop.f32.mrf.mxu0
        %v482 = vadd.f32 0.0, %v481
        %483 = vmatprep.mubr.bf16.mxu0 0
        %484 = vmatmul.mubr.bf16.gmra.mxu0 %v397
        %v485 = vpop.f32.mrf.mxu0
        %v486 = vadd.f32 0.0, %v485
        %v487 = vpop.f32.mrf.mxu0
        %v488 = vadd.f32 0.0, %v487
        %v489 = vpop.f32.mrf.mxu0
        %v490 = vadd.f32 0.0, %v489
        %v491 = vpop.f32.mrf.mxu0
        %v492 = vadd.f32 0.0, %v491
        %493 = vmatprep.mubr.bf16.mxu0 0
        %494 = vmatmul.mubr.bf16.gmra.mxu0 %v400
        %v495 = vpop.f32.mrf.mxu0
        %v496 = vadd.f32 0.0, %v495
        %v497 = vpop.f32.mrf.mxu0
        %v498 = vadd.f32 0.0, %v497
        %v499 = vpop.f32.mrf.mxu0
        %v500 = vadd.f32 0.0, %v499
        %v501 = vpop.f32.mrf.mxu0
        %v502 = vadd.f32 0.0, %v501
        %503 = vmatprep.mubr.bf16.mxu0 0
        %504 = vmatmul.mubr.bf16.gmra.mxu0 %v403
        %v505 = vpop.f32.mrf.mxu0
        %v506 = vadd.f32 0.0, %v505
        %v507 = vpop.f32.mrf.mxu0
        %v508 = vadd.f32 0.0, %v507
        %v509 = vpop.f32.mrf.mxu0
        %v510 = vadd.f32 0.0, %v509
        %v511 = vpop.f32.mrf.mxu0
        %v512 = vadd.f32 0.0, %v511
        %513 = vmatprep.mubr.bf16.mxu0 0
        %514 = vmatmul.mubr.bf16.gmra.mxu0 %v406
        %v515 = vpop.f32.mrf.mxu0
        %v516 = vadd.f32 0.0, %v515
        %v517 = vpop.f32.mrf.mxu0
        %v518 = vadd.f32 0.0, %v517
        %v519 = vpop.f32.mrf.mxu0
        %v520 = vadd.f32 0.0, %v519
        %v521 = vpop.f32.mrf.mxu0
        %v522 = vadd.f32 0.0, %v521
        %523 = vmatprep.mubr.bf16.mxu0 0
        %524 = vmatmul.mubr.bf16.gmra.mxu0 %v409
        %v525 = vpop.f32.mrf.mxu0
        %v526 = vadd.f32 0.0, %v525
        %v527 = vpop.f32.mrf.mxu0
        %v528 = vadd.f32 0.0, %v527
        %v529 = vpop.f32.mrf.mxu0
        %v530 = vadd.f32 0.0, %v529
        %v531 = vpop.f32.mrf.mxu0
        %v532 = vadd.f32 0.0, %v531
        %533 = vmatprep.mubr.bf16.mxu0 0
        %534 = vmatmul.mubr.bf16.gmra.mxu0 %v412
        %v535 = vpop.f32.mrf.mxu0
        %v536 = vadd.f32 0.0, %v535
        %v537 = vpop.f32.mrf.mxu0
        %v538 = vadd.f32 0.0, %v537
        %v539 = vpop.f32.mrf.mxu0
        %v540 = vadd.f32 0.0, %v539
        %v541 = vpop.f32.mrf.mxu0
        %v542 = vadd.f32 0.0, %v541
        %543 = vmatprep.mubr.bf16.mxu0 0
        %544 = vmatmul.mubr.bf16.gmra.mxu0 %v415
        %v545 = vpop.f32.mrf.mxu0
        %v546 = vadd.f32 0.0, %v545
        %v547 = vpop.f32.mrf.mxu0
        %v548 = vadd.f32 0.0, %v547
        %v549 = vpop.f32.mrf.mxu0
        %v550 = vadd.f32 0.0, %v549
        %v551 = vpop.f32.mrf.mxu0
        %v552 = vadd.f32 0.0, %v551
        %553 = vmatprep.mubr.bf16.mxu0 0
        %554 = vmatmul.mubr.bf16.gmra.mxu0 %v418
        %v555 = vpop.f32.mrf.mxu0
        %v556 = vadd.f32 0.0, %v555
        %v557 = vpop.f32.mrf.mxu0
        %v558 = vadd.f32 0.0, %v557
        %v559 = vpop.f32.mrf.mxu0
        %v560 = vadd.f32 0.0, %v559
        %v561 = vpop.f32.mrf.mxu0
        %v562 = vadd.f32 0.0, %v561
        %563 = vmatprep.mubr.bf16.mxu0 0
        %564 = vmatmul.mubr.bf16.gmra.mxu0 %v421
        %v565 = vpop.f32.mrf.mxu0
        %v566 = vadd.f32 0.0, %v565
        %v567 = vpop.f32.mrf.mxu0
        %v568 = vadd.f32 0.0, %v567
        %v569 = vpop.f32.mrf.mxu0
        %v570 = vadd.f32 0.0, %v569
        %v571 = vpop.f32.mrf.mxu0
        %v572 = vadd.f32 0.0, %v571
        %573 = vmatprep.mubr.bf16.mxu0 0
        %574 = vmatmul.mubr.bf16.gmra.mxu0 %v424
        %v575 = vpop.f32.mrf.mxu0
        %v576 = vadd.f32 0.0, %v575
        %v577 = vpop.f32.mrf.mxu0
        %v578 = vadd.f32 0.0, %v577
        %v579 = vpop.f32.mrf.mxu0
        %v580 = vadd.f32 0.0, %v579
        %v581 = vpop.f32.mrf.mxu0
        %v582 = vadd.f32 0.0, %v581
        %583 = vmatprep.mubr.bf16.mxu0 0
        %584 = vmatmul.mubr.bf16.gmra.mxu0 %v427
        %v585 = vpop.f32.mrf.mxu0
        %v586 = vadd.f32 0.0, %v585
        %v587 = vpop.f32.mrf.mxu0
        %v588 = vadd.f32 0.0, %v587
        %v589 = vpop.f32.mrf.mxu0
        %v590 = vadd.f32 0.0, %v589
        %v591 = vpop.f32.mrf.mxu0
        %v592 = vadd.f32 0.0, %v591
        %593 = vmatprep.mubr.bf16.mxu0 0
        %594 = vmatmul.mubr.bf16.gmra.mxu0 %v430
        %v595 = vpop.f32.mrf.mxu0
        %v596 = vadd.f32 0.0, %v595
        %v597 = vpop.f32.mrf.mxu0
        %v598 = vadd.f32 0.0, %v597
        %v599 = vpop.f32.mrf.mxu0
        %v600 = vadd.f32 0.0, %v599
        %v601 = vpop.f32.mrf.mxu0
        %v602 = vadd.f32 0.0, %v601
        %603 = vmatprep.mubr.bf16.mxu0 0
        %604 = vmatmul.mubr.bf16.gmra.mxu0 %v433
        %v605 = vpop.f32.mrf.mxu0
        %v606 = vadd.f32 0.0, %v605
        %v607 = vpop.f32.mrf.mxu0
        %v608 = vadd.f32 0.0, %v607
        %v609 = vpop.f32.mrf.mxu0
        %v610 = vadd.f32 0.0, %v609
        %v611 = vpop.f32.mrf.mxu0
        %v612 = vadd.f32 0.0, %v611
        %613 = vmatprep.mubr.bf16.mxu0 0
        %614 = vmatmul.mubr.bf16.gmra.mxu0 %v436
        %v615 = vpop.f32.mrf.mxu0
        %v616 = vadd.f32 0.0, %v615
        %v617 = vpop.f32.mrf.mxu0
        %v618 = vadd.f32 0.0, %v617
        %v619 = vpop.f32.mrf.mxu0
        %v620 = vadd.f32 0.0, %v619
        %v621 = vpop.f32.mrf.mxu0
        %v622 = vadd.f32 0.0, %v621
        %623 = vmatprep.mubr.bf16.mxu0 0
        %624 = vmatmul.mubr.bf16.gmra.mxu0 %v439
        %v625 = vpop.f32.mrf.mxu0
        %v626 = vadd.f32 0.0, %v625
        %v627 = vpop.f32.mrf.mxu0
        %v628 = vadd.f32 0.0, %v627
        %v629 = vpop.f32.mrf.mxu0
        %v630 = vadd.f32 0.0, %v629
        %v631 = vpop.f32.mrf.mxu0
        %v632 = vadd.f32 0.0, %v631
        %633 = vdwg.mxu0
        %v634 = vld [vmem:[%s4] sm:$0x1]
        %v635 = vlaneseq
        %v636 = vshrl.u32 %v635, 7
        %v637 = vsub.s32 0, %v636
        %v638 = vrot.slane %v634, %v637
        %v639 = vadd.f32 %v476, %v638
        %v640 = vadd.f32 %v480, %v638
        %v641 = vadd.f32 %v486, %v638
        %v642 = vadd.f32 %v490, %v638
        %v643 = vadd.f32 %v496, %v638
        %v644 = vadd.f32 %v500, %v638
        %v645 = vadd.f32 %v506, %v638
        %v646 = vadd.f32 %v510, %v638
        %v647 = vadd.f32 %v516, %v638
        %v648 = vadd.f32 %v520, %v638
        %v649 = vadd.f32 %v526, %v638
        %v650 = vadd.f32 %v530, %v638
        %v651 = vadd.f32 %v536, %v638
        %v652 = vadd.f32 %v540, %v638
        %v653 = vadd.f32 %v546, %v638
        %v654 = vadd.f32 %v550, %v638
        %v655 = vadd.f32 %v556, %v638
        %v656 = vadd.f32 %v560, %v638
        %v657 = vadd.f32 %v566, %v638
        %v658 = vadd.f32 %v570, %v638
        %v659 = vadd.f32 %v576, %v638
        %v660 = vadd.f32 %v580, %v638
        %v661 = vadd.f32 %v586, %v638
        %v662 = vadd.f32 %v590, %v638
        %v663 = vadd.f32 %v596, %v638
        %v664 = vadd.f32 %v600, %v638
        %v665 = vadd.f32 %v606, %v638
        %v666 = vadd.f32 %v610, %v638
        %v667 = vadd.f32 %v616, %v638
        %v668 = vadd.f32 %v620, %v638
        %v669 = vadd.f32 %v626, %v638
        %v670 = vadd.f32 %v630, %v638
        %v671 = vpack.c.bf16 %v640, %v639
        %v672 = vpack.c.bf16 %v642, %v641
        %v673 = vpack.c.bf16 %v644, %v643
        %v674 = vpack.c.bf16 %v646, %v645
        %v675 = vpack.c.bf16 %v648, %v647
        %v676 = vpack.c.bf16 %v650, %v649
        %v677 = vpack.c.bf16 %v652, %v651
        %v678 = vpack.c.bf16 %v654, %v653
        %v679 = vpack.c.bf16 %v656, %v655
        %v680 = vpack.c.bf16 %v658, %v657
        %v681 = vpack.c.bf16 %v660, %v659
        %v682 = vpack.c.bf16 %v662, %v661
        %v683 = vpack.c.bf16 %v664, %v663
        %v684 = vpack.c.bf16 %v666, %v665
        %v685 = vpack.c.bf16 %v668, %v667
        %v686 = vpack.c.bf16 %v670, %v669
        %v687 = vxor.u32 %v671, 2147516416
        %v688 = vxor.u32 %v672, 2147516416
        %v689 = vxor.u32 %v673, 2147516416
        %v690 = vxor.u32 %v674, 2147516416
        %v691 = vxor.u32 %v675, 2147516416
        %v692 = vxor.u32 %v676, 2147516416
        %v693 = vxor.u32 %v677, 2147516416
        %v694 = vxor.u32 %v678, 2147516416
        %v695 = vxor.u32 %v679, 2147516416
        %v696 = vxor.u32 %v680, 2147516416
        %v697 = vxor.u32 %v681, 2147516416
        %v698 = vxor.u32 %v682, 2147516416
        %v699 = vxor.u32 %v683, 2147516416
        %v700 = vxor.u32 %v684, 2147516416
        %v701 = vxor.u32 %v685, 2147516416
        %v702 = vxor.u32 %v686, 2147516416
        %v704 = vmul.bf16 %v687, 1069105081
        %v705 = vpow.bf16.pop %v704
        %v707 = vmul.bf16 %v688, 1069105081
        %v708 = vpow.bf16.pop %v707
        %v710 = vmul.bf16 %v689, 1069105081
        %v711 = vpow.bf16.pop %v710
        %v713 = vmul.bf16 %v690, 1069105081
        %v714 = vpow.bf16.pop %v713
        %v716 = vmul.bf16 %v691, 1069105081
        %v717 = vpow.bf16.pop %v716
        %v719 = vmul.bf16 %v692, 1069105081
        %v720 = vpow.bf16.pop %v719
        %v722 = vmul.bf16 %v693, 1069105081
        %v723 = vpow.bf16.pop %v722
        %v725 = vmul.bf16 %v694, 1069105081
        %v726 = vpow.bf16.pop %v725
        %v728 = vmul.bf16 %v695, 1069105081
        %v729 = vpow.bf16.pop %v728
        %v731 = vmul.bf16 %v696, 1069105081
        %v732 = vpow.bf16.pop %v731
        %v734 = vmul.bf16 %v697, 1069105081
        %v735 = vpow.bf16.pop %v734
        %v737 = vmul.bf16 %v698, 1069105081
        %v738 = vpow.bf16.pop %v737
        %v740 = vmul.bf16 %v699, 1069105081
        %v741 = vpow.bf16.pop %v740
        %v743 = vmul.bf16 %v700, 1069105081
        %v744 = vpow.bf16.pop %v743
        %v746 = vmul.bf16 %v701, 1069105081
        %v747 = vpow.bf16.pop %v746
        %v749 = vmul.bf16 %v702, 1069105081
        %v750 = vpow.bf16.pop %v749
        %v751 = vadd.bf16 %v705, 1065369472
        %v752 = vadd.bf16 %v708, 1065369472
        %v753 = vadd.bf16 %v711, 1065369472
        %v754 = vadd.bf16 %v714, 1065369472
        %v755 = vadd.bf16 %v717, 1065369472
        %v756 = vadd.bf16 %v720, 1065369472
        %v757 = vadd.bf16 %v723, 1065369472
        %v758 = vadd.bf16 %v726, 1065369472
        %v759 = vadd.bf16 %v729, 1065369472
        %v760 = vadd.bf16 %v732, 1065369472
        %v761 = vadd.bf16 %v735, 1065369472
        %v762 = vadd.bf16 %v738, 1065369472
        %v763 = vadd.bf16 %v741, 1065369472
        %v764 = vadd.bf16 %v744, 1065369472
        %v765 = vadd.bf16 %v747, 1065369472
        %v766 = vadd.bf16 %v750, 1065369472
        %v767 = vrcp.bf16.pop %v751
        %v768 = vmul.bf16 1065369472, %v767
        %v769 = vrcp.bf16.pop %v752
        %v770 = vmul.bf16 1065369472, %v769
        %v771 = vrcp.bf16.pop %v753
        %v772 = vmul.bf16 1065369472, %v771
        %v773 = vrcp.bf16.pop %v754
        %v774 = vmul.bf16 1065369472, %v773
        %v775 = vrcp.bf16.pop %v755
        %v776 = vmul.bf16 1065369472, %v775
        %v777 = vrcp.bf16.pop %v756
        %v778 = vmul.bf16 1065369472, %v777
        %v779 = vrcp.bf16.pop %v757
        %v780 = vmul.bf16 1065369472, %v779
        %v781 = vrcp.bf16.pop %v758
        %v782 = vmul.bf16 1065369472, %v781
        %v783 = vrcp.bf16.pop %v759
        %v784 = vmul.bf16 1065369472, %v783
        %v785 = vrcp.bf16.pop %v760
        %v786 = vmul.bf16 1065369472, %v785
        %v787 = vrcp.bf16.pop %v761
        %v788 = vmul.bf16 1065369472, %v787
        %v789 = vrcp.bf16.pop %v762
        %v790 = vmul.bf16 1065369472, %v789
        %v791 = vrcp.bf16.pop %v763
        %v792 = vmul.bf16 1065369472, %v791
        %v793 = vrcp.bf16.pop %v764
        %v794 = vmul.bf16 1065369472, %v793
        %v795 = vrcp.bf16.pop %v765
        %v796 = vmul.bf16 1065369472, %v795
        %v797 = vrcp.bf16.pop %v766
        %v798 = vmul.bf16 1065369472, %v797
        %v799 = vmul.bf16 %v671, %v768
        %v800 = vmul.bf16 %v672, %v770
        %v801 = vmul.bf16 %v673, %v772
        %v802 = vmul.bf16 %v674, %v774
        %v803 = vmul.bf16 %v675, %v776
        %v804 = vmul.bf16 %v676, %v778
        %v805 = vmul.bf16 %v677, %v780
        %v806 = vmul.bf16 %v678, %v782
        %v807 = vmul.bf16 %v679, %v784
        %v808 = vmul.bf16 %v680, %v786
        %v809 = vmul.bf16 %v681, %v788
        %v810 = vmul.bf16 %v682, %v790
        %v811 = vmul.bf16 %v683, %v792
        %v812 = vmul.bf16 %v684, %v794
        %v813 = vmul.bf16 %v685, %v796
        %v814 = vmul.bf16 %v686, %v798
        %v815 = vld [vmem:[%s4 + $0x1] sm:$0x1]
        %v816 = vlaneseq
        %v817 = vshrl.u32 %v816, 7
        %v818 = vsub.s32 0, %v817
        %v819 = vrot.slane %v815, %v818
        %v820 = vadd.f32 %v478, %v819
        %v821 = vadd.f32 %v482, %v819
        %v822 = vadd.f32 %v488, %v819
        %v823 = vadd.f32 %v492, %v819
        %v824 = vadd.f32 %v498, %v819
        %v825 = vadd.f32 %v502, %v819
        %v826 = vadd.f32 %v508, %v819
        %v827 = vadd.f32 %v512, %v819
        %v828 = vadd.f32 %v518, %v819
        %v829 = vadd.f32 %v522, %v819
        %v830 = vadd.f32 %v528, %v819
        %v831 = vadd.f32 %v532, %v819
        %v832 = vadd.f32 %v538, %v819
        %v833 = vadd.f32 %v542, %v819
        %v834 = vadd.f32 %v548, %v819
        %v835 = vadd.f32 %v552, %v819
        %v836 = vadd.f32 %v558, %v819
        %v837 = vadd.f32 %v562, %v819
        %v838 = vadd.f32 %v568, %v819
        %v839 = vadd.f32 %v572, %v819
        %v840 = vadd.f32 %v578, %v819
        %v841 = vadd.f32 %v582, %v819
        %v842 = vadd.f32 %v588, %v819
        %v843 = vadd.f32 %v592, %v819
        %v844 = vadd.f32 %v598, %v819
        %v845 = vadd.f32 %v602, %v819
        %v846 = vadd.f32 %v608, %v819
        %v847 = vadd.f32 %v612, %v819
        %v848 = vadd.f32 %v618, %v819
        %v849 = vadd.f32 %v622, %v819
        %v850 = vadd.f32 %v628, %v819
        %v851 = vadd.f32 %v632, %v819
        %v852 = vpack.c.bf16 %v821, %v820
        %v853 = vpack.c.bf16 %v823, %v822
        %v854 = vpack.c.bf16 %v825, %v824
        %v855 = vpack.c.bf16 %v827, %v826
        %v856 = vpack.c.bf16 %v829, %v828
        %v857 = vpack.c.bf16 %v831, %v830
        %v858 = vpack.c.bf16 %v833, %v832
        %v859 = vpack.c.bf16 %v835, %v834
        %v860 = vpack.c.bf16 %v837, %v836
        %v861 = vpack.c.bf16 %v839, %v838
        %v862 = vpack.c.bf16 %v841, %v840
        %v863 = vpack.c.bf16 %v843, %v842
        %v864 = vpack.c.bf16 %v845, %v844
        %v865 = vpack.c.bf16 %v847, %v846
        %v866 = vpack.c.bf16 %v849, %v848
        %v867 = vpack.c.bf16 %v851, %v850
        %v868 = vld [vmem:[#allocation2] sm:$0xf]
        %v869 = vld [vmem:[#allocation2 + $0x4] sm:$0xf]
        %v870 = vld [vmem:[#allocation2 + $0x8] sm:$0xf]
        %v871 = vld [vmem:[#allocation2 + $0xc] sm:$0xf]
        %v872 = vld [vmem:[#allocation2 + $0x10] sm:$0xf]
        %v873 = vld [vmem:[#allocation2 + $0x14] sm:$0xf]
        %v874 = vld [vmem:[#allocation2 + $0x18] sm:$0xf]
        %v875 = vld [vmem:[#allocation2 + $0x1c] sm:$0xf]
        %v876 = vld [vmem:[#allocation2 + $0x20] sm:$0xf]
        %v877 = vld [vmem:[#allocation2 + $0x24] sm:$0xf]
        %v878 = vld [vmem:[#allocation2 + $0x28] sm:$0xf]
        %v879 = vld [vmem:[#allocation2 + $0x2c] sm:$0xf]
        %v880 = vld [vmem:[#allocation2 + $0x30] sm:$0xf]
        %v881 = vld [vmem:[#allocation2 + $0x34] sm:$0xf]
        %v882 = vld [vmem:[#allocation2 + $0x38] sm:$0xf]
        %v883 = vld [vmem:[#allocation2 + $0x3c] sm:$0xf]
        %v884 = vld [vmem:[%s4 + $0x2] sm:$0x1]
        %v885 = vlaneseq
        %v886 = vshrl.u32 %v885, 7
        %v887 = vsub.s32 0, %v886
        %v888 = vrot.slane %v884, %v887
        %v905 = vunpack.c.l.b16 %v868
        %v906 = vunpack.c.l.b16 %v869
        %v907 = vunpack.c.l.b16 %v870
        %v908 = vunpack.c.l.b16 %v871
        %v909 = vunpack.c.l.b16 %v872
        %v910 = vunpack.c.l.b16 %v873
        %v911 = vunpack.c.l.b16 %v874
        %v912 = vunpack.c.l.b16 %v875
        %v913 = vunpack.c.l.b16 %v876
        %v914 = vunpack.c.l.b16 %v877
        %v915 = vunpack.c.l.b16 %v878
        %v916 = vunpack.c.l.b16 %v879
        %v917 = vunpack.c.l.b16 %v880
        %v918 = vunpack.c.l.b16 %v881
        %v919 = vunpack.c.l.b16 %v882
        %v920 = vunpack.c.l.b16 %v883
        %v921 = vpack.c.b16 %v906, %v905
        %v922 = vpack.c.b16 %v908, %v907
        %v923 = vpack.c.b16 %v910, %v909
        %v924 = vpack.c.b16 %v912, %v911
        %v925 = vpack.c.b16 %v914, %v913
        %v926 = vpack.c.b16 %v916, %v915
        %v927 = vpack.c.b16 %v918, %v917
        %v928 = vpack.c.b16 %v920, %v919
        %937 = vmatprep.subr.bf16.mxu0 0
        %938 = vmatpush1.bf16.msra.mxu0 %v928
        %939 = vmatprep.subr.bf16.mxu0 0
        %940 = vmatpush1.bf16.msra.mxu0 %v927
        %941 = vmatprep.subr.bf16.mxu0 0
        %942 = vmatpush1.bf16.msra.mxu0 %v926
        %943 = vmatprep.subr.bf16.mxu0 0
        %944 = vmatpush1.bf16.msra.mxu0 %v925
        %945 = vmatprep.subr.bf16.mxu0 0
        %946 = vmatpush1.bf16.msra.mxu0 %v924
        %947 = vmatprep.subr.bf16.mxu0 0
        %948 = vmatpush1.bf16.msra.mxu0 %v923
        %949 = vmatprep.subr.bf16.mxu0 0
        %950 = vmatpush1.bf16.msra.mxu0 %v922
        %951 = vmatprep.subr.bf16.mxu0 0
        %952 = vmatpush1.bf16.msra.mxu0 %v921
        %953 = vmatprep.subr.bf16.mxu0 0
        %954 = vmatpush2.bf16.msra.mxu0 0
        %955 = vmatprep.subr.bf16.mxu0 0
        %956 = vmatpush2.bf16.msra.mxu0 0
        %957 = vmatprep.subr.bf16.mxu0 0
        %958 = vmatpush2.bf16.msra.mxu0 0
        %959 = vmatprep.subr.bf16.mxu0 0
        %960 = vmatpush2.bf16.msra.mxu0 0
        %961 = vmatprep.subr.bf16.mxu0 0
        %962 = vmatpush2.bf16.msra.mxu0 0
        %963 = vmatprep.subr.bf16.mxu0 0
        %964 = vmatpush2.bf16.msra.mxu0 0
        %965 = vmatprep.subr.bf16.mxu0 0
        %966 = vmatpush2.bf16.msra.mxu0 0
        %967 = vmatprep.subr.bf16.mxu0 0
        %968 = vmatpush2.bf16.msra.mxu0 0
        %969 = vmatprep.mubr.bf16.mxu0 0
        %970 = vmatmul.mubr.bf16.gmra.mxu0 %v799
        %v971 = vpop.f32.mrf.mxu0
        %v972 = vadd.f32 %v888, %v971
        %v973 = vpop.f32.mrf.mxu0
        %v974 = vpop.f32.mrf.mxu0
        %v975 = vadd.f32 %v888, %v974
        %v976 = vpop.f32.mrf.mxu0
        %977 = vmatprep.mubr.bf16.mxu0 0
        %978 = vmatmul.mubr.bf16.gmra.mxu0 %v800
        %v979 = vpop.f32.mrf.mxu0
        %v980 = vadd.f32 %v888, %v979
        %v981 = vpop.f32.mrf.mxu0
        %v982 = vpop.f32.mrf.mxu0
        %v983 = vadd.f32 %v888, %v982
        %v984 = vpop.f32.mrf.mxu0
        %985 = vmatprep.mubr.bf16.mxu0 0
        %986 = vmatmul.mubr.bf16.gmra.mxu0 %v801
        %v987 = vpop.f32.mrf.mxu0
        %v988 = vadd.f32 %v888, %v987
        %v989 = vpop.f32.mrf.mxu0
        %v990 = vpop.f32.mrf.mxu0
        %v991 = vadd.f32 %v888, %v990
        %v992 = vpop.f32.mrf.mxu0
        %993 = vmatprep.mubr.bf16.mxu0 0
        %994 = vmatmul.mubr.bf16.gmra.mxu0 %v802
        %v995 = vpop.f32.mrf.mxu0
        %v996 = vadd.f32 %v888, %v995
        %v997 = vpop.f32.mrf.mxu0
        %v998 = vpop.f32.mrf.mxu0
        %v999 = vadd.f32 %v888, %v998
        %v1000 = vpop.f32.mrf.mxu0
        %1001 = vmatprep.mubr.bf16.mxu0 0
        %1002 = vmatmul.mubr.bf16.gmra.mxu0 %v803
        %v1003 = vpop.f32.mrf.mxu0
        %v1004 = vadd.f32 %v888, %v1003
        %v1005 = vpop.f32.mrf.mxu0
        %v1006 = vpop.f32.mrf.mxu0
        %v1007 = vadd.f32 %v888, %v1006
        %v1008 = vpop.f32.mrf.mxu0
        %1009 = vmatprep.mubr.bf16.mxu0 0
        %1010 = vmatmul.mubr.bf16.gmra.mxu0 %v804
        %v1011 = vpop.f32.mrf.mxu0
        %v1012 = vadd.f32 %v888, %v1011
        %v1013 = vpop.f32.mrf.mxu0
        %v1014 = vpop.f32.mrf.mxu0
        %v1015 = vadd.f32 %v888, %v1014
        %v1016 = vpop.f32.mrf.mxu0
        %1017 = vmatprep.mubr.bf16.mxu0 0
        %1018 = vmatmul.mubr.bf16.gmra.mxu0 %v805
        %v1019 = vpop.f32.mrf.mxu0
        %v1020 = vadd.f32 %v888, %v1019
        %v1021 = vpop.f32.mrf.mxu0
        %v1022 = vpop.f32.mrf.mxu0
        %v1023 = vadd.f32 %v888, %v1022
        %v1024 = vpop.f32.mrf.mxu0
        %1025 = vmatprep.mubr.bf16.mxu0 0
        %1026 = vmatmul.mubr.bf16.gmra.mxu0 %v806
        %v1027 = vpop.f32.mrf.mxu0
        %v1028 = vadd.f32 %v888, %v1027
        %v1029 = vpop.f32.mrf.mxu0
        %v1030 = vpop.f32.mrf.mxu0
        %v1031 = vadd.f32 %v888, %v1030
        %v1032 = vpop.f32.mrf.mxu0
        %1033 = vmatprep.mubr.bf16.mxu0 0
        %1034 = vmatmul.mubr.bf16.gmra.mxu0 %v807
        %v1035 = vpop.f32.mrf.mxu0
        %v1036 = vadd.f32 %v888, %v1035
        %v1037 = vpop.f32.mrf.mxu0
        %v1038 = vpop.f32.mrf.mxu0
        %v1039 = vadd.f32 %v888, %v1038
        %v1040 = vpop.f32.mrf.mxu0
        %1041 = vmatprep.mubr.bf16.mxu0 0
        %1042 = vmatmul.mubr.bf16.gmra.mxu0 %v808
        %v1043 = vpop.f32.mrf.mxu0
        %v1044 = vadd.f32 %v888, %v1043
        %v1045 = vpop.f32.mrf.mxu0
        %v1046 = vpop.f32.mrf.mxu0
        %v1047 = vadd.f32 %v888, %v1046
        %v1048 = vpop.f32.mrf.mxu0
        %1049 = vmatprep.mubr.bf16.mxu0 0
        %1050 = vmatmul.mubr.bf16.gmra.mxu0 %v809
        %v1051 = vpop.f32.mrf.mxu0
        %v1052 = vadd.f32 %v888, %v1051
        %v1053 = vpop.f32.mrf.mxu0
        %v1054 = vpop.f32.mrf.mxu0
        %v1055 = vadd.f32 %v888, %v1054
        %v1056 = vpop.f32.mrf.mxu0
        %1057 = vmatprep.mubr.bf16.mxu0 0
        %1058 = vmatmul.mubr.bf16.gmra.mxu0 %v810
        %v1059 = vpop.f32.mrf.mxu0
        %v1060 = vadd.f32 %v888, %v1059
        %v1061 = vpop.f32.mrf.mxu0
        %v1062 = vpop.f32.mrf.mxu0
        %v1063 = vadd.f32 %v888, %v1062
        %v1064 = vpop.f32.mrf.mxu0
        %1065 = vmatprep.mubr.bf16.mxu0 0
        %1066 = vmatmul.mubr.bf16.gmra.mxu0 %v811
        %v1067 = vpop.f32.mrf.mxu0
        %v1068 = vadd.f32 %v888, %v1067
        %v1069 = vpop.f32.mrf.mxu0
        %v1070 = vpop.f32.mrf.mxu0
        %v1071 = vadd.f32 %v888, %v1070
        %v1072 = vpop.f32.mrf.mxu0
        %1073 = vmatprep.mubr.bf16.mxu0 0
        %1074 = vmatmul.mubr.bf16.gmra.mxu0 %v812
        %v1075 = vpop.f32.mrf.mxu0
        %v1076 = vadd.f32 %v888, %v1075
        %v1077 = vpop.f32.mrf.mxu0
        %v1078 = vpop.f32.mrf.mxu0
        %v1079 = vadd.f32 %v888, %v1078
        %v1080 = vpop.f32.mrf.mxu0
        %1081 = vmatprep.mubr.bf16.mxu0 0
        %1082 = vmatmul.mubr.bf16.gmra.mxu0 %v813
        %v1083 = vpop.f32.mrf.mxu0
        %v1084 = vadd.f32 %v888, %v1083
        %v1085 = vpop.f32.mrf.mxu0
        %v1086 = vpop.f32.mrf.mxu0
        %v1087 = vadd.f32 %v888, %v1086
        %v1088 = vpop.f32.mrf.mxu0
        %1089 = vmatprep.mubr.bf16.mxu0 0
        %1090 = vmatmul.mubr.bf16.gmra.mxu0 %v814
        %v1091 = vpop.f32.mrf.mxu0
        %v1092 = vadd.f32 %v888, %v1091
        %v1093 = vpop.f32.mrf.mxu0
        %v1094 = vpop.f32.mrf.mxu0
        %v1095 = vadd.f32 %v888, %v1094
        %v1096 = vpop.f32.mrf.mxu0
        %1097 = vdwg.mxu0
        %v1098 = vpack.c.bf16 %v975, %v972
        %v1099 = vpack.c.bf16 %v983, %v980
        %v1100 = vpack.c.bf16 %v991, %v988
        %v1101 = vpack.c.bf16 %v999, %v996
        %v1102 = vpack.c.bf16 %v1007, %v1004
        %v1103 = vpack.c.bf16 %v1015, %v1012
        %v1104 = vpack.c.bf16 %v1023, %v1020
        %v1105 = vpack.c.bf16 %v1031, %v1028
        %v1106 = vpack.c.bf16 %v1039, %v1036
        %v1107 = vpack.c.bf16 %v1047, %v1044
        %v1108 = vpack.c.bf16 %v1055, %v1052
        %v1109 = vpack.c.bf16 %v1063, %v1060
        %v1110 = vpack.c.bf16 %v1071, %v1068
        %v1111 = vpack.c.bf16 %v1079, %v1076
        %v1112 = vpack.c.bf16 %v1087, %v1084
        %v1113 = vpack.c.bf16 %v1095, %v1092
        %v1114 = vmul.bf16 %v852, %v852
        %v1115 = vmul.bf16 %v853, %v853
        %v1116 = vmul.bf16 %v854, %v854
        %v1117 = vmul.bf16 %v855, %v855
        %v1118 = vmul.bf16 %v856, %v856
        %v1119 = vmul.bf16 %v857, %v857
        %v1120 = vmul.bf16 %v858, %v858
        %v1121 = vmul.bf16 %v859, %v859
        %v1122 = vmul.bf16 %v860, %v860
        %v1123 = vmul.bf16 %v861, %v861
        %v1124 = vmul.bf16 %v862, %v862
        %v1125 = vmul.bf16 %v863, %v863
        %v1126 = vmul.bf16 %v864, %v864
        %v1127 = vmul.bf16 %v865, %v865
        %v1128 = vmul.bf16 %v866, %v866
        %v1129 = vmul.bf16 %v867, %v867
        %v1130 = vld [vmem:[%s2] sm:$0xff]
        %v1131 = vld [vmem:[%s2 + $0x8] sm:$0xff]
        %v1132 = vld [vmem:[%s2 + $0x10] sm:$0xff]
        %v1133 = vld [vmem:[%s2 + $0x18] sm:$0xff]
        %v1134 = vld [vmem:[%s2 + $0x20] sm:$0xff]
        %v1135 = vld [vmem:[%s2 + $0x28] sm:$0xff]
        %v1136 = vld [vmem:[%s2 + $0x30] sm:$0xff]
        %v1137 = vld [vmem:[%s2 + $0x38] sm:$0xff]
        %v1138 = vld [vmem:[%s2 + $0x40] sm:$0xff]
        %v1139 = vld [vmem:[%s2 + $0x48] sm:$0xff]
        %v1140 = vld [vmem:[%s2 + $0x50] sm:$0xff]
        %v1141 = vld [vmem:[%s2 + $0x58] sm:$0xff]
        %v1142 = vld [vmem:[%s2 + $0x60] sm:$0xff]
        %v1143 = vld [vmem:[%s2 + $0x68] sm:$0xff]
        %v1144 = vld [vmem:[%s2 + $0x70] sm:$0xff]
        %v1145 = vld [vmem:[%s2 + $0x78] sm:$0xff]
        %v1146 = vld [vmem:[%s2 + $0x80] sm:$0xff]
        %v1147 = vld [vmem:[%s2 + $0x88] sm:$0xff]
        %v1148 = vld [vmem:[%s2 + $0x90] sm:$0xff]
        %v1149 = vld [vmem:[%s2 + $0x98] sm:$0xff]
        %v1150 = vld [vmem:[%s2 + $0xa0] sm:$0xff]
        %v1151 = vld [vmem:[%s2 + $0xa8] sm:$0xff]
        %v1152 = vld [vmem:[%s2 + $0xb0] sm:$0xff]
        %v1153 = vld [vmem:[%s2 + $0xb8] sm:$0xff]
        %v1154 = vld [vmem:[%s2 + $0xc0] sm:$0xff]
        %v1155 = vld [vmem:[%s2 + $0xc8] sm:$0xff]
        %v1156 = vld [vmem:[%s2 + $0xd0] sm:$0xff]
        %v1157 = vld [vmem:[%s2 + $0xd8] sm:$0xff]
        %v1158 = vld [vmem:[%s2 + $0xe0] sm:$0xff]
        %v1159 = vld [vmem:[%s2 + $0xe8] sm:$0xff]
        %v1160 = vld [vmem:[%s2 + $0xf0] sm:$0xff]
        %v1161 = vld [vmem:[%s2 + $0xf8] sm:$0xff]
        %v1194 = vunpack.c.l.b16 %v1130
        %v1195 = vunpack.c.h.b16 %v1130
        %v1196 = vunpack.c.l.b16 %v1131
        %v1197 = vunpack.c.h.b16 %v1131
        %v1198 = vunpack.c.l.b16 %v1132
        %v1199 = vunpack.c.h.b16 %v1132
        %v1200 = vunpack.c.l.b16 %v1133
        %v1201 = vunpack.c.h.b16 %v1133
        %v1202 = vunpack.c.l.b16 %v1134
        %v1203 = vunpack.c.h.b16 %v1134
        %v1204 = vunpack.c.l.b16 %v1135
        %v1205 = vunpack.c.h.b16 %v1135
        %v1206 = vunpack.c.l.b16 %v1136
        %v1207 = vunpack.c.h.b16 %v1136
        %v1208 = vunpack.c.l.b16 %v1137
        %v1209 = vunpack.c.h.b16 %v1137
        %v1210 = vunpack.c.l.b16 %v1138
        %v1211 = vunpack.c.h.b16 %v1138
        %v1212 = vunpack.c.l.b16 %v1139
        %v1213 = vunpack.c.h.b16 %v1139
        %v1214 = vunpack.c.l.b16 %v1140
        %v1215 = vunpack.c.h.b16 %v1140
        %v1216 = vunpack.c.l.b16 %v1141
        %v1217 = vunpack.c.h.b16 %v1141
        %v1218 = vunpack.c.l.b16 %v1142
        %v1219 = vunpack.c.h.b16 %v1142
        %v1220 = vunpack.c.l.b16 %v1143
        %v1221 = vunpack.c.h.b16 %v1143
        %v1222 = vunpack.c.l.b16 %v1144
        %v1223 = vunpack.c.h.b16 %v1144
        %v1224 = vunpack.c.l.b16 %v1145
        %v1225 = vunpack.c.h.b16 %v1145
        %v1226 = vunpack.c.l.b16 %v1146
        %v1227 = vunpack.c.h.b16 %v1146
        %v1228 = vunpack.c.l.b16 %v1147
        %v1229 = vunpack.c.h.b16 %v1147
        %v1230 = vunpack.c.l.b16 %v1148
        %v1231 = vunpack.c.h.b16 %v1148
        %v1232 = vunpack.c.l.b16 %v1149
        %v1233 = vunpack.c.h.b16 %v1149
        %v1234 = vunpack.c.l.b16 %v1150
        %v1235 = vunpack.c.h.b16 %v1150
        %v1236 = vunpack.c.l.b16 %v1151
        %v1237 = vunpack.c.h.b16 %v1151
        %v1238 = vunpack.c.l.b16 %v1152
        %v1239 = vunpack.c.h.b16 %v1152
        %v1240 = vunpack.c.l.b16 %v1153
        %v1241 = vunpack.c.h.b16 %v1153
        %v1242 = vunpack.c.l.b16 %v1154
        %v1243 = vunpack.c.h.b16 %v1154
        %v1244 = vunpack.c.l.b16 %v1155
        %v1245 = vunpack.c.h.b16 %v1155
        %v1246 = vunpack.c.l.b16 %v1156
        %v1247 = vunpack.c.h.b16 %v1156
        %v1248 = vunpack.c.l.b16 %v1157
        %v1249 = vunpack.c.h.b16 %v1157
        %v1250 = vunpack.c.l.b16 %v1158
        %v1251 = vunpack.c.h.b16 %v1158
        %v1252 = vunpack.c.l.b16 %v1159
        %v1253 = vunpack.c.h.b16 %v1159
        %v1254 = vunpack.c.l.b16 %v1160
        %v1255 = vunpack.c.h.b16 %v1160
        %v1256 = vunpack.c.l.b16 %v1161
        %v1257 = vunpack.c.h.b16 %v1161
        %v1258 = vpack.c.b16 %v1196, %v1194
        %v1259 = vpack.c.b16 %v1197, %v1195
        %v1260 = vpack.c.b16 %v1200, %v1198
        %v1261 = vpack.c.b16 %v1201, %v1199
        %v1262 = vpack.c.b16 %v1204, %v1202
        %v1263 = vpack.c.b16 %v1205, %v1203
        %v1264 = vpack.c.b16 %v1208, %v1206
        %v1265 = vpack.c.b16 %v1209, %v1207
        %v1266 = vpack.c.b16 %v1212, %v1210
        %v1267 = vpack.c.b16 %v1213, %v1211
        %v1268 = vpack.c.b16 %v1216, %v1214
        %v1269 = vpack.c.b16 %v1217, %v1215
        %v1270 = vpack.c.b16 %v1220, %v1218
        %v1271 = vpack.c.b16 %v1221, %v1219
        %v1272 = vpack.c.b16 %v1224, %v1222
        %v1273 = vpack.c.b16 %v1225, %v1223
        %v1274 = vpack.c.b16 %v1228, %v1226
        %v1275 = vpack.c.b16 %v1229, %v1227
        %v1276 = vpack.c.b16 %v1232, %v1230
        %v1277 = vpack.c.b16 %v1233, %v1231
        %v1278 = vpack.c.b16 %v1236, %v1234
        %v1279 = vpack.c.b16 %v1237, %v1235
        %v1280 = vpack.c.b16 %v1240, %v1238
        %v1281 = vpack.c.b16 %v1241, %v1239
        %v1282 = vpack.c.b16 %v1244, %v1242
        %v1283 = vpack.c.b16 %v1245, %v1243
        %v1284 = vpack.c.b16 %v1248, %v1246
        %v1285 = vpack.c.b16 %v1249, %v1247
        %v1286 = vpack.c.b16 %v1252, %v1250
        %v1287 = vpack.c.b16 %v1253, %v1251
        %v1288 = vpack.c.b16 %v1256, %v1254
        %v1289 = vpack.c.b16 %v1257, %v1255
        %1322 = vmatprep.subr.bf16.mxu0 %v1273
        %1323 = vmatpush1.bf16.msra.mxu0 %v1272
        %1324 = vmatprep.subr.bf16.mxu0 %v1271
        %1325 = vmatpush1.bf16.msra.mxu0 %v1270
        %1326 = vmatprep.subr.bf16.mxu0 %v1269
        %1327 = vmatpush1.bf16.msra.mxu0 %v1268
        %1328 = vmatprep.subr.bf16.mxu0 %v1267
        %1329 = vmatpush1.bf16.msra.mxu0 %v1266
        %1330 = vmatprep.subr.bf16.mxu0 %v1265
        %1331 = vmatpush1.bf16.msra.mxu0 %v1264
        %1332 = vmatprep.subr.bf16.mxu0 %v1263
        %1333 = vmatpush1.bf16.msra.mxu0 %v1262
        %1334 = vmatprep.subr.bf16.mxu0 %v1261
        %1335 = vmatpush1.bf16.msra.mxu0 %v1260
        %1336 = vmatprep.subr.bf16.mxu0 %v1259
        %1337 = vmatpush1.bf16.msra.mxu0 %v1258
        %1338 = vmatprep.subr.bf16.mxu0 %v1289
        %1339 = vmatpush2.bf16.msra.mxu0 %v1288
        %1340 = vmatprep.subr.bf16.mxu0 %v1287
        %1341 = vmatpush2.bf16.msra.mxu0 %v1286
        %1342 = vmatprep.subr.bf16.mxu0 %v1285
        %1343 = vmatpush2.bf16.msra.mxu0 %v1284
        %1344 = vmatprep.subr.bf16.mxu0 %v1283
        %1345 = vmatpush2.bf16.msra.mxu0 %v1282
        %1346 = vmatprep.subr.bf16.mxu0 %v1281
        %1347 = vmatpush2.bf16.msra.mxu0 %v1280
        %1348 = vmatprep.subr.bf16.mxu0 %v1279
        %1349 = vmatpush2.bf16.msra.mxu0 %v1278
        %1350 = vmatprep.subr.bf16.mxu0 %v1277
        %1351 = vmatpush2.bf16.msra.mxu0 %v1276
        %1352 = vmatprep.subr.bf16.mxu0 %v1275
        %1353 = vmatpush2.bf16.msra.mxu0 %v1274
        %1354 = vmatprep.mubr.bf16.mxu0 %v1114
        %1355 = vmatmul.mubr.bf16.gmra.mxu0 %v852
        %v1356 = vpop.f32.mrf.mxu0
        %v1357 = vadd.f32 0.0, %v1356
        %v1358 = vpop.f32.mrf.mxu0
        %v1359 = vadd.f32 0.0, %v1358
        %v1360 = vpop.f32.mrf.mxu0
        %v1361 = vadd.f32 0.0, %v1360
        %v1362 = vpop.f32.mrf.mxu0
        %v1363 = vadd.f32 0.0, %v1362
        %1364 = vmatprep.mubr.bf16.mxu0 %v1115
        %1365 = vmatmul.mubr.bf16.gmra.mxu0 %v853
        %v1366 = vpop.f32.mrf.mxu0
        %v1367 = vadd.f32 0.0, %v1366
        %v1368 = vpop.f32.mrf.mxu0
        %v1369 = vadd.f32 0.0, %v1368
        %v1370 = vpop.f32.mrf.mxu0
        %v1371 = vadd.f32 0.0, %v1370
        %v1372 = vpop.f32.mrf.mxu0
        %v1373 = vadd.f32 0.0, %v1372
        %1374 = vmatprep.mubr.bf16.mxu0 %v1116
        %1375 = vmatmul.mubr.bf16.gmra.mxu0 %v854
        %v1376 = vpop.f32.mrf.mxu0
        %v1377 = vadd.f32 0.0, %v1376
        %v1378 = vpop.f32.mrf.mxu0
        %v1379 = vadd.f32 0.0, %v1378
        %v1380 = vpop.f32.mrf.mxu0
        %v1381 = vadd.f32 0.0, %v1380
        %v1382 = vpop.f32.mrf.mxu0
        %v1383 = vadd.f32 0.0, %v1382
        %1384 = vmatprep.mubr.bf16.mxu0 %v1117
        %1385 = vmatmul.mubr.bf16.gmra.mxu0 %v855
        %v1386 = vpop.f32.mrf.mxu0
        %v1387 = vadd.f32 0.0, %v1386
        %v1388 = vpop.f32.mrf.mxu0
        %v1389 = vadd.f32 0.0, %v1388
        %v1390 = vpop.f32.mrf.mxu0
        %v1391 = vadd.f32 0.0, %v1390
        %v1392 = vpop.f32.mrf.mxu0
        %v1393 = vadd.f32 0.0, %v1392
        %1394 = vmatprep.mubr.bf16.mxu0 %v1118
        %1395 = vmatmul.mubr.bf16.gmra.mxu0 %v856
        %v1396 = vpop.f32.mrf.mxu0
        %v1397 = vadd.f32 0.0, %v1396
        %v1398 = vpop.f32.mrf.mxu0
        %v1399 = vadd.f32 0.0, %v1398
        %v1400 = vpop.f32.mrf.mxu0
        %v1401 = vadd.f32 0.0, %v1400
        %v1402 = vpop.f32.mrf.mxu0
        %v1403 = vadd.f32 0.0, %v1402
        %1404 = vmatprep.mubr.bf16.mxu0 %v1119
        %1405 = vmatmul.mubr.bf16.gmra.mxu0 %v857
        %v1406 = vpop.f32.mrf.mxu0
        %v1407 = vadd.f32 0.0, %v1406
        %v1408 = vpop.f32.mrf.mxu0
        %v1409 = vadd.f32 0.0, %v1408
        %v1410 = vpop.f32.mrf.mxu0
        %v1411 = vadd.f32 0.0, %v1410
        %v1412 = vpop.f32.mrf.mxu0
        %v1413 = vadd.f32 0.0, %v1412
        %1414 = vmatprep.mubr.bf16.mxu0 %v1120
        %1415 = vmatmul.mubr.bf16.gmra.mxu0 %v858
        %v1416 = vpop.f32.mrf.mxu0
        %v1417 = vadd.f32 0.0, %v1416
        %v1418 = vpop.f32.mrf.mxu0
        %v1419 = vadd.f32 0.0, %v1418
        %v1420 = vpop.f32.mrf.mxu0
        %v1421 = vadd.f32 0.0, %v1420
        %v1422 = vpop.f32.mrf.mxu0
        %v1423 = vadd.f32 0.0, %v1422
        %1424 = vmatprep.mubr.bf16.mxu0 %v1121
        %1425 = vmatmul.mubr.bf16.gmra.mxu0 %v859
        %v1426 = vpop.f32.mrf.mxu0
        %v1427 = vadd.f32 0.0, %v1426
        %v1428 = vpop.f32.mrf.mxu0
        %v1429 = vadd.f32 0.0, %v1428
        %v1430 = vpop.f32.mrf.mxu0
        %v1431 = vadd.f32 0.0, %v1430
        %v1432 = vpop.f32.mrf.mxu0
        %v1433 = vadd.f32 0.0, %v1432
        %1434 = vmatprep.mubr.bf16.mxu0 %v1122
        %1435 = vmatmul.mubr.bf16.gmra.mxu0 %v860
        %v1436 = vpop.f32.mrf.mxu0
        %v1437 = vadd.f32 0.0, %v1436
        %v1438 = vpop.f32.mrf.mxu0
        %v1439 = vadd.f32 0.0, %v1438
        %v1440 = vpop.f32.mrf.mxu0
        %v1441 = vadd.f32 0.0, %v1440
        %v1442 = vpop.f32.mrf.mxu0
        %v1443 = vadd.f32 0.0, %v1442
        %1444 = vmatprep.mubr.bf16.mxu0 %v1123
        %1445 = vmatmul.mubr.bf16.gmra.mxu0 %v861
        %v1446 = vpop.f32.mrf.mxu0
        %v1447 = vadd.f32 0.0, %v1446
        %v1448 = vpop.f32.mrf.mxu0
        %v1449 = vadd.f32 0.0, %v1448
        %v1450 = vpop.f32.mrf.mxu0
        %v1451 = vadd.f32 0.0, %v1450
        %v1452 = vpop.f32.mrf.mxu0
        %v1453 = vadd.f32 0.0, %v1452
        %1454 = vmatprep.mubr.bf16.mxu0 %v1124
        %1455 = vmatmul.mubr.bf16.gmra.mxu0 %v862
        %v1456 = vpop.f32.mrf.mxu0
        %v1457 = vadd.f32 0.0, %v1456
        %v1458 = vpop.f32.mrf.mxu0
        %v1459 = vadd.f32 0.0, %v1458
        %v1460 = vpop.f32.mrf.mxu0
        %v1461 = vadd.f32 0.0, %v1460
        %v1462 = vpop.f32.mrf.mxu0
        %v1463 = vadd.f32 0.0, %v1462
        %1464 = vmatprep.mubr.bf16.mxu0 %v1125
        %1465 = vmatmul.mubr.bf16.gmra.mxu0 %v863
        %v1466 = vpop.f32.mrf.mxu0
        %v1467 = vadd.f32 0.0, %v1466
        %v1468 = vpop.f32.mrf.mxu0
        %v1469 = vadd.f32 0.0, %v1468
        %v1470 = vpop.f32.mrf.mxu0
        %v1471 = vadd.f32 0.0, %v1470
        %v1472 = vpop.f32.mrf.mxu0
        %v1473 = vadd.f32 0.0, %v1472
        %1474 = vmatprep.mubr.bf16.mxu0 %v1126
        %1475 = vmatmul.mubr.bf16.gmra.mxu0 %v864
        %v1476 = vpop.f32.mrf.mxu0
        %v1477 = vadd.f32 0.0, %v1476
        %v1478 = vpop.f32.mrf.mxu0
        %v1479 = vadd.f32 0.0, %v1478
        %v1480 = vpop.f32.mrf.mxu0
        %v1481 = vadd.f32 0.0, %v1480
        %v1482 = vpop.f32.mrf.mxu0
        %v1483 = vadd.f32 0.0, %v1482
        %1484 = vmatprep.mubr.bf16.mxu0 %v1127
        %1485 = vmatmul.mubr.bf16.gmra.mxu0 %v865
        %v1486 = vpop.f32.mrf.mxu0
        %v1487 = vadd.f32 0.0, %v1486
        %v1488 = vpop.f32.mrf.mxu0
        %v1489 = vadd.f32 0.0, %v1488
        %v1490 = vpop.f32.mrf.mxu0
        %v1491 = vadd.f32 0.0, %v1490
        %v1492 = vpop.f32.mrf.mxu0
        %v1493 = vadd.f32 0.0, %v1492
        %1494 = vmatprep.mubr.bf16.mxu0 %v1128
        %1495 = vmatmul.mubr.bf16.gmra.mxu0 %v866
        %v1496 = vpop.f32.mrf.mxu0
        %v1497 = vadd.f32 0.0, %v1496
        %v1498 = vpop.f32.mrf.mxu0
        %v1499 = vadd.f32 0.0, %v1498
        %v1500 = vpop.f32.mrf.mxu0
        %v1501 = vadd.f32 0.0, %v1500
        %v1502 = vpop.f32.mrf.mxu0
        %v1503 = vadd.f32 0.0, %v1502
        %1504 = vmatprep.mubr.bf16.mxu0 %v1129
        %1505 = vmatmul.mubr.bf16.gmra.mxu0 %v867
        %v1506 = vpop.f32.mrf.mxu0
        %v1507 = vadd.f32 0.0, %v1506
        %v1508 = vpop.f32.mrf.mxu0
        %v1509 = vadd.f32 0.0, %v1508
        %v1510 = vpop.f32.mrf.mxu0
        %v1511 = vadd.f32 0.0, %v1510
        %v1512 = vpop.f32.mrf.mxu0
        %v1513 = vadd.f32 0.0, %v1512
        %1514 = vdwg.mxu0
        %v1515 = vmul.f32 %v1357, %v1357
        %v1516 = vmul.f32 %v1361, %v1361
        %v1517 = vmul.f32 %v1367, %v1367
        %v1518 = vmul.f32 %v1371, %v1371
        %v1519 = vmul.f32 %v1377, %v1377
        %v1520 = vmul.f32 %v1381, %v1381
        %v1521 = vmul.f32 %v1387, %v1387
        %v1522 = vmul.f32 %v1391, %v1391
        %v1523 = vmul.f32 %v1397, %v1397
        %v1524 = vmul.f32 %v1401, %v1401
        %v1525 = vmul.f32 %v1407, %v1407
        %v1526 = vmul.f32 %v1411, %v1411
        %v1527 = vmul.f32 %v1417, %v1417
        %v1528 = vmul.f32 %v1421, %v1421
        %v1529 = vmul.f32 %v1427, %v1427
        %v1530 = vmul.f32 %v1431, %v1431
        %v1531 = vmul.f32 %v1437, %v1437
        %v1532 = vmul.f32 %v1441, %v1441
        %v1533 = vmul.f32 %v1447, %v1447
        %v1534 = vmul.f32 %v1451, %v1451
        %v1535 = vmul.f32 %v1457, %v1457
        %v1536 = vmul.f32 %v1461, %v1461
        %v1537 = vmul.f32 %v1467, %v1467
        %v1538 = vmul.f32 %v1471, %v1471
        %v1539 = vmul.f32 %v1477, %v1477
        %v1540 = vmul.f32 %v1481, %v1481
        %v1541 = vmul.f32 %v1487, %v1487
        %v1542 = vmul.f32 %v1491, %v1491
        %v1543 = vmul.f32 %v1497, %v1497
        %v1544 = vmul.f32 %v1501, %v1501
        %v1545 = vmul.f32 %v1507, %v1507
        %v1546 = vmul.f32 %v1511, %v1511
        %v1547 = vsub.f32 %v1359, %v1515
        %v1548 = vsub.f32 %v1363, %v1516
        %v1549 = vsub.f32 %v1369, %v1517
        %v1550 = vsub.f32 %v1373, %v1518
        %v1551 = vsub.f32 %v1379, %v1519
        %v1552 = vsub.f32 %v1383, %v1520
        %v1553 = vsub.f32 %v1389, %v1521
        %v1554 = vsub.f32 %v1393, %v1522
        %v1555 = vsub.f32 %v1399, %v1523
        %v1556 = vsub.f32 %v1403, %v1524
        %v1557 = vsub.f32 %v1409, %v1525
        %v1558 = vsub.f32 %v1413, %v1526
        %v1559 = vsub.f32 %v1419, %v1527
        %v1560 = vsub.f32 %v1423, %v1528
        %v1561 = vsub.f32 %v1429, %v1529
        %v1562 = vsub.f32 %v1433, %v1530
        %v1563 = vsub.f32 %v1439, %v1531
        %v1564 = vsub.f32 %v1443, %v1532
        %v1565 = vsub.f32 %v1449, %v1533
        %v1566 = vsub.f32 %v1453, %v1534
        %v1567 = vsub.f32 %v1459, %v1535
        %v1568 = vsub.f32 %v1463, %v1536
        %v1569 = vsub.f32 %v1469, %v1537
        %v1570 = vsub.f32 %v1473, %v1538
        %v1571 = vsub.f32 %v1479, %v1539
        %v1572 = vsub.f32 %v1483, %v1540
        %v1573 = vsub.f32 %v1489, %v1541
        %v1574 = vsub.f32 %v1493, %v1542
        %v1575 = vsub.f32 %v1499, %v1543
        %v1576 = vsub.f32 %v1503, %v1544
        %v1577 = vsub.f32 %v1509, %v1545
        %v1578 = vsub.f32 %v1513, %v1546
        %v1579 = vmax.f32 %v1547, 0.0
        %v1580 = vmax.f32 %v1548, 0.0
        %v1581 = vmax.f32 %v1549, 0.0
        %v1582 = vmax.f32 %v1550, 0.0
        %v1583 = vmax.f32 %v1551, 0.0
        %v1584 = vmax.f32 %v1552, 0.0
        %v1585 = vmax.f32 %v1553, 0.0
        %v1586 = vmax.f32 %v1554, 0.0
        %v1587 = vmax.f32 %v1555, 0.0
        %v1588 = vmax.f32 %v1556, 0.0
        %v1589 = vmax.f32 %v1557, 0.0
        %v1590 = vmax.f32 %v1558, 0.0
        %v1591 = vmax.f32 %v1559, 0.0
        %v1592 = vmax.f32 %v1560, 0.0
        %v1593 = vmax.f32 %v1561, 0.0
        %v1594 = vmax.f32 %v1562, 0.0
        %v1595 = vmax.f32 %v1563, 0.0
        %v1596 = vmax.f32 %v1564, 0.0
        %v1597 = vmax.f32 %v1565, 0.0
        %v1598 = vmax.f32 %v1566, 0.0
        %v1599 = vmax.f32 %v1567, 0.0
        %v1600 = vmax.f32 %v1568, 0.0
        %v1601 = vmax.f32 %v1569, 0.0
        %v1602 = vmax.f32 %v1570, 0.0
        %v1603 = vmax.f32 %v1571, 0.0
        %v1604 = vmax.f32 %v1572, 0.0
        %v1605 = vmax.f32 %v1573, 0.0
        %v1606 = vmax.f32 %v1574, 0.0
        %v1607 = vmax.f32 %v1575, 0.0
        %v1608 = vmax.f32 %v1576, 0.0
        %v1609 = vmax.f32 %v1577, 0.0
        %v1610 = vmax.f32 %v1578, 0.0
        %v1611 = vld [vmem:[%s4 + $0x3] sm:$0x1]
        %v1612 = vadd.f32 %v1579, 1e-05
        %v1613 = vadd.f32 %v1580, 1e-05
        %v1614 = vadd.f32 %v1581, 1e-05
        %v1615 = vadd.f32 %v1582, 1e-05
        %v1616 = vadd.f32 %v1583, 1e-05
        %v1617 = vadd.f32 %v1584, 1e-05
        %v1618 = vadd.f32 %v1585, 1e-05
        %v1619 = vadd.f32 %v1586, 1e-05
        %v1620 = vadd.f32 %v1587, 1e-05
        %v1621 = vadd.f32 %v1588, 1e-05
        %v1622 = vadd.f32 %v1589, 1e-05
        %v1623 = vadd.f32 %v1590, 1e-05
        %v1624 = vadd.f32 %v1591, 1e-05
        %v1625 = vadd.f32 %v1592, 1e-05
        %v1626 = vadd.f32 %v1593, 1e-05
        %v1627 = vadd.f32 %v1594, 1e-05
        %v1628 = vadd.f32 %v1595, 1e-05
        %v1629 = vadd.f32 %v1596, 1e-05
        %v1630 = vadd.f32 %v1597, 1e-05
        %v1631 = vadd.f32 %v1598, 1e-05
        %v1632 = vadd.f32 %v1599, 1e-05
        %v1633 = vadd.f32 %v1600, 1e-05
        %v1634 = vadd.f32 %v1601, 1e-05
        %v1635 = vadd.f32 %v1602, 1e-05
        %v1636 = vadd.f32 %v1603, 1e-05
        %v1637 = vadd.f32 %v1604, 1e-05
        %v1638 = vadd.f32 %v1605, 1e-05
        %v1639 = vadd.f32 %v1606, 1e-05
        %v1640 = vadd.f32 %v1607, 1e-05
        %v1641 = vadd.f32 %v1608, 1e-05
        %v1642 = vadd.f32 %v1609, 1e-05
        %v1643 = vadd.f32 %v1610, 1e-05
        %v1644 = vrsqrt.pop %v1612
        %v1645 = vrsqrt.pop %v1613
        %v1646 = vrsqrt.pop %v1614
        %v1647 = vrsqrt.pop %v1615
        %v1648 = vrsqrt.pop %v1616
        %v1649 = vrsqrt.pop %v1617
        %v1650 = vrsqrt.pop %v1618
        %v1651 = vrsqrt.pop %v1619
        %v1652 = vrsqrt.pop %v1620
        %v1653 = vrsqrt.pop %v1621
        %v1654 = vrsqrt.pop %v1622
        %v1655 = vrsqrt.pop %v1623
        %v1656 = vrsqrt.pop %v1624
        %v1657 = vrsqrt.pop %v1625
        %v1658 = vrsqrt.pop %v1626
        %v1659 = vrsqrt.pop %v1627
        %v1660 = vrsqrt.pop %v1628
        %v1661 = vrsqrt.pop %v1629
        %v1662 = vrsqrt.pop %v1630
        %v1663 = vrsqrt.pop %v1631
        %v1664 = vrsqrt.pop %v1632
        %v1665 = vrsqrt.pop %v1633
        %v1666 = vrsqrt.pop %v1634
        %v1667 = vrsqrt.pop %v1635
        %v1668 = vrsqrt.pop %v1636
        %v1669 = vrsqrt.pop %v1637
        %v1670 = vrsqrt.pop %v1638
        %v1671 = vrsqrt.pop %v1639
        %v1672 = vrsqrt.pop %v1640
        %v1673 = vrsqrt.pop %v1641
        %v1674 = vrsqrt.pop %v1642
        %v1675 = vrsqrt.pop %v1643
        %v1676 = vlaneseq
        %v1677 = vshrl.u32 %v1676, 7
        %v1678 = vsub.s32 0, %v1677
        %v1679 = vrot.slane %v1611, %v1678
        %v1680 = vmul.f32 %v1679, %v1644
        %v1681 = vmul.f32 %v1679, %v1645
        %v1682 = vmul.f32 %v1679, %v1646
        %v1683 = vmul.f32 %v1679, %v1647
        %v1684 = vmul.f32 %v1679, %v1648
        %v1685 = vmul.f32 %v1679, %v1649
        %v1686 = vmul.f32 %v1679, %v1650
        %v1687 = vmul.f32 %v1679, %v1651
        %v1688 = vmul.f32 %v1679, %v1652
        %v1689 = vmul.f32 %v1679, %v1653
        %v1690 = vmul.f32 %v1679, %v1654
        %v1691 = vmul.f32 %v1679, %v1655
        %v1692 = vmul.f32 %v1679, %v1656
        %v1693 = vmul.f32 %v1679, %v1657
        %v1694 = vmul.f32 %v1679, %v1658
        %v1695 = vmul.f32 %v1679, %v1659
        %v1696 = vmul.f32 %v1679, %v1660
        %v1697 = vmul.f32 %v1679, %v1661
        %v1698 = vmul.f32 %v1679, %v1662
        %v1699 = vmul.f32 %v1679, %v1663
        %v1700 = vmul.f32 %v1679, %v1664
        %v1701 = vmul.f32 %v1679, %v1665
        %v1702 = vmul.f32 %v1679, %v1666
        %v1703 = vmul.f32 %v1679, %v1667
        %v1704 = vmul.f32 %v1679, %v1668
        %v1705 = vmul.f32 %v1679, %v1669
        %v1706 = vmul.f32 %v1679, %v1670
        %v1707 = vmul.f32 %v1679, %v1671
        %v1708 = vmul.f32 %v1679, %v1672
        %v1709 = vmul.f32 %v1679, %v1673
        %v1710 = vmul.f32 %v1679, %v1674
        %v1711 = vmul.f32 %v1679, %v1675
        %v1712 = vld [vmem:[%s4 + $0x4] sm:$0x1]
        %v1713 = vmul.f32 %v1357, %v1680
        %v1714 = vmul.f32 %v1361, %v1681
        %v1715 = vmul.f32 %v1367, %v1682
        %v1716 = vmul.f32 %v1371, %v1683
        %v1717 = vmul.f32 %v1377, %v1684
        %v1718 = vmul.f32 %v1381, %v1685
        %v1719 = vmul.f32 %v1387, %v1686
        %v1720 = vmul.f32 %v1391, %v1687
        %v1721 = vmul.f32 %v1397, %v1688
        %v1722 = vmul.f32 %v1401, %v1689
        %v1723 = vmul.f32 %v1407, %v1690
        %v1724 = vmul.f32 %v1411, %v1691
        %v1725 = vmul.f32 %v1417, %v1692
        %v1726 = vmul.f32 %v1421, %v1693
        %v1727 = vmul.f32 %v1427, %v1694
        %v1728 = vmul.f32 %v1431, %v1695
        %v1729 = vmul.f32 %v1437, %v1696
        %v1730 = vmul.f32 %v1441, %v1697
        %v1731 = vmul.f32 %v1447, %v1698
        %v1732 = vmul.f32 %v1451, %v1699
        %v1733 = vmul.f32 %v1457, %v1700
        %v1734 = vmul.f32 %v1461, %v1701
        %v1735 = vmul.f32 %v1467, %v1702
        %v1736 = vmul.f32 %v1471, %v1703
        %v1737 = vmul.f32 %v1477, %v1704
        %v1738 = vmul.f32 %v1481, %v1705
        %v1739 = vmul.f32 %v1487, %v1706
        %v1740 = vmul.f32 %v1491, %v1707
        %v1741 = vmul.f32 %v1497, %v1708
        %v1742 = vmul.f32 %v1501, %v1709
        %v1743 = vmul.f32 %v1507, %v1710
        %v1744 = vmul.f32 %v1511, %v1711
        %v1745 = vlaneseq
        %v1746 = vshrl.u32 %v1745, 7
        %v1747 = vsub.s32 0, %v1746
        %v1748 = vrot.slane %v1712, %v1747
        %v1749 = vsub.f32 %v1748, %v1713
        %v1750 = vsub.f32 %v1748, %v1714
        %v1751 = vsub.f32 %v1748, %v1715
        %v1752 = vsub.f32 %v1748, %v1716
        %v1753 = vsub.f32 %v1748, %v1717
        %v1754 = vsub.f32 %v1748, %v1718
        %v1755 = vsub.f32 %v1748, %v1719
        %v1756 = vsub.f32 %v1748, %v1720
        %v1757 = vsub.f32 %v1748, %v1721
        %v1758 = vsub.f32 %v1748, %v1722
        %v1759 = vsub.f32 %v1748, %v1723
        %v1760 = vsub.f32 %v1748, %v1724
        %v1761 = vsub.f32 %v1748, %v1725
        %v1762 = vsub.f32 %v1748, %v1726
        %v1763 = vsub.f32 %v1748, %v1727
        %v1764 = vsub.f32 %v1748, %v1728
        %v1765 = vsub.f32 %v1748, %v1729
        %v1766 = vsub.f32 %v1748, %v1730
        %v1767 = vsub.f32 %v1748, %v1731
        %v1768 = vsub.f32 %v1748, %v1732
        %v1769 = vsub.f32 %v1748, %v1733
        %v1770 = vsub.f32 %v1748, %v1734
        %v1771 = vsub.f32 %v1748, %v1735
        %v1772 = vsub.f32 %v1748, %v1736
        %v1773 = vsub.f32 %v1748, %v1737
        %v1774 = vsub.f32 %v1748, %v1738
        %v1775 = vsub.f32 %v1748, %v1739
        %v1776 = vsub.f32 %v1748, %v1740
        %v1777 = vsub.f32 %v1748, %v1741
        %v1778 = vsub.f32 %v1748, %v1742
        %v1779 = vsub.f32 %v1748, %v1743
        %v1780 = vsub.f32 %v1748, %v1744
        %v1781 = vunpack.c.l.bf16 %v852
        %v1782 = vunpack.c.h.bf16 %v852
        %v1783 = vunpack.c.l.bf16 %v853
        %v1784 = vunpack.c.h.bf16 %v853
        %v1785 = vunpack.c.l.bf16 %v854
        %v1786 = vunpack.c.h.bf16 %v854
        %v1787 = vunpack.c.l.bf16 %v855
        %v1788 = vunpack.c.h.bf16 %v855
        %v1789 = vunpack.c.l.bf16 %v856
        %v1790 = vunpack.c.h.bf16 %v856
        %v1791 = vunpack.c.l.bf16 %v857
        %v1792 = vunpack.c.h.bf16 %v857
        %v1793 = vunpack.c.l.bf16 %v858
        %v1794 = vunpack.c.h.bf16 %v858
        %v1795 = vunpack.c.l.bf16 %v859
        %v1796 = vunpack.c.h.bf16 %v859
        %v1797 = vunpack.c.l.bf16 %v860
        %v1798 = vunpack.c.h.bf16 %v860
        %v1799 = vunpack.c.l.bf16 %v861
        %v1800 = vunpack.c.h.bf16 %v861
        %v1801 = vunpack.c.l.bf16 %v862
        %v1802 = vunpack.c.h.bf16 %v862
        %v1803 = vunpack.c.l.bf16 %v863
        %v1804 = vunpack.c.h.bf16 %v863
        %v1805 = vunpack.c.l.bf16 %v864
        %v1806 = vunpack.c.h.bf16 %v864
        %v1807 = vunpack.c.l.bf16 %v865
        %v1808 = vunpack.c.h.bf16 %v865
        %v1809 = vunpack.c.l.bf16 %v866
        %v1810 = vunpack.c.h.bf16 %v866
        %v1811 = vunpack.c.l.bf16 %v867
        %v1812 = vunpack.c.h.bf16 %v867
        %v1813 = vmul.f32 %v1781, %v1680
        %v1814 = vmul.f32 %v1782, %v1681
        %v1815 = vmul.f32 %v1783, %v1682
        %v1816 = vmul.f32 %v1784, %v1683
        %v1817 = vmul.f32 %v1785, %v1684
        %v1818 = vmul.f32 %v1786, %v1685
        %v1819 = vmul.f32 %v1787, %v1686
        %v1820 = vmul.f32 %v1788, %v1687
        %v1821 = vmul.f32 %v1789, %v1688
        %v1822 = vmul.f32 %v1790, %v1689
        %v1823 = vmul.f32 %v1791, %v1690
        %v1824 = vmul.f32 %v1792, %v1691
        %v1825 = vmul.f32 %v1793, %v1692
        %v1826 = vmul.f32 %v1794, %v1693
        %v1827 = vmul.f32 %v1795, %v1694
        %v1828 = vmul.f32 %v1796, %v1695
        %v1829 = vmul.f32 %v1797, %v1696
        %v1830 = vmul.f32 %v1798, %v1697
        %v1831 = vmul.f32 %v1799, %v1698
        %v1832 = vmul.f32 %v1800, %v1699
        %v1833 = vmul.f32 %v1801, %v1700
        %v1834 = vmul.f32 %v1802, %v1701
        %v1835 = vmul.f32 %v1803, %v1702
        %v1836 = vmul.f32 %v1804, %v1703
        %v1837 = vmul.f32 %v1805, %v1704
        %v1838 = vmul.f32 %v1806, %v1705
        %v1839 = vmul.f32 %v1807, %v1706
        %v1840 = vmul.f32 %v1808, %v1707
        %v1841 = vmul.f32 %v1809, %v1708
        %v1842 = vmul.f32 %v1810, %v1709
        %v1843 = vmul.f32 %v1811, %v1710
        %v1844 = vmul.f32 %v1812, %v1711
        %v1845 = vadd.f32 %v1813, %v1749
        %v1846 = vadd.f32 %v1814, %v1750
        %v1847 = vadd.f32 %v1815, %v1751
        %v1848 = vadd.f32 %v1816, %v1752
        %v1849 = vadd.f32 %v1817, %v1753
        %v1850 = vadd.f32 %v1818, %v1754
        %v1851 = vadd.f32 %v1819, %v1755
        %v1852 = vadd.f32 %v1820, %v1756
        %v1853 = vadd.f32 %v1821, %v1757
        %v1854 = vadd.f32 %v1822, %v1758
        %v1855 = vadd.f32 %v1823, %v1759
        %v1856 = vadd.f32 %v1824, %v1760
        %v1857 = vadd.f32 %v1825, %v1761
        %v1858 = vadd.f32 %v1826, %v1762
        %v1859 = vadd.f32 %v1827, %v1763
        %v1860 = vadd.f32 %v1828, %v1764
        %v1861 = vadd.f32 %v1829, %v1765
        %v1862 = vadd.f32 %v1830, %v1766
        %v1863 = vadd.f32 %v1831, %v1767
        %v1864 = vadd.f32 %v1832, %v1768
        %v1865 = vadd.f32 %v1833, %v1769
        %v1866 = vadd.f32 %v1834, %v1770
        %v1867 = vadd.f32 %v1835, %v1771
        %v1868 = vadd.f32 %v1836, %v1772
        %v1869 = vadd.f32 %v1837, %v1773
        %v1870 = vadd.f32 %v1838, %v1774
        %v1871 = vadd.f32 %v1839, %v1775
        %v1872 = vadd.f32 %v1840, %v1776
        %v1873 = vadd.f32 %v1841, %v1777
        %v1874 = vadd.f32 %v1842, %v1778
        %v1875 = vadd.f32 %v1843, %v1779
        %v1876 = vadd.f32 %v1844, %v1780
        %v1877 = vpack.c.bf16 %v1846, %v1845
        %v1878 = vpack.c.bf16 %v1848, %v1847
        %v1879 = vpack.c.bf16 %v1850, %v1849
        %v1880 = vpack.c.bf16 %v1852, %v1851
        %v1881 = vpack.c.bf16 %v1854, %v1853
        %v1882 = vpack.c.bf16 %v1856, %v1855
        %v1883 = vpack.c.bf16 %v1858, %v1857
        %v1884 = vpack.c.bf16 %v1860, %v1859
        %v1885 = vpack.c.bf16 %v1862, %v1861
        %v1886 = vpack.c.bf16 %v1864, %v1863
        %v1887 = vpack.c.bf16 %v1866, %v1865
        %v1888 = vpack.c.bf16 %v1868, %v1867
        %v1889 = vpack.c.bf16 %v1870, %v1869
        %v1890 = vpack.c.bf16 %v1872, %v1871
        %v1891 = vpack.c.bf16 %v1874, %v1873
        %v1892 = vpack.c.bf16 %v1876, %v1875
        %s1893 = scalar_lea.vmem [#allocation2], 64
        %v1894 = vld [vmem:[%s1893] sm:$0xf]
        %v1895 = vld [vmem:[%s1893 + $0x4] sm:$0xf]
        %v1896 = vld [vmem:[%s1893 + $0x8] sm:$0xf]
        %v1897 = vld [vmem:[%s1893 + $0xc] sm:$0xf]
        %v1898 = vld [vmem:[%s1893 + $0x10] sm:$0xf]
        %v1899 = vld [vmem:[%s1893 + $0x14] sm:$0xf]
        %v1900 = vld [vmem:[%s1893 + $0x18] sm:$0xf]
        %v1901 = vld [vmem:[%s1893 + $0x1c] sm:$0xf]
        %v1902 = vld [vmem:[%s1893 + $0x20] sm:$0xf]
        %v1903 = vld [vmem:[%s1893 + $0x24] sm:$0xf]
        %v1904 = vld [vmem:[%s1893 + $0x28] sm:$0xf]
        %v1905 = vld [vmem:[%s1893 + $0x2c] sm:$0xf]
        %v1906 = vld [vmem:[%s1893 + $0x30] sm:$0xf]
        %v1907 = vld [vmem:[%s1893 + $0x34] sm:$0xf]
        %v1908 = vld [vmem:[%s1893 + $0x38] sm:$0xf]
        %v1909 = vld [vmem:[%s1893 + $0x3c] sm:$0xf]
        %v1910 = vld [vmem:[%s4 + $0x5] sm:$0x1]
        %v1911 = vlaneseq
        %v1912 = vshrl.u32 %v1911, 7
        %v1913 = vsub.s32 0, %v1912
        %v1914 = vrot.slane %v1910, %v1913
        %v1931 = vunpack.c.l.b16 %v1894
        %v1932 = vunpack.c.l.b16 %v1895
        %v1933 = vunpack.c.l.b16 %v1896
        %v1934 = vunpack.c.l.b16 %v1897
        %v1935 = vunpack.c.l.b16 %v1898
        %v1936 = vunpack.c.l.b16 %v1899
        %v1937 = vunpack.c.l.b16 %v1900
        %v1938 = vunpack.c.l.b16 %v1901
        %v1939 = vunpack.c.l.b16 %v1902
        %v1940 = vunpack.c.l.b16 %v1903
        %v1941 = vunpack.c.l.b16 %v1904
        %v1942 = vunpack.c.l.b16 %v1905
        %v1943 = vunpack.c.l.b16 %v1906
        %v1944 = vunpack.c.l.b16 %v1907
        %v1945 = vunpack.c.l.b16 %v1908
        %v1946 = vunpack.c.l.b16 %v1909
        %v1947 = vpack.c.b16 %v1932, %v1931
        %v1948 = vpack.c.b16 %v1934, %v1933
        %v1949 = vpack.c.b16 %v1936, %v1935
        %v1950 = vpack.c.b16 %v1938, %v1937
        %v1951 = vpack.c.b16 %v1940, %v1939
        %v1952 = vpack.c.b16 %v1942, %v1941
        %v1953 = vpack.c.b16 %v1944, %v1943
        %v1954 = vpack.c.b16 %v1946, %v1945
        %1963 = vmatprep.subr.bf16.mxu0 0
        %1964 = vmatpush1.bf16.msra.mxu0 %v1954
        %1965 = vmatprep.subr.bf16.mxu0 0
        %1966 = vmatpush1.bf16.msra.mxu0 %v1953
        %1967 = vmatprep.subr.bf16.mxu0 0
        %1968 = vmatpush1.bf16.msra.mxu0 %v1952
        %1969 = vmatprep.subr.bf16.mxu0 0
        %1970 = vmatpush1.bf16.msra.mxu0 %v1951
        %1971 = vmatprep.subr.bf16.mxu0 0
        %1972 = vmatpush1.bf16.msra.mxu0 %v1950
        %1973 = vmatprep.subr.bf16.mxu0 0
        %1974 = vmatpush1.bf16.msra.mxu0 %v1949
        %1975 = vmatprep.subr.bf16.mxu0 0
        %1976 = vmatpush1.bf16.msra.mxu0 %v1948
        %1977 = vmatprep.subr.bf16.mxu0 0
        %1978 = vmatpush1.bf16.msra.mxu0 %v1947
        %1979 = vmatprep.subr.bf16.mxu0 0
        %1980 = vmatpush2.bf16.msra.mxu0 0
        %1981 = vmatprep.subr.bf16.mxu0 0
        %1982 = vmatpush2.bf16.msra.mxu0 0
        %1983 = vmatprep.subr.bf16.mxu0 0
        %1984 = vmatpush2.bf16.msra.mxu0 0
        %1985 = vmatprep.subr.bf16.mxu0 0
        %1986 = vmatpush2.bf16.msra.mxu0 0
        %1987 = vmatprep.subr.bf16.mxu0 0
        %1988 = vmatpush2.bf16.msra.mxu0 0
        %1989 = vmatprep.subr.bf16.mxu0 0
        %1990 = vmatpush2.bf16.msra.mxu0 0
        %1991 = vmatprep.subr.bf16.mxu0 0
        %1992 = vmatpush2.bf16.msra.mxu0 0
        %1993 = vmatprep.subr.bf16.mxu0 0
        %1994 = vmatpush2.bf16.msra.mxu0 0
        %1995 = vmatprep.mubr.bf16.mxu0 0
        %1996 = vmatmul.mubr.bf16.gmra.mxu0 %v1877
        %v1997 = vpop.f32.mrf.mxu0
        %v1998 = vadd.f32 %v1914, %v1997
        %v1999 = vpop.f32.mrf.mxu0
        %v2000 = vpop.f32.mrf.mxu0
        %v2001 = vadd.f32 %v1914, %v2000
        %v2002 = vpop.f32.mrf.mxu0
        %2003 = vmatprep.mubr.bf16.mxu0 0
        %2004 = vmatmul.mubr.bf16.gmra.mxu0 %v1878
        %v2005 = vpop.f32.mrf.mxu0
        %v2006 = vadd.f32 %v1914, %v2005
        %v2007 = vpop.f32.mrf.mxu0
        %v2008 = vpop.f32.mrf.mxu0
        %v2009 = vadd.f32 %v1914, %v2008
        %v2010 = vpop.f32.mrf.mxu0
        %2011 = vmatprep.mubr.bf16.mxu0 0
        %2012 = vmatmul.mubr.bf16.gmra.mxu0 %v1879
        %v2013 = vpop.f32.mrf.mxu0
        %v2014 = vadd.f32 %v1914, %v2013
        %v2015 = vpop.f32.mrf.mxu0
        %v2016 = vpop.f32.mrf.mxu0
        %v2017 = vadd.f32 %v1914, %v2016
        %v2018 = vpop.f32.mrf.mxu0
        %2019 = vmatprep.mubr.bf16.mxu0 0
        %2020 = vmatmul.mubr.bf16.gmra.mxu0 %v1880
        %v2021 = vpop.f32.mrf.mxu0
        %v2022 = vadd.f32 %v1914, %v2021
        %v2023 = vpop.f32.mrf.mxu0
        %v2024 = vpop.f32.mrf.mxu0
        %v2025 = vadd.f32 %v1914, %v2024
        %v2026 = vpop.f32.mrf.mxu0
        %2027 = vmatprep.mubr.bf16.mxu0 0
        %2028 = vmatmul.mubr.bf16.gmra.mxu0 %v1881
        %v2029 = vpop.f32.mrf.mxu0
        %v2030 = vadd.f32 %v1914, %v2029
        %v2031 = vpop.f32.mrf.mxu0
        %v2032 = vpop.f32.mrf.mxu0
        %v2033 = vadd.f32 %v1914, %v2032
        %v2034 = vpop.f32.mrf.mxu0
        %2035 = vmatprep.mubr.bf16.mxu0 0
        %2036 = vmatmul.mubr.bf16.gmra.mxu0 %v1882
        %v2037 = vpop.f32.mrf.mxu0
        %v2038 = vadd.f32 %v1914, %v2037
        %v2039 = vpop.f32.mrf.mxu0
        %v2040 = vpop.f32.mrf.mxu0
        %v2041 = vadd.f32 %v1914, %v2040
        %v2042 = vpop.f32.mrf.mxu0
        %2043 = vmatprep.mubr.bf16.mxu0 0
        %2044 = vmatmul.mubr.bf16.gmra.mxu0 %v1883
        %v2045 = vpop.f32.mrf.mxu0
        %v2046 = vadd.f32 %v1914, %v2045
        %v2047 = vpop.f32.mrf.mxu0
        %v2048 = vpop.f32.mrf.mxu0
        %v2049 = vadd.f32 %v1914, %v2048
        %v2050 = vpop.f32.mrf.mxu0
        %2051 = vmatprep.mubr.bf16.mxu0 0
        %2052 = vmatmul.mubr.bf16.gmra.mxu0 %v1884
        %v2053 = vpop.f32.mrf.mxu0
        %v2054 = vadd.f32 %v1914, %v2053
        %v2055 = vpop.f32.mrf.mxu0
        %v2056 = vpop.f32.mrf.mxu0
        %v2057 = vadd.f32 %v1914, %v2056
        %v2058 = vpop.f32.mrf.mxu0
        %2059 = vmatprep.mubr.bf16.mxu0 0
        %2060 = vmatmul.mubr.bf16.gmra.mxu0 %v1885
        %v2061 = vpop.f32.mrf.mxu0
        %v2062 = vadd.f32 %v1914, %v2061
        %v2063 = vpop.f32.mrf.mxu0
        %v2064 = vpop.f32.mrf.mxu0
        %v2065 = vadd.f32 %v1914, %v2064
        %v2066 = vpop.f32.mrf.mxu0
        %2067 = vmatprep.mubr.bf16.mxu0 0
        %2068 = vmatmul.mubr.bf16.gmra.mxu0 %v1886
        %v2069 = vpop.f32.mrf.mxu0
        %v2070 = vadd.f32 %v1914, %v2069
        %v2071 = vpop.f32.mrf.mxu0
        %v2072 = vpop.f32.mrf.mxu0
        %v2073 = vadd.f32 %v1914, %v2072
        %v2074 = vpop.f32.mrf.mxu0
        %2075 = vmatprep.mubr.bf16.mxu0 0
        %2076 = vmatmul.mubr.bf16.gmra.mxu0 %v1887
        %v2077 = vpop.f32.mrf.mxu0
        %v2078 = vadd.f32 %v1914, %v2077
        %v2079 = vpop.f32.mrf.mxu0
        %v2080 = vpop.f32.mrf.mxu0
        %v2081 = vadd.f32 %v1914, %v2080
        %v2082 = vpop.f32.mrf.mxu0
        %2083 = vmatprep.mubr.bf16.mxu0 0
        %2084 = vmatmul.mubr.bf16.gmra.mxu0 %v1888
        %v2085 = vpop.f32.mrf.mxu0
        %v2086 = vadd.f32 %v1914, %v2085
        %v2087 = vpop.f32.mrf.mxu0
        %v2088 = vpop.f32.mrf.mxu0
        %v2089 = vadd.f32 %v1914, %v2088
        %v2090 = vpop.f32.mrf.mxu0
        %2091 = vmatprep.mubr.bf16.mxu0 0
        %2092 = vmatmul.mubr.bf16.gmra.mxu0 %v1889
        %v2093 = vpop.f32.mrf.mxu0
        %v2094 = vadd.f32 %v1914, %v2093
        %v2095 = vpop.f32.mrf.mxu0
        %v2096 = vpop.f32.mrf.mxu0
        %v2097 = vadd.f32 %v1914, %v2096
        %v2098 = vpop.f32.mrf.mxu0
        %2099 = vmatprep.mubr.bf16.mxu0 0
        %2100 = vmatmul.mubr.bf16.gmra.mxu0 %v1890
        %v2101 = vpop.f32.mrf.mxu0
        %v2102 = vadd.f32 %v1914, %v2101
        %v2103 = vpop.f32.mrf.mxu0
        %v2104 = vpop.f32.mrf.mxu0
        %v2105 = vadd.f32 %v1914, %v2104
        %v2106 = vpop.f32.mrf.mxu0
        %2107 = vmatprep.mubr.bf16.mxu0 0
        %2108 = vmatmul.mubr.bf16.gmra.mxu0 %v1891
        %v2109 = vpop.f32.mrf.mxu0
        %v2110 = vadd.f32 %v1914, %v2109
        %v2111 = vpop.f32.mrf.mxu0
        %v2112 = vpop.f32.mrf.mxu0
        %v2113 = vadd.f32 %v1914, %v2112
        %v2114 = vpop.f32.mrf.mxu0
        %2115 = vmatprep.mubr.bf16.mxu0 0
        %2116 = vmatmul.mubr.bf16.gmra.mxu0 %v1892
        %v2117 = vpop.f32.mrf.mxu0
        %v2118 = vadd.f32 %v1914, %v2117
        %v2119 = vpop.f32.mrf.mxu0
        %v2120 = vpop.f32.mrf.mxu0
        %v2121 = vadd.f32 %v1914, %v2120
        %v2122 = vpop.f32.mrf.mxu0
        %2123 = vdwg.mxu0
        %v2124 = vpack.c.bf16 %v2001, %v1998
        %v2125 = vpack.c.bf16 %v2009, %v2006
        %v2126 = vpack.c.bf16 %v2017, %v2014
        %v2127 = vpack.c.bf16 %v2025, %v2022
        %v2128 = vpack.c.bf16 %v2033, %v2030
        %v2129 = vpack.c.bf16 %v2041, %v2038
        %v2130 = vpack.c.bf16 %v2049, %v2046
        %v2131 = vpack.c.bf16 %v2057, %v2054
        %v2132 = vpack.c.bf16 %v2065, %v2062
        %v2133 = vpack.c.bf16 %v2073, %v2070
        %v2134 = vpack.c.bf16 %v2081, %v2078
        %v2135 = vpack.c.bf16 %v2089, %v2086
        %v2136 = vpack.c.bf16 %v2097, %v2094
        %v2137 = vpack.c.bf16 %v2105, %v2102
        %v2138 = vpack.c.bf16 %v2113, %v2110
        %v2139 = vpack.c.bf16 %v2121, %v2118
        %v2140 = vxor.u32 %v2124, 2147516416
        %v2141 = vxor.u32 %v2125, 2147516416
        %v2142 = vxor.u32 %v2126, 2147516416
        %v2143 = vxor.u32 %v2127, 2147516416
        %v2144 = vxor.u32 %v2128, 2147516416
        %v2145 = vxor.u32 %v2129, 2147516416
        %v2146 = vxor.u32 %v2130, 2147516416
        %v2147 = vxor.u32 %v2131, 2147516416
        %v2148 = vxor.u32 %v2132, 2147516416
        %v2149 = vxor.u32 %v2133, 2147516416
        %v2150 = vxor.u32 %v2134, 2147516416
        %v2151 = vxor.u32 %v2135, 2147516416
        %v2152 = vxor.u32 %v2136, 2147516416
        %v2153 = vxor.u32 %v2137, 2147516416
        %v2154 = vxor.u32 %v2138, 2147516416
        %v2155 = vxor.u32 %v2139, 2147516416
        %v2157 = vmul.bf16 %v2140, 1069105081
        %v2158 = vpow.bf16.pop %v2157
        %v2160 = vmul.bf16 %v2141, 1069105081
        %v2161 = vpow.bf16.pop %v2160
        %v2163 = vmul.bf16 %v2142, 1069105081
        %v2164 = vpow.bf16.pop %v2163
        %v2166 = vmul.bf16 %v2143, 1069105081
        %v2167 = vpow.bf16.pop %v2166
        %v2169 = vmul.bf16 %v2144, 1069105081
        %v2170 = vpow.bf16.pop %v2169
        %v2172 = vmul.bf16 %v2145, 1069105081
        %v2173 = vpow.bf16.pop %v2172
        %v2175 = vmul.bf16 %v2146, 1069105081
        %v2176 = vpow.bf16.pop %v2175
        %v2178 = vmul.bf16 %v2147, 1069105081
        %v2179 = vpow.bf16.pop %v2178
        %v2181 = vmul.bf16 %v2148, 1069105081
        %v2182 = vpow.bf16.pop %v2181
        %v2184 = vmul.bf16 %v2149, 1069105081
        %v2185 = vpow.bf16.pop %v2184
        %v2187 = vmul.bf16 %v2150, 1069105081
        %v2188 = vpow.bf16.pop %v2187
        %v2190 = vmul.bf16 %v2151, 1069105081
        %v2191 = vpow.bf16.pop %v2190
        %v2193 = vmul.bf16 %v2152, 1069105081
        %v2194 = vpow.bf16.pop %v2193
        %v2196 = vmul.bf16 %v2153, 1069105081
        %v2197 = vpow.bf16.pop %v2196
        %v2199 = vmul.bf16 %v2154, 1069105081
        %v2200 = vpow.bf16.pop %v2199
        %v2202 = vmul.bf16 %v2155, 1069105081
        %v2203 = vpow.bf16.pop %v2202
        %v2204 = vadd.bf16 %v2158, 1065369472
        %v2205 = vadd.bf16 %v2161, 1065369472
        %v2206 = vadd.bf16 %v2164, 1065369472
        %v2207 = vadd.bf16 %v2167, 1065369472
        %v2208 = vadd.bf16 %v2170, 1065369472
        %v2209 = vadd.bf16 %v2173, 1065369472
        %v2210 = vadd.bf16 %v2176, 1065369472
        %v2211 = vadd.bf16 %v2179, 1065369472
        %v2212 = vadd.bf16 %v2182, 1065369472
        %v2213 = vadd.bf16 %v2185, 1065369472
        %v2214 = vadd.bf16 %v2188, 1065369472
        %v2215 = vadd.bf16 %v2191, 1065369472
        %v2216 = vadd.bf16 %v2194, 1065369472
        %v2217 = vadd.bf16 %v2197, 1065369472
        %v2218 = vadd.bf16 %v2200, 1065369472
        %v2219 = vadd.bf16 %v2203, 1065369472
        %v2220 = vrcp.bf16.pop %v2204
        %v2221 = vmul.bf16 1065369472, %v2220
        %v2222 = vrcp.bf16.pop %v2205
        %v2223 = vmul.bf16 1065369472, %v2222
        %v2224 = vrcp.bf16.pop %v2206
        %v2225 = vmul.bf16 1065369472, %v2224
        %v2226 = vrcp.bf16.pop %v2207
        %v2227 = vmul.bf16 1065369472, %v2226
        %v2228 = vrcp.bf16.pop %v2208
        %v2229 = vmul.bf16 1065369472, %v2228
        %v2230 = vrcp.bf16.pop %v2209
        %v2231 = vmul.bf16 1065369472, %v2230
        %v2232 = vrcp.bf16.pop %v2210
        %v2233 = vmul.bf16 1065369472, %v2232
        %v2234 = vrcp.bf16.pop %v2211
        %v2235 = vmul.bf16 1065369472, %v2234
        %v2236 = vrcp.bf16.pop %v2212
        %v2237 = vmul.bf16 1065369472, %v2236
        %v2238 = vrcp.bf16.pop %v2213
        %v2239 = vmul.bf16 1065369472, %v2238
        %v2240 = vrcp.bf16.pop %v2214
        %v2241 = vmul.bf16 1065369472, %v2240
        %v2242 = vrcp.bf16.pop %v2215
        %v2243 = vmul.bf16 1065369472, %v2242
        %v2244 = vrcp.bf16.pop %v2216
        %v2245 = vmul.bf16 1065369472, %v2244
        %v2246 = vrcp.bf16.pop %v2217
        %v2247 = vmul.bf16 1065369472, %v2246
        %v2248 = vrcp.bf16.pop %v2218
        %v2249 = vmul.bf16 1065369472, %v2248
        %v2250 = vrcp.bf16.pop %v2219
        %v2251 = vmul.bf16 1065369472, %v2250
        %v2252 = vmul.bf16 %v2124, %v2221
        %v2253 = vmul.bf16 %v2125, %v2223
        %v2254 = vmul.bf16 %v2126, %v2225
        %v2255 = vmul.bf16 %v2127, %v2227
        %v2256 = vmul.bf16 %v2128, %v2229
        %v2257 = vmul.bf16 %v2129, %v2231
        %v2258 = vmul.bf16 %v2130, %v2233
        %v2259 = vmul.bf16 %v2131, %v2235
        %v2260 = vmul.bf16 %v2132, %v2237
        %v2261 = vmul.bf16 %v2133, %v2239
        %v2262 = vmul.bf16 %v2134, %v2241
        %v2263 = vmul.bf16 %v2135, %v2243
        %v2264 = vmul.bf16 %v2136, %v2245
        %v2265 = vmul.bf16 %v2137, %v2247
        %v2266 = vmul.bf16 %v2138, %v2249
        %v2267 = vmul.bf16 %v2139, %v2251
        %s2268 = scalar_lea.vmem [#allocation2], 128
        %v2269 = vld [vmem:[%s2268] sm:$0xf]
        %v2270 = vld [vmem:[%s2268 + $0x4] sm:$0xf]
        %v2271 = vld [vmem:[%s2268 + $0x8] sm:$0xf]
        %v2272 = vld [vmem:[%s2268 + $0xc] sm:$0xf]
        %v2273 = vld [vmem:[%s2268 + $0x10] sm:$0xf]
        %v2274 = vld [vmem:[%s2268 + $0x14] sm:$0xf]
        %v2275 = vld [vmem:[%s2268 + $0x18] sm:$0xf]
        %v2276 = vld [vmem:[%s2268 + $0x1c] sm:$0xf]
        %v2277 = vld [vmem:[%s2268 + $0x20] sm:$0xf]
        %v2278 = vld [vmem:[%s2268 + $0x24] sm:$0xf]
        %v2279 = vld [vmem:[%s2268 + $0x28] sm:$0xf]
        %v2280 = vld [vmem:[%s2268 + $0x2c] sm:$0xf]
        %v2281 = vld [vmem:[%s2268 + $0x30] sm:$0xf]
        %v2282 = vld [vmem:[%s2268 + $0x34] sm:$0xf]
        %v2283 = vld [vmem:[%s2268 + $0x38] sm:$0xf]
        %v2284 = vld [vmem:[%s2268 + $0x3c] sm:$0xf]
        %v2285 = vld [vmem:[%s4 + $0x6] sm:$0x1]
        %v2286 = vlaneseq
        %v2287 = vshrl.u32 %v2286, 7
        %v2288 = vsub.s32 0, %v2287
        %v2289 = vrot.slane %v2285, %v2288
        %v2306 = vunpack.c.l.b16 %v2269
        %v2307 = vunpack.c.l.b16 %v2270
        %v2308 = vunpack.c.l.b16 %v2271
        %v2309 = vunpack.c.l.b16 %v2272
        %v2310 = vunpack.c.l.b16 %v2273
        %v2311 = vunpack.c.l.b16 %v2274
        %v2312 = vunpack.c.l.b16 %v2275
        %v2313 = vunpack.c.l.b16 %v2276
        %v2314 = vunpack.c.l.b16 %v2277
        %v2315 = vunpack.c.l.b16 %v2278
        %v2316 = vunpack.c.l.b16 %v2279
        %v2317 = vunpack.c.l.b16 %v2280
        %v2318 = vunpack.c.l.b16 %v2281
        %v2319 = vunpack.c.l.b16 %v2282
        %v2320 = vunpack.c.l.b16 %v2283
        %v2321 = vunpack.c.l.b16 %v2284
        %v2322 = vpack.c.b16 %v2307, %v2306
        %v2323 = vpack.c.b16 %v2309, %v2308
        %v2324 = vpack.c.b16 %v2311, %v2310
        %v2325 = vpack.c.b16 %v2313, %v2312
        %v2326 = vpack.c.b16 %v2315, %v2314
        %v2327 = vpack.c.b16 %v2317, %v2316
        %v2328 = vpack.c.b16 %v2319, %v2318
        %v2329 = vpack.c.b16 %v2321, %v2320
        %2338 = vmatprep.subr.bf16.mxu0 0
        %2339 = vmatpush1.bf16.msra.mxu0 %v2329
        %2340 = vmatprep.subr.bf16.mxu0 0
        %2341 = vmatpush1.bf16.msra.mxu0 %v2328
        %2342 = vmatprep.subr.bf16.mxu0 0
        %2343 = vmatpush1.bf16.msra.mxu0 %v2327
        %2344 = vmatprep.subr.bf16.mxu0 0
        %2345 = vmatpush1.bf16.msra.mxu0 %v2326
        %2346 = vmatprep.subr.bf16.mxu0 0
        %2347 = vmatpush1.bf16.msra.mxu0 %v2325
        %2348 = vmatprep.subr.bf16.mxu0 0
        %2349 = vmatpush1.bf16.msra.mxu0 %v2324
        %2350 = vmatprep.subr.bf16.mxu0 0
        %2351 = vmatpush1.bf16.msra.mxu0 %v2323
        %2352 = vmatprep.subr.bf16.mxu0 0
        %2353 = vmatpush1.bf16.msra.mxu0 %v2322
        %2354 = vmatprep.subr.bf16.mxu0 0
        %2355 = vmatpush2.bf16.msra.mxu0 0
        %2356 = vmatprep.subr.bf16.mxu0 0
        %2357 = vmatpush2.bf16.msra.mxu0 0
        %2358 = vmatprep.subr.bf16.mxu0 0
        %2359 = vmatpush2.bf16.msra.mxu0 0
        %2360 = vmatprep.subr.bf16.mxu0 0
        %2361 = vmatpush2.bf16.msra.mxu0 0
        %2362 = vmatprep.subr.bf16.mxu0 0
        %2363 = vmatpush2.bf16.msra.mxu0 0
        %2364 = vmatprep.subr.bf16.mxu0 0
        %2365 = vmatpush2.bf16.msra.mxu0 0
        %2366 = vmatprep.subr.bf16.mxu0 0
        %2367 = vmatpush2.bf16.msra.mxu0 0
        %2368 = vmatprep.subr.bf16.mxu0 0
        %2369 = vmatpush2.bf16.msra.mxu0 0
        %2370 = vmatprep.mubr.bf16.mxu0 0
        %2371 = vmatmul.mubr.bf16.gmra.mxu0 %v2252
        %v2372 = vpop.f32.mrf.mxu0
        %v2373 = vadd.f32 %v2289, %v2372
        %v2374 = vpop.f32.mrf.mxu0
        %v2375 = vpop.f32.mrf.mxu0
        %v2376 = vadd.f32 %v2289, %v2375
        %v2377 = vpop.f32.mrf.mxu0
        %2378 = vmatprep.mubr.bf16.mxu0 0
        %2379 = vmatmul.mubr.bf16.gmra.mxu0 %v2253
        %v2380 = vpop.f32.mrf.mxu0
        %v2381 = vadd.f32 %v2289, %v2380
        %v2382 = vpop.f32.mrf.mxu0
        %v2383 = vpop.f32.mrf.mxu0
        %v2384 = vadd.f32 %v2289, %v2383
        %v2385 = vpop.f32.mrf.mxu0
        %2386 = vmatprep.mubr.bf16.mxu0 0
        %2387 = vmatmul.mubr.bf16.gmra.mxu0 %v2254
        %v2388 = vpop.f32.mrf.mxu0
        %v2389 = vadd.f32 %v2289, %v2388
        %v2390 = vpop.f32.mrf.mxu0
        %v2391 = vpop.f32.mrf.mxu0
        %v2392 = vadd.f32 %v2289, %v2391
        %v2393 = vpop.f32.mrf.mxu0
        %2394 = vmatprep.mubr.bf16.mxu0 0
        %2395 = vmatmul.mubr.bf16.gmra.mxu0 %v2255
        %v2396 = vpop.f32.mrf.mxu0
        %v2397 = vadd.f32 %v2289, %v2396
        %v2398 = vpop.f32.mrf.mxu0
        %v2399 = vpop.f32.mrf.mxu0
        %v2400 = vadd.f32 %v2289, %v2399
        %v2401 = vpop.f32.mrf.mxu0
        %2402 = vmatprep.mubr.bf16.mxu0 0
        %2403 = vmatmul.mubr.bf16.gmra.mxu0 %v2256
        %v2404 = vpop.f32.mrf.mxu0
        %v2405 = vadd.f32 %v2289, %v2404
        %v2406 = vpop.f32.mrf.mxu0
        %v2407 = vpop.f32.mrf.mxu0
        %v2408 = vadd.f32 %v2289, %v2407
        %v2409 = vpop.f32.mrf.mxu0
        %2410 = vmatprep.mubr.bf16.mxu0 0
        %2411 = vmatmul.mubr.bf16.gmra.mxu0 %v2257
        %v2412 = vpop.f32.mrf.mxu0
        %v2413 = vadd.f32 %v2289, %v2412
        %v2414 = vpop.f32.mrf.mxu0
        %v2415 = vpop.f32.mrf.mxu0
        %v2416 = vadd.f32 %v2289, %v2415
        %v2417 = vpop.f32.mrf.mxu0
        %2418 = vmatprep.mubr.bf16.mxu0 0
        %2419 = vmatmul.mubr.bf16.gmra.mxu0 %v2258
        %v2420 = vpop.f32.mrf.mxu0
        %v2421 = vadd.f32 %v2289, %v2420
        %v2422 = vpop.f32.mrf.mxu0
        %v2423 = vpop.f32.mrf.mxu0
        %v2424 = vadd.f32 %v2289, %v2423
        %v2425 = vpop.f32.mrf.mxu0
        %2426 = vmatprep.mubr.bf16.mxu0 0
        %2427 = vmatmul.mubr.bf16.gmra.mxu0 %v2259
        %v2428 = vpop.f32.mrf.mxu0
        %v2429 = vadd.f32 %v2289, %v2428
        %v2430 = vpop.f32.mrf.mxu0
        %v2431 = vpop.f32.mrf.mxu0
        %v2432 = vadd.f32 %v2289, %v2431
        %v2433 = vpop.f32.mrf.mxu0
        %2434 = vmatprep.mubr.bf16.mxu0 0
        %2435 = vmatmul.mubr.bf16.gmra.mxu0 %v2260
        %v2436 = vpop.f32.mrf.mxu0
        %v2437 = vadd.f32 %v2289, %v2436
        %v2438 = vpop.f32.mrf.mxu0
        %v2439 = vpop.f32.mrf.mxu0
        %v2440 = vadd.f32 %v2289, %v2439
        %v2441 = vpop.f32.mrf.mxu0
        %2442 = vmatprep.mubr.bf16.mxu0 0
        %2443 = vmatmul.mubr.bf16.gmra.mxu0 %v2261
        %v2444 = vpop.f32.mrf.mxu0
        %v2445 = vadd.f32 %v2289, %v2444
        %v2446 = vpop.f32.mrf.mxu0
        %v2447 = vpop.f32.mrf.mxu0
        %v2448 = vadd.f32 %v2289, %v2447
        %v2449 = vpop.f32.mrf.mxu0
        %2450 = vmatprep.mubr.bf16.mxu0 0
        %2451 = vmatmul.mubr.bf16.gmra.mxu0 %v2262
        %v2452 = vpop.f32.mrf.mxu0
        %v2453 = vadd.f32 %v2289, %v2452
        %v2454 = vpop.f32.mrf.mxu0
        %v2455 = vpop.f32.mrf.mxu0
        %v2456 = vadd.f32 %v2289, %v2455
        %v2457 = vpop.f32.mrf.mxu0
        %2458 = vmatprep.mubr.bf16.mxu0 0
        %2459 = vmatmul.mubr.bf16.gmra.mxu0 %v2263
        %v2460 = vpop.f32.mrf.mxu0
        %v2461 = vadd.f32 %v2289, %v2460
        %v2462 = vpop.f32.mrf.mxu0
        %v2463 = vpop.f32.mrf.mxu0
        %v2464 = vadd.f32 %v2289, %v2463
        %v2465 = vpop.f32.mrf.mxu0
        %2466 = vmatprep.mubr.bf16.mxu0 0
        %2467 = vmatmul.mubr.bf16.gmra.mxu0 %v2264
        %v2468 = vpop.f32.mrf.mxu0
        %v2469 = vadd.f32 %v2289, %v2468
        %v2470 = vpop.f32.mrf.mxu0
        %v2471 = vpop.f32.mrf.mxu0
        %v2472 = vadd.f32 %v2289, %v2471
        %v2473 = vpop.f32.mrf.mxu0
        %2474 = vmatprep.mubr.bf16.mxu0 0
        %2475 = vmatmul.mubr.bf16.gmra.mxu0 %v2265
        %v2476 = vpop.f32.mrf.mxu0
        %v2477 = vadd.f32 %v2289, %v2476
        %v2478 = vpop.f32.mrf.mxu0
        %v2479 = vpop.f32.mrf.mxu0
        %v2480 = vadd.f32 %v2289, %v2479
        %v2481 = vpop.f32.mrf.mxu0
        %2482 = vmatprep.mubr.bf16.mxu0 0
        %2483 = vmatmul.mubr.bf16.gmra.mxu0 %v2266
        %v2484 = vpop.f32.mrf.mxu0
        %v2485 = vadd.f32 %v2289, %v2484
        %v2486 = vpop.f32.mrf.mxu0
        %v2487 = vpop.f32.mrf.mxu0
        %v2488 = vadd.f32 %v2289, %v2487
        %v2489 = vpop.f32.mrf.mxu0
        %2490 = vmatprep.mubr.bf16.mxu0 0
        %2491 = vmatmul.mubr.bf16.gmra.mxu0 %v2267
        %v2492 = vpop.f32.mrf.mxu0
        %v2493 = vadd.f32 %v2289, %v2492
        %v2494 = vpop.f32.mrf.mxu0
        %v2495 = vpop.f32.mrf.mxu0
        %v2496 = vadd.f32 %v2289, %v2495
        %v2497 = vpop.f32.mrf.mxu0
        %2498 = vdwg.mxu0
        %v2499 = vpack.c.bf16 %v2376, %v2373
        %v2500 = vpack.c.bf16 %v2384, %v2381
        %v2501 = vpack.c.bf16 %v2392, %v2389
        %v2502 = vpack.c.bf16 %v2400, %v2397
        %v2503 = vpack.c.bf16 %v2408, %v2405
        %v2504 = vpack.c.bf16 %v2416, %v2413
        %v2505 = vpack.c.bf16 %v2424, %v2421
        %v2506 = vpack.c.bf16 %v2432, %v2429
        %v2507 = vpack.c.bf16 %v2440, %v2437
        %v2508 = vpack.c.bf16 %v2448, %v2445
        %v2509 = vpack.c.bf16 %v2456, %v2453
        %v2510 = vpack.c.bf16 %v2464, %v2461
        %v2511 = vpack.c.bf16 %v2472, %v2469
        %v2512 = vpack.c.bf16 %v2480, %v2477
        %v2513 = vpack.c.bf16 %v2488, %v2485
        %v2514 = vpack.c.bf16 %v2496, %v2493
        %v2515 = vxor.u32 %v2499, 2147516416
        %v2516 = vxor.u32 %v2500, 2147516416
        %v2517 = vxor.u32 %v2501, 2147516416
        %v2518 = vxor.u32 %v2502, 2147516416
        %v2519 = vxor.u32 %v2503, 2147516416
        %v2520 = vxor.u32 %v2504, 2147516416
        %v2521 = vxor.u32 %v2505, 2147516416
        %v2522 = vxor.u32 %v2506, 2147516416
        %v2523 = vxor.u32 %v2507, 2147516416
        %v2524 = vxor.u32 %v2508, 2147516416
        %v2525 = vxor.u32 %v2509, 2147516416
        %v2526 = vxor.u32 %v2510, 2147516416
        %v2527 = vxor.u32 %v2511, 2147516416
        %v2528 = vxor.u32 %v2512, 2147516416
        %v2529 = vxor.u32 %v2513, 2147516416
        %v2530 = vxor.u32 %v2514, 2147516416
        %v2532 = vmul.bf16 %v2515, 1069105081
        %v2533 = vpow.bf16.pop %v2532
        %v2535 = vmul.bf16 %v2516, 1069105081
        %v2536 = vpow.bf16.pop %v2535
        %v2538 = vmul.bf16 %v2517, 1069105081
        %v2539 = vpow.bf16.pop %v2538
        %v2541 = vmul.bf16 %v2518, 1069105081
        %v2542 = vpow.bf16.pop %v2541
        %v2544 = vmul.bf16 %v2519, 1069105081
        %v2545 = vpow.bf16.pop %v2544
        %v2547 = vmul.bf16 %v2520, 1069105081
        %v2548 = vpow.bf16.pop %v2547
        %v2550 = vmul.bf16 %v2521, 1069105081
        %v2551 = vpow.bf16.pop %v2550
        %v2553 = vmul.bf16 %v2522, 1069105081
        %v2554 = vpow.bf16.pop %v2553
        %v2556 = vmul.bf16 %v2523, 1069105081
        %v2557 = vpow.bf16.pop %v2556
        %v2559 = vmul.bf16 %v2524, 1069105081
        %v2560 = vpow.bf16.pop %v2559
        %v2562 = vmul.bf16 %v2525, 1069105081
        %v2563 = vpow.bf16.pop %v2562
        %v2565 = vmul.bf16 %v2526, 1069105081
        %v2566 = vpow.bf16.pop %v2565
        %v2568 = vmul.bf16 %v2527, 1069105081
        %v2569 = vpow.bf16.pop %v2568
        %v2571 = vmul.bf16 %v2528, 1069105081
        %v2572 = vpow.bf16.pop %v2571
        %v2574 = vmul.bf16 %v2529, 1069105081
        %v2575 = vpow.bf16.pop %v2574
        %v2577 = vmul.bf16 %v2530, 1069105081
        %v2578 = vpow.bf16.pop %v2577
        %v2579 = vadd.bf16 %v2533, 1065369472
        %v2580 = vadd.bf16 %v2536, 1065369472
        %v2581 = vadd.bf16 %v2539, 1065369472
        %v2582 = vadd.bf16 %v2542, 1065369472
        %v2583 = vadd.bf16 %v2545, 1065369472
        %v2584 = vadd.bf16 %v2548, 1065369472
        %v2585 = vadd.bf16 %v2551, 1065369472
        %v2586 = vadd.bf16 %v2554, 1065369472
        %v2587 = vadd.bf16 %v2557, 1065369472
        %v2588 = vadd.bf16 %v2560, 1065369472
        %v2589 = vadd.bf16 %v2563, 1065369472
        %v2590 = vadd.bf16 %v2566, 1065369472
        %v2591 = vadd.bf16 %v2569, 1065369472
        %v2592 = vadd.bf16 %v2572, 1065369472
        %v2593 = vadd.bf16 %v2575, 1065369472
        %v2594 = vadd.bf16 %v2578, 1065369472
        %v2595 = vrcp.bf16.pop %v2579
        %v2596 = vmul.bf16 1065369472, %v2595
        %v2597 = vrcp.bf16.pop %v2580
        %v2598 = vmul.bf16 1065369472, %v2597
        %v2599 = vrcp.bf16.pop %v2581
        %v2600 = vmul.bf16 1065369472, %v2599
        %v2601 = vrcp.bf16.pop %v2582
        %v2602 = vmul.bf16 1065369472, %v2601
        %v2603 = vrcp.bf16.pop %v2583
        %v2604 = vmul.bf16 1065369472, %v2603
        %v2605 = vrcp.bf16.pop %v2584
        %v2606 = vmul.bf16 1065369472, %v2605
        %v2607 = vrcp.bf16.pop %v2585
        %v2608 = vmul.bf16 1065369472, %v2607
        %v2609 = vrcp.bf16.pop %v2586
        %v2610 = vmul.bf16 1065369472, %v2609
        %v2611 = vrcp.bf16.pop %v2587
        %v2612 = vmul.bf16 1065369472, %v2611
        %v2613 = vrcp.bf16.pop %v2588
        %v2614 = vmul.bf16 1065369472, %v2613
        %v2615 = vrcp.bf16.pop %v2589
        %v2616 = vmul.bf16 1065369472, %v2615
        %v2617 = vrcp.bf16.pop %v2590
        %v2618 = vmul.bf16 1065369472, %v2617
        %v2619 = vrcp.bf16.pop %v2591
        %v2620 = vmul.bf16 1065369472, %v2619
        %v2621 = vrcp.bf16.pop %v2592
        %v2622 = vmul.bf16 1065369472, %v2621
        %v2623 = vrcp.bf16.pop %v2593
        %v2624 = vmul.bf16 1065369472, %v2623
        %v2625 = vrcp.bf16.pop %v2594
        %v2626 = vmul.bf16 1065369472, %v2625
        %v2627 = vmul.bf16 %v2499, %v2596
        %v2628 = vmul.bf16 %v2500, %v2598
        %v2629 = vmul.bf16 %v2501, %v2600
        %v2630 = vmul.bf16 %v2502, %v2602
        %v2631 = vmul.bf16 %v2503, %v2604
        %v2632 = vmul.bf16 %v2504, %v2606
        %v2633 = vmul.bf16 %v2505, %v2608
        %v2634 = vmul.bf16 %v2506, %v2610
        %v2635 = vmul.bf16 %v2507, %v2612
        %v2636 = vmul.bf16 %v2508, %v2614
        %v2637 = vmul.bf16 %v2509, %v2616
        %v2638 = vmul.bf16 %v2510, %v2618
        %v2639 = vmul.bf16 %v2511, %v2620
        %v2640 = vmul.bf16 %v2512, %v2622
        %v2641 = vmul.bf16 %v2513, %v2624
        %v2642 = vmul.bf16 %v2514, %v2626
        %s2643 = scalar_lea.vmem [#allocation2], 192
        %v2644 = vld [vmem:[%s2643] sm:$0xf]
        %v2645 = vld [vmem:[%s2643 + $0x4] sm:$0xf]
        %v2646 = vld [vmem:[%s2643 + $0x8] sm:$0xf]
        %v2647 = vld [vmem:[%s2643 + $0xc] sm:$0xf]
        %v2648 = vld [vmem:[%s2643 + $0x10] sm:$0xf]
        %v2649 = vld [vmem:[%s2643 + $0x14] sm:$0xf]
        %v2650 = vld [vmem:[%s2643 + $0x18] sm:$0xf]
        %v2651 = vld [vmem:[%s2643 + $0x1c] sm:$0xf]
        %v2652 = vld [vmem:[%s2643 + $0x20] sm:$0xf]
        %v2653 = vld [vmem:[%s2643 + $0x24] sm:$0xf]
        %v2654 = vld [vmem:[%s2643 + $0x28] sm:$0xf]
        %v2655 = vld [vmem:[%s2643 + $0x2c] sm:$0xf]
        %v2656 = vld [vmem:[%s2643 + $0x30] sm:$0xf]
        %v2657 = vld [vmem:[%s2643 + $0x34] sm:$0xf]
        %v2658 = vld [vmem:[%s2643 + $0x38] sm:$0xf]
        %v2659 = vld [vmem:[%s2643 + $0x3c] sm:$0xf]
        %v2660 = vld [vmem:[%s4 + $0x7] sm:$0x1]
        %v2661 = vlaneseq
        %v2662 = vshrl.u32 %v2661, 7
        %v2663 = vsub.s32 0, %v2662
        %v2664 = vrot.slane %v2660, %v2663
        %v2681 = vunpack.c.l.b16 %v2644
        %v2682 = vunpack.c.l.b16 %v2645
        %v2683 = vunpack.c.l.b16 %v2646
        %v2684 = vunpack.c.l.b16 %v2647
        %v2685 = vunpack.c.l.b16 %v2648
        %v2686 = vunpack.c.l.b16 %v2649
        %v2687 = vunpack.c.l.b16 %v2650
        %v2688 = vunpack.c.l.b16 %v2651
        %v2689 = vunpack.c.l.b16 %v2652
        %v2690 = vunpack.c.l.b16 %v2653
        %v2691 = vunpack.c.l.b16 %v2654
        %v2692 = vunpack.c.l.b16 %v2655
        %v2693 = vunpack.c.l.b16 %v2656
        %v2694 = vunpack.c.l.b16 %v2657
        %v2695 = vunpack.c.l.b16 %v2658
        %v2696 = vunpack.c.l.b16 %v2659
        %v2697 = vpack.c.b16 %v2682, %v2681
        %v2698 = vpack.c.b16 %v2684, %v2683
        %v2699 = vpack.c.b16 %v2686, %v2685
        %v2700 = vpack.c.b16 %v2688, %v2687
        %v2701 = vpack.c.b16 %v2690, %v2689
        %v2702 = vpack.c.b16 %v2692, %v2691
        %v2703 = vpack.c.b16 %v2694, %v2693
        %v2704 = vpack.c.b16 %v2696, %v2695
        %2713 = vmatprep.subr.bf16.mxu0 0
        %2714 = vmatpush1.bf16.msra.mxu0 %v2704
        %2715 = vmatprep.subr.bf16.mxu0 0
        %2716 = vmatpush1.bf16.msra.mxu0 %v2703
        %2717 = vmatprep.subr.bf16.mxu0 0
        %2718 = vmatpush1.bf16.msra.mxu0 %v2702
        %2719 = vmatprep.subr.bf16.mxu0 0
        %2720 = vmatpush1.bf16.msra.mxu0 %v2701
        %2721 = vmatprep.subr.bf16.mxu0 0
        %2722 = vmatpush1.bf16.msra.mxu0 %v2700
        %2723 = vmatprep.subr.bf16.mxu0 0
        %2724 = vmatpush1.bf16.msra.mxu0 %v2699
        %2725 = vmatprep.subr.bf16.mxu0 0
        %2726 = vmatpush1.bf16.msra.mxu0 %v2698
        %2727 = vmatprep.subr.bf16.mxu0 0
        %2728 = vmatpush1.bf16.msra.mxu0 %v2697
        %2729 = vmatprep.subr.bf16.mxu0 0
        %2730 = vmatpush2.bf16.msra.mxu0 0
        %2731 = vmatprep.subr.bf16.mxu0 0
        %2732 = vmatpush2.bf16.msra.mxu0 0
        %2733 = vmatprep.subr.bf16.mxu0 0
        %2734 = vmatpush2.bf16.msra.mxu0 0
        %2735 = vmatprep.subr.bf16.mxu0 0
        %2736 = vmatpush2.bf16.msra.mxu0 0
        %2737 = vmatprep.subr.bf16.mxu0 0
        %2738 = vmatpush2.bf16.msra.mxu0 0
        %2739 = vmatprep.subr.bf16.mxu0 0
        %2740 = vmatpush2.bf16.msra.mxu0 0
        %2741 = vmatprep.subr.bf16.mxu0 0
        %2742 = vmatpush2.bf16.msra.mxu0 0
        %2743 = vmatprep.subr.bf16.mxu0 0
        %2744 = vmatpush2.bf16.msra.mxu0 0
        %2745 = vmatprep.mubr.bf16.mxu0 0
        %2746 = vmatmul.mubr.bf16.gmra.mxu0 %v2627
        %v2747 = vpop.f32.mrf.mxu0
        %v2748 = vadd.f32 %v2664, %v2747
        %v2749 = vpop.f32.mrf.mxu0
        %v2750 = vpop.f32.mrf.mxu0
        %v2751 = vadd.f32 %v2664, %v2750
        %v2752 = vpop.f32.mrf.mxu0
        %2753 = vmatprep.mubr.bf16.mxu0 0
        %2754 = vmatmul.mubr.bf16.gmra.mxu0 %v2628
        %v2755 = vpop.f32.mrf.mxu0
        %v2756 = vadd.f32 %v2664, %v2755
        %v2757 = vpop.f32.mrf.mxu0
        %v2758 = vpop.f32.mrf.mxu0
        %v2759 = vadd.f32 %v2664, %v2758
        %v2760 = vpop.f32.mrf.mxu0
        %2761 = vmatprep.mubr.bf16.mxu0 0
        %2762 = vmatmul.mubr.bf16.gmra.mxu0 %v2629
        %v2763 = vpop.f32.mrf.mxu0
        %v2764 = vadd.f32 %v2664, %v2763
        %v2765 = vpop.f32.mrf.mxu0
        %v2766 = vpop.f32.mrf.mxu0
        %v2767 = vadd.f32 %v2664, %v2766
        %v2768 = vpop.f32.mrf.mxu0
        %2769 = vmatprep.mubr.bf16.mxu0 0
        %2770 = vmatmul.mubr.bf16.gmra.mxu0 %v2630
        %v2771 = vpop.f32.mrf.mxu0
        %v2772 = vadd.f32 %v2664, %v2771
        %v2773 = vpop.f32.mrf.mxu0
        %v2774 = vpop.f32.mrf.mxu0
        %v2775 = vadd.f32 %v2664, %v2774
        %v2776 = vpop.f32.mrf.mxu0
        %2777 = vmatprep.mubr.bf16.mxu0 0
        %2778 = vmatmul.mubr.bf16.gmra.mxu0 %v2631
        %v2779 = vpop.f32.mrf.mxu0
        %v2780 = vadd.f32 %v2664, %v2779
        %v2781 = vpop.f32.mrf.mxu0
        %v2782 = vpop.f32.mrf.mxu0
        %v2783 = vadd.f32 %v2664, %v2782
        %v2784 = vpop.f32.mrf.mxu0
        %2785 = vmatprep.mubr.bf16.mxu0 0
        %2786 = vmatmul.mubr.bf16.gmra.mxu0 %v2632
        %v2787 = vpop.f32.mrf.mxu0
        %v2788 = vadd.f32 %v2664, %v2787
        %v2789 = vpop.f32.mrf.mxu0
        %v2790 = vpop.f32.mrf.mxu0
        %v2791 = vadd.f32 %v2664, %v2790
        %v2792 = vpop.f32.mrf.mxu0
        %2793 = vmatprep.mubr.bf16.mxu0 0
        %2794 = vmatmul.mubr.bf16.gmra.mxu0 %v2633
        %v2795 = vpop.f32.mrf.mxu0
        %v2796 = vadd.f32 %v2664, %v2795
        %v2797 = vpop.f32.mrf.mxu0
        %v2798 = vpop.f32.mrf.mxu0
        %v2799 = vadd.f32 %v2664, %v2798
        %v2800 = vpop.f32.mrf.mxu0
        %2801 = vmatprep.mubr.bf16.mxu0 0
        %2802 = vmatmul.mubr.bf16.gmra.mxu0 %v2634
        %v2803 = vpop.f32.mrf.mxu0
        %v2804 = vadd.f32 %v2664, %v2803
        %v2805 = vpop.f32.mrf.mxu0
        %v2806 = vpop.f32.mrf.mxu0
        %v2807 = vadd.f32 %v2664, %v2806
        %v2808 = vpop.f32.mrf.mxu0
        %2809 = vmatprep.mubr.bf16.mxu0 0
        %2810 = vmatmul.mubr.bf16.gmra.mxu0 %v2635
        %v2811 = vpop.f32.mrf.mxu0
        %v2812 = vadd.f32 %v2664, %v2811
        %v2813 = vpop.f32.mrf.mxu0
        %v2814 = vpop.f32.mrf.mxu0
        %v2815 = vadd.f32 %v2664, %v2814
        %v2816 = vpop.f32.mrf.mxu0
        %2817 = vmatprep.mubr.bf16.mxu0 0
        %2818 = vmatmul.mubr.bf16.gmra.mxu0 %v2636
        %v2819 = vpop.f32.mrf.mxu0
        %v2820 = vadd.f32 %v2664, %v2819
        %v2821 = vpop.f32.mrf.mxu0
        %v2822 = vpop.f32.mrf.mxu0
        %v2823 = vadd.f32 %v2664, %v2822
        %v2824 = vpop.f32.mrf.mxu0
        %2825 = vmatprep.mubr.bf16.mxu0 0
        %2826 = vmatmul.mubr.bf16.gmra.mxu0 %v2637
        %v2827 = vpop.f32.mrf.mxu0
        %v2828 = vadd.f32 %v2664, %v2827
        %v2829 = vpop.f32.mrf.mxu0
        %v2830 = vpop.f32.mrf.mxu0
        %v2831 = vadd.f32 %v2664, %v2830
        %v2832 = vpop.f32.mrf.mxu0
        %2833 = vmatprep.mubr.bf16.mxu0 0
        %2834 = vmatmul.mubr.bf16.gmra.mxu0 %v2638
        %v2835 = vpop.f32.mrf.mxu0
        %v2836 = vadd.f32 %v2664, %v2835
        %v2837 = vpop.f32.mrf.mxu0
        %v2838 = vpop.f32.mrf.mxu0
        %v2839 = vadd.f32 %v2664, %v2838
        %v2840 = vpop.f32.mrf.mxu0
        %2841 = vmatprep.mubr.bf16.mxu0 0
        %2842 = vmatmul.mubr.bf16.gmra.mxu0 %v2639
        %v2843 = vpop.f32.mrf.mxu0
        %v2844 = vadd.f32 %v2664, %v2843
        %v2845 = vpop.f32.mrf.mxu0
        %v2846 = vpop.f32.mrf.mxu0
        %v2847 = vadd.f32 %v2664, %v2846
        %v2848 = vpop.f32.mrf.mxu0
        %2849 = vmatprep.mubr.bf16.mxu0 0
        %2850 = vmatmul.mubr.bf16.gmra.mxu0 %v2640
        %v2851 = vpop.f32.mrf.mxu0
        %v2852 = vadd.f32 %v2664, %v2851
        %v2853 = vpop.f32.mrf.mxu0
        %v2854 = vpop.f32.mrf.mxu0
        %v2855 = vadd.f32 %v2664, %v2854
        %v2856 = vpop.f32.mrf.mxu0
        %2857 = vmatprep.mubr.bf16.mxu0 0
        %2858 = vmatmul.mubr.bf16.gmra.mxu0 %v2641
        %v2859 = vpop.f32.mrf.mxu0
        %v2860 = vadd.f32 %v2664, %v2859
        %v2861 = vpop.f32.mrf.mxu0
        %v2862 = vpop.f32.mrf.mxu0
        %v2863 = vadd.f32 %v2664, %v2862
        %v2864 = vpop.f32.mrf.mxu0
        %2865 = vmatprep.mubr.bf16.mxu0 0
        %2866 = vmatmul.mubr.bf16.gmra.mxu0 %v2642
        %v2867 = vpop.f32.mrf.mxu0
        %v2868 = vadd.f32 %v2664, %v2867
        %v2869 = vpop.f32.mrf.mxu0
        %v2870 = vpop.f32.mrf.mxu0
        %v2871 = vadd.f32 %v2664, %v2870
        %v2872 = vpop.f32.mrf.mxu0
        %2873 = vdwg.mxu0
        %v2874 = vpack.c.bf16 %v2751, %v2748
        %v2875 = vpack.c.bf16 %v2759, %v2756
        %v2876 = vpack.c.bf16 %v2767, %v2764
        %v2877 = vpack.c.bf16 %v2775, %v2772
        %v2878 = vpack.c.bf16 %v2783, %v2780
        %v2879 = vpack.c.bf16 %v2791, %v2788
        %v2880 = vpack.c.bf16 %v2799, %v2796
        %v2881 = vpack.c.bf16 %v2807, %v2804
        %v2882 = vpack.c.bf16 %v2815, %v2812
        %v2883 = vpack.c.bf16 %v2823, %v2820
        %v2884 = vpack.c.bf16 %v2831, %v2828
        %v2885 = vpack.c.bf16 %v2839, %v2836
        %v2886 = vpack.c.bf16 %v2847, %v2844
        %v2887 = vpack.c.bf16 %v2855, %v2852
        %v2888 = vpack.c.bf16 %v2863, %v2860
        %v2889 = vpack.c.bf16 %v2871, %v2868
        %v2890 = vxor.u32 %v2874, 2147516416
        %v2891 = vxor.u32 %v2875, 2147516416
        %v2892 = vxor.u32 %v2876, 2147516416
        %v2893 = vxor.u32 %v2877, 2147516416
        %v2894 = vxor.u32 %v2878, 2147516416
        %v2895 = vxor.u32 %v2879, 2147516416
        %v2896 = vxor.u32 %v2880, 2147516416
        %v2897 = vxor.u32 %v2881, 2147516416
        %v2898 = vxor.u32 %v2882, 2147516416
        %v2899 = vxor.u32 %v2883, 2147516416
        %v2900 = vxor.u32 %v2884, 2147516416
        %v2901 = vxor.u32 %v2885, 2147516416
        %v2902 = vxor.u32 %v2886, 2147516416
        %v2903 = vxor.u32 %v2887, 2147516416
        %v2904 = vxor.u32 %v2888, 2147516416
        %v2905 = vxor.u32 %v2889, 2147516416
        %v2907 = vmul.bf16 %v2890, 1069105081
        %v2908 = vpow.bf16.pop %v2907
        %v2910 = vmul.bf16 %v2891, 1069105081
        %v2911 = vpow.bf16.pop %v2910
        %v2913 = vmul.bf16 %v2892, 1069105081
        %v2914 = vpow.bf16.pop %v2913
        %v2916 = vmul.bf16 %v2893, 1069105081
        %v2917 = vpow.bf16.pop %v2916
        %v2919 = vmul.bf16 %v2894, 1069105081
        %v2920 = vpow.bf16.pop %v2919
        %v2922 = vmul.bf16 %v2895, 1069105081
        %v2923 = vpow.bf16.pop %v2922
        %v2925 = vmul.bf16 %v2896, 1069105081
        %v2926 = vpow.bf16.pop %v2925
        %v2928 = vmul.bf16 %v2897, 1069105081
        %v2929 = vpow.bf16.pop %v2928
        %v2931 = vmul.bf16 %v2898, 1069105081
        %v2932 = vpow.bf16.pop %v2931
        %v2934 = vmul.bf16 %v2899, 1069105081
        %v2935 = vpow.bf16.pop %v2934
        %v2937 = vmul.bf16 %v2900, 1069105081
        %v2938 = vpow.bf16.pop %v2937
        %v2940 = vmul.bf16 %v2901, 1069105081
        %v2941 = vpow.bf16.pop %v2940
        %v2943 = vmul.bf16 %v2902, 1069105081
        %v2944 = vpow.bf16.pop %v2943
        %v2946 = vmul.bf16 %v2903, 1069105081
        %v2947 = vpow.bf16.pop %v2946
        %v2949 = vmul.bf16 %v2904, 1069105081
        %v2950 = vpow.bf16.pop %v2949
        %v2952 = vmul.bf16 %v2905, 1069105081
        %v2953 = vpow.bf16.pop %v2952
        %v2954 = vadd.bf16 %v2908, 1065369472
        %v2955 = vadd.bf16 %v2911, 1065369472
        %v2956 = vadd.bf16 %v2914, 1065369472
        %v2957 = vadd.bf16 %v2917, 1065369472
        %v2958 = vadd.bf16 %v2920, 1065369472
        %v2959 = vadd.bf16 %v2923, 1065369472
        %v2960 = vadd.bf16 %v2926, 1065369472
        %v2961 = vadd.bf16 %v2929, 1065369472
        %v2962 = vadd.bf16 %v2932, 1065369472
        %v2963 = vadd.bf16 %v2935, 1065369472
        %v2964 = vadd.bf16 %v2938, 1065369472
        %v2965 = vadd.bf16 %v2941, 1065369472
        %v2966 = vadd.bf16 %v2944, 1065369472
        %v2967 = vadd.bf16 %v2947, 1065369472
        %v2968 = vadd.bf16 %v2950, 1065369472
        %v2969 = vadd.bf16 %v2953, 1065369472
        %v2970 = vrcp.bf16.pop %v2954
        %v2971 = vmul.bf16 1065369472, %v2970
        %v2972 = vrcp.bf16.pop %v2955
        %v2973 = vmul.bf16 1065369472, %v2972
        %v2974 = vrcp.bf16.pop %v2956
        %v2975 = vmul.bf16 1065369472, %v2974
        %v2976 = vrcp.bf16.pop %v2957
        %v2977 = vmul.bf16 1065369472, %v2976
        %v2978 = vrcp.bf16.pop %v2958
        %v2979 = vmul.bf16 1065369472, %v2978
        %v2980 = vrcp.bf16.pop %v2959
        %v2981 = vmul.bf16 1065369472, %v2980
        %v2982 = vrcp.bf16.pop %v2960
        %v2983 = vmul.bf16 1065369472, %v2982
        %v2984 = vrcp.bf16.pop %v2961
        %v2985 = vmul.bf16 1065369472, %v2984
        %v2986 = vrcp.bf16.pop %v2962
        %v2987 = vmul.bf16 1065369472, %v2986
        %v2988 = vrcp.bf16.pop %v2963
        %v2989 = vmul.bf16 1065369472, %v2988
        %v2990 = vrcp.bf16.pop %v2964
        %v2991 = vmul.bf16 1065369472, %v2990
        %v2992 = vrcp.bf16.pop %v2965
        %v2993 = vmul.bf16 1065369472, %v2992
        %v2994 = vrcp.bf16.pop %v2966
        %v2995 = vmul.bf16 1065369472, %v2994
        %v2996 = vrcp.bf16.pop %v2967
        %v2997 = vmul.bf16 1065369472, %v2996
        %v2998 = vrcp.bf16.pop %v2968
        %v2999 = vmul.bf16 1065369472, %v2998
        %v3000 = vrcp.bf16.pop %v2969
        %v3001 = vmul.bf16 1065369472, %v3000
        %v3002 = vmul.bf16 %v2874, %v2971
        %v3003 = vmul.bf16 %v2875, %v2973
        %v3004 = vmul.bf16 %v2876, %v2975
        %v3005 = vmul.bf16 %v2877, %v2977
        %v3006 = vmul.bf16 %v2878, %v2979
        %v3007 = vmul.bf16 %v2879, %v2981
        %v3008 = vmul.bf16 %v2880, %v2983
        %v3009 = vmul.bf16 %v2881, %v2985
        %v3010 = vmul.bf16 %v2882, %v2987
        %v3011 = vmul.bf16 %v2883, %v2989
        %v3012 = vmul.bf16 %v2884, %v2991
        %v3013 = vmul.bf16 %v2885, %v2993
        %v3014 = vmul.bf16 %v2886, %v2995
        %v3015 = vmul.bf16 %v2887, %v2997
        %v3016 = vmul.bf16 %v2888, %v2999
        %v3017 = vmul.bf16 %v2889, %v3001
        %v3018 = vadd.bf16 %v852, %v3002
        %v3019 = vadd.bf16 %v853, %v3003
        %v3020 = vadd.bf16 %v854, %v3004
        %v3021 = vadd.bf16 %v855, %v3005
        %v3022 = vadd.bf16 %v856, %v3006
        %v3023 = vadd.bf16 %v857, %v3007
        %v3024 = vadd.bf16 %v858, %v3008
        %v3025 = vadd.bf16 %v859, %v3009
        %v3026 = vadd.bf16 %v860, %v3010
        %v3027 = vadd.bf16 %v861, %v3011
        %v3028 = vadd.bf16 %v862, %v3012
        %v3029 = vadd.bf16 %v863, %v3013
        %v3030 = vadd.bf16 %v864, %v3014
        %v3031 = vadd.bf16 %v865, %v3015
        %v3032 = vadd.bf16 %v866, %v3016
        %v3033 = vadd.bf16 %v867, %v3017
        %v3034 = vmul.bf16 %v3018, 1060454197
        %v3035 = vmul.bf16 %v3019, 1060454197
        %v3036 = vmul.bf16 %v3020, 1060454197
        %v3037 = vmul.bf16 %v3021, 1060454197
        %v3038 = vmul.bf16 %v3022, 1060454197
        %v3039 = vmul.bf16 %v3023, 1060454197
        %v3040 = vmul.bf16 %v3024, 1060454197
        %v3041 = vmul.bf16 %v3025, 1060454197
        %v3042 = vmul.bf16 %v3026, 1060454197
        %v3043 = vmul.bf16 %v3027, 1060454197
        %v3044 = vmul.bf16 %v3028, 1060454197
        %v3045 = vmul.bf16 %v3029, 1060454197
        %v3046 = vmul.bf16 %v3030, 1060454197
        %v3047 = vmul.bf16 %v3031, 1060454197
        %v3048 = vmul.bf16 %v3032, 1060454197
        %v3049 = vmul.bf16 %v3033, 1060454197
        %v3050 = vmul.bf16 %v3034, %v3034
        %v3051 = vmul.bf16 %v3035, %v3035
        %v3052 = vmul.bf16 %v3036, %v3036
        %v3053 = vmul.bf16 %v3037, %v3037
        %v3054 = vmul.bf16 %v3038, %v3038
        %v3055 = vmul.bf16 %v3039, %v3039
        %v3056 = vmul.bf16 %v3040, %v3040
        %v3057 = vmul.bf16 %v3041, %v3041
        %v3058 = vmul.bf16 %v3042, %v3042
        %v3059 = vmul.bf16 %v3043, %v3043
        %v3060 = vmul.bf16 %v3044, %v3044
        %v3061 = vmul.bf16 %v3045, %v3045
        %v3062 = vmul.bf16 %v3046, %v3046
        %v3063 = vmul.bf16 %v3047, %v3047
        %v3064 = vmul.bf16 %v3048, %v3048
        %v3065 = vmul.bf16 %v3049, %v3049
        %3066 = vmatprep.subr.bf16.mxu0 %v1273
        %3067 = vmatpush1.bf16.msra.mxu0 %v1272
        %3068 = vmatprep.subr.bf16.mxu0 %v1271
        %3069 = vmatpush1.bf16.msra.mxu0 %v1270
        %3070 = vmatprep.subr.bf16.mxu0 %v1269
        %3071 = vmatpush1.bf16.msra.mxu0 %v1268
        %3072 = vmatprep.subr.bf16.mxu0 %v1267
        %3073 = vmatpush1.bf16.msra.mxu0 %v1266
        %3074 = vmatprep.subr.bf16.mxu0 %v1265
        %3075 = vmatpush1.bf16.msra.mxu0 %v1264
        %3076 = vmatprep.subr.bf16.mxu0 %v1263
        %3077 = vmatpush1.bf16.msra.mxu0 %v1262
        %3078 = vmatprep.subr.bf16.mxu0 %v1261
        %3079 = vmatpush1.bf16.msra.mxu0 %v1260
        %3080 = vmatprep.subr.bf16.mxu0 %v1259
        %3081 = vmatpush1.bf16.msra.mxu0 %v1258
        %3082 = vmatprep.subr.bf16.mxu0 %v1289
        %3083 = vmatpush2.bf16.msra.mxu0 %v1288
        %3084 = vmatprep.subr.bf16.mxu0 %v1287
        %3085 = vmatpush2.bf16.msra.mxu0 %v1286
        %3086 = vmatprep.subr.bf16.mxu0 %v1285
        %3087 = vmatpush2.bf16.msra.mxu0 %v1284
        %3088 = vmatprep.subr.bf16.mxu0 %v1283
        %3089 = vmatpush2.bf16.msra.mxu0 %v1282
        %3090 = vmatprep.subr.bf16.mxu0 %v1281
        %3091 = vmatpush2.bf16.msra.mxu0 %v1280
        %3092 = vmatprep.subr.bf16.mxu0 %v1279
        %3093 = vmatpush2.bf16.msra.mxu0 %v1278
        %3094 = vmatprep.subr.bf16.mxu0 %v1277
        %3095 = vmatpush2.bf16.msra.mxu0 %v1276
        %3096 = vmatprep.subr.bf16.mxu0 %v1275
        %3097 = vmatpush2.bf16.msra.mxu0 %v1274
        %3098 = vmatprep.mubr.bf16.mxu0 %v3050
        %3099 = vmatmul.mubr.bf16.gmra.mxu0 %v3034
        %v3100 = vpop.f32.mrf.mxu0
        %v3101 = vadd.f32 0.0, %v3100
        %v3102 = vpop.f32.mrf.mxu0
        %v3103 = vadd.f32 0.0, %v3102
        %v3104 = vpop.f32.mrf.mxu0
        %v3105 = vadd.f32 0.0, %v3104
        %v3106 = vpop.f32.mrf.mxu0
        %v3107 = vadd.f32 0.0, %v3106
        %3108 = vmatprep.mubr.bf16.mxu0 %v3051
        %3109 = vmatmul.mubr.bf16.gmra.mxu0 %v3035
        %v3110 = vpop.f32.mrf.mxu0
        %v3111 = vadd.f32 0.0, %v3110
        %v3112 = vpop.f32.mrf.mxu0
        %v3113 = vadd.f32 0.0, %v3112
        %v3114 = vpop.f32.mrf.mxu0
        %v3115 = vadd.f32 0.0, %v3114
        %v3116 = vpop.f32.mrf.mxu0
        %v3117 = vadd.f32 0.0, %v3116
        %3118 = vmatprep.mubr.bf16.mxu0 %v3052
        %3119 = vmatmul.mubr.bf16.gmra.mxu0 %v3036
        %v3120 = vpop.f32.mrf.mxu0
        %v3121 = vadd.f32 0.0, %v3120
        %v3122 = vpop.f32.mrf.mxu0
        %v3123 = vadd.f32 0.0, %v3122
        %v3124 = vpop.f32.mrf.mxu0
        %v3125 = vadd.f32 0.0, %v3124
        %v3126 = vpop.f32.mrf.mxu0
        %v3127 = vadd.f32 0.0, %v3126
        %3128 = vmatprep.mubr.bf16.mxu0 %v3053
        %3129 = vmatmul.mubr.bf16.gmra.mxu0 %v3037
        %v3130 = vpop.f32.mrf.mxu0
        %v3131 = vadd.f32 0.0, %v3130
        %v3132 = vpop.f32.mrf.mxu0
        %v3133 = vadd.f32 0.0, %v3132
        %v3134 = vpop.f32.mrf.mxu0
        %v3135 = vadd.f32 0.0, %v3134
        %v3136 = vpop.f32.mrf.mxu0
        %v3137 = vadd.f32 0.0, %v3136
        %3138 = vmatprep.mubr.bf16.mxu0 %v3054
        %3139 = vmatmul.mubr.bf16.gmra.mxu0 %v3038
        %v3140 = vpop.f32.mrf.mxu0
        %v3141 = vadd.f32 0.0, %v3140
        %v3142 = vpop.f32.mrf.mxu0
        %v3143 = vadd.f32 0.0, %v3142
        %v3144 = vpop.f32.mrf.mxu0
        %v3145 = vadd.f32 0.0, %v3144
        %v3146 = vpop.f32.mrf.mxu0
        %v3147 = vadd.f32 0.0, %v3146
        %3148 = vmatprep.mubr.bf16.mxu0 %v3055
        %3149 = vmatmul.mubr.bf16.gmra.mxu0 %v3039
        %v3150 = vpop.f32.mrf.mxu0
        %v3151 = vadd.f32 0.0, %v3150
        %v3152 = vpop.f32.mrf.mxu0
        %v3153 = vadd.f32 0.0, %v3152
        %v3154 = vpop.f32.mrf.mxu0
        %v3155 = vadd.f32 0.0, %v3154
        %v3156 = vpop.f32.mrf.mxu0
        %v3157 = vadd.f32 0.0, %v3156
        %3158 = vmatprep.mubr.bf16.mxu0 %v3056
        %3159 = vmatmul.mubr.bf16.gmra.mxu0 %v3040
        %v3160 = vpop.f32.mrf.mxu0
        %v3161 = vadd.f32 0.0, %v3160
        %v3162 = vpop.f32.mrf.mxu0
        %v3163 = vadd.f32 0.0, %v3162
        %v3164 = vpop.f32.mrf.mxu0
        %v3165 = vadd.f32 0.0, %v3164
        %v3166 = vpop.f32.mrf.mxu0
        %v3167 = vadd.f32 0.0, %v3166
        %3168 = vmatprep.mubr.bf16.mxu0 %v3057
        %3169 = vmatmul.mubr.bf16.gmra.mxu0 %v3041
        %v3170 = vpop.f32.mrf.mxu0
        %v3171 = vadd.f32 0.0, %v3170
        %v3172 = vpop.f32.mrf.mxu0
        %v3173 = vadd.f32 0.0, %v3172
        %v3174 = vpop.f32.mrf.mxu0
        %v3175 = vadd.f32 0.0, %v3174
        %v3176 = vpop.f32.mrf.mxu0
        %v3177 = vadd.f32 0.0, %v3176
        %3178 = vmatprep.mubr.bf16.mxu0 %v3058
        %3179 = vmatmul.mubr.bf16.gmra.mxu0 %v3042
        %v3180 = vpop.f32.mrf.mxu0
        %v3181 = vadd.f32 0.0, %v3180
        %v3182 = vpop.f32.mrf.mxu0
        %v3183 = vadd.f32 0.0, %v3182
        %v3184 = vpop.f32.mrf.mxu0
        %v3185 = vadd.f32 0.0, %v3184
        %v3186 = vpop.f32.mrf.mxu0
        %v3187 = vadd.f32 0.0, %v3186
        %3188 = vmatprep.mubr.bf16.mxu0 %v3059
        %3189 = vmatmul.mubr.bf16.gmra.mxu0 %v3043
        %v3190 = vpop.f32.mrf.mxu0
        %v3191 = vadd.f32 0.0, %v3190
        %v3192 = vpop.f32.mrf.mxu0
        %v3193 = vadd.f32 0.0, %v3192
        %v3194 = vpop.f32.mrf.mxu0
        %v3195 = vadd.f32 0.0, %v3194
        %v3196 = vpop.f32.mrf.mxu0
        %v3197 = vadd.f32 0.0, %v3196
        %3198 = vmatprep.mubr.bf16.mxu0 %v3060
        %3199 = vmatmul.mubr.bf16.gmra.mxu0 %v3044
        %v3200 = vpop.f32.mrf.mxu0
        %v3201 = vadd.f32 0.0, %v3200
        %v3202 = vpop.f32.mrf.mxu0
        %v3203 = vadd.f32 0.0, %v3202
        %v3204 = vpop.f32.mrf.mxu0
        %v3205 = vadd.f32 0.0, %v3204
        %v3206 = vpop.f32.mrf.mxu0
        %v3207 = vadd.f32 0.0, %v3206
        %3208 = vmatprep.mubr.bf16.mxu0 %v3061
        %3209 = vmatmul.mubr.bf16.gmra.mxu0 %v3045
        %v3210 = vpop.f32.mrf.mxu0
        %v3211 = vadd.f32 0.0, %v3210
        %v3212 = vpop.f32.mrf.mxu0
        %v3213 = vadd.f32 0.0, %v3212
        %v3214 = vpop.f32.mrf.mxu0
        %v3215 = vadd.f32 0.0, %v3214
        %v3216 = vpop.f32.mrf.mxu0
        %v3217 = vadd.f32 0.0, %v3216
        %3218 = vmatprep.mubr.bf16.mxu0 %v3062
        %3219 = vmatmul.mubr.bf16.gmra.mxu0 %v3046
        %v3220 = vpop.f32.mrf.mxu0
        %v3221 = vadd.f32 0.0, %v3220
        %v3222 = vpop.f32.mrf.mxu0
        %v3223 = vadd.f32 0.0, %v3222
        %v3224 = vpop.f32.mrf.mxu0
        %v3225 = vadd.f32 0.0, %v3224
        %v3226 = vpop.f32.mrf.mxu0
        %v3227 = vadd.f32 0.0, %v3226
        %3228 = vmatprep.mubr.bf16.mxu0 %v3063
        %3229 = vmatmul.mubr.bf16.gmra.mxu0 %v3047
        %v3230 = vpop.f32.mrf.mxu0
        %v3231 = vadd.f32 0.0, %v3230
        %v3232 = vpop.f32.mrf.mxu0
        %v3233 = vadd.f32 0.0, %v3232
        %v3234 = vpop.f32.mrf.mxu0
        %v3235 = vadd.f32 0.0, %v3234
        %v3236 = vpop.f32.mrf.mxu0
        %v3237 = vadd.f32 0.0, %v3236
        %3238 = vmatprep.mubr.bf16.mxu0 %v3064
        %3239 = vmatmul.mubr.bf16.gmra.mxu0 %v3048
        %v3240 = vpop.f32.mrf.mxu0
        %v3241 = vadd.f32 0.0, %v3240
        %v3242 = vpop.f32.mrf.mxu0
        %v3243 = vadd.f32 0.0, %v3242
        %v3244 = vpop.f32.mrf.mxu0
        %v3245 = vadd.f32 0.0, %v3244
        %v3246 = vpop.f32.mrf.mxu0
        %v3247 = vadd.f32 0.0, %v3246
        %3248 = vmatprep.mubr.bf16.mxu0 %v3065
        %3249 = vmatmul.mubr.bf16.gmra.mxu0 %v3049
        %v3250 = vpop.f32.mrf.mxu0
        %v3251 = vadd.f32 0.0, %v3250
        %v3252 = vpop.f32.mrf.mxu0
        %v3253 = vadd.f32 0.0, %v3252
        %v3254 = vpop.f32.mrf.mxu0
        %v3255 = vadd.f32 0.0, %v3254
        %v3256 = vpop.f32.mrf.mxu0
        %v3257 = vadd.f32 0.0, %v3256
        %3258 = vdwg.mxu0
        %v3259 = vmul.f32 %v3101, %v3101
        %v3260 = vmul.f32 %v3105, %v3105
        %v3261 = vmul.f32 %v3111, %v3111
        %v3262 = vmul.f32 %v3115, %v3115
        %v3263 = vmul.f32 %v3121, %v3121
        %v3264 = vmul.f32 %v3125, %v3125
        %v3265 = vmul.f32 %v3131, %v3131
        %v3266 = vmul.f32 %v3135, %v3135
        %v3267 = vmul.f32 %v3141, %v3141
        %v3268 = vmul.f32 %v3145, %v3145
        %v3269 = vmul.f32 %v3151, %v3151
        %v3270 = vmul.f32 %v3155, %v3155
        %v3271 = vmul.f32 %v3161, %v3161
        %v3272 = vmul.f32 %v3165, %v3165
        %v3273 = vmul.f32 %v3171, %v3171
        %v3274 = vmul.f32 %v3175, %v3175
        %v3275 = vmul.f32 %v3181, %v3181
        %v3276 = vmul.f32 %v3185, %v3185
        %v3277 = vmul.f32 %v3191, %v3191
        %v3278 = vmul.f32 %v3195, %v3195
        %v3279 = vmul.f32 %v3201, %v3201
        %v3280 = vmul.f32 %v3205, %v3205
        %v3281 = vmul.f32 %v3211, %v3211
        %v3282 = vmul.f32 %v3215, %v3215
        %v3283 = vmul.f32 %v3221, %v3221
        %v3284 = vmul.f32 %v3225, %v3225
        %v3285 = vmul.f32 %v3231, %v3231
        %v3286 = vmul.f32 %v3235, %v3235
        %v3287 = vmul.f32 %v3241, %v3241
        %v3288 = vmul.f32 %v3245, %v3245
        %v3289 = vmul.f32 %v3251, %v3251
        %v3290 = vmul.f32 %v3255, %v3255
        %v3291 = vsub.f32 %v3103, %v3259
        %v3292 = vsub.f32 %v3107, %v3260
        %v3293 = vsub.f32 %v3113, %v3261
        %v3294 = vsub.f32 %v3117, %v3262
        %v3295 = vsub.f32 %v3123, %v3263
        %v3296 = vsub.f32 %v3127, %v3264
        %v3297 = vsub.f32 %v3133, %v3265
        %v3298 = vsub.f32 %v3137, %v3266
        %v3299 = vsub.f32 %v3143, %v3267
        %v3300 = vsub.f32 %v3147, %v3268
        %v3301 = vsub.f32 %v3153, %v3269
        %v3302 = vsub.f32 %v3157, %v3270
        %v3303 = vsub.f32 %v3163, %v3271
        %v3304 = vsub.f32 %v3167, %v3272
        %v3305 = vsub.f32 %v3173, %v3273
        %v3306 = vsub.f32 %v3177, %v3274
        %v3307 = vsub.f32 %v3183, %v3275
        %v3308 = vsub.f32 %v3187, %v3276
        %v3309 = vsub.f32 %v3193, %v3277
        %v3310 = vsub.f32 %v3197, %v3278
        %v3311 = vsub.f32 %v3203, %v3279
        %v3312 = vsub.f32 %v3207, %v3280
        %v3313 = vsub.f32 %v3213, %v3281
        %v3314 = vsub.f32 %v3217, %v3282
        %v3315 = vsub.f32 %v3223, %v3283
        %v3316 = vsub.f32 %v3227, %v3284
        %v3317 = vsub.f32 %v3233, %v3285
        %v3318 = vsub.f32 %v3237, %v3286
        %v3319 = vsub.f32 %v3243, %v3287
        %v3320 = vsub.f32 %v3247, %v3288
        %v3321 = vsub.f32 %v3253, %v3289
        %v3322 = vsub.f32 %v3257, %v3290
        %v3323 = vmax.f32 %v3291, 0.0
        %v3324 = vmax.f32 %v3292, 0.0
        %v3325 = vmax.f32 %v3293, 0.0
        %v3326 = vmax.f32 %v3294, 0.0
        %v3327 = vmax.f32 %v3295, 0.0
        %v3328 = vmax.f32 %v3296, 0.0
        %v3329 = vmax.f32 %v3297, 0.0
        %v3330 = vmax.f32 %v3298, 0.0
        %v3331 = vmax.f32 %v3299, 0.0
        %v3332 = vmax.f32 %v3300, 0.0
        %v3333 = vmax.f32 %v3301, 0.0
        %v3334 = vmax.f32 %v3302, 0.0
        %v3335 = vmax.f32 %v3303, 0.0
        %v3336 = vmax.f32 %v3304, 0.0
        %v3337 = vmax.f32 %v3305, 0.0
        %v3338 = vmax.f32 %v3306, 0.0
        %v3339 = vmax.f32 %v3307, 0.0
        %v3340 = vmax.f32 %v3308, 0.0
        %v3341 = vmax.f32 %v3309, 0.0
        %v3342 = vmax.f32 %v3310, 0.0
        %v3343 = vmax.f32 %v3311, 0.0
        %v3344 = vmax.f32 %v3312, 0.0
        %v3345 = vmax.f32 %v3313, 0.0
        %v3346 = vmax.f32 %v3314, 0.0
        %v3347 = vmax.f32 %v3315, 0.0
        %v3348 = vmax.f32 %v3316, 0.0
        %v3349 = vmax.f32 %v3317, 0.0
        %v3350 = vmax.f32 %v3318, 0.0
        %v3351 = vmax.f32 %v3319, 0.0
        %v3352 = vmax.f32 %v3320, 0.0
        %v3353 = vmax.f32 %v3321, 0.0
        %v3354 = vmax.f32 %v3322, 0.0
        %v3355 = vld [vmem:[%s4 + $0x8] sm:$0x1]
        %v3356 = vadd.f32 %v3323, 1e-05
        %v3357 = vadd.f32 %v3324, 1e-05
        %v3358 = vadd.f32 %v3325, 1e-05
        %v3359 = vadd.f32 %v3326, 1e-05
        %v3360 = vadd.f32 %v3327, 1e-05
        %v3361 = vadd.f32 %v3328, 1e-05
        %v3362 = vadd.f32 %v3329, 1e-05
        %v3363 = vadd.f32 %v3330, 1e-05
        %v3364 = vadd.f32 %v3331, 1e-05
        %v3365 = vadd.f32 %v3332, 1e-05
        %v3366 = vadd.f32 %v3333, 1e-05
        %v3367 = vadd.f32 %v3334, 1e-05
        %v3368 = vadd.f32 %v3335, 1e-05
        %v3369 = vadd.f32 %v3336, 1e-05
        %v3370 = vadd.f32 %v3337, 1e-05
        %v3371 = vadd.f32 %v3338, 1e-05
        %v3372 = vadd.f32 %v3339, 1e-05
        %v3373 = vadd.f32 %v3340, 1e-05
        %v3374 = vadd.f32 %v3341, 1e-05
        %v3375 = vadd.f32 %v3342, 1e-05
        %v3376 = vadd.f32 %v3343, 1e-05
        %v3377 = vadd.f32 %v3344, 1e-05
        %v3378 = vadd.f32 %v3345, 1e-05
        %v3379 = vadd.f32 %v3346, 1e-05
        %v3380 = vadd.f32 %v3347, 1e-05
        %v3381 = vadd.f32 %v3348, 1e-05
        %v3382 = vadd.f32 %v3349, 1e-05
        %v3383 = vadd.f32 %v3350, 1e-05
        %v3384 = vadd.f32 %v3351, 1e-05
        %v3385 = vadd.f32 %v3352, 1e-05
        %v3386 = vadd.f32 %v3353, 1e-05
        %v3387 = vadd.f32 %v3354, 1e-05
        %v3388 = vrsqrt.pop %v3356
        %v3389 = vrsqrt.pop %v3357
        %v3390 = vrsqrt.pop %v3358
        %v3391 = vrsqrt.pop %v3359
        %v3392 = vrsqrt.pop %v3360
        %v3393 = vrsqrt.pop %v3361
        %v3394 = vrsqrt.pop %v3362
        %v3395 = vrsqrt.pop %v3363
        %v3396 = vrsqrt.pop %v3364
        %v3397 = vrsqrt.pop %v3365
        %v3398 = vrsqrt.pop %v3366
        %v3399 = vrsqrt.pop %v3367
        %v3400 = vrsqrt.pop %v3368
        %v3401 = vrsqrt.pop %v3369
        %v3402 = vrsqrt.pop %v3370
        %v3403 = vrsqrt.pop %v3371
        %v3404 = vrsqrt.pop %v3372
        %v3405 = vrsqrt.pop %v3373
        %v3406 = vrsqrt.pop %v3374
        %v3407 = vrsqrt.pop %v3375
        %v3408 = vrsqrt.pop %v3376
        %v3409 = vrsqrt.pop %v3377
        %v3410 = vrsqrt.pop %v3378
        %v3411 = vrsqrt.pop %v3379
        %v3412 = vrsqrt.pop %v3380
        %v3413 = vrsqrt.pop %v3381
        %v3414 = vrsqrt.pop %v3382
        %v3415 = vrsqrt.pop %v3383
        %v3416 = vrsqrt.pop %v3384
        %v3417 = vrsqrt.pop %v3385
        %v3418 = vrsqrt.pop %v3386
        %v3419 = vrsqrt.pop %v3387
        %v3420 = vlaneseq
        %v3421 = vshrl.u32 %v3420, 7
        %v3422 = vsub.s32 0, %v3421
        %v3423 = vrot.slane %v3355, %v3422
        %v3424 = vmul.f32 %v3423, %v3388
        %v3425 = vmul.f32 %v3423, %v3389
        %v3426 = vmul.f32 %v3423, %v3390
        %v3427 = vmul.f32 %v3423, %v3391
        %v3428 = vmul.f32 %v3423, %v3392
        %v3429 = vmul.f32 %v3423, %v3393
        %v3430 = vmul.f32 %v3423, %v3394
        %v3431 = vmul.f32 %v3423, %v3395
        %v3432 = vmul.f32 %v3423, %v3396
        %v3433 = vmul.f32 %v3423, %v3397
        %v3434 = vmul.f32 %v3423, %v3398
        %v3435 = vmul.f32 %v3423, %v3399
        %v3436 = vmul.f32 %v3423, %v3400
        %v3437 = vmul.f32 %v3423, %v3401
        %v3438 = vmul.f32 %v3423, %v3402
        %v3439 = vmul.f32 %v3423, %v3403
        %v3440 = vmul.f32 %v3423, %v3404
        %v3441 = vmul.f32 %v3423, %v3405
        %v3442 = vmul.f32 %v3423, %v3406
        %v3443 = vmul.f32 %v3423, %v3407
        %v3444 = vmul.f32 %v3423, %v3408
        %v3445 = vmul.f32 %v3423, %v3409
        %v3446 = vmul.f32 %v3423, %v3410
        %v3447 = vmul.f32 %v3423, %v3411
        %v3448 = vmul.f32 %v3423, %v3412
        %v3449 = vmul.f32 %v3423, %v3413
        %v3450 = vmul.f32 %v3423, %v3414
        %v3451 = vmul.f32 %v3423, %v3415
        %v3452 = vmul.f32 %v3423, %v3416
        %v3453 = vmul.f32 %v3423, %v3417
        %v3454 = vmul.f32 %v3423, %v3418
        %v3455 = vmul.f32 %v3423, %v3419
        %v3456 = vld [vmem:[%s4 + $0x9] sm:$0x1]
        %v3457 = vmul.f32 %v3101, %v3424
        %v3458 = vmul.f32 %v3105, %v3425
        %v3459 = vmul.f32 %v3111, %v3426
        %v3460 = vmul.f32 %v3115, %v3427
        %v3461 = vmul.f32 %v3121, %v3428
        %v3462 = vmul.f32 %v3125, %v3429
        %v3463 = vmul.f32 %v3131, %v3430
        %v3464 = vmul.f32 %v3135, %v3431
        %v3465 = vmul.f32 %v3141, %v3432
        %v3466 = vmul.f32 %v3145, %v3433
        %v3467 = vmul.f32 %v3151, %v3434
        %v3468 = vmul.f32 %v3155, %v3435
        %v3469 = vmul.f32 %v3161, %v3436
        %v3470 = vmul.f32 %v3165, %v3437
        %v3471 = vmul.f32 %v3171, %v3438
        %v3472 = vmul.f32 %v3175, %v3439
        %v3473 = vmul.f32 %v3181, %v3440
        %v3474 = vmul.f32 %v3185, %v3441
        %v3475 = vmul.f32 %v3191, %v3442
        %v3476 = vmul.f32 %v3195, %v3443
        %v3477 = vmul.f32 %v3201, %v3444
        %v3478 = vmul.f32 %v3205, %v3445
        %v3479 = vmul.f32 %v3211, %v3446
        %v3480 = vmul.f32 %v3215, %v3447
        %v3481 = vmul.f32 %v3221, %v3448
        %v3482 = vmul.f32 %v3225, %v3449
        %v3483 = vmul.f32 %v3231, %v3450
        %v3484 = vmul.f32 %v3235, %v3451
        %v3485 = vmul.f32 %v3241, %v3452
        %v3486 = vmul.f32 %v3245, %v3453
        %v3487 = vmul.f32 %v3251, %v3454
        %v3488 = vmul.f32 %v3255, %v3455
        %v3489 = vlaneseq
        %v3490 = vshrl.u32 %v3489, 7
        %v3491 = vsub.s32 0, %v3490
        %v3492 = vrot.slane %v3456, %v3491
        %v3493 = vsub.f32 %v3492, %v3457
        %v3494 = vsub.f32 %v3492, %v3458
        %v3495 = vsub.f32 %v3492, %v3459
        %v3496 = vsub.f32 %v3492, %v3460
        %v3497 = vsub.f32 %v3492, %v3461
        %v3498 = vsub.f32 %v3492, %v3462
        %v3499 = vsub.f32 %v3492, %v3463
        %v3500 = vsub.f32 %v3492, %v3464
        %v3501 = vsub.f32 %v3492, %v3465
        %v3502 = vsub.f32 %v3492, %v3466
        %v3503 = vsub.f32 %v3492, %v3467
        %v3504 = vsub.f32 %v3492, %v3468
        %v3505 = vsub.f32 %v3492, %v3469
        %v3506 = vsub.f32 %v3492, %v3470
        %v3507 = vsub.f32 %v3492, %v3471
        %v3508 = vsub.f32 %v3492, %v3472
        %v3509 = vsub.f32 %v3492, %v3473
        %v3510 = vsub.f32 %v3492, %v3474
        %v3511 = vsub.f32 %v3492, %v3475
        %v3512 = vsub.f32 %v3492, %v3476
        %v3513 = vsub.f32 %v3492, %v3477
        %v3514 = vsub.f32 %v3492, %v3478
        %v3515 = vsub.f32 %v3492, %v3479
        %v3516 = vsub.f32 %v3492, %v3480
        %v3517 = vsub.f32 %v3492, %v3481
        %v3518 = vsub.f32 %v3492, %v3482
        %v3519 = vsub.f32 %v3492, %v3483
        %v3520 = vsub.f32 %v3492, %v3484
        %v3521 = vsub.f32 %v3492, %v3485
        %v3522 = vsub.f32 %v3492, %v3486
        %v3523 = vsub.f32 %v3492, %v3487
        %v3524 = vsub.f32 %v3492, %v3488
        %v3525 = vunpack.c.l.bf16 %v3034
        %v3526 = vunpack.c.h.bf16 %v3034
        %v3527 = vunpack.c.l.bf16 %v3035
        %v3528 = vunpack.c.h.bf16 %v3035
        %v3529 = vunpack.c.l.bf16 %v3036
        %v3530 = vunpack.c.h.bf16 %v3036
        %v3531 = vunpack.c.l.bf16 %v3037
        %v3532 = vunpack.c.h.bf16 %v3037
        %v3533 = vunpack.c.l.bf16 %v3038
        %v3534 = vunpack.c.h.bf16 %v3038
        %v3535 = vunpack.c.l.bf16 %v3039
        %v3536 = vunpack.c.h.bf16 %v3039
        %v3537 = vunpack.c.l.bf16 %v3040
        %v3538 = vunpack.c.h.bf16 %v3040
        %v3539 = vunpack.c.l.bf16 %v3041
        %v3540 = vunpack.c.h.bf16 %v3041
        %v3541 = vunpack.c.l.bf16 %v3042
        %v3542 = vunpack.c.h.bf16 %v3042
        %v3543 = vunpack.c.l.bf16 %v3043
        %v3544 = vunpack.c.h.bf16 %v3043
        %v3545 = vunpack.c.l.bf16 %v3044
        %v3546 = vunpack.c.h.bf16 %v3044
        %v3547 = vunpack.c.l.bf16 %v3045
        %v3548 = vunpack.c.h.bf16 %v3045
        %v3549 = vunpack.c.l.bf16 %v3046
        %v3550 = vunpack.c.h.bf16 %v3046
        %v3551 = vunpack.c.l.bf16 %v3047
        %v3552 = vunpack.c.h.bf16 %v3047
        %v3553 = vunpack.c.l.bf16 %v3048
        %v3554 = vunpack.c.h.bf16 %v3048
        %v3555 = vunpack.c.l.bf16 %v3049
        %v3556 = vunpack.c.h.bf16 %v3049
        %v3557 = vmul.f32 %v3525, %v3424
        %v3558 = vmul.f32 %v3526, %v3425
        %v3559 = vmul.f32 %v3527, %v3426
        %v3560 = vmul.f32 %v3528, %v3427
        %v3561 = vmul.f32 %v3529, %v3428
        %v3562 = vmul.f32 %v3530, %v3429
        %v3563 = vmul.f32 %v3531, %v3430
        %v3564 = vmul.f32 %v3532, %v3431
        %v3565 = vmul.f32 %v3533, %v3432
        %v3566 = vmul.f32 %v3534, %v3433
        %v3567 = vmul.f32 %v3535, %v3434
        %v3568 = vmul.f32 %v3536, %v3435
        %v3569 = vmul.f32 %v3537, %v3436
        %v3570 = vmul.f32 %v3538, %v3437
        %v3571 = vmul.f32 %v3539, %v3438
        %v3572 = vmul.f32 %v3540, %v3439
        %v3573 = vmul.f32 %v3541, %v3440
        %v3574 = vmul.f32 %v3542, %v3441
        %v3575 = vmul.f32 %v3543, %v3442
        %v3576 = vmul.f32 %v3544, %v3443
        %v3577 = vmul.f32 %v3545, %v3444
        %v3578 = vmul.f32 %v3546, %v3445
        %v3579 = vmul.f32 %v3547, %v3446
        %v3580 = vmul.f32 %v3548, %v3447
        %v3581 = vmul.f32 %v3549, %v3448
        %v3582 = vmul.f32 %v3550, %v3449
        %v3583 = vmul.f32 %v3551, %v3450
        %v3584 = vmul.f32 %v3552, %v3451
        %v3585 = vmul.f32 %v3553, %v3452
        %v3586 = vmul.f32 %v3554, %v3453
        %v3587 = vmul.f32 %v3555, %v3454
        %v3588 = vmul.f32 %v3556, %v3455
        %v3589 = vadd.f32 %v3557, %v3493
        %v3590 = vadd.f32 %v3558, %v3494
        %v3591 = vadd.f32 %v3559, %v3495
        %v3592 = vadd.f32 %v3560, %v3496
        %v3593 = vadd.f32 %v3561, %v3497
        %v3594 = vadd.f32 %v3562, %v3498
        %v3595 = vadd.f32 %v3563, %v3499
        %v3596 = vadd.f32 %v3564, %v3500
        %v3597 = vadd.f32 %v3565, %v3501
        %v3598 = vadd.f32 %v3566, %v3502
        %v3599 = vadd.f32 %v3567, %v3503
        %v3600 = vadd.f32 %v3568, %v3504
        %v3601 = vadd.f32 %v3569, %v3505
        %v3602 = vadd.f32 %v3570, %v3506
        %v3603 = vadd.f32 %v3571, %v3507
        %v3604 = vadd.f32 %v3572, %v3508
        %v3605 = vadd.f32 %v3573, %v3509
        %v3606 = vadd.f32 %v3574, %v3510
        %v3607 = vadd.f32 %v3575, %v3511
        %v3608 = vadd.f32 %v3576, %v3512
        %v3609 = vadd.f32 %v3577, %v3513
        %v3610 = vadd.f32 %v3578, %v3514
        %v3611 = vadd.f32 %v3579, %v3515
        %v3612 = vadd.f32 %v3580, %v3516
        %v3613 = vadd.f32 %v3581, %v3517
        %v3614 = vadd.f32 %v3582, %v3518
        %v3615 = vadd.f32 %v3583, %v3519
        %v3616 = vadd.f32 %v3584, %v3520
        %v3617 = vadd.f32 %v3585, %v3521
        %v3618 = vadd.f32 %v3586, %v3522
        %v3619 = vadd.f32 %v3587, %v3523
        %v3620 = vadd.f32 %v3588, %v3524
        %v3621 = vpack.c.bf16 %v3590, %v3589
        %v3622 = vpack.c.bf16 %v3592, %v3591
        %v3623 = vpack.c.bf16 %v3594, %v3593
        %v3624 = vpack.c.bf16 %v3596, %v3595
        %v3625 = vpack.c.bf16 %v3598, %v3597
        %v3626 = vpack.c.bf16 %v3600, %v3599
        %v3627 = vpack.c.bf16 %v3602, %v3601
        %v3628 = vpack.c.bf16 %v3604, %v3603
        %v3629 = vpack.c.bf16 %v3606, %v3605
        %v3630 = vpack.c.bf16 %v3608, %v3607
        %v3631 = vpack.c.bf16 %v3610, %v3609
        %v3632 = vpack.c.bf16 %v3612, %v3611
        %v3633 = vpack.c.bf16 %v3614, %v3613
        %v3634 = vpack.c.bf16 %v3616, %v3615
        %v3635 = vpack.c.bf16 %v3618, %v3617
        %v3636 = vpack.c.bf16 %v3620, %v3619
        %s3637 = scalar_lea.vmem [#allocation2], 256
        %v3638 = vld [vmem:[%s3637] sm:$0xf]
        %v3639 = vld [vmem:[%s3637 + $0x4] sm:$0xf]
        %v3640 = vld [vmem:[%s3637 + $0x8] sm:$0xf]
        %v3641 = vld [vmem:[%s3637 + $0xc] sm:$0xf]
        %v3642 = vld [vmem:[%s3637 + $0x10] sm:$0xf]
        %v3643 = vld [vmem:[%s3637 + $0x14] sm:$0xf]
        %v3644 = vld [vmem:[%s3637 + $0x18] sm:$0xf]
        %v3645 = vld [vmem:[%s3637 + $0x1c] sm:$0xf]
        %v3646 = vld [vmem:[%s3637 + $0x20] sm:$0xf]
        %v3647 = vld [vmem:[%s3637 + $0x24] sm:$0xf]
        %v3648 = vld [vmem:[%s3637 + $0x28] sm:$0xf]
        %v3649 = vld [vmem:[%s3637 + $0x2c] sm:$0xf]
        %v3650 = vld [vmem:[%s3637 + $0x30] sm:$0xf]
        %v3651 = vld [vmem:[%s3637 + $0x34] sm:$0xf]
        %v3652 = vld [vmem:[%s3637 + $0x38] sm:$0xf]
        %v3653 = vld [vmem:[%s3637 + $0x3c] sm:$0xf]
        %v3654 = vld [vmem:[%s4 + $0xa] sm:$0x1]
        %v3655 = vlaneseq
        %v3656 = vshrl.u32 %v3655, 7
        %v3657 = vsub.s32 0, %v3656
        %v3658 = vrot.slane %v3654, %v3657
        %v3675 = vunpack.c.l.b16 %v3638
        %v3676 = vunpack.c.l.b16 %v3639
        %v3677 = vunpack.c.l.b16 %v3640
        %v3678 = vunpack.c.l.b16 %v3641
        %v3679 = vunpack.c.l.b16 %v3642
        %v3680 = vunpack.c.l.b16 %v3643
        %v3681 = vunpack.c.l.b16 %v3644
        %v3682 = vunpack.c.l.b16 %v3645
        %v3683 = vunpack.c.l.b16 %v3646
        %v3684 = vunpack.c.l.b16 %v3647
        %v3685 = vunpack.c.l.b16 %v3648
        %v3686 = vunpack.c.l.b16 %v3649
        %v3687 = vunpack.c.l.b16 %v3650
        %v3688 = vunpack.c.l.b16 %v3651
        %v3689 = vunpack.c.l.b16 %v3652
        %v3690 = vunpack.c.l.b16 %v3653
        %v3691 = vpack.c.b16 %v3676, %v3675
        %v3692 = vpack.c.b16 %v3678, %v3677
        %v3693 = vpack.c.b16 %v3680, %v3679
        %v3694 = vpack.c.b16 %v3682, %v3681
        %v3695 = vpack.c.b16 %v3684, %v3683
        %v3696 = vpack.c.b16 %v3686, %v3685
        %v3697 = vpack.c.b16 %v3688, %v3687
        %v3698 = vpack.c.b16 %v3690, %v3689
        %3707 = vmatprep.subr.bf16.mxu0 0
        %3708 = vmatpush1.bf16.msra.mxu0 %v3698
        %3709 = vmatprep.subr.bf16.mxu0 0
        %3710 = vmatpush1.bf16.msra.mxu0 %v3697
        %3711 = vmatprep.subr.bf16.mxu0 0
        %3712 = vmatpush1.bf16.msra.mxu0 %v3696
        %3713 = vmatprep.subr.bf16.mxu0 0
        %3714 = vmatpush1.bf16.msra.mxu0 %v3695
        %3715 = vmatprep.subr.bf16.mxu0 0
        %3716 = vmatpush1.bf16.msra.mxu0 %v3694
        %3717 = vmatprep.subr.bf16.mxu0 0
        %3718 = vmatpush1.bf16.msra.mxu0 %v3693
        %3719 = vmatprep.subr.bf16.mxu0 0
        %3720 = vmatpush1.bf16.msra.mxu0 %v3692
        %3721 = vmatprep.subr.bf16.mxu0 0
        %3722 = vmatpush1.bf16.msra.mxu0 %v3691
        %3723 = vmatprep.subr.bf16.mxu0 0
        %3724 = vmatpush2.bf16.msra.mxu0 0
        %3725 = vmatprep.subr.bf16.mxu0 0
        %3726 = vmatpush2.bf16.msra.mxu0 0
        %3727 = vmatprep.subr.bf16.mxu0 0
        %3728 = vmatpush2.bf16.msra.mxu0 0
        %3729 = vmatprep.subr.bf16.mxu0 0
        %3730 = vmatpush2.bf16.msra.mxu0 0
        %3731 = vmatprep.subr.bf16.mxu0 0
        %3732 = vmatpush2.bf16.msra.mxu0 0
        %3733 = vmatprep.subr.bf16.mxu0 0
        %3734 = vmatpush2.bf16.msra.mxu0 0
        %3735 = vmatprep.subr.bf16.mxu0 0
        %3736 = vmatpush2.bf16.msra.mxu0 0
        %3737 = vmatprep.subr.bf16.mxu0 0
        %3738 = vmatpush2.bf16.msra.mxu0 0
        %3739 = vmatprep.mubr.bf16.mxu0 0
        %3740 = vmatmul.mubr.bf16.gmra.mxu0 %v3621
        %v3741 = vpop.f32.mrf.mxu0
        %v3742 = vadd.f32 %v3658, %v3741
        %v3743 = vpop.f32.mrf.mxu0
        %v3744 = vpop.f32.mrf.mxu0
        %v3745 = vadd.f32 %v3658, %v3744
        %v3746 = vpop.f32.mrf.mxu0
        %3747 = vmatprep.mubr.bf16.mxu0 0
        %3748 = vmatmul.mubr.bf16.gmra.mxu0 %v3622
        %v3749 = vpop.f32.mrf.mxu0
        %v3750 = vadd.f32 %v3658, %v3749
        %v3751 = vpop.f32.mrf.mxu0
        %v3752 = vpop.f32.mrf.mxu0
        %v3753 = vadd.f32 %v3658, %v3752
        %v3754 = vpop.f32.mrf.mxu0
        %3755 = vmatprep.mubr.bf16.mxu0 0
        %3756 = vmatmul.mubr.bf16.gmra.mxu0 %v3623
        %v3757 = vpop.f32.mrf.mxu0
        %v3758 = vadd.f32 %v3658, %v3757
        %v3759 = vpop.f32.mrf.mxu0
        %v3760 = vpop.f32.mrf.mxu0
        %v3761 = vadd.f32 %v3658, %v3760
        %v3762 = vpop.f32.mrf.mxu0
        %3763 = vmatprep.mubr.bf16.mxu0 0
        %3764 = vmatmul.mubr.bf16.gmra.mxu0 %v3624
        %v3765 = vpop.f32.mrf.mxu0
        %v3766 = vadd.f32 %v3658, %v3765
        %v3767 = vpop.f32.mrf.mxu0
        %v3768 = vpop.f32.mrf.mxu0
        %v3769 = vadd.f32 %v3658, %v3768
        %v3770 = vpop.f32.mrf.mxu0
        %3771 = vmatprep.mubr.bf16.mxu0 0
        %3772 = vmatmul.mubr.bf16.gmra.mxu0 %v3625
        %v3773 = vpop.f32.mrf.mxu0
        %v3774 = vadd.f32 %v3658, %v3773
        %v3775 = vpop.f32.mrf.mxu0
        %v3776 = vpop.f32.mrf.mxu0
        %v3777 = vadd.f32 %v3658, %v3776
        %v3778 = vpop.f32.mrf.mxu0
        %3779 = vmatprep.mubr.bf16.mxu0 0
        %3780 = vmatmul.mubr.bf16.gmra.mxu0 %v3626
        %v3781 = vpop.f32.mrf.mxu0
        %v3782 = vadd.f32 %v3658, %v3781
        %v3783 = vpop.f32.mrf.mxu0
        %v3784 = vpop.f32.mrf.mxu0
        %v3785 = vadd.f32 %v3658, %v3784
        %v3786 = vpop.f32.mrf.mxu0
        %3787 = vmatprep.mubr.bf16.mxu0 0
        %3788 = vmatmul.mubr.bf16.gmra.mxu0 %v3627
        %v3789 = vpop.f32.mrf.mxu0
        %v3790 = vadd.f32 %v3658, %v3789
        %v3791 = vpop.f32.mrf.mxu0
        %v3792 = vpop.f32.mrf.mxu0
        %v3793 = vadd.f32 %v3658, %v3792
        %v3794 = vpop.f32.mrf.mxu0
        %3795 = vmatprep.mubr.bf16.mxu0 0
        %3796 = vmatmul.mubr.bf16.gmra.mxu0 %v3628
        %v3797 = vpop.f32.mrf.mxu0
        %v3798 = vadd.f32 %v3658, %v3797
        %v3799 = vpop.f32.mrf.mxu0
        %v3800 = vpop.f32.mrf.mxu0
        %v3801 = vadd.f32 %v3658, %v3800
        %v3802 = vpop.f32.mrf.mxu0
        %3803 = vmatprep.mubr.bf16.mxu0 0
        %3804 = vmatmul.mubr.bf16.gmra.mxu0 %v3629
        %v3805 = vpop.f32.mrf.mxu0
        %v3806 = vadd.f32 %v3658, %v3805
        %v3807 = vpop.f32.mrf.mxu0
        %v3808 = vpop.f32.mrf.mxu0
        %v3809 = vadd.f32 %v3658, %v3808
        %v3810 = vpop.f32.mrf.mxu0
        %3811 = vmatprep.mubr.bf16.mxu0 0
        %3812 = vmatmul.mubr.bf16.gmra.mxu0 %v3630
        %v3813 = vpop.f32.mrf.mxu0
        %v3814 = vadd.f32 %v3658, %v3813
        %v3815 = vpop.f32.mrf.mxu0
        %v3816 = vpop.f32.mrf.mxu0
        %v3817 = vadd.f32 %v3658, %v3816
        %v3818 = vpop.f32.mrf.mxu0
        %3819 = vmatprep.mubr.bf16.mxu0 0
        %3820 = vmatmul.mubr.bf16.gmra.mxu0 %v3631
        %v3821 = vpop.f32.mrf.mxu0
        %v3822 = vadd.f32 %v3658, %v3821
        %v3823 = vpop.f32.mrf.mxu0
        %v3824 = vpop.f32.mrf.mxu0
        %v3825 = vadd.f32 %v3658, %v3824
        %v3826 = vpop.f32.mrf.mxu0
        %3827 = vmatprep.mubr.bf16.mxu0 0
        %3828 = vmatmul.mubr.bf16.gmra.mxu0 %v3632
        %v3829 = vpop.f32.mrf.mxu0
        %v3830 = vadd.f32 %v3658, %v3829
        %v3831 = vpop.f32.mrf.mxu0
        %v3832 = vpop.f32.mrf.mxu0
        %v3833 = vadd.f32 %v3658, %v3832
        %v3834 = vpop.f32.mrf.mxu0
        %3835 = vmatprep.mubr.bf16.mxu0 0
        %3836 = vmatmul.mubr.bf16.gmra.mxu0 %v3633
        %v3837 = vpop.f32.mrf.mxu0
        %v3838 = vadd.f32 %v3658, %v3837
        %v3839 = vpop.f32.mrf.mxu0
        %v3840 = vpop.f32.mrf.mxu0
        %v3841 = vadd.f32 %v3658, %v3840
        %v3842 = vpop.f32.mrf.mxu0
        %3843 = vmatprep.mubr.bf16.mxu0 0
        %3844 = vmatmul.mubr.bf16.gmra.mxu0 %v3634
        %v3845 = vpop.f32.mrf.mxu0
        %v3846 = vadd.f32 %v3658, %v3845
        %v3847 = vpop.f32.mrf.mxu0
        %v3848 = vpop.f32.mrf.mxu0
        %v3849 = vadd.f32 %v3658, %v3848
        %v3850 = vpop.f32.mrf.mxu0
        %3851 = vmatprep.mubr.bf16.mxu0 0
        %3852 = vmatmul.mubr.bf16.gmra.mxu0 %v3635
        %v3853 = vpop.f32.mrf.mxu0
        %v3854 = vadd.f32 %v3658, %v3853
        %v3855 = vpop.f32.mrf.mxu0
        %v3856 = vpop.f32.mrf.mxu0
        %v3857 = vadd.f32 %v3658, %v3856
        %v3858 = vpop.f32.mrf.mxu0
        %3859 = vmatprep.mubr.bf16.mxu0 0
        %3860 = vmatmul.mubr.bf16.gmra.mxu0 %v3636
        %v3861 = vpop.f32.mrf.mxu0
        %v3862 = vadd.f32 %v3658, %v3861
        %v3863 = vpop.f32.mrf.mxu0
        %v3864 = vpop.f32.mrf.mxu0
        %v3865 = vadd.f32 %v3658, %v3864
        %v3866 = vpop.f32.mrf.mxu0
        %3867 = vdwg.mxu0
        %v3868 = vpack.c.bf16 %v3745, %v3742
        %v3869 = vpack.c.bf16 %v3753, %v3750
        %v3870 = vpack.c.bf16 %v3761, %v3758
        %v3871 = vpack.c.bf16 %v3769, %v3766
        %v3872 = vpack.c.bf16 %v3777, %v3774
        %v3873 = vpack.c.bf16 %v3785, %v3782
        %v3874 = vpack.c.bf16 %v3793, %v3790
        %v3875 = vpack.c.bf16 %v3801, %v3798
        %v3876 = vpack.c.bf16 %v3809, %v3806
        %v3877 = vpack.c.bf16 %v3817, %v3814
        %v3878 = vpack.c.bf16 %v3825, %v3822
        %v3879 = vpack.c.bf16 %v3833, %v3830
        %v3880 = vpack.c.bf16 %v3841, %v3838
        %v3881 = vpack.c.bf16 %v3849, %v3846
        %v3882 = vpack.c.bf16 %v3857, %v3854
        %v3883 = vpack.c.bf16 %v3865, %v3862
        %v3884 = vxor.u32 %v3868, 2147516416
        %v3885 = vxor.u32 %v3869, 2147516416
        %v3886 = vxor.u32 %v3870, 2147516416
        %v3887 = vxor.u32 %v3871, 2147516416
        %v3888 = vxor.u32 %v3872, 2147516416
        %v3889 = vxor.u32 %v3873, 2147516416
        %v3890 = vxor.u32 %v3874, 2147516416
        %v3891 = vxor.u32 %v3875, 2147516416
        %v3892 = vxor.u32 %v3876, 2147516416
        %v3893 = vxor.u32 %v3877, 2147516416
        %v3894 = vxor.u32 %v3878, 2147516416
        %v3895 = vxor.u32 %v3879, 2147516416
        %v3896 = vxor.u32 %v3880, 2147516416
        %v3897 = vxor.u32 %v3881, 2147516416
        %v3898 = vxor.u32 %v3882, 2147516416
        %v3899 = vxor.u32 %v3883, 2147516416
        %v3901 = vmul.bf16 %v3884, 1069105081
        %v3902 = vpow.bf16.pop %v3901
        %v3904 = vmul.bf16 %v3885, 1069105081
        %v3905 = vpow.bf16.pop %v3904
        %v3907 = vmul.bf16 %v3886, 1069105081
        %v3908 = vpow.bf16.pop %v3907
        %v3910 = vmul.bf16 %v3887, 1069105081
        %v3911 = vpow.bf16.pop %v3910
        %v3913 = vmul.bf16 %v3888, 1069105081
        %v3914 = vpow.bf16.pop %v3913
        %v3916 = vmul.bf16 %v3889, 1069105081
        %v3917 = vpow.bf16.pop %v3916
        %v3919 = vmul.bf16 %v3890, 1069105081
        %v3920 = vpow.bf16.pop %v3919
        %v3922 = vmul.bf16 %v3891, 1069105081
        %v3923 = vpow.bf16.pop %v3922
        %v3925 = vmul.bf16 %v3892, 1069105081
        %v3926 = vpow.bf16.pop %v3925
        %v3928 = vmul.bf16 %v3893, 1069105081
        %v3929 = vpow.bf16.pop %v3928
        %v3931 = vmul.bf16 %v3894, 1069105081
        %v3932 = vpow.bf16.pop %v3931
        %v3934 = vmul.bf16 %v3895, 1069105081
        %v3935 = vpow.bf16.pop %v3934
        %v3937 = vmul.bf16 %v3896, 1069105081
        %v3938 = vpow.bf16.pop %v3937
        %v3940 = vmul.bf16 %v3897, 1069105081
        %v3941 = vpow.bf16.pop %v3940
        %v3943 = vmul.bf16 %v3898, 1069105081
        %v3944 = vpow.bf16.pop %v3943
        %v3946 = vmul.bf16 %v3899, 1069105081
        %v3947 = vpow.bf16.pop %v3946
        %v3948 = vadd.bf16 %v3902, 1065369472
        %v3949 = vadd.bf16 %v3905, 1065369472
        %v3950 = vadd.bf16 %v3908, 1065369472
        %v3951 = vadd.bf16 %v3911, 1065369472
        %v3952 = vadd.bf16 %v3914, 1065369472
        %v3953 = vadd.bf16 %v3917, 1065369472
        %v3954 = vadd.bf16 %v3920, 1065369472
        %v3955 = vadd.bf16 %v3923, 1065369472
        %v3956 = vadd.bf16 %v3926, 1065369472
        %v3957 = vadd.bf16 %v3929, 1065369472
        %v3958 = vadd.bf16 %v3932, 1065369472
        %v3959 = vadd.bf16 %v3935, 1065369472
        %v3960 = vadd.bf16 %v3938, 1065369472
        %v3961 = vadd.bf16 %v3941, 1065369472
        %v3962 = vadd.bf16 %v3944, 1065369472
        %v3963 = vadd.bf16 %v3947, 1065369472
        %v3964 = vrcp.bf16.pop %v3948
        %v3965 = vmul.bf16 1065369472, %v3964
        %v3966 = vrcp.bf16.pop %v3949
        %v3967 = vmul.bf16 1065369472, %v3966
        %v3968 = vrcp.bf16.pop %v3950
        %v3969 = vmul.bf16 1065369472, %v3968
        %v3970 = vrcp.bf16.pop %v3951
        %v3971 = vmul.bf16 1065369472, %v3970
        %v3972 = vrcp.bf16.pop %v3952
        %v3973 = vmul.bf16 1065369472, %v3972
        %v3974 = vrcp.bf16.pop %v3953
        %v3975 = vmul.bf16 1065369472, %v3974
        %v3976 = vrcp.bf16.pop %v3954
        %v3977 = vmul.bf16 1065369472, %v3976
        %v3978 = vrcp.bf16.pop %v3955
        %v3979 = vmul.bf16 1065369472, %v3978
        %v3980 = vrcp.bf16.pop %v3956
        %v3981 = vmul.bf16 1065369472, %v3980
        %v3982 = vrcp.bf16.pop %v3957
        %v3983 = vmul.bf16 1065369472, %v3982
        %v3984 = vrcp.bf16.pop %v3958
        %v3985 = vmul.bf16 1065369472, %v3984
        %v3986 = vrcp.bf16.pop %v3959
        %v3987 = vmul.bf16 1065369472, %v3986
        %v3988 = vrcp.bf16.pop %v3960
        %v3989 = vmul.bf16 1065369472, %v3988
        %v3990 = vrcp.bf16.pop %v3961
        %v3991 = vmul.bf16 1065369472, %v3990
        %v3992 = vrcp.bf16.pop %v3962
        %v3993 = vmul.bf16 1065369472, %v3992
        %v3994 = vrcp.bf16.pop %v3963
        %v3995 = vmul.bf16 1065369472, %v3994
        %v3996 = vmul.bf16 %v3868, %v3965
        %v3997 = vmul.bf16 %v3869, %v3967
        %v3998 = vmul.bf16 %v3870, %v3969
        %v3999 = vmul.bf16 %v3871, %v3971
        %v4000 = vmul.bf16 %v3872, %v3973
        %v4001 = vmul.bf16 %v3873, %v3975
        %v4002 = vmul.bf16 %v3874, %v3977
        %v4003 = vmul.bf16 %v3875, %v3979
        %v4004 = vmul.bf16 %v3876, %v3981
        %v4005 = vmul.bf16 %v3877, %v3983
        %v4006 = vmul.bf16 %v3878, %v3985
        %v4007 = vmul.bf16 %v3879, %v3987
        %v4008 = vmul.bf16 %v3880, %v3989
        %v4009 = vmul.bf16 %v3881, %v3991
        %v4010 = vmul.bf16 %v3882, %v3993
        %v4011 = vmul.bf16 %v3883, %v3995
        %s4012 = scalar_lea.vmem [#allocation2], 320
        %v4013 = vld [vmem:[%s4012] sm:$0xf]
        %v4014 = vld [vmem:[%s4012 + $0x4] sm:$0xf]
        %v4015 = vld [vmem:[%s4012 + $0x8] sm:$0xf]
        %v4016 = vld [vmem:[%s4012 + $0xc] sm:$0xf]
        %v4017 = vld [vmem:[%s4012 + $0x10] sm:$0xf]
        %v4018 = vld [vmem:[%s4012 + $0x14] sm:$0xf]
        %v4019 = vld [vmem:[%s4012 + $0x18] sm:$0xf]
        %v4020 = vld [vmem:[%s4012 + $0x1c] sm:$0xf]
        %v4021 = vld [vmem:[%s4012 + $0x20] sm:$0xf]
        %v4022 = vld [vmem:[%s4012 + $0x24] sm:$0xf]
        %v4023 = vld [vmem:[%s4012 + $0x28] sm:$0xf]
        %v4024 = vld [vmem:[%s4012 + $0x2c] sm:$0xf]
        %v4025 = vld [vmem:[%s4012 + $0x30] sm:$0xf]
        %v4026 = vld [vmem:[%s4012 + $0x34] sm:$0xf]
        %v4027 = vld [vmem:[%s4012 + $0x38] sm:$0xf]
        %v4028 = vld [vmem:[%s4012 + $0x3c] sm:$0xf]
        %v4029 = vld [vmem:[%s4 + $0xb] sm:$0x1]
        %v4030 = vlaneseq
        %v4031 = vshrl.u32 %v4030, 7
        %v4032 = vsub.s32 0, %v4031
        %v4033 = vrot.slane %v4029, %v4032
        %v4050 = vunpack.c.l.b16 %v4013
        %v4051 = vunpack.c.l.b16 %v4014
        %v4052 = vunpack.c.l.b16 %v4015
        %v4053 = vunpack.c.l.b16 %v4016
        %v4054 = vunpack.c.l.b16 %v4017
        %v4055 = vunpack.c.l.b16 %v4018
        %v4056 = vunpack.c.l.b16 %v4019
        %v4057 = vunpack.c.l.b16 %v4020
        %v4058 = vunpack.c.l.b16 %v4021
        %v4059 = vunpack.c.l.b16 %v4022
        %v4060 = vunpack.c.l.b16 %v4023
        %v4061 = vunpack.c.l.b16 %v4024
        %v4062 = vunpack.c.l.b16 %v4025
        %v4063 = vunpack.c.l.b16 %v4026
        %v4064 = vunpack.c.l.b16 %v4027
        %v4065 = vunpack.c.l.b16 %v4028
        %v4066 = vpack.c.b16 %v4051, %v4050
        %v4067 = vpack.c.b16 %v4053, %v4052
        %v4068 = vpack.c.b16 %v4055, %v4054
        %v4069 = vpack.c.b16 %v4057, %v4056
        %v4070 = vpack.c.b16 %v4059, %v4058
        %v4071 = vpack.c.b16 %v4061, %v4060
        %v4072 = vpack.c.b16 %v4063, %v4062
        %v4073 = vpack.c.b16 %v4065, %v4064
        %4082 = vmatprep.subr.bf16.mxu0 0
        %4083 = vmatpush1.bf16.msra.mxu0 %v4073
        %4084 = vmatprep.subr.bf16.mxu0 0
        %4085 = vmatpush1.bf16.msra.mxu0 %v4072
        %4086 = vmatprep.subr.bf16.mxu0 0
        %4087 = vmatpush1.bf16.msra.mxu0 %v4071
        %4088 = vmatprep.subr.bf16.mxu0 0
        %4089 = vmatpush1.bf16.msra.mxu0 %v4070
        %4090 = vmatprep.subr.bf16.mxu0 0
        %4091 = vmatpush1.bf16.msra.mxu0 %v4069
        %4092 = vmatprep.subr.bf16.mxu0 0
        %4093 = vmatpush1.bf16.msra.mxu0 %v4068
        %4094 = vmatprep.subr.bf16.mxu0 0
        %4095 = vmatpush1.bf16.msra.mxu0 %v4067
        %4096 = vmatprep.subr.bf16.mxu0 0
        %4097 = vmatpush1.bf16.msra.mxu0 %v4066
        %4098 = vmatprep.subr.bf16.mxu0 0
        %4099 = vmatpush2.bf16.msra.mxu0 0
        %4100 = vmatprep.subr.bf16.mxu0 0
        %4101 = vmatpush2.bf16.msra.mxu0 0
        %4102 = vmatprep.subr.bf16.mxu0 0
        %4103 = vmatpush2.bf16.msra.mxu0 0
        %4104 = vmatprep.subr.bf16.mxu0 0
        %4105 = vmatpush2.bf16.msra.mxu0 0
        %4106 = vmatprep.subr.bf16.mxu0 0
        %4107 = vmatpush2.bf16.msra.mxu0 0
        %4108 = vmatprep.subr.bf16.mxu0 0
        %4109 = vmatpush2.bf16.msra.mxu0 0
        %4110 = vmatprep.subr.bf16.mxu0 0
        %4111 = vmatpush2.bf16.msra.mxu0 0
        %4112 = vmatprep.subr.bf16.mxu0 0
        %4113 = vmatpush2.bf16.msra.mxu0 0
        %4114 = vmatprep.mubr.bf16.mxu0 0
        %4115 = vmatmul.mubr.bf16.gmra.mxu0 %v3996
        %v4116 = vpop.f32.mrf.mxu0
        %v4117 = vadd.f32 %v4033, %v4116
        %v4118 = vpop.f32.mrf.mxu0
        %v4119 = vpop.f32.mrf.mxu0
        %v4120 = vadd.f32 %v4033, %v4119
        %v4121 = vpop.f32.mrf.mxu0
        %4122 = vmatprep.mubr.bf16.mxu0 0
        %4123 = vmatmul.mubr.bf16.gmra.mxu0 %v3997
        %v4124 = vpop.f32.mrf.mxu0
        %v4125 = vadd.f32 %v4033, %v4124
        %v4126 = vpop.f32.mrf.mxu0
        %v4127 = vpop.f32.mrf.mxu0
        %v4128 = vadd.f32 %v4033, %v4127
        %v4129 = vpop.f32.mrf.mxu0
        %4130 = vmatprep.mubr.bf16.mxu0 0
        %4131 = vmatmul.mubr.bf16.gmra.mxu0 %v3998
        %v4132 = vpop.f32.mrf.mxu0
        %v4133 = vadd.f32 %v4033, %v4132
        %v4134 = vpop.f32.mrf.mxu0
        %v4135 = vpop.f32.mrf.mxu0
        %v4136 = vadd.f32 %v4033, %v4135
        %v4137 = vpop.f32.mrf.mxu0
        %4138 = vmatprep.mubr.bf16.mxu0 0
        %4139 = vmatmul.mubr.bf16.gmra.mxu0 %v3999
        %v4140 = vpop.f32.mrf.mxu0
        %v4141 = vadd.f32 %v4033, %v4140
        %v4142 = vpop.f32.mrf.mxu0
        %v4143 = vpop.f32.mrf.mxu0
        %v4144 = vadd.f32 %v4033, %v4143
        %v4145 = vpop.f32.mrf.mxu0
        %4146 = vmatprep.mubr.bf16.mxu0 0
        %4147 = vmatmul.mubr.bf16.gmra.mxu0 %v4000
        %v4148 = vpop.f32.mrf.mxu0
        %v4149 = vadd.f32 %v4033, %v4148
        %v4150 = vpop.f32.mrf.mxu0
        %v4151 = vpop.f32.mrf.mxu0
        %v4152 = vadd.f32 %v4033, %v4151
        %v4153 = vpop.f32.mrf.mxu0
        %4154 = vmatprep.mubr.bf16.mxu0 0
        %4155 = vmatmul.mubr.bf16.gmra.mxu0 %v4001
        %v4156 = vpop.f32.mrf.mxu0
        %v4157 = vadd.f32 %v4033, %v4156
        %v4158 = vpop.f32.mrf.mxu0
        %v4159 = vpop.f32.mrf.mxu0
        %v4160 = vadd.f32 %v4033, %v4159
        %v4161 = vpop.f32.mrf.mxu0
        %4162 = vmatprep.mubr.bf16.mxu0 0
        %4163 = vmatmul.mubr.bf16.gmra.mxu0 %v4002
        %v4164 = vpop.f32.mrf.mxu0
        %v4165 = vadd.f32 %v4033, %v4164
        %v4166 = vpop.f32.mrf.mxu0
        %v4167 = vpop.f32.mrf.mxu0
        %v4168 = vadd.f32 %v4033, %v4167
        %v4169 = vpop.f32.mrf.mxu0
        %4170 = vmatprep.mubr.bf16.mxu0 0
        %4171 = vmatmul.mubr.bf16.gmra.mxu0 %v4003
        %v4172 = vpop.f32.mrf.mxu0
        %v4173 = vadd.f32 %v4033, %v4172
        %v4174 = vpop.f32.mrf.mxu0
        %v4175 = vpop.f32.mrf.mxu0
        %v4176 = vadd.f32 %v4033, %v4175
        %v4177 = vpop.f32.mrf.mxu0
        %4178 = vmatprep.mubr.bf16.mxu0 0
        %4179 = vmatmul.mubr.bf16.gmra.mxu0 %v4004
        %v4180 = vpop.f32.mrf.mxu0
        %v4181 = vadd.f32 %v4033, %v4180
        %v4182 = vpop.f32.mrf.mxu0
        %v4183 = vpop.f32.mrf.mxu0
        %v4184 = vadd.f32 %v4033, %v4183
        %v4185 = vpop.f32.mrf.mxu0
        %4186 = vmatprep.mubr.bf16.mxu0 0
        %4187 = vmatmul.mubr.bf16.gmra.mxu0 %v4005
        %v4188 = vpop.f32.mrf.mxu0
        %v4189 = vadd.f32 %v4033, %v4188
        %v4190 = vpop.f32.mrf.mxu0
        %v4191 = vpop.f32.mrf.mxu0
        %v4192 = vadd.f32 %v4033, %v4191
        %v4193 = vpop.f32.mrf.mxu0
        %4194 = vmatprep.mubr.bf16.mxu0 0
        %4195 = vmatmul.mubr.bf16.gmra.mxu0 %v4006
        %v4196 = vpop.f32.mrf.mxu0
        %v4197 = vadd.f32 %v4033, %v4196
        %v4198 = vpop.f32.mrf.mxu0
        %v4199 = vpop.f32.mrf.mxu0
        %v4200 = vadd.f32 %v4033, %v4199
        %v4201 = vpop.f32.mrf.mxu0
        %4202 = vmatprep.mubr.bf16.mxu0 0
        %4203 = vmatmul.mubr.bf16.gmra.mxu0 %v4007
        %v4204 = vpop.f32.mrf.mxu0
        %v4205 = vadd.f32 %v4033, %v4204
        %v4206 = vpop.f32.mrf.mxu0
        %v4207 = vpop.f32.mrf.mxu0
        %v4208 = vadd.f32 %v4033, %v4207
        %v4209 = vpop.f32.mrf.mxu0
        %4210 = vmatprep.mubr.bf16.mxu0 0
        %4211 = vmatmul.mubr.bf16.gmra.mxu0 %v4008
        %v4212 = vpop.f32.mrf.mxu0
        %v4213 = vadd.f32 %v4033, %v4212
        %v4214 = vpop.f32.mrf.mxu0
        %v4215 = vpop.f32.mrf.mxu0
        %v4216 = vadd.f32 %v4033, %v4215
        %v4217 = vpop.f32.mrf.mxu0
        %4218 = vmatprep.mubr.bf16.mxu0 0
        %4219 = vmatmul.mubr.bf16.gmra.mxu0 %v4009
        %v4220 = vpop.f32.mrf.mxu0
        %v4221 = vadd.f32 %v4033, %v4220
        %v4222 = vpop.f32.mrf.mxu0
        %v4223 = vpop.f32.mrf.mxu0
        %v4224 = vadd.f32 %v4033, %v4223
        %v4225 = vpop.f32.mrf.mxu0
        %4226 = vmatprep.mubr.bf16.mxu0 0
        %4227 = vmatmul.mubr.bf16.gmra.mxu0 %v4010
        %v4228 = vpop.f32.mrf.mxu0
        %v4229 = vadd.f32 %v4033, %v4228
        %v4230 = vpop.f32.mrf.mxu0
        %v4231 = vpop.f32.mrf.mxu0
        %v4232 = vadd.f32 %v4033, %v4231
        %v4233 = vpop.f32.mrf.mxu0
        %4234 = vmatprep.mubr.bf16.mxu0 0
        %4235 = vmatmul.mubr.bf16.gmra.mxu0 %v4011
        %v4236 = vpop.f32.mrf.mxu0
        %v4237 = vadd.f32 %v4033, %v4236
        %v4238 = vpop.f32.mrf.mxu0
        %v4239 = vpop.f32.mrf.mxu0
        %v4240 = vadd.f32 %v4033, %v4239
        %v4241 = vpop.f32.mrf.mxu0
        %4242 = vdwg.mxu0
        %v4243 = vpack.c.bf16 %v4120, %v4117
        %v4244 = vpack.c.bf16 %v4128, %v4125
        %v4245 = vpack.c.bf16 %v4136, %v4133
        %v4246 = vpack.c.bf16 %v4144, %v4141
        %v4247 = vpack.c.bf16 %v4152, %v4149
        %v4248 = vpack.c.bf16 %v4160, %v4157
        %v4249 = vpack.c.bf16 %v4168, %v4165
        %v4250 = vpack.c.bf16 %v4176, %v4173
        %v4251 = vpack.c.bf16 %v4184, %v4181
        %v4252 = vpack.c.bf16 %v4192, %v4189
        %v4253 = vpack.c.bf16 %v4200, %v4197
        %v4254 = vpack.c.bf16 %v4208, %v4205
        %v4255 = vpack.c.bf16 %v4216, %v4213
        %v4256 = vpack.c.bf16 %v4224, %v4221
        %v4257 = vpack.c.bf16 %v4232, %v4229
        %v4258 = vpack.c.bf16 %v4240, %v4237
        %v4259 = vxor.u32 %v4243, 2147516416
        %v4260 = vxor.u32 %v4244, 2147516416
        %v4261 = vxor.u32 %v4245, 2147516416
        %v4262 = vxor.u32 %v4246, 2147516416
        %v4263 = vxor.u32 %v4247, 2147516416
        %v4264 = vxor.u32 %v4248, 2147516416
        %v4265 = vxor.u32 %v4249, 2147516416
        %v4266 = vxor.u32 %v4250, 2147516416
        %v4267 = vxor.u32 %v4251, 2147516416
        %v4268 = vxor.u32 %v4252, 2147516416
        %v4269 = vxor.u32 %v4253, 2147516416
        %v4270 = vxor.u32 %v4254, 2147516416
        %v4271 = vxor.u32 %v4255, 2147516416
        %v4272 = vxor.u32 %v4256, 2147516416
        %v4273 = vxor.u32 %v4257, 2147516416
        %v4274 = vxor.u32 %v4258, 2147516416
        %v4276 = vmul.bf16 %v4259, 1069105081
        %v4277 = vpow.bf16.pop %v4276
        %v4279 = vmul.bf16 %v4260, 1069105081
        %v4280 = vpow.bf16.pop %v4279
        %v4282 = vmul.bf16 %v4261, 1069105081
        %v4283 = vpow.bf16.pop %v4282
        %v4285 = vmul.bf16 %v4262, 1069105081
        %v4286 = vpow.bf16.pop %v4285
        %v4288 = vmul.bf16 %v4263, 1069105081
        %v4289 = vpow.bf16.pop %v4288
        %v4291 = vmul.bf16 %v4264, 1069105081
        %v4292 = vpow.bf16.pop %v4291
        %v4294 = vmul.bf16 %v4265, 1069105081
        %v4295 = vpow.bf16.pop %v4294
        %v4297 = vmul.bf16 %v4266, 1069105081
        %v4298 = vpow.bf16.pop %v4297
        %v4300 = vmul.bf16 %v4267, 1069105081
        %v4301 = vpow.bf16.pop %v4300
        %v4303 = vmul.bf16 %v4268, 1069105081
        %v4304 = vpow.bf16.pop %v4303
        %v4306 = vmul.bf16 %v4269, 1069105081
        %v4307 = vpow.bf16.pop %v4306
        %v4309 = vmul.bf16 %v4270, 1069105081
        %v4310 = vpow.bf16.pop %v4309
        %v4312 = vmul.bf16 %v4271, 1069105081
        %v4313 = vpow.bf16.pop %v4312
        %v4315 = vmul.bf16 %v4272, 1069105081
        %v4316 = vpow.bf16.pop %v4315
        %v4318 = vmul.bf16 %v4273, 1069105081
        %v4319 = vpow.bf16.pop %v4318
        %v4321 = vmul.bf16 %v4274, 1069105081
        %v4322 = vpow.bf16.pop %v4321
        %v4323 = vadd.bf16 %v4277, 1065369472
        %v4324 = vadd.bf16 %v4280, 1065369472
        %v4325 = vadd.bf16 %v4283, 1065369472
        %v4326 = vadd.bf16 %v4286, 1065369472
        %v4327 = vadd.bf16 %v4289, 1065369472
        %v4328 = vadd.bf16 %v4292, 1065369472
        %v4329 = vadd.bf16 %v4295, 1065369472
        %v4330 = vadd.bf16 %v4298, 1065369472
        %v4331 = vadd.bf16 %v4301, 1065369472
        %v4332 = vadd.bf16 %v4304, 1065369472
        %v4333 = vadd.bf16 %v4307, 1065369472
        %v4334 = vadd.bf16 %v4310, 1065369472
        %v4335 = vadd.bf16 %v4313, 1065369472
        %v4336 = vadd.bf16 %v4316, 1065369472
        %v4337 = vadd.bf16 %v4319, 1065369472
        %v4338 = vadd.bf16 %v4322, 1065369472
        %v4339 = vrcp.bf16.pop %v4323
        %v4340 = vmul.bf16 1065369472, %v4339
        %v4341 = vrcp.bf16.pop %v4324
        %v4342 = vmul.bf16 1065369472, %v4341
        %v4343 = vrcp.bf16.pop %v4325
        %v4344 = vmul.bf16 1065369472, %v4343
        %v4345 = vrcp.bf16.pop %v4326
        %v4346 = vmul.bf16 1065369472, %v4345
        %v4347 = vrcp.bf16.pop %v4327
        %v4348 = vmul.bf16 1065369472, %v4347
        %v4349 = vrcp.bf16.pop %v4328
        %v4350 = vmul.bf16 1065369472, %v4349
        %v4351 = vrcp.bf16.pop %v4329
        %v4352 = vmul.bf16 1065369472, %v4351
        %v4353 = vrcp.bf16.pop %v4330
        %v4354 = vmul.bf16 1065369472, %v4353
        %v4355 = vrcp.bf16.pop %v4331
        %v4356 = vmul.bf16 1065369472, %v4355
        %v4357 = vrcp.bf16.pop %v4332
        %v4358 = vmul.bf16 1065369472, %v4357
        %v4359 = vrcp.bf16.pop %v4333
        %v4360 = vmul.bf16 1065369472, %v4359
        %v4361 = vrcp.bf16.pop %v4334
        %v4362 = vmul.bf16 1065369472, %v4361
        %v4363 = vrcp.bf16.pop %v4335
        %v4364 = vmul.bf16 1065369472, %v4363
        %v4365 = vrcp.bf16.pop %v4336
        %v4366 = vmul.bf16 1065369472, %v4365
        %v4367 = vrcp.bf16.pop %v4337
        %v4368 = vmul.bf16 1065369472, %v4367
        %v4369 = vrcp.bf16.pop %v4338
        %v4370 = vmul.bf16 1065369472, %v4369
        %v4371 = vmul.bf16 %v4243, %v4340
        %v4372 = vmul.bf16 %v4244, %v4342
        %v4373 = vmul.bf16 %v4245, %v4344
        %v4374 = vmul.bf16 %v4246, %v4346
        %v4375 = vmul.bf16 %v4247, %v4348
        %v4376 = vmul.bf16 %v4248, %v4350
        %v4377 = vmul.bf16 %v4249, %v4352
        %v4378 = vmul.bf16 %v4250, %v4354
        %v4379 = vmul.bf16 %v4251, %v4356
        %v4380 = vmul.bf16 %v4252, %v4358
        %v4381 = vmul.bf16 %v4253, %v4360
        %v4382 = vmul.bf16 %v4254, %v4362
        %v4383 = vmul.bf16 %v4255, %v4364
        %v4384 = vmul.bf16 %v4256, %v4366
        %v4385 = vmul.bf16 %v4257, %v4368
        %v4386 = vmul.bf16 %v4258, %v4370
        %s4387 = scalar_lea.vmem [#allocation2], 384
        %v4388 = vld [vmem:[%s4387] sm:$0xf]
        %v4389 = vld [vmem:[%s4387 + $0x4] sm:$0xf]
        %v4390 = vld [vmem:[%s4387 + $0x8] sm:$0xf]
        %v4391 = vld [vmem:[%s4387 + $0xc] sm:$0xf]
        %v4392 = vld [vmem:[%s4387 + $0x10] sm:$0xf]
        %v4393 = vld [vmem:[%s4387 + $0x14] sm:$0xf]
        %v4394 = vld [vmem:[%s4387 + $0x18] sm:$0xf]
        %v4395 = vld [vmem:[%s4387 + $0x1c] sm:$0xf]
        %v4396 = vld [vmem:[%s4387 + $0x20] sm:$0xf]
        %v4397 = vld [vmem:[%s4387 + $0x24] sm:$0xf]
        %v4398 = vld [vmem:[%s4387 + $0x28] sm:$0xf]
        %v4399 = vld [vmem:[%s4387 + $0x2c] sm:$0xf]
        %v4400 = vld [vmem:[%s4387 + $0x30] sm:$0xf]
        %v4401 = vld [vmem:[%s4387 + $0x34] sm:$0xf]
        %v4402 = vld [vmem:[%s4387 + $0x38] sm:$0xf]
        %v4403 = vld [vmem:[%s4387 + $0x3c] sm:$0xf]
        %v4404 = vld [vmem:[%s4 + $0xc] sm:$0x1]
        %v4405 = vlaneseq
        %v4406 = vshrl.u32 %v4405, 7
        %v4407 = vsub.s32 0, %v4406
        %v4408 = vrot.slane %v4404, %v4407
        %v4425 = vunpack.c.l.b16 %v4388
        %v4426 = vunpack.c.l.b16 %v4389
        %v4427 = vunpack.c.l.b16 %v4390
        %v4428 = vunpack.c.l.b16 %v4391
        %v4429 = vunpack.c.l.b16 %v4392
        %v4430 = vunpack.c.l.b16 %v4393
        %v4431 = vunpack.c.l.b16 %v4394
        %v4432 = vunpack.c.l.b16 %v4395
        %v4433 = vunpack.c.l.b16 %v4396
        %v4434 = vunpack.c.l.b16 %v4397
        %v4435 = vunpack.c.l.b16 %v4398
        %v4436 = vunpack.c.l.b16 %v4399
        %v4437 = vunpack.c.l.b16 %v4400
        %v4438 = vunpack.c.l.b16 %v4401
        %v4439 = vunpack.c.l.b16 %v4402
        %v4440 = vunpack.c.l.b16 %v4403
        %v4441 = vpack.c.b16 %v4426, %v4425
        %v4442 = vpack.c.b16 %v4428, %v4427
        %v4443 = vpack.c.b16 %v4430, %v4429
        %v4444 = vpack.c.b16 %v4432, %v4431
        %v4445 = vpack.c.b16 %v4434, %v4433
        %v4446 = vpack.c.b16 %v4436, %v4435
        %v4447 = vpack.c.b16 %v4438, %v4437
        %v4448 = vpack.c.b16 %v4440, %v4439
        %4457 = vmatprep.subr.bf16.mxu0 0
        %4458 = vmatpush1.bf16.msra.mxu0 %v4448
        %4459 = vmatprep.subr.bf16.mxu0 0
        %4460 = vmatpush1.bf16.msra.mxu0 %v4447
        %4461 = vmatprep.subr.bf16.mxu0 0
        %4462 = vmatpush1.bf16.msra.mxu0 %v4446
        %4463 = vmatprep.subr.bf16.mxu0 0
        %4464 = vmatpush1.bf16.msra.mxu0 %v4445
        %4465 = vmatprep.subr.bf16.mxu0 0
        %4466 = vmatpush1.bf16.msra.mxu0 %v4444
        %4467 = vmatprep.subr.bf16.mxu0 0
        %4468 = vmatpush1.bf16.msra.mxu0 %v4443
        %4469 = vmatprep.subr.bf16.mxu0 0
        %4470 = vmatpush1.bf16.msra.mxu0 %v4442
        %4471 = vmatprep.subr.bf16.mxu0 0
        %4472 = vmatpush1.bf16.msra.mxu0 %v4441
        %4473 = vmatprep.subr.bf16.mxu0 0
        %4474 = vmatpush2.bf16.msra.mxu0 0
        %4475 = vmatprep.subr.bf16.mxu0 0
        %4476 = vmatpush2.bf16.msra.mxu0 0
        %4477 = vmatprep.subr.bf16.mxu0 0
        %4478 = vmatpush2.bf16.msra.mxu0 0
        %4479 = vmatprep.subr.bf16.mxu0 0
        %4480 = vmatpush2.bf16.msra.mxu0 0
        %4481 = vmatprep.subr.bf16.mxu0 0
        %4482 = vmatpush2.bf16.msra.mxu0 0
        %4483 = vmatprep.subr.bf16.mxu0 0
        %4484 = vmatpush2.bf16.msra.mxu0 0
        %4485 = vmatprep.subr.bf16.mxu0 0
        %4486 = vmatpush2.bf16.msra.mxu0 0
        %4487 = vmatprep.subr.bf16.mxu0 0
        %4488 = vmatpush2.bf16.msra.mxu0 0
        %4489 = vmatprep.mubr.bf16.mxu0 0
        %4490 = vmatmul.mubr.bf16.gmra.mxu0 %v4371
        %v4491 = vpop.f32.mrf.mxu0
        %v4492 = vadd.f32 %v4408, %v4491
        %v4493 = vpop.f32.mrf.mxu0
        %v4494 = vpop.f32.mrf.mxu0
        %v4495 = vadd.f32 %v4408, %v4494
        %v4496 = vpop.f32.mrf.mxu0
        %4497 = vmatprep.mubr.bf16.mxu0 0
        %4498 = vmatmul.mubr.bf16.gmra.mxu0 %v4372
        %v4499 = vpop.f32.mrf.mxu0
        %v4500 = vadd.f32 %v4408, %v4499
        %v4501 = vpop.f32.mrf.mxu0
        %v4502 = vpop.f32.mrf.mxu0
        %v4503 = vadd.f32 %v4408, %v4502
        %v4504 = vpop.f32.mrf.mxu0
        %4505 = vmatprep.mubr.bf16.mxu0 0
        %4506 = vmatmul.mubr.bf16.gmra.mxu0 %v4373
        %v4507 = vpop.f32.mrf.mxu0
        %v4508 = vadd.f32 %v4408, %v4507
        %v4509 = vpop.f32.mrf.mxu0
        %v4510 = vpop.f32.mrf.mxu0
        %v4511 = vadd.f32 %v4408, %v4510
        %v4512 = vpop.f32.mrf.mxu0
        %4513 = vmatprep.mubr.bf16.mxu0 0
        %4514 = vmatmul.mubr.bf16.gmra.mxu0 %v4374
        %v4515 = vpop.f32.mrf.mxu0
        %v4516 = vadd.f32 %v4408, %v4515
        %v4517 = vpop.f32.mrf.mxu0
        %v4518 = vpop.f32.mrf.mxu0
        %v4519 = vadd.f32 %v4408, %v4518
        %v4520 = vpop.f32.mrf.mxu0
        %4521 = vmatprep.mubr.bf16.mxu0 0
        %4522 = vmatmul.mubr.bf16.gmra.mxu0 %v4375
        %v4523 = vpop.f32.mrf.mxu0
        %v4524 = vadd.f32 %v4408, %v4523
        %v4525 = vpop.f32.mrf.mxu0
        %v4526 = vpop.f32.mrf.mxu0
        %v4527 = vadd.f32 %v4408, %v4526
        %v4528 = vpop.f32.mrf.mxu0
        %4529 = vmatprep.mubr.bf16.mxu0 0
        %4530 = vmatmul.mubr.bf16.gmra.mxu0 %v4376
        %v4531 = vpop.f32.mrf.mxu0
        %v4532 = vadd.f32 %v4408, %v4531
        %v4533 = vpop.f32.mrf.mxu0
        %v4534 = vpop.f32.mrf.mxu0
        %v4535 = vadd.f32 %v4408, %v4534
        %v4536 = vpop.f32.mrf.mxu0
        %4537 = vmatprep.mubr.bf16.mxu0 0
        %4538 = vmatmul.mubr.bf16.gmra.mxu0 %v4377
        %v4539 = vpop.f32.mrf.mxu0
        %v4540 = vadd.f32 %v4408, %v4539
        %v4541 = vpop.f32.mrf.mxu0
        %v4542 = vpop.f32.mrf.mxu0
        %v4543 = vadd.f32 %v4408, %v4542
        %v4544 = vpop.f32.mrf.mxu0
        %4545 = vmatprep.mubr.bf16.mxu0 0
        %4546 = vmatmul.mubr.bf16.gmra.mxu0 %v4378
        %v4547 = vpop.f32.mrf.mxu0
        %v4548 = vadd.f32 %v4408, %v4547
        %v4549 = vpop.f32.mrf.mxu0
        %v4550 = vpop.f32.mrf.mxu0
        %v4551 = vadd.f32 %v4408, %v4550
        %v4552 = vpop.f32.mrf.mxu0
        %4553 = vmatprep.mubr.bf16.mxu0 0
        %4554 = vmatmul.mubr.bf16.gmra.mxu0 %v4379
        %v4555 = vpop.f32.mrf.mxu0
        %v4556 = vadd.f32 %v4408, %v4555
        %v4557 = vpop.f32.mrf.mxu0
        %v4558 = vpop.f32.mrf.mxu0
        %v4559 = vadd.f32 %v4408, %v4558
        %v4560 = vpop.f32.mrf.mxu0
        %4561 = vmatprep.mubr.bf16.mxu0 0
        %4562 = vmatmul.mubr.bf16.gmra.mxu0 %v4380
        %v4563 = vpop.f32.mrf.mxu0
        %v4564 = vadd.f32 %v4408, %v4563
        %v4565 = vpop.f32.mrf.mxu0
        %v4566 = vpop.f32.mrf.mxu0
        %v4567 = vadd.f32 %v4408, %v4566
        %v4568 = vpop.f32.mrf.mxu0
        %4569 = vmatprep.mubr.bf16.mxu0 0
        %4570 = vmatmul.mubr.bf16.gmra.mxu0 %v4381
        %v4571 = vpop.f32.mrf.mxu0
        %v4572 = vadd.f32 %v4408, %v4571
        %v4573 = vpop.f32.mrf.mxu0
        %v4574 = vpop.f32.mrf.mxu0
        %v4575 = vadd.f32 %v4408, %v4574
        %v4576 = vpop.f32.mrf.mxu0
        %4577 = vmatprep.mubr.bf16.mxu0 0
        %4578 = vmatmul.mubr.bf16.gmra.mxu0 %v4382
        %v4579 = vpop.f32.mrf.mxu0
        %v4580 = vadd.f32 %v4408, %v4579
        %v4581 = vpop.f32.mrf.mxu0
        %v4582 = vpop.f32.mrf.mxu0
        %v4583 = vadd.f32 %v4408, %v4582
        %v4584 = vpop.f32.mrf.mxu0
        %4585 = vmatprep.mubr.bf16.mxu0 0
        %4586 = vmatmul.mubr.bf16.gmra.mxu0 %v4383
        %v4587 = vpop.f32.mrf.mxu0
        %v4588 = vadd.f32 %v4408, %v4587
        %v4589 = vpop.f32.mrf.mxu0
        %v4590 = vpop.f32.mrf.mxu0
        %v4591 = vadd.f32 %v4408, %v4590
        %v4592 = vpop.f32.mrf.mxu0
        %4593 = vmatprep.mubr.bf16.mxu0 0
        %4594 = vmatmul.mubr.bf16.gmra.mxu0 %v4384
        %v4595 = vpop.f32.mrf.mxu0
        %v4596 = vadd.f32 %v4408, %v4595
        %v4597 = vpop.f32.mrf.mxu0
        %v4598 = vpop.f32.mrf.mxu0
        %v4599 = vadd.f32 %v4408, %v4598
        %v4600 = vpop.f32.mrf.mxu0
        %4601 = vmatprep.mubr.bf16.mxu0 0
        %4602 = vmatmul.mubr.bf16.gmra.mxu0 %v4385
        %v4603 = vpop.f32.mrf.mxu0
        %v4604 = vadd.f32 %v4408, %v4603
        %v4605 = vpop.f32.mrf.mxu0
        %v4606 = vpop.f32.mrf.mxu0
        %v4607 = vadd.f32 %v4408, %v4606
        %v4608 = vpop.f32.mrf.mxu0
        %4609 = vmatprep.mubr.bf16.mxu0 0
        %4610 = vmatmul.mubr.bf16.gmra.mxu0 %v4386
        %v4611 = vpop.f32.mrf.mxu0
        %v4612 = vadd.f32 %v4408, %v4611
        %v4613 = vpop.f32.mrf.mxu0
        %v4614 = vpop.f32.mrf.mxu0
        %v4615 = vadd.f32 %v4408, %v4614
        %v4616 = vpop.f32.mrf.mxu0
        %4617 = vdwg.mxu0
        %v4618 = vpack.c.bf16 %v4495, %v4492
        %v4619 = vpack.c.bf16 %v4503, %v4500
        %v4620 = vpack.c.bf16 %v4511, %v4508
        %v4621 = vpack.c.bf16 %v4519, %v4516
        %v4622 = vpack.c.bf16 %v4527, %v4524
        %v4623 = vpack.c.bf16 %v4535, %v4532
        %v4624 = vpack.c.bf16 %v4543, %v4540
        %v4625 = vpack.c.bf16 %v4551, %v4548
        %v4626 = vpack.c.bf16 %v4559, %v4556
        %v4627 = vpack.c.bf16 %v4567, %v4564
        %v4628 = vpack.c.bf16 %v4575, %v4572
        %v4629 = vpack.c.bf16 %v4583, %v4580
        %v4630 = vpack.c.bf16 %v4591, %v4588
        %v4631 = vpack.c.bf16 %v4599, %v4596
        %v4632 = vpack.c.bf16 %v4607, %v4604
        %v4633 = vpack.c.bf16 %v4615, %v4612
        %v4634 = vxor.u32 %v4618, 2147516416
        %v4635 = vxor.u32 %v4619, 2147516416
        %v4636 = vxor.u32 %v4620, 2147516416
        %v4637 = vxor.u32 %v4621, 2147516416
        %v4638 = vxor.u32 %v4622, 2147516416
        %v4639 = vxor.u32 %v4623, 2147516416
        %v4640 = vxor.u32 %v4624, 2147516416
        %v4641 = vxor.u32 %v4625, 2147516416
        %v4642 = vxor.u32 %v4626, 2147516416
        %v4643 = vxor.u32 %v4627, 2147516416
        %v4644 = vxor.u32 %v4628, 2147516416
        %v4645 = vxor.u32 %v4629, 2147516416
        %v4646 = vxor.u32 %v4630, 2147516416
        %v4647 = vxor.u32 %v4631, 2147516416
        %v4648 = vxor.u32 %v4632, 2147516416
        %v4649 = vxor.u32 %v4633, 2147516416
        %v4651 = vmul.bf16 %v4634, 1069105081
        %v4652 = vpow.bf16.pop %v4651
        %v4654 = vmul.bf16 %v4635, 1069105081
        %v4655 = vpow.bf16.pop %v4654
        %v4657 = vmul.bf16 %v4636, 1069105081
        %v4658 = vpow.bf16.pop %v4657
        %v4660 = vmul.bf16 %v4637, 1069105081
        %v4661 = vpow.bf16.pop %v4660
        %v4663 = vmul.bf16 %v4638, 1069105081
        %v4664 = vpow.bf16.pop %v4663
        %v4666 = vmul.bf16 %v4639, 1069105081
        %v4667 = vpow.bf16.pop %v4666
        %v4669 = vmul.bf16 %v4640, 1069105081
        %v4670 = vpow.bf16.pop %v4669
        %v4672 = vmul.bf16 %v4641, 1069105081
        %v4673 = vpow.bf16.pop %v4672
        %v4675 = vmul.bf16 %v4642, 1069105081
        %v4676 = vpow.bf16.pop %v4675
        %v4678 = vmul.bf16 %v4643, 1069105081
        %v4679 = vpow.bf16.pop %v4678
        %v4681 = vmul.bf16 %v4644, 1069105081
        %v4682 = vpow.bf16.pop %v4681
        %v4684 = vmul.bf16 %v4645, 1069105081
        %v4685 = vpow.bf16.pop %v4684
        %v4687 = vmul.bf16 %v4646, 1069105081
        %v4688 = vpow.bf16.pop %v4687
        %v4690 = vmul.bf16 %v4647, 1069105081
        %v4691 = vpow.bf16.pop %v4690
        %v4693 = vmul.bf16 %v4648, 1069105081
        %v4694 = vpow.bf16.pop %v4693
        %v4696 = vmul.bf16 %v4649, 1069105081
        %v4697 = vpow.bf16.pop %v4696
        %v4698 = vadd.bf16 %v4652, 1065369472
        %v4699 = vadd.bf16 %v4655, 1065369472
        %v4700 = vadd.bf16 %v4658, 1065369472
        %v4701 = vadd.bf16 %v4661, 1065369472
        %v4702 = vadd.bf16 %v4664, 1065369472
        %v4703 = vadd.bf16 %v4667, 1065369472
        %v4704 = vadd.bf16 %v4670, 1065369472
        %v4705 = vadd.bf16 %v4673, 1065369472
        %v4706 = vadd.bf16 %v4676, 1065369472
        %v4707 = vadd.bf16 %v4679, 1065369472
        %v4708 = vadd.bf16 %v4682, 1065369472
        %v4709 = vadd.bf16 %v4685, 1065369472
        %v4710 = vadd.bf16 %v4688, 1065369472
        %v4711 = vadd.bf16 %v4691, 1065369472
        %v4712 = vadd.bf16 %v4694, 1065369472
        %v4713 = vadd.bf16 %v4697, 1065369472
        %v4714 = vrcp.bf16.pop %v4698
        %v4715 = vmul.bf16 1065369472, %v4714
        %v4716 = vrcp.bf16.pop %v4699
        %v4717 = vmul.bf16 1065369472, %v4716
        %v4718 = vrcp.bf16.pop %v4700
        %v4719 = vmul.bf16 1065369472, %v4718
        %v4720 = vrcp.bf16.pop %v4701
        %v4721 = vmul.bf16 1065369472, %v4720
        %v4722 = vrcp.bf16.pop %v4702
        %v4723 = vmul.bf16 1065369472, %v4722
        %v4724 = vrcp.bf16.pop %v4703
        %v4725 = vmul.bf16 1065369472, %v4724
        %v4726 = vrcp.bf16.pop %v4704
        %v4727 = vmul.bf16 1065369472, %v4726
        %v4728 = vrcp.bf16.pop %v4705
        %v4729 = vmul.bf16 1065369472, %v4728
        %v4730 = vrcp.bf16.pop %v4706
        %v4731 = vmul.bf16 1065369472, %v4730
        %v4732 = vrcp.bf16.pop %v4707
        %v4733 = vmul.bf16 1065369472, %v4732
        %v4734 = vrcp.bf16.pop %v4708
        %v4735 = vmul.bf16 1065369472, %v4734
        %v4736 = vrcp.bf16.pop %v4709
        %v4737 = vmul.bf16 1065369472, %v4736
        %v4738 = vrcp.bf16.pop %v4710
        %v4739 = vmul.bf16 1065369472, %v4738
        %v4740 = vrcp.bf16.pop %v4711
        %v4741 = vmul.bf16 1065369472, %v4740
        %v4742 = vrcp.bf16.pop %v4712
        %v4743 = vmul.bf16 1065369472, %v4742
        %v4744 = vrcp.bf16.pop %v4713
        %v4745 = vmul.bf16 1065369472, %v4744
        %v4746 = vmul.bf16 %v4618, %v4715
        %v4747 = vmul.bf16 %v4619, %v4717
        %v4748 = vmul.bf16 %v4620, %v4719
        %v4749 = vmul.bf16 %v4621, %v4721
        %v4750 = vmul.bf16 %v4622, %v4723
        %v4751 = vmul.bf16 %v4623, %v4725
        %v4752 = vmul.bf16 %v4624, %v4727
        %v4753 = vmul.bf16 %v4625, %v4729
        %v4754 = vmul.bf16 %v4626, %v4731
        %v4755 = vmul.bf16 %v4627, %v4733
        %v4756 = vmul.bf16 %v4628, %v4735
        %v4757 = vmul.bf16 %v4629, %v4737
        %v4758 = vmul.bf16 %v4630, %v4739
        %v4759 = vmul.bf16 %v4631, %v4741
        %v4760 = vmul.bf16 %v4632, %v4743
        %v4761 = vmul.bf16 %v4633, %v4745
        %v4762 = vadd.bf16 %v3034, %v4746
        %v4763 = vadd.bf16 %v3035, %v4747
        %v4764 = vadd.bf16 %v3036, %v4748
        %v4765 = vadd.bf16 %v3037, %v4749
        %v4766 = vadd.bf16 %v3038, %v4750
        %v4767 = vadd.bf16 %v3039, %v4751
        %v4768 = vadd.bf16 %v3040, %v4752
        %v4769 = vadd.bf16 %v3041, %v4753
        %v4770 = vadd.bf16 %v3042, %v4754
        %v4771 = vadd.bf16 %v3043, %v4755
        %v4772 = vadd.bf16 %v3044, %v4756
        %v4773 = vadd.bf16 %v3045, %v4757
        %v4774 = vadd.bf16 %v3046, %v4758
        %v4775 = vadd.bf16 %v3047, %v4759
        %v4776 = vadd.bf16 %v3048, %v4760
        %v4777 = vadd.bf16 %v3049, %v4761
        %v4778 = vmul.bf16 %v4762, 1060454197
        %v4779 = vmul.bf16 %v4763, 1060454197
        %v4780 = vmul.bf16 %v4764, 1060454197
        %v4781 = vmul.bf16 %v4765, 1060454197
        %v4782 = vmul.bf16 %v4766, 1060454197
        %v4783 = vmul.bf16 %v4767, 1060454197
        %v4784 = vmul.bf16 %v4768, 1060454197
        %v4785 = vmul.bf16 %v4769, 1060454197
        %v4786 = vmul.bf16 %v4770, 1060454197
        %v4787 = vmul.bf16 %v4771, 1060454197
        %v4788 = vmul.bf16 %v4772, 1060454197
        %v4789 = vmul.bf16 %v4773, 1060454197
        %v4790 = vmul.bf16 %v4774, 1060454197
        %v4791 = vmul.bf16 %v4775, 1060454197
        %v4792 = vmul.bf16 %v4776, 1060454197
        %v4793 = vmul.bf16 %v4777, 1060454197
        %v4794 = vadd.bf16 %v4778, %v1098
        %v4795 = vadd.bf16 %v4779, %v1099
        %v4796 = vadd.bf16 %v4780, %v1100
        %v4797 = vadd.bf16 %v4781, %v1101
        %v4798 = vadd.bf16 %v4782, %v1102
        %v4799 = vadd.bf16 %v4783, %v1103
        %v4800 = vadd.bf16 %v4784, %v1104
        %v4801 = vadd.bf16 %v4785, %v1105
        %v4802 = vadd.bf16 %v4786, %v1106
        %v4803 = vadd.bf16 %v4787, %v1107
        %v4804 = vadd.bf16 %v4788, %v1108
        %v4805 = vadd.bf16 %v4789, %v1109
        %v4806 = vadd.bf16 %v4790, %v1110
        %v4807 = vadd.bf16 %v4791, %v1111
        %v4808 = vadd.bf16 %v4792, %v1112
        %v4809 = vadd.bf16 %v4793, %v1113
        %v4810 = vmul.bf16 %v4794, %v4794
        %v4811 = vmul.bf16 %v4795, %v4795
        %v4812 = vmul.bf16 %v4796, %v4796
        %v4813 = vmul.bf16 %v4797, %v4797
        %v4814 = vmul.bf16 %v4798, %v4798
        %v4815 = vmul.bf16 %v4799, %v4799
        %v4816 = vmul.bf16 %v4800, %v4800
        %v4817 = vmul.bf16 %v4801, %v4801
        %v4818 = vmul.bf16 %v4802, %v4802
        %v4819 = vmul.bf16 %v4803, %v4803
        %v4820 = vmul.bf16 %v4804, %v4804
        %v4821 = vmul.bf16 %v4805, %v4805
        %v4822 = vmul.bf16 %v4806, %v4806
        %v4823 = vmul.bf16 %v4807, %v4807
        %v4824 = vmul.bf16 %v4808, %v4808
        %v4825 = vmul.bf16 %v4809, %v4809
        %4826 = vmatprep.subr.bf16.mxu0 %v1273
        %4827 = vmatpush1.bf16.msra.mxu0 %v1272
        %4828 = vmatprep.subr.bf16.mxu0 %v1271
        %4829 = vmatpush1.bf16.msra.mxu0 %v1270
        %4830 = vmatprep.subr.bf16.mxu0 %v1269
        %4831 = vmatpush1.bf16.msra.mxu0 %v1268
        %4832 = vmatprep.subr.bf16.mxu0 %v1267
        %4833 = vmatpush1.bf16.msra.mxu0 %v1266
        %4834 = vmatprep.subr.bf16.mxu0 %v1265
        %4835 = vmatpush1.bf16.msra.mxu0 %v1264
        %4836 = vmatprep.subr.bf16.mxu0 %v1263
        %4837 = vmatpush1.bf16.msra.mxu0 %v1262
        %4838 = vmatprep.subr.bf16.mxu0 %v1261
        %4839 = vmatpush1.bf16.msra.mxu0 %v1260
        %4840 = vmatprep.subr.bf16.mxu0 %v1259
        %4841 = vmatpush1.bf16.msra.mxu0 %v1258
        %4842 = vmatprep.subr.bf16.mxu0 %v1289
        %4843 = vmatpush2.bf16.msra.mxu0 %v1288
        %4844 = vmatprep.subr.bf16.mxu0 %v1287
        %4845 = vmatpush2.bf16.msra.mxu0 %v1286
        %4846 = vmatprep.subr.bf16.mxu0 %v1285
        %4847 = vmatpush2.bf16.msra.mxu0 %v1284
        %4848 = vmatprep.subr.bf16.mxu0 %v1283
        %4849 = vmatpush2.bf16.msra.mxu0 %v1282
        %4850 = vmatprep.subr.bf16.mxu0 %v1281
        %4851 = vmatpush2.bf16.msra.mxu0 %v1280
        %4852 = vmatprep.subr.bf16.mxu0 %v1279
        %4853 = vmatpush2.bf16.msra.mxu0 %v1278
        %4854 = vmatprep.subr.bf16.mxu0 %v1277
        %4855 = vmatpush2.bf16.msra.mxu0 %v1276
        %4856 = vmatprep.subr.bf16.mxu0 %v1275
        %4857 = vmatpush2.bf16.msra.mxu0 %v1274
        %4858 = vmatprep.mubr.bf16.mxu0 %v4810
        %4859 = vmatmul.mubr.bf16.gmra.mxu0 %v4794
        %v4860 = vpop.f32.mrf.mxu0
        %v4861 = vadd.f32 0.0, %v4860
        %v4862 = vpop.f32.mrf.mxu0
        %v4863 = vadd.f32 0.0, %v4862
        %v4864 = vpop.f32.mrf.mxu0
        %v4865 = vadd.f32 0.0, %v4864
        %v4866 = vpop.f32.mrf.mxu0
        %v4867 = vadd.f32 0.0, %v4866
        %4868 = vmatprep.mubr.bf16.mxu0 %v4811
        %4869 = vmatmul.mubr.bf16.gmra.mxu0 %v4795
        %v4870 = vpop.f32.mrf.mxu0
        %v4871 = vadd.f32 0.0, %v4870
        %v4872 = vpop.f32.mrf.mxu0
        %v4873 = vadd.f32 0.0, %v4872
        %v4874 = vpop.f32.mrf.mxu0
        %v4875 = vadd.f32 0.0, %v4874
        %v4876 = vpop.f32.mrf.mxu0
        %v4877 = vadd.f32 0.0, %v4876
        %4878 = vmatprep.mubr.bf16.mxu0 %v4812
        %4879 = vmatmul.mubr.bf16.gmra.mxu0 %v4796
        %v4880 = vpop.f32.mrf.mxu0
        %v4881 = vadd.f32 0.0, %v4880
        %v4882 = vpop.f32.mrf.mxu0
        %v4883 = vadd.f32 0.0, %v4882
        %v4884 = vpop.f32.mrf.mxu0
        %v4885 = vadd.f32 0.0, %v4884
        %v4886 = vpop.f32.mrf.mxu0
        %v4887 = vadd.f32 0.0, %v4886
        %4888 = vmatprep.mubr.bf16.mxu0 %v4813
        %4889 = vmatmul.mubr.bf16.gmra.mxu0 %v4797
        %v4890 = vpop.f32.mrf.mxu0
        %v4891 = vadd.f32 0.0, %v4890
        %v4892 = vpop.f32.mrf.mxu0
        %v4893 = vadd.f32 0.0, %v4892
        %v4894 = vpop.f32.mrf.mxu0
        %v4895 = vadd.f32 0.0, %v4894
        %v4896 = vpop.f32.mrf.mxu0
        %v4897 = vadd.f32 0.0, %v4896
        %4898 = vmatprep.mubr.bf16.mxu0 %v4814
        %4899 = vmatmul.mubr.bf16.gmra.mxu0 %v4798
        %v4900 = vpop.f32.mrf.mxu0
        %v4901 = vadd.f32 0.0, %v4900
        %v4902 = vpop.f32.mrf.mxu0
        %v4903 = vadd.f32 0.0, %v4902
        %v4904 = vpop.f32.mrf.mxu0
        %v4905 = vadd.f32 0.0, %v4904
        %v4906 = vpop.f32.mrf.mxu0
        %v4907 = vadd.f32 0.0, %v4906
        %4908 = vmatprep.mubr.bf16.mxu0 %v4815
        %4909 = vmatmul.mubr.bf16.gmra.mxu0 %v4799
        %v4910 = vpop.f32.mrf.mxu0
        %v4911 = vadd.f32 0.0, %v4910
        %v4912 = vpop.f32.mrf.mxu0
        %v4913 = vadd.f32 0.0, %v4912
        %v4914 = vpop.f32.mrf.mxu0
        %v4915 = vadd.f32 0.0, %v4914
        %v4916 = vpop.f32.mrf.mxu0
        %v4917 = vadd.f32 0.0, %v4916
        %4918 = vmatprep.mubr.bf16.mxu0 %v4816
        %4919 = vmatmul.mubr.bf16.gmra.mxu0 %v4800
        %v4920 = vpop.f32.mrf.mxu0
        %v4921 = vadd.f32 0.0, %v4920
        %v4922 = vpop.f32.mrf.mxu0
        %v4923 = vadd.f32 0.0, %v4922
        %v4924 = vpop.f32.mrf.mxu0
        %v4925 = vadd.f32 0.0, %v4924
        %v4926 = vpop.f32.mrf.mxu0
        %v4927 = vadd.f32 0.0, %v4926
        %4928 = vmatprep.mubr.bf16.mxu0 %v4817
        %4929 = vmatmul.mubr.bf16.gmra.mxu0 %v4801
        %v4930 = vpop.f32.mrf.mxu0
        %v4931 = vadd.f32 0.0, %v4930
        %v4932 = vpop.f32.mrf.mxu0
        %v4933 = vadd.f32 0.0, %v4932
        %v4934 = vpop.f32.mrf.mxu0
        %v4935 = vadd.f32 0.0, %v4934
        %v4936 = vpop.f32.mrf.mxu0
        %v4937 = vadd.f32 0.0, %v4936
        %4938 = vmatprep.mubr.bf16.mxu0 %v4818
        %4939 = vmatmul.mubr.bf16.gmra.mxu0 %v4802
        %v4940 = vpop.f32.mrf.mxu0
        %v4941 = vadd.f32 0.0, %v4940
        %v4942 = vpop.f32.mrf.mxu0
        %v4943 = vadd.f32 0.0, %v4942
        %v4944 = vpop.f32.mrf.mxu0
        %v4945 = vadd.f32 0.0, %v4944
        %v4946 = vpop.f32.mrf.mxu0
        %v4947 = vadd.f32 0.0, %v4946
        %4948 = vmatprep.mubr.bf16.mxu0 %v4819
        %4949 = vmatmul.mubr.bf16.gmra.mxu0 %v4803
        %v4950 = vpop.f32.mrf.mxu0
        %v4951 = vadd.f32 0.0, %v4950
        %v4952 = vpop.f32.mrf.mxu0
        %v4953 = vadd.f32 0.0, %v4952
        %v4954 = vpop.f32.mrf.mxu0
        %v4955 = vadd.f32 0.0, %v4954
        %v4956 = vpop.f32.mrf.mxu0
        %v4957 = vadd.f32 0.0, %v4956
        %4958 = vmatprep.mubr.bf16.mxu0 %v4820
        %4959 = vmatmul.mubr.bf16.gmra.mxu0 %v4804
        %v4960 = vpop.f32.mrf.mxu0
        %v4961 = vadd.f32 0.0, %v4960
        %v4962 = vpop.f32.mrf.mxu0
        %v4963 = vadd.f32 0.0, %v4962
        %v4964 = vpop.f32.mrf.mxu0
        %v4965 = vadd.f32 0.0, %v4964
        %v4966 = vpop.f32.mrf.mxu0
        %v4967 = vadd.f32 0.0, %v4966
        %4968 = vmatprep.mubr.bf16.mxu0 %v4821
        %4969 = vmatmul.mubr.bf16.gmra.mxu0 %v4805
        %v4970 = vpop.f32.mrf.mxu0
        %v4971 = vadd.f32 0.0, %v4970
        %v4972 = vpop.f32.mrf.mxu0
        %v4973 = vadd.f32 0.0, %v4972
        %v4974 = vpop.f32.mrf.mxu0
        %v4975 = vadd.f32 0.0, %v4974
        %v4976 = vpop.f32.mrf.mxu0
        %v4977 = vadd.f32 0.0, %v4976
        %4978 = vmatprep.mubr.bf16.mxu0 %v4822
        %4979 = vmatmul.mubr.bf16.gmra.mxu0 %v4806
        %v4980 = vpop.f32.mrf.mxu0
        %v4981 = vadd.f32 0.0, %v4980
        %v4982 = vpop.f32.mrf.mxu0
        %v4983 = vadd.f32 0.0, %v4982
        %v4984 = vpop.f32.mrf.mxu0
        %v4985 = vadd.f32 0.0, %v4984
        %v4986 = vpop.f32.mrf.mxu0
        %v4987 = vadd.f32 0.0, %v4986
        %4988 = vmatprep.mubr.bf16.mxu0 %v4823
        %4989 = vmatmul.mubr.bf16.gmra.mxu0 %v4807
        %v4990 = vpop.f32.mrf.mxu0
        %v4991 = vadd.f32 0.0, %v4990
        %v4992 = vpop.f32.mrf.mxu0
        %v4993 = vadd.f32 0.0, %v4992
        %v4994 = vpop.f32.mrf.mxu0
        %v4995 = vadd.f32 0.0, %v4994
        %v4996 = vpop.f32.mrf.mxu0
        %v4997 = vadd.f32 0.0, %v4996
        %4998 = vmatprep.mubr.bf16.mxu0 %v4824
        %4999 = vmatmul.mubr.bf16.gmra.mxu0 %v4808
        %v5000 = vpop.f32.mrf.mxu0
        %v5001 = vadd.f32 0.0, %v5000
        %v5002 = vpop.f32.mrf.mxu0
        %v5003 = vadd.f32 0.0, %v5002
        %v5004 = vpop.f32.mrf.mxu0
        %v5005 = vadd.f32 0.0, %v5004
        %v5006 = vpop.f32.mrf.mxu0
        %v5007 = vadd.f32 0.0, %v5006
        %5008 = vmatprep.mubr.bf16.mxu0 %v4825
        %5009 = vmatmul.mubr.bf16.gmra.mxu0 %v4809
        %v5010 = vpop.f32.mrf.mxu0
        %v5011 = vadd.f32 0.0, %v5010
        %v5012 = vpop.f32.mrf.mxu0
        %v5013 = vadd.f32 0.0, %v5012
        %v5014 = vpop.f32.mrf.mxu0
        %v5015 = vadd.f32 0.0, %v5014
        %v5016 = vpop.f32.mrf.mxu0
        %v5017 = vadd.f32 0.0, %v5016
        %5018 = vdwg.mxu0
        %v5019 = vmul.f32 %v4861, %v4861
        %v5020 = vmul.f32 %v4865, %v4865
        %v5021 = vmul.f32 %v4871, %v4871
        %v5022 = vmul.f32 %v4875, %v4875
        %v5023 = vmul.f32 %v4881, %v4881
        %v5024 = vmul.f32 %v4885, %v4885
        %v5025 = vmul.f32 %v4891, %v4891
        %v5026 = vmul.f32 %v4895, %v4895
        %v5027 = vmul.f32 %v4901, %v4901
        %v5028 = vmul.f32 %v4905, %v4905
        %v5029 = vmul.f32 %v4911, %v4911
        %v5030 = vmul.f32 %v4915, %v4915
        %v5031 = vmul.f32 %v4921, %v4921
        %v5032 = vmul.f32 %v4925, %v4925
        %v5033 = vmul.f32 %v4931, %v4931
        %v5034 = vmul.f32 %v4935, %v4935
        %v5035 = vmul.f32 %v4941, %v4941
        %v5036 = vmul.f32 %v4945, %v4945
        %v5037 = vmul.f32 %v4951, %v4951
        %v5038 = vmul.f32 %v4955, %v4955
        %v5039 = vmul.f32 %v4961, %v4961
        %v5040 = vmul.f32 %v4965, %v4965
        %v5041 = vmul.f32 %v4971, %v4971
        %v5042 = vmul.f32 %v4975, %v4975
        %v5043 = vmul.f32 %v4981, %v4981
        %v5044 = vmul.f32 %v4985, %v4985
        %v5045 = vmul.f32 %v4991, %v4991
        %v5046 = vmul.f32 %v4995, %v4995
        %v5047 = vmul.f32 %v5001, %v5001
        %v5048 = vmul.f32 %v5005, %v5005
        %v5049 = vmul.f32 %v5011, %v5011
        %v5050 = vmul.f32 %v5015, %v5015
        %v5051 = vsub.f32 %v4863, %v5019
        %v5052 = vsub.f32 %v4867, %v5020
        %v5053 = vsub.f32 %v4873, %v5021
        %v5054 = vsub.f32 %v4877, %v5022
        %v5055 = vsub.f32 %v4883, %v5023
        %v5056 = vsub.f32 %v4887, %v5024
        %v5057 = vsub.f32 %v4893, %v5025
        %v5058 = vsub.f32 %v4897, %v5026
        %v5059 = vsub.f32 %v4903, %v5027
        %v5060 = vsub.f32 %v4907, %v5028
        %v5061 = vsub.f32 %v4913, %v5029
        %v5062 = vsub.f32 %v4917, %v5030
        %v5063 = vsub.f32 %v4923, %v5031
        %v5064 = vsub.f32 %v4927, %v5032
        %v5065 = vsub.f32 %v4933, %v5033
        %v5066 = vsub.f32 %v4937, %v5034
        %v5067 = vsub.f32 %v4943, %v5035
        %v5068 = vsub.f32 %v4947, %v5036
        %v5069 = vsub.f32 %v4953, %v5037
        %v5070 = vsub.f32 %v4957, %v5038
        %v5071 = vsub.f32 %v4963, %v5039
        %v5072 = vsub.f32 %v4967, %v5040
        %v5073 = vsub.f32 %v4973, %v5041
        %v5074 = vsub.f32 %v4977, %v5042
        %v5075 = vsub.f32 %v4983, %v5043
        %v5076 = vsub.f32 %v4987, %v5044
        %v5077 = vsub.f32 %v4993, %v5045
        %v5078 = vsub.f32 %v4997, %v5046
        %v5079 = vsub.f32 %v5003, %v5047
        %v5080 = vsub.f32 %v5007, %v5048
        %v5081 = vsub.f32 %v5013, %v5049
        %v5082 = vsub.f32 %v5017, %v5050
        %v5083 = vmax.f32 %v5051, 0.0
        %v5084 = vmax.f32 %v5052, 0.0
        %v5085 = vmax.f32 %v5053, 0.0
        %v5086 = vmax.f32 %v5054, 0.0
        %v5087 = vmax.f32 %v5055, 0.0
        %v5088 = vmax.f32 %v5056, 0.0
        %v5089 = vmax.f32 %v5057, 0.0
        %v5090 = vmax.f32 %v5058, 0.0
        %v5091 = vmax.f32 %v5059, 0.0
        %v5092 = vmax.f32 %v5060, 0.0
        %v5093 = vmax.f32 %v5061, 0.0
        %v5094 = vmax.f32 %v5062, 0.0
        %v5095 = vmax.f32 %v5063, 0.0
        %v5096 = vmax.f32 %v5064, 0.0
        %v5097 = vmax.f32 %v5065, 0.0
        %v5098 = vmax.f32 %v5066, 0.0
        %v5099 = vmax.f32 %v5067, 0.0
        %v5100 = vmax.f32 %v5068, 0.0
        %v5101 = vmax.f32 %v5069, 0.0
        %v5102 = vmax.f32 %v5070, 0.0
        %v5103 = vmax.f32 %v5071, 0.0
        %v5104 = vmax.f32 %v5072, 0.0
        %v5105 = vmax.f32 %v5073, 0.0
        %v5106 = vmax.f32 %v5074, 0.0
        %v5107 = vmax.f32 %v5075, 0.0
        %v5108 = vmax.f32 %v5076, 0.0
        %v5109 = vmax.f32 %v5077, 0.0
        %v5110 = vmax.f32 %v5078, 0.0
        %v5111 = vmax.f32 %v5079, 0.0
        %v5112 = vmax.f32 %v5080, 0.0
        %v5113 = vmax.f32 %v5081, 0.0
        %v5114 = vmax.f32 %v5082, 0.0
        %v5115 = vld [vmem:[%s4 + $0xd] sm:$0x1]
        %v5116 = vadd.f32 %v5083, 1e-05
        %v5117 = vadd.f32 %v5084, 1e-05
        %v5118 = vadd.f32 %v5085, 1e-05
        %v5119 = vadd.f32 %v5086, 1e-05
        %v5120 = vadd.f32 %v5087, 1e-05
        %v5121 = vadd.f32 %v5088, 1e-05
        %v5122 = vadd.f32 %v5089, 1e-05
        %v5123 = vadd.f32 %v5090, 1e-05
        %v5124 = vadd.f32 %v5091, 1e-05
        %v5125 = vadd.f32 %v5092, 1e-05
        %v5126 = vadd.f32 %v5093, 1e-05
        %v5127 = vadd.f32 %v5094, 1e-05
        %v5128 = vadd.f32 %v5095, 1e-05
        %v5129 = vadd.f32 %v5096, 1e-05
        %v5130 = vadd.f32 %v5097, 1e-05
        %v5131 = vadd.f32 %v5098, 1e-05
        %v5132 = vadd.f32 %v5099, 1e-05
        %v5133 = vadd.f32 %v5100, 1e-05
        %v5134 = vadd.f32 %v5101, 1e-05
        %v5135 = vadd.f32 %v5102, 1e-05
        %v5136 = vadd.f32 %v5103, 1e-05
        %v5137 = vadd.f32 %v5104, 1e-05
        %v5138 = vadd.f32 %v5105, 1e-05
        %v5139 = vadd.f32 %v5106, 1e-05
        %v5140 = vadd.f32 %v5107, 1e-05
        %v5141 = vadd.f32 %v5108, 1e-05
        %v5142 = vadd.f32 %v5109, 1e-05
        %v5143 = vadd.f32 %v5110, 1e-05
        %v5144 = vadd.f32 %v5111, 1e-05
        %v5145 = vadd.f32 %v5112, 1e-05
        %v5146 = vadd.f32 %v5113, 1e-05
        %v5147 = vadd.f32 %v5114, 1e-05
        %v5148 = vrsqrt.pop %v5116
        %v5149 = vrsqrt.pop %v5117
        %v5150 = vrsqrt.pop %v5118
        %v5151 = vrsqrt.pop %v5119
        %v5152 = vrsqrt.pop %v5120
        %v5153 = vrsqrt.pop %v5121
        %v5154 = vrsqrt.pop %v5122
        %v5155 = vrsqrt.pop %v5123
        %v5156 = vrsqrt.pop %v5124
        %v5157 = vrsqrt.pop %v5125
        %v5158 = vrsqrt.pop %v5126
        %v5159 = vrsqrt.pop %v5127
        %v5160 = vrsqrt.pop %v5128
        %v5161 = vrsqrt.pop %v5129
        %v5162 = vrsqrt.pop %v5130
        %v5163 = vrsqrt.pop %v5131
        %v5164 = vrsqrt.pop %v5132
        %v5165 = vrsqrt.pop %v5133
        %v5166 = vrsqrt.pop %v5134
        %v5167 = vrsqrt.pop %v5135
        %v5168 = vrsqrt.pop %v5136
        %v5169 = vrsqrt.pop %v5137
        %v5170 = vrsqrt.pop %v5138
        %v5171 = vrsqrt.pop %v5139
        %v5172 = vrsqrt.pop %v5140
        %v5173 = vrsqrt.pop %v5141
        %v5174 = vrsqrt.pop %v5142
        %v5175 = vrsqrt.pop %v5143
        %v5176 = vrsqrt.pop %v5144
        %v5177 = vrsqrt.pop %v5145
        %v5178 = vrsqrt.pop %v5146
        %v5179 = vrsqrt.pop %v5147
        %v5180 = vlaneseq
        %v5181 = vshrl.u32 %v5180, 7
        %v5182 = vsub.s32 0, %v5181
        %v5183 = vrot.slane %v5115, %v5182
        %v5184 = vmul.f32 %v5183, %v5148
        %v5185 = vmul.f32 %v5183, %v5149
        %v5186 = vmul.f32 %v5183, %v5150
        %v5187 = vmul.f32 %v5183, %v5151
        %v5188 = vmul.f32 %v5183, %v5152
        %v5189 = vmul.f32 %v5183, %v5153
        %v5190 = vmul.f32 %v5183, %v5154
        %v5191 = vmul.f32 %v5183, %v5155
        %v5192 = vmul.f32 %v5183, %v5156
        %v5193 = vmul.f32 %v5183, %v5157
        %v5194 = vmul.f32 %v5183, %v5158
        %v5195 = vmul.f32 %v5183, %v5159
        %v5196 = vmul.f32 %v5183, %v5160
        %v5197 = vmul.f32 %v5183, %v5161
        %v5198 = vmul.f32 %v5183, %v5162
        %v5199 = vmul.f32 %v5183, %v5163
        %v5200 = vmul.f32 %v5183, %v5164
        %v5201 = vmul.f32 %v5183, %v5165
        %v5202 = vmul.f32 %v5183, %v5166
        %v5203 = vmul.f32 %v5183, %v5167
        %v5204 = vmul.f32 %v5183, %v5168
        %v5205 = vmul.f32 %v5183, %v5169
        %v5206 = vmul.f32 %v5183, %v5170
        %v5207 = vmul.f32 %v5183, %v5171
        %v5208 = vmul.f32 %v5183, %v5172
        %v5209 = vmul.f32 %v5183, %v5173
        %v5210 = vmul.f32 %v5183, %v5174
        %v5211 = vmul.f32 %v5183, %v5175
        %v5212 = vmul.f32 %v5183, %v5176
        %v5213 = vmul.f32 %v5183, %v5177
        %v5214 = vmul.f32 %v5183, %v5178
        %v5215 = vmul.f32 %v5183, %v5179
        %v5216 = vld [vmem:[%s4 + $0xe] sm:$0x1]
        %v5217 = vmul.f32 %v4861, %v5184
        %v5218 = vmul.f32 %v4865, %v5185
        %v5219 = vmul.f32 %v4871, %v5186
        %v5220 = vmul.f32 %v4875, %v5187
        %v5221 = vmul.f32 %v4881, %v5188
        %v5222 = vmul.f32 %v4885, %v5189
        %v5223 = vmul.f32 %v4891, %v5190
        %v5224 = vmul.f32 %v4895, %v5191
        %v5225 = vmul.f32 %v4901, %v5192
        %v5226 = vmul.f32 %v4905, %v5193
        %v5227 = vmul.f32 %v4911, %v5194
        %v5228 = vmul.f32 %v4915, %v5195
        %v5229 = vmul.f32 %v4921, %v5196
        %v5230 = vmul.f32 %v4925, %v5197
        %v5231 = vmul.f32 %v4931, %v5198
        %v5232 = vmul.f32 %v4935, %v5199
        %v5233 = vmul.f32 %v4941, %v5200
        %v5234 = vmul.f32 %v4945, %v5201
        %v5235 = vmul.f32 %v4951, %v5202
        %v5236 = vmul.f32 %v4955, %v5203
        %v5237 = vmul.f32 %v4961, %v5204
        %v5238 = vmul.f32 %v4965, %v5205
        %v5239 = vmul.f32 %v4971, %v5206
        %v5240 = vmul.f32 %v4975, %v5207
        %v5241 = vmul.f32 %v4981, %v5208
        %v5242 = vmul.f32 %v4985, %v5209
        %v5243 = vmul.f32 %v4991, %v5210
        %v5244 = vmul.f32 %v4995, %v5211
        %v5245 = vmul.f32 %v5001, %v5212
        %v5246 = vmul.f32 %v5005, %v5213
        %v5247 = vmul.f32 %v5011, %v5214
        %v5248 = vmul.f32 %v5015, %v5215
        %v5249 = vlaneseq
        %v5250 = vshrl.u32 %v5249, 7
        %v5251 = vsub.s32 0, %v5250
        %v5252 = vrot.slane %v5216, %v5251
        %v5253 = vsub.f32 %v5252, %v5217
        %v5254 = vsub.f32 %v5252, %v5218
        %v5255 = vsub.f32 %v5252, %v5219
        %v5256 = vsub.f32 %v5252, %v5220
        %v5257 = vsub.f32 %v5252, %v5221
        %v5258 = vsub.f32 %v5252, %v5222
        %v5259 = vsub.f32 %v5252, %v5223
        %v5260 = vsub.f32 %v5252, %v5224
        %v5261 = vsub.f32 %v5252, %v5225
        %v5262 = vsub.f32 %v5252, %v5226
        %v5263 = vsub.f32 %v5252, %v5227
        %v5264 = vsub.f32 %v5252, %v5228
        %v5265 = vsub.f32 %v5252, %v5229
        %v5266 = vsub.f32 %v5252, %v5230
        %v5267 = vsub.f32 %v5252, %v5231
        %v5268 = vsub.f32 %v5252, %v5232
        %v5269 = vsub.f32 %v5252, %v5233
        %v5270 = vsub.f32 %v5252, %v5234
        %v5271 = vsub.f32 %v5252, %v5235
        %v5272 = vsub.f32 %v5252, %v5236
        %v5273 = vsub.f32 %v5252, %v5237
        %v5274 = vsub.f32 %v5252, %v5238
        %v5275 = vsub.f32 %v5252, %v5239
        %v5276 = vsub.f32 %v5252, %v5240
        %v5277 = vsub.f32 %v5252, %v5241
        %v5278 = vsub.f32 %v5252, %v5242
        %v5279 = vsub.f32 %v5252, %v5243
        %v5280 = vsub.f32 %v5252, %v5244
        %v5281 = vsub.f32 %v5252, %v5245
        %v5282 = vsub.f32 %v5252, %v5246
        %v5283 = vsub.f32 %v5252, %v5247
        %v5284 = vsub.f32 %v5252, %v5248
        %v5285 = vunpack.c.l.bf16 %v4794
        %v5286 = vunpack.c.h.bf16 %v4794
        %v5287 = vunpack.c.l.bf16 %v4795
        %v5288 = vunpack.c.h.bf16 %v4795
        %v5289 = vunpack.c.l.bf16 %v4796
        %v5290 = vunpack.c.h.bf16 %v4796
        %v5291 = vunpack.c.l.bf16 %v4797
        %v5292 = vunpack.c.h.bf16 %v4797
        %v5293 = vunpack.c.l.bf16 %v4798
        %v5294 = vunpack.c.h.bf16 %v4798
        %v5295 = vunpack.c.l.bf16 %v4799
        %v5296 = vunpack.c.h.bf16 %v4799
        %v5297 = vunpack.c.l.bf16 %v4800
        %v5298 = vunpack.c.h.bf16 %v4800
        %v5299 = vunpack.c.l.bf16 %v4801
        %v5300 = vunpack.c.h.bf16 %v4801
        %v5301 = vunpack.c.l.bf16 %v4802
        %v5302 = vunpack.c.h.bf16 %v4802
        %v5303 = vunpack.c.l.bf16 %v4803
        %v5304 = vunpack.c.h.bf16 %v4803
        %v5305 = vunpack.c.l.bf16 %v4804
        %v5306 = vunpack.c.h.bf16 %v4804
        %v5307 = vunpack.c.l.bf16 %v4805
        %v5308 = vunpack.c.h.bf16 %v4805
        %v5309 = vunpack.c.l.bf16 %v4806
        %v5310 = vunpack.c.h.bf16 %v4806
        %v5311 = vunpack.c.l.bf16 %v4807
        %v5312 = vunpack.c.h.bf16 %v4807
        %v5313 = vunpack.c.l.bf16 %v4808
        %v5314 = vunpack.c.h.bf16 %v4808
        %v5315 = vunpack.c.l.bf16 %v4809
        %v5316 = vunpack.c.h.bf16 %v4809
        %v5317 = vmul.f32 %v5285, %v5184
        %v5318 = vmul.f32 %v5286, %v5185
        %v5319 = vmul.f32 %v5287, %v5186
        %v5320 = vmul.f32 %v5288, %v5187
        %v5321 = vmul.f32 %v5289, %v5188
        %v5322 = vmul.f32 %v5290, %v5189
        %v5323 = vmul.f32 %v5291, %v5190
        %v5324 = vmul.f32 %v5292, %v5191
        %v5325 = vmul.f32 %v5293, %v5192
        %v5326 = vmul.f32 %v5294, %v5193
        %v5327 = vmul.f32 %v5295, %v5194
        %v5328 = vmul.f32 %v5296, %v5195
        %v5329 = vmul.f32 %v5297, %v5196
        %v5330 = vmul.f32 %v5298, %v5197
        %v5331 = vmul.f32 %v5299, %v5198
        %v5332 = vmul.f32 %v5300, %v5199
        %v5333 = vmul.f32 %v5301, %v5200
        %v5334 = vmul.f32 %v5302, %v5201
        %v5335 = vmul.f32 %v5303, %v5202
        %v5336 = vmul.f32 %v5304, %v5203
        %v5337 = vmul.f32 %v5305, %v5204
        %v5338 = vmul.f32 %v5306, %v5205
        %v5339 = vmul.f32 %v5307, %v5206
        %v5340 = vmul.f32 %v5308, %v5207
        %v5341 = vmul.f32 %v5309, %v5208
        %v5342 = vmul.f32 %v5310, %v5209
        %v5343 = vmul.f32 %v5311, %v5210
        %v5344 = vmul.f32 %v5312, %v5211
        %v5345 = vmul.f32 %v5313, %v5212
        %v5346 = vmul.f32 %v5314, %v5213
        %v5347 = vmul.f32 %v5315, %v5214
        %v5348 = vmul.f32 %v5316, %v5215
        %v5349 = vadd.f32 %v5317, %v5253
        %v5350 = vadd.f32 %v5318, %v5254
        %v5351 = vadd.f32 %v5319, %v5255
        %v5352 = vadd.f32 %v5320, %v5256
        %v5353 = vadd.f32 %v5321, %v5257
        %v5354 = vadd.f32 %v5322, %v5258
        %v5355 = vadd.f32 %v5323, %v5259
        %v5356 = vadd.f32 %v5324, %v5260
        %v5357 = vadd.f32 %v5325, %v5261
        %v5358 = vadd.f32 %v5326, %v5262
        %v5359 = vadd.f32 %v5327, %v5263
        %v5360 = vadd.f32 %v5328, %v5264
        %v5361 = vadd.f32 %v5329, %v5265
        %v5362 = vadd.f32 %v5330, %v5266
        %v5363 = vadd.f32 %v5331, %v5267
        %v5364 = vadd.f32 %v5332, %v5268
        %v5365 = vadd.f32 %v5333, %v5269
        %v5366 = vadd.f32 %v5334, %v5270
        %v5367 = vadd.f32 %v5335, %v5271
        %v5368 = vadd.f32 %v5336, %v5272
        %v5369 = vadd.f32 %v5337, %v5273
        %v5370 = vadd.f32 %v5338, %v5274
        %v5371 = vadd.f32 %v5339, %v5275
        %v5372 = vadd.f32 %v5340, %v5276
        %v5373 = vadd.f32 %v5341, %v5277
        %v5374 = vadd.f32 %v5342, %v5278
        %v5375 = vadd.f32 %v5343, %v5279
        %v5376 = vadd.f32 %v5344, %v5280
        %v5377 = vadd.f32 %v5345, %v5281
        %v5378 = vadd.f32 %v5346, %v5282
        %v5379 = vadd.f32 %v5347, %v5283
        %v5380 = vadd.f32 %v5348, %v5284
        %v5381 = vpack.c.bf16 %v5350, %v5349
        %v5382 = vpack.c.bf16 %v5352, %v5351
        %v5383 = vpack.c.bf16 %v5354, %v5353
        %v5384 = vpack.c.bf16 %v5356, %v5355
        %v5385 = vpack.c.bf16 %v5358, %v5357
        %v5386 = vpack.c.bf16 %v5360, %v5359
        %v5387 = vpack.c.bf16 %v5362, %v5361
        %v5388 = vpack.c.bf16 %v5364, %v5363
        %v5389 = vpack.c.bf16 %v5366, %v5365
        %v5390 = vpack.c.bf16 %v5368, %v5367
        %v5391 = vpack.c.bf16 %v5370, %v5369
        %v5392 = vpack.c.bf16 %v5372, %v5371
        %v5393 = vpack.c.bf16 %v5374, %v5373
        %v5394 = vpack.c.bf16 %v5376, %v5375
        %v5395 = vpack.c.bf16 %v5378, %v5377
        %v5396 = vpack.c.bf16 %v5380, %v5379
        %s5397 = scalar_lea.vmem [#allocation2], 448
        %v5398 = vld [vmem:[%s5397] sm:$0xf]
        %v5399 = vld [vmem:[%s5397 + $0x4] sm:$0xf]
        %v5400 = vld [vmem:[%s5397 + $0x8] sm:$0xf]
        %v5401 = vld [vmem:[%s5397 + $0xc] sm:$0xf]
        %v5402 = vld [vmem:[%s5397 + $0x10] sm:$0xf]
        %v5403 = vld [vmem:[%s5397 + $0x14] sm:$0xf]
        %v5404 = vld [vmem:[%s5397 + $0x18] sm:$0xf]
        %v5405 = vld [vmem:[%s5397 + $0x1c] sm:$0xf]
        %v5406 = vld [vmem:[%s5397 + $0x20] sm:$0xf]
        %v5407 = vld [vmem:[%s5397 + $0x24] sm:$0xf]
        %v5408 = vld [vmem:[%s5397 + $0x28] sm:$0xf]
        %v5409 = vld [vmem:[%s5397 + $0x2c] sm:$0xf]
        %v5410 = vld [vmem:[%s5397 + $0x30] sm:$0xf]
        %v5411 = vld [vmem:[%s5397 + $0x34] sm:$0xf]
        %v5412 = vld [vmem:[%s5397 + $0x38] sm:$0xf]
        %v5413 = vld [vmem:[%s5397 + $0x3c] sm:$0xf]
        %v5414 = vld [vmem:[%s4 + $0xf] sm:$0x1]
        %v5415 = vlaneseq
        %v5416 = vshrl.u32 %v5415, 7
        %v5417 = vsub.s32 0, %v5416
        %v5418 = vrot.slane %v5414, %v5417
        %v5435 = vunpack.c.l.b16 %v5398
        %v5436 = vunpack.c.l.b16 %v5399
        %v5437 = vunpack.c.l.b16 %v5400
        %v5438 = vunpack.c.l.b16 %v5401
        %v5439 = vunpack.c.l.b16 %v5402
        %v5440 = vunpack.c.l.b16 %v5403
        %v5441 = vunpack.c.l.b16 %v5404
        %v5442 = vunpack.c.l.b16 %v5405
        %v5443 = vunpack.c.l.b16 %v5406
        %v5444 = vunpack.c.l.b16 %v5407
        %v5445 = vunpack.c.l.b16 %v5408
        %v5446 = vunpack.c.l.b16 %v5409
        %v5447 = vunpack.c.l.b16 %v5410
        %v5448 = vunpack.c.l.b16 %v5411
        %v5449 = vunpack.c.l.b16 %v5412
        %v5450 = vunpack.c.l.b16 %v5413
        %v5451 = vpack.c.b16 %v5436, %v5435
        %v5452 = vpack.c.b16 %v5438, %v5437
        %v5453 = vpack.c.b16 %v5440, %v5439
        %v5454 = vpack.c.b16 %v5442, %v5441
        %v5455 = vpack.c.b16 %v5444, %v5443
        %v5456 = vpack.c.b16 %v5446, %v5445
        %v5457 = vpack.c.b16 %v5448, %v5447
        %v5458 = vpack.c.b16 %v5450, %v5449
        %5467 = vmatprep.subr.bf16.mxu0 0
        %5468 = vmatpush1.bf16.msra.mxu0 %v5458
        %5469 = vmatprep.subr.bf16.mxu0 0
        %5470 = vmatpush1.bf16.msra.mxu0 %v5457
        %5471 = vmatprep.subr.bf16.mxu0 0
        %5472 = vmatpush1.bf16.msra.mxu0 %v5456
        %5473 = vmatprep.subr.bf16.mxu0 0
        %5474 = vmatpush1.bf16.msra.mxu0 %v5455
        %5475 = vmatprep.subr.bf16.mxu0 0
        %5476 = vmatpush1.bf16.msra.mxu0 %v5454
        %5477 = vmatprep.subr.bf16.mxu0 0
        %5478 = vmatpush1.bf16.msra.mxu0 %v5453
        %5479 = vmatprep.subr.bf16.mxu0 0
        %5480 = vmatpush1.bf16.msra.mxu0 %v5452
        %5481 = vmatprep.subr.bf16.mxu0 0
        %5482 = vmatpush1.bf16.msra.mxu0 %v5451
        %5483 = vmatprep.subr.bf16.mxu0 0
        %5484 = vmatpush2.bf16.msra.mxu0 0
        %5485 = vmatprep.subr.bf16.mxu0 0
        %5486 = vmatpush2.bf16.msra.mxu0 0
        %5487 = vmatprep.subr.bf16.mxu0 0
        %5488 = vmatpush2.bf16.msra.mxu0 0
        %5489 = vmatprep.subr.bf16.mxu0 0
        %5490 = vmatpush2.bf16.msra.mxu0 0
        %5491 = vmatprep.subr.bf16.mxu0 0
        %5492 = vmatpush2.bf16.msra.mxu0 0
        %5493 = vmatprep.subr.bf16.mxu0 0
        %5494 = vmatpush2.bf16.msra.mxu0 0
        %5495 = vmatprep.subr.bf16.mxu0 0
        %5496 = vmatpush2.bf16.msra.mxu0 0
        %5497 = vmatprep.subr.bf16.mxu0 0
        %5498 = vmatpush2.bf16.msra.mxu0 0
        %5499 = vmatprep.mubr.bf16.mxu0 0
        %5500 = vmatmul.mubr.bf16.gmra.mxu0 %v5381
        %v5501 = vpop.f32.mrf.mxu0
        %v5502 = vadd.f32 %v5418, %v5501
        %v5503 = vpop.f32.mrf.mxu0
        %v5504 = vpop.f32.mrf.mxu0
        %v5505 = vadd.f32 %v5418, %v5504
        %v5506 = vpop.f32.mrf.mxu0
        %5507 = vmatprep.mubr.bf16.mxu0 0
        %5508 = vmatmul.mubr.bf16.gmra.mxu0 %v5382
        %v5509 = vpop.f32.mrf.mxu0
        %v5510 = vadd.f32 %v5418, %v5509
        %v5511 = vpop.f32.mrf.mxu0
        %v5512 = vpop.f32.mrf.mxu0
        %v5513 = vadd.f32 %v5418, %v5512
        %v5514 = vpop.f32.mrf.mxu0
        %5515 = vmatprep.mubr.bf16.mxu0 0
        %5516 = vmatmul.mubr.bf16.gmra.mxu0 %v5383
        %v5517 = vpop.f32.mrf.mxu0
        %v5518 = vadd.f32 %v5418, %v5517
        %v5519 = vpop.f32.mrf.mxu0
        %v5520 = vpop.f32.mrf.mxu0
        %v5521 = vadd.f32 %v5418, %v5520
        %v5522 = vpop.f32.mrf.mxu0
        %5523 = vmatprep.mubr.bf16.mxu0 0
        %5524 = vmatmul.mubr.bf16.gmra.mxu0 %v5384
        %v5525 = vpop.f32.mrf.mxu0
        %v5526 = vadd.f32 %v5418, %v5525
        %v5527 = vpop.f32.mrf.mxu0
        %v5528 = vpop.f32.mrf.mxu0
        %v5529 = vadd.f32 %v5418, %v5528
        %v5530 = vpop.f32.mrf.mxu0
        %5531 = vmatprep.mubr.bf16.mxu0 0
        %5532 = vmatmul.mubr.bf16.gmra.mxu0 %v5385
        %v5533 = vpop.f32.mrf.mxu0
        %v5534 = vadd.f32 %v5418, %v5533
        %v5535 = vpop.f32.mrf.mxu0
        %v5536 = vpop.f32.mrf.mxu0
        %v5537 = vadd.f32 %v5418, %v5536
        %v5538 = vpop.f32.mrf.mxu0
        %5539 = vmatprep.mubr.bf16.mxu0 0
        %5540 = vmatmul.mubr.bf16.gmra.mxu0 %v5386
        %v5541 = vpop.f32.mrf.mxu0
        %v5542 = vadd.f32 %v5418, %v5541
        %v5543 = vpop.f32.mrf.mxu0
        %v5544 = vpop.f32.mrf.mxu0
        %v5545 = vadd.f32 %v5418, %v5544
        %v5546 = vpop.f32.mrf.mxu0
        %5547 = vmatprep.mubr.bf16.mxu0 0
        %5548 = vmatmul.mubr.bf16.gmra.mxu0 %v5387
        %v5549 = vpop.f32.mrf.mxu0
        %v5550 = vadd.f32 %v5418, %v5549
        %v5551 = vpop.f32.mrf.mxu0
        %v5552 = vpop.f32.mrf.mxu0
        %v5553 = vadd.f32 %v5418, %v5552
        %v5554 = vpop.f32.mrf.mxu0
        %5555 = vmatprep.mubr.bf16.mxu0 0
        %5556 = vmatmul.mubr.bf16.gmra.mxu0 %v5388
        %v5557 = vpop.f32.mrf.mxu0
        %v5558 = vadd.f32 %v5418, %v5557
        %v5559 = vpop.f32.mrf.mxu0
        %v5560 = vpop.f32.mrf.mxu0
        %v5561 = vadd.f32 %v5418, %v5560
        %v5562 = vpop.f32.mrf.mxu0
        %5563 = vmatprep.mubr.bf16.mxu0 0
        %5564 = vmatmul.mubr.bf16.gmra.mxu0 %v5389
        %v5565 = vpop.f32.mrf.mxu0
        %v5566 = vadd.f32 %v5418, %v5565
        %v5567 = vpop.f32.mrf.mxu0
        %v5568 = vpop.f32.mrf.mxu0
        %v5569 = vadd.f32 %v5418, %v5568
        %v5570 = vpop.f32.mrf.mxu0
        %5571 = vmatprep.mubr.bf16.mxu0 0
        %5572 = vmatmul.mubr.bf16.gmra.mxu0 %v5390
        %v5573 = vpop.f32.mrf.mxu0
        %v5574 = vadd.f32 %v5418, %v5573
        %v5575 = vpop.f32.mrf.mxu0
        %v5576 = vpop.f32.mrf.mxu0
        %v5577 = vadd.f32 %v5418, %v5576
        %v5578 = vpop.f32.mrf.mxu0
        %5579 = vmatprep.mubr.bf16.mxu0 0
        %5580 = vmatmul.mubr.bf16.gmra.mxu0 %v5391
        %v5581 = vpop.f32.mrf.mxu0
        %v5582 = vadd.f32 %v5418, %v5581
        %v5583 = vpop.f32.mrf.mxu0
        %v5584 = vpop.f32.mrf.mxu0
        %v5585 = vadd.f32 %v5418, %v5584
        %v5586 = vpop.f32.mrf.mxu0
        %5587 = vmatprep.mubr.bf16.mxu0 0
        %5588 = vmatmul.mubr.bf16.gmra.mxu0 %v5392
        %v5589 = vpop.f32.mrf.mxu0
        %v5590 = vadd.f32 %v5418, %v5589
        %v5591 = vpop.f32.mrf.mxu0
        %v5592 = vpop.f32.mrf.mxu0
        %v5593 = vadd.f32 %v5418, %v5592
        %v5594 = vpop.f32.mrf.mxu0
        %5595 = vmatprep.mubr.bf16.mxu0 0
        %5596 = vmatmul.mubr.bf16.gmra.mxu0 %v5393
        %v5597 = vpop.f32.mrf.mxu0
        %v5598 = vadd.f32 %v5418, %v5597
        %v5599 = vpop.f32.mrf.mxu0
        %v5600 = vpop.f32.mrf.mxu0
        %v5601 = vadd.f32 %v5418, %v5600
        %v5602 = vpop.f32.mrf.mxu0
        %5603 = vmatprep.mubr.bf16.mxu0 0
        %5604 = vmatmul.mubr.bf16.gmra.mxu0 %v5394
        %v5605 = vpop.f32.mrf.mxu0
        %v5606 = vadd.f32 %v5418, %v5605
        %v5607 = vpop.f32.mrf.mxu0
        %v5608 = vpop.f32.mrf.mxu0
        %v5609 = vadd.f32 %v5418, %v5608
        %v5610 = vpop.f32.mrf.mxu0
        %5611 = vmatprep.mubr.bf16.mxu0 0
        %5612 = vmatmul.mubr.bf16.gmra.mxu0 %v5395
        %v5613 = vpop.f32.mrf.mxu0
        %v5614 = vadd.f32 %v5418, %v5613
        %v5615 = vpop.f32.mrf.mxu0
        %v5616 = vpop.f32.mrf.mxu0
        %v5617 = vadd.f32 %v5418, %v5616
        %v5618 = vpop.f32.mrf.mxu0
        %5619 = vmatprep.mubr.bf16.mxu0 0
        %5620 = vmatmul.mubr.bf16.gmra.mxu0 %v5396
        %v5621 = vpop.f32.mrf.mxu0
        %v5622 = vadd.f32 %v5418, %v5621
        %v5623 = vpop.f32.mrf.mxu0
        %v5624 = vpop.f32.mrf.mxu0
        %v5625 = vadd.f32 %v5418, %v5624
        %v5626 = vpop.f32.mrf.mxu0
        %5627 = vdwg.mxu0
        %v5628 = vpack.c.bf16 %v5505, %v5502
        %v5629 = vpack.c.bf16 %v5513, %v5510
        %v5630 = vpack.c.bf16 %v5521, %v5518
        %v5631 = vpack.c.bf16 %v5529, %v5526
        %v5632 = vpack.c.bf16 %v5537, %v5534
        %v5633 = vpack.c.bf16 %v5545, %v5542
        %v5634 = vpack.c.bf16 %v5553, %v5550
        %v5635 = vpack.c.bf16 %v5561, %v5558
        %v5636 = vpack.c.bf16 %v5569, %v5566
        %v5637 = vpack.c.bf16 %v5577, %v5574
        %v5638 = vpack.c.bf16 %v5585, %v5582
        %v5639 = vpack.c.bf16 %v5593, %v5590
        %v5640 = vpack.c.bf16 %v5601, %v5598
        %v5641 = vpack.c.bf16 %v5609, %v5606
        %v5642 = vpack.c.bf16 %v5617, %v5614
        %v5643 = vpack.c.bf16 %v5625, %v5622
        %v5644 = vxor.u32 %v5628, 2147516416
        %v5645 = vxor.u32 %v5629, 2147516416
        %v5646 = vxor.u32 %v5630, 2147516416
        %v5647 = vxor.u32 %v5631, 2147516416
        %v5648 = vxor.u32 %v5632, 2147516416
        %v5649 = vxor.u32 %v5633, 2147516416
        %v5650 = vxor.u32 %v5634, 2147516416
        %v5651 = vxor.u32 %v5635, 2147516416
        %v5652 = vxor.u32 %v5636, 2147516416
        %v5653 = vxor.u32 %v5637, 2147516416
        %v5654 = vxor.u32 %v5638, 2147516416
        %v5655 = vxor.u32 %v5639, 2147516416
        %v5656 = vxor.u32 %v5640, 2147516416
        %v5657 = vxor.u32 %v5641, 2147516416
        %v5658 = vxor.u32 %v5642, 2147516416
        %v5659 = vxor.u32 %v5643, 2147516416
        %v5661 = vmul.bf16 %v5644, 1069105081
        %v5662 = vpow.bf16.pop %v5661
        %v5664 = vmul.bf16 %v5645, 1069105081
        %v5665 = vpow.bf16.pop %v5664
        %v5667 = vmul.bf16 %v5646, 1069105081
        %v5668 = vpow.bf16.pop %v5667
        %v5670 = vmul.bf16 %v5647, 1069105081
        %v5671 = vpow.bf16.pop %v5670
        %v5673 = vmul.bf16 %v5648, 1069105081
        %v5674 = vpow.bf16.pop %v5673
        %v5676 = vmul.bf16 %v5649, 1069105081
        %v5677 = vpow.bf16.pop %v5676
        %v5679 = vmul.bf16 %v5650, 1069105081
        %v5680 = vpow.bf16.pop %v5679
        %v5682 = vmul.bf16 %v5651, 1069105081
        %v5683 = vpow.bf16.pop %v5682
        %v5685 = vmul.bf16 %v5652, 1069105081
        %v5686 = vpow.bf16.pop %v5685
        %v5688 = vmul.bf16 %v5653, 1069105081
        %v5689 = vpow.bf16.pop %v5688
        %v5691 = vmul.bf16 %v5654, 1069105081
        %v5692 = vpow.bf16.pop %v5691
        %v5694 = vmul.bf16 %v5655, 1069105081
        %v5695 = vpow.bf16.pop %v5694
        %v5697 = vmul.bf16 %v5656, 1069105081
        %v5698 = vpow.bf16.pop %v5697
        %v5700 = vmul.bf16 %v5657, 1069105081
        %v5701 = vpow.bf16.pop %v5700
        %v5703 = vmul.bf16 %v5658, 1069105081
        %v5704 = vpow.bf16.pop %v5703
        %v5706 = vmul.bf16 %v5659, 1069105081
        %v5707 = vpow.bf16.pop %v5706
        %v5708 = vadd.bf16 %v5662, 1065369472
        %v5709 = vadd.bf16 %v5665, 1065369472
        %v5710 = vadd.bf16 %v5668, 1065369472
        %v5711 = vadd.bf16 %v5671, 1065369472
        %v5712 = vadd.bf16 %v5674, 1065369472
        %v5713 = vadd.bf16 %v5677, 1065369472
        %v5714 = vadd.bf16 %v5680, 1065369472
        %v5715 = vadd.bf16 %v5683, 1065369472
        %v5716 = vadd.bf16 %v5686, 1065369472
        %v5717 = vadd.bf16 %v5689, 1065369472
        %v5718 = vadd.bf16 %v5692, 1065369472
        %v5719 = vadd.bf16 %v5695, 1065369472
        %v5720 = vadd.bf16 %v5698, 1065369472
        %v5721 = vadd.bf16 %v5701, 1065369472
        %v5722 = vadd.bf16 %v5704, 1065369472
        %v5723 = vadd.bf16 %v5707, 1065369472
        %v5724 = vrcp.bf16.pop %v5708
        %v5725 = vmul.bf16 1065369472, %v5724
        %v5726 = vrcp.bf16.pop %v5709
        %v5727 = vmul.bf16 1065369472, %v5726
        %v5728 = vrcp.bf16.pop %v5710
        %v5729 = vmul.bf16 1065369472, %v5728
        %v5730 = vrcp.bf16.pop %v5711
        %v5731 = vmul.bf16 1065369472, %v5730
        %v5732 = vrcp.bf16.pop %v5712
        %v5733 = vmul.bf16 1065369472, %v5732
        %v5734 = vrcp.bf16.pop %v5713
        %v5735 = vmul.bf16 1065369472, %v5734
        %v5736 = vrcp.bf16.pop %v5714
        %v5737 = vmul.bf16 1065369472, %v5736
        %v5738 = vrcp.bf16.pop %v5715
        %v5739 = vmul.bf16 1065369472, %v5738
        %v5740 = vrcp.bf16.pop %v5716
        %v5741 = vmul.bf16 1065369472, %v5740
        %v5742 = vrcp.bf16.pop %v5717
        %v5743 = vmul.bf16 1065369472, %v5742
        %v5744 = vrcp.bf16.pop %v5718
        %v5745 = vmul.bf16 1065369472, %v5744
        %v5746 = vrcp.bf16.pop %v5719
        %v5747 = vmul.bf16 1065369472, %v5746
        %v5748 = vrcp.bf16.pop %v5720
        %v5749 = vmul.bf16 1065369472, %v5748
        %v5750 = vrcp.bf16.pop %v5721
        %v5751 = vmul.bf16 1065369472, %v5750
        %v5752 = vrcp.bf16.pop %v5722
        %v5753 = vmul.bf16 1065369472, %v5752
        %v5754 = vrcp.bf16.pop %v5723
        %v5755 = vmul.bf16 1065369472, %v5754
        %v5756 = vmul.bf16 %v5628, %v5725
        %v5757 = vmul.bf16 %v5629, %v5727
        %v5758 = vmul.bf16 %v5630, %v5729
        %v5759 = vmul.bf16 %v5631, %v5731
        %v5760 = vmul.bf16 %v5632, %v5733
        %v5761 = vmul.bf16 %v5633, %v5735
        %v5762 = vmul.bf16 %v5634, %v5737
        %v5763 = vmul.bf16 %v5635, %v5739
        %v5764 = vmul.bf16 %v5636, %v5741
        %v5765 = vmul.bf16 %v5637, %v5743
        %v5766 = vmul.bf16 %v5638, %v5745
        %v5767 = vmul.bf16 %v5639, %v5747
        %v5768 = vmul.bf16 %v5640, %v5749
        %v5769 = vmul.bf16 %v5641, %v5751
        %v5770 = vmul.bf16 %v5642, %v5753
        %v5771 = vmul.bf16 %v5643, %v5755
        %s5772 = scalar_lea.vmem [#allocation2], 512
        %v5773 = vld [vmem:[%s5772] sm:$0xf]
        %v5774 = vld [vmem:[%s5772 + $0x4] sm:$0xf]
        %v5775 = vld [vmem:[%s5772 + $0x8] sm:$0xf]
        %v5776 = vld [vmem:[%s5772 + $0xc] sm:$0xf]
        %v5777 = vld [vmem:[%s5772 + $0x10] sm:$0xf]
        %v5778 = vld [vmem:[%s5772 + $0x14] sm:$0xf]
        %v5779 = vld [vmem:[%s5772 + $0x18] sm:$0xf]
        %v5780 = vld [vmem:[%s5772 + $0x1c] sm:$0xf]
        %v5781 = vld [vmem:[%s5772 + $0x20] sm:$0xf]
        %v5782 = vld [vmem:[%s5772 + $0x24] sm:$0xf]
        %v5783 = vld [vmem:[%s5772 + $0x28] sm:$0xf]
        %v5784 = vld [vmem:[%s5772 + $0x2c] sm:$0xf]
        %v5785 = vld [vmem:[%s5772 + $0x30] sm:$0xf]
        %v5786 = vld [vmem:[%s5772 + $0x34] sm:$0xf]
        %v5787 = vld [vmem:[%s5772 + $0x38] sm:$0xf]
        %v5788 = vld [vmem:[%s5772 + $0x3c] sm:$0xf]
        %v5789 = vld [vmem:[%s4 + $0x10] sm:$0x1]
        %v5790 = vlaneseq
        %v5791 = vshrl.u32 %v5790, 7
        %v5792 = vsub.s32 0, %v5791
        %v5793 = vrot.slane %v5789, %v5792
        %v5810 = vunpack.c.l.b16 %v5773
        %v5811 = vunpack.c.l.b16 %v5774
        %v5812 = vunpack.c.l.b16 %v5775
        %v5813 = vunpack.c.l.b16 %v5776
        %v5814 = vunpack.c.l.b16 %v5777
        %v5815 = vunpack.c.l.b16 %v5778
        %v5816 = vunpack.c.l.b16 %v5779
        %v5817 = vunpack.c.l.b16 %v5780
        %v5818 = vunpack.c.l.b16 %v5781
        %v5819 = vunpack.c.l.b16 %v5782
        %v5820 = vunpack.c.l.b16 %v5783
        %v5821 = vunpack.c.l.b16 %v5784
        %v5822 = vunpack.c.l.b16 %v5785
        %v5823 = vunpack.c.l.b16 %v5786
        %v5824 = vunpack.c.l.b16 %v5787
        %v5825 = vunpack.c.l.b16 %v5788
        %v5826 = vpack.c.b16 %v5811, %v5810
        %v5827 = vpack.c.b16 %v5813, %v5812
        %v5828 = vpack.c.b16 %v5815, %v5814
        %v5829 = vpack.c.b16 %v5817, %v5816
        %v5830 = vpack.c.b16 %v5819, %v5818
        %v5831 = vpack.c.b16 %v5821, %v5820
        %v5832 = vpack.c.b16 %v5823, %v5822
        %v5833 = vpack.c.b16 %v5825, %v5824
        %5842 = vmatprep.subr.bf16.mxu0 0
        %5843 = vmatpush1.bf16.msra.mxu0 %v5833
        %5844 = vmatprep.subr.bf16.mxu0 0
        %5845 = vmatpush1.bf16.msra.mxu0 %v5832
        %5846 = vmatprep.subr.bf16.mxu0 0
        %5847 = vmatpush1.bf16.msra.mxu0 %v5831
        %5848 = vmatprep.subr.bf16.mxu0 0
        %5849 = vmatpush1.bf16.msra.mxu0 %v5830
        %5850 = vmatprep.subr.bf16.mxu0 0
        %5851 = vmatpush1.bf16.msra.mxu0 %v5829
        %5852 = vmatprep.subr.bf16.mxu0 0
        %5853 = vmatpush1.bf16.msra.mxu0 %v5828
        %5854 = vmatprep.subr.bf16.mxu0 0
        %5855 = vmatpush1.bf16.msra.mxu0 %v5827
        %5856 = vmatprep.subr.bf16.mxu0 0
        %5857 = vmatpush1.bf16.msra.mxu0 %v5826
        %5858 = vmatprep.subr.bf16.mxu0 0
        %5859 = vmatpush2.bf16.msra.mxu0 0
        %5860 = vmatprep.subr.bf16.mxu0 0
        %5861 = vmatpush2.bf16.msra.mxu0 0
        %5862 = vmatprep.subr.bf16.mxu0 0
        %5863 = vmatpush2.bf16.msra.mxu0 0
        %5864 = vmatprep.subr.bf16.mxu0 0
        %5865 = vmatpush2.bf16.msra.mxu0 0
        %5866 = vmatprep.subr.bf16.mxu0 0
        %5867 = vmatpush2.bf16.msra.mxu0 0
        %5868 = vmatprep.subr.bf16.mxu0 0
        %5869 = vmatpush2.bf16.msra.mxu0 0
        %5870 = vmatprep.subr.bf16.mxu0 0
        %5871 = vmatpush2.bf16.msra.mxu0 0
        %5872 = vmatprep.subr.bf16.mxu0 0
        %5873 = vmatpush2.bf16.msra.mxu0 0
        %5874 = vmatprep.mubr.bf16.mxu0 0
        %5875 = vmatmul.mubr.bf16.gmra.mxu0 %v5756
        %v5876 = vpop.f32.mrf.mxu0
        %v5877 = vadd.f32 %v5793, %v5876
        %v5878 = vpop.f32.mrf.mxu0
        %v5879 = vpop.f32.mrf.mxu0
        %v5880 = vadd.f32 %v5793, %v5879
        %v5881 = vpop.f32.mrf.mxu0
        %5882 = vmatprep.mubr.bf16.mxu0 0
        %5883 = vmatmul.mubr.bf16.gmra.mxu0 %v5757
        %v5884 = vpop.f32.mrf.mxu0
        %v5885 = vadd.f32 %v5793, %v5884
        %v5886 = vpop.f32.mrf.mxu0
        %v5887 = vpop.f32.mrf.mxu0
        %v5888 = vadd.f32 %v5793, %v5887
        %v5889 = vpop.f32.mrf.mxu0
        %5890 = vmatprep.mubr.bf16.mxu0 0
        %5891 = vmatmul.mubr.bf16.gmra.mxu0 %v5758
        %v5892 = vpop.f32.mrf.mxu0
        %v5893 = vadd.f32 %v5793, %v5892
        %v5894 = vpop.f32.mrf.mxu0
        %v5895 = vpop.f32.mrf.mxu0
        %v5896 = vadd.f32 %v5793, %v5895
        %v5897 = vpop.f32.mrf.mxu0
        %5898 = vmatprep.mubr.bf16.mxu0 0
        %5899 = vmatmul.mubr.bf16.gmra.mxu0 %v5759
        %v5900 = vpop.f32.mrf.mxu0
        %v5901 = vadd.f32 %v5793, %v5900
        %v5902 = vpop.f32.mrf.mxu0
        %v5903 = vpop.f32.mrf.mxu0
        %v5904 = vadd.f32 %v5793, %v5903
        %v5905 = vpop.f32.mrf.mxu0
        %5906 = vmatprep.mubr.bf16.mxu0 0
        %5907 = vmatmul.mubr.bf16.gmra.mxu0 %v5760
        %v5908 = vpop.f32.mrf.mxu0
        %v5909 = vadd.f32 %v5793, %v5908
        %v5910 = vpop.f32.mrf.mxu0
        %v5911 = vpop.f32.mrf.mxu0
        %v5912 = vadd.f32 %v5793, %v5911
        %v5913 = vpop.f32.mrf.mxu0
        %5914 = vmatprep.mubr.bf16.mxu0 0
        %5915 = vmatmul.mubr.bf16.gmra.mxu0 %v5761
        %v5916 = vpop.f32.mrf.mxu0
        %v5917 = vadd.f32 %v5793, %v5916
        %v5918 = vpop.f32.mrf.mxu0
        %v5919 = vpop.f32.mrf.mxu0
        %v5920 = vadd.f32 %v5793, %v5919
        %v5921 = vpop.f32.mrf.mxu0
        %5922 = vmatprep.mubr.bf16.mxu0 0
        %5923 = vmatmul.mubr.bf16.gmra.mxu0 %v5762
        %v5924 = vpop.f32.mrf.mxu0
        %v5925 = vadd.f32 %v5793, %v5924
        %v5926 = vpop.f32.mrf.mxu0
        %v5927 = vpop.f32.mrf.mxu0
        %v5928 = vadd.f32 %v5793, %v5927
        %v5929 = vpop.f32.mrf.mxu0
        %5930 = vmatprep.mubr.bf16.mxu0 0
        %5931 = vmatmul.mubr.bf16.gmra.mxu0 %v5763
        %v5932 = vpop.f32.mrf.mxu0
        %v5933 = vadd.f32 %v5793, %v5932
        %v5934 = vpop.f32.mrf.mxu0
        %v5935 = vpop.f32.mrf.mxu0
        %v5936 = vadd.f32 %v5793, %v5935
        %v5937 = vpop.f32.mrf.mxu0
        %5938 = vmatprep.mubr.bf16.mxu0 0
        %5939 = vmatmul.mubr.bf16.gmra.mxu0 %v5764
        %v5940 = vpop.f32.mrf.mxu0
        %v5941 = vadd.f32 %v5793, %v5940
        %v5942 = vpop.f32.mrf.mxu0
        %v5943 = vpop.f32.mrf.mxu0
        %v5944 = vadd.f32 %v5793, %v5943
        %v5945 = vpop.f32.mrf.mxu0
        %5946 = vmatprep.mubr.bf16.mxu0 0
        %5947 = vmatmul.mubr.bf16.gmra.mxu0 %v5765
        %v5948 = vpop.f32.mrf.mxu0
        %v5949 = vadd.f32 %v5793, %v5948
        %v5950 = vpop.f32.mrf.mxu0
        %v5951 = vpop.f32.mrf.mxu0
        %v5952 = vadd.f32 %v5793, %v5951
        %v5953 = vpop.f32.mrf.mxu0
        %5954 = vmatprep.mubr.bf16.mxu0 0
        %5955 = vmatmul.mubr.bf16.gmra.mxu0 %v5766
        %v5956 = vpop.f32.mrf.mxu0
        %v5957 = vadd.f32 %v5793, %v5956
        %v5958 = vpop.f32.mrf.mxu0
        %v5959 = vpop.f32.mrf.mxu0
        %v5960 = vadd.f32 %v5793, %v5959
        %v5961 = vpop.f32.mrf.mxu0
        %5962 = vmatprep.mubr.bf16.mxu0 0
        %5963 = vmatmul.mubr.bf16.gmra.mxu0 %v5767
        %v5964 = vpop.f32.mrf.mxu0
        %v5965 = vadd.f32 %v5793, %v5964
        %v5966 = vpop.f32.mrf.mxu0
        %v5967 = vpop.f32.mrf.mxu0
        %v5968 = vadd.f32 %v5793, %v5967
        %v5969 = vpop.f32.mrf.mxu0
        %5970 = vmatprep.mubr.bf16.mxu0 0
        %5971 = vmatmul.mubr.bf16.gmra.mxu0 %v5768
        %v5972 = vpop.f32.mrf.mxu0
        %v5973 = vadd.f32 %v5793, %v5972
        %v5974 = vpop.f32.mrf.mxu0
        %v5975 = vpop.f32.mrf.mxu0
        %v5976 = vadd.f32 %v5793, %v5975
        %v5977 = vpop.f32.mrf.mxu0
        %5978 = vmatprep.mubr.bf16.mxu0 0
        %5979 = vmatmul.mubr.bf16.gmra.mxu0 %v5769
        %v5980 = vpop.f32.mrf.mxu0
        %v5981 = vadd.f32 %v5793, %v5980
        %v5982 = vpop.f32.mrf.mxu0
        %v5983 = vpop.f32.mrf.mxu0
        %v5984 = vadd.f32 %v5793, %v5983
        %v5985 = vpop.f32.mrf.mxu0
        %5986 = vmatprep.mubr.bf16.mxu0 0
        %5987 = vmatmul.mubr.bf16.gmra.mxu0 %v5770
        %v5988 = vpop.f32.mrf.mxu0
        %v5989 = vadd.f32 %v5793, %v5988
        %v5990 = vpop.f32.mrf.mxu0
        %v5991 = vpop.f32.mrf.mxu0
        %v5992 = vadd.f32 %v5793, %v5991
        %v5993 = vpop.f32.mrf.mxu0
        %5994 = vmatprep.mubr.bf16.mxu0 0
        %5995 = vmatmul.mubr.bf16.gmra.mxu0 %v5771
        %v5996 = vpop.f32.mrf.mxu0
        %v5997 = vadd.f32 %v5793, %v5996
        %v5998 = vpop.f32.mrf.mxu0
        %v5999 = vpop.f32.mrf.mxu0
        %v6000 = vadd.f32 %v5793, %v5999
        %v6001 = vpop.f32.mrf.mxu0
        %6002 = vdwg.mxu0
        %v6003 = vpack.c.bf16 %v5880, %v5877
        %v6004 = vpack.c.bf16 %v5888, %v5885
        %v6005 = vpack.c.bf16 %v5896, %v5893
        %v6006 = vpack.c.bf16 %v5904, %v5901
        %v6007 = vpack.c.bf16 %v5912, %v5909
        %v6008 = vpack.c.bf16 %v5920, %v5917
        %v6009 = vpack.c.bf16 %v5928, %v5925
        %v6010 = vpack.c.bf16 %v5936, %v5933
        %v6011 = vpack.c.bf16 %v5944, %v5941
        %v6012 = vpack.c.bf16 %v5952, %v5949
        %v6013 = vpack.c.bf16 %v5960, %v5957
        %v6014 = vpack.c.bf16 %v5968, %v5965
        %v6015 = vpack.c.bf16 %v5976, %v5973
        %v6016 = vpack.c.bf16 %v5984, %v5981
        %v6017 = vpack.c.bf16 %v5992, %v5989
        %v6018 = vpack.c.bf16 %v6000, %v5997
        %v6019 = vxor.u32 %v6003, 2147516416
        %v6020 = vxor.u32 %v6004, 2147516416
        %v6021 = vxor.u32 %v6005, 2147516416
        %v6022 = vxor.u32 %v6006, 2147516416
        %v6023 = vxor.u32 %v6007, 2147516416
        %v6024 = vxor.u32 %v6008, 2147516416
        %v6025 = vxor.u32 %v6009, 2147516416
        %v6026 = vxor.u32 %v6010, 2147516416
        %v6027 = vxor.u32 %v6011, 2147516416
        %v6028 = vxor.u32 %v6012, 2147516416
        %v6029 = vxor.u32 %v6013, 2147516416
        %v6030 = vxor.u32 %v6014, 2147516416
        %v6031 = vxor.u32 %v6015, 2147516416
        %v6032 = vxor.u32 %v6016, 2147516416
        %v6033 = vxor.u32 %v6017, 2147516416
        %v6034 = vxor.u32 %v6018, 2147516416
        %v6036 = vmul.bf16 %v6019, 1069105081
        %v6037 = vpow.bf16.pop %v6036
        %v6039 = vmul.bf16 %v6020, 1069105081
        %v6040 = vpow.bf16.pop %v6039
        %v6042 = vmul.bf16 %v6021, 1069105081
        %v6043 = vpow.bf16.pop %v6042
        %v6045 = vmul.bf16 %v6022, 1069105081
        %v6046 = vpow.bf16.pop %v6045
        %v6048 = vmul.bf16 %v6023, 1069105081
        %v6049 = vpow.bf16.pop %v6048
        %v6051 = vmul.bf16 %v6024, 1069105081
        %v6052 = vpow.bf16.pop %v6051
        %v6054 = vmul.bf16 %v6025, 1069105081
        %v6055 = vpow.bf16.pop %v6054
        %v6057 = vmul.bf16 %v6026, 1069105081
        %v6058 = vpow.bf16.pop %v6057
        %v6060 = vmul.bf16 %v6027, 1069105081
        %v6061 = vpow.bf16.pop %v6060
        %v6063 = vmul.bf16 %v6028, 1069105081
        %v6064 = vpow.bf16.pop %v6063
        %v6066 = vmul.bf16 %v6029, 1069105081
        %v6067 = vpow.bf16.pop %v6066
        %v6069 = vmul.bf16 %v6030, 1069105081
        %v6070 = vpow.bf16.pop %v6069
        %v6072 = vmul.bf16 %v6031, 1069105081
        %v6073 = vpow.bf16.pop %v6072
        %v6075 = vmul.bf16 %v6032, 1069105081
        %v6076 = vpow.bf16.pop %v6075
        %v6078 = vmul.bf16 %v6033, 1069105081
        %v6079 = vpow.bf16.pop %v6078
        %v6081 = vmul.bf16 %v6034, 1069105081
        %v6082 = vpow.bf16.pop %v6081
        %v6083 = vadd.bf16 %v6037, 1065369472
        %v6084 = vadd.bf16 %v6040, 1065369472
        %v6085 = vadd.bf16 %v6043, 1065369472
        %v6086 = vadd.bf16 %v6046, 1065369472
        %v6087 = vadd.bf16 %v6049, 1065369472
        %v6088 = vadd.bf16 %v6052, 1065369472
        %v6089 = vadd.bf16 %v6055, 1065369472
        %v6090 = vadd.bf16 %v6058, 1065369472
        %v6091 = vadd.bf16 %v6061, 1065369472
        %v6092 = vadd.bf16 %v6064, 1065369472
        %v6093 = vadd.bf16 %v6067, 1065369472
        %v6094 = vadd.bf16 %v6070, 1065369472
        %v6095 = vadd.bf16 %v6073, 1065369472
        %v6096 = vadd.bf16 %v6076, 1065369472
        %v6097 = vadd.bf16 %v6079, 1065369472
        %v6098 = vadd.bf16 %v6082, 1065369472
        %v6099 = vrcp.bf16.pop %v6083
        %v6100 = vmul.bf16 1065369472, %v6099
        %v6101 = vrcp.bf16.pop %v6084
        %v6102 = vmul.bf16 1065369472, %v6101
        %v6103 = vrcp.bf16.pop %v6085
        %v6104 = vmul.bf16 1065369472, %v6103
        %v6105 = vrcp.bf16.pop %v6086
        %v6106 = vmul.bf16 1065369472, %v6105
        %v6107 = vrcp.bf16.pop %v6087
        %v6108 = vmul.bf16 1065369472, %v6107
        %v6109 = vrcp.bf16.pop %v6088
        %v6110 = vmul.bf16 1065369472, %v6109
        %v6111 = vrcp.bf16.pop %v6089
        %v6112 = vmul.bf16 1065369472, %v6111
        %v6113 = vrcp.bf16.pop %v6090
        %v6114 = vmul.bf16 1065369472, %v6113
        %v6115 = vrcp.bf16.pop %v6091
        %v6116 = vmul.bf16 1065369472, %v6115
        %v6117 = vrcp.bf16.pop %v6092
        %v6118 = vmul.bf16 1065369472, %v6117
        %v6119 = vrcp.bf16.pop %v6093
        %v6120 = vmul.bf16 1065369472, %v6119
        %v6121 = vrcp.bf16.pop %v6094
        %v6122 = vmul.bf16 1065369472, %v6121
        %v6123 = vrcp.bf16.pop %v6095
        %v6124 = vmul.bf16 1065369472, %v6123
        %v6125 = vrcp.bf16.pop %v6096
        %v6126 = vmul.bf16 1065369472, %v6125
        %v6127 = vrcp.bf16.pop %v6097
        %v6128 = vmul.bf16 1065369472, %v6127
        %v6129 = vrcp.bf16.pop %v6098
        %v6130 = vmul.bf16 1065369472, %v6129
        %v6131 = vmul.bf16 %v6003, %v6100
        %v6132 = vmul.bf16 %v6004, %v6102
        %v6133 = vmul.bf16 %v6005, %v6104
        %v6134 = vmul.bf16 %v6006, %v6106
        %v6135 = vmul.bf16 %v6007, %v6108
        %v6136 = vmul.bf16 %v6008, %v6110
        %v6137 = vmul.bf16 %v6009, %v6112
        %v6138 = vmul.bf16 %v6010, %v6114
        %v6139 = vmul.bf16 %v6011, %v6116
        %v6140 = vmul.bf16 %v6012, %v6118
        %v6141 = vmul.bf16 %v6013, %v6120
        %v6142 = vmul.bf16 %v6014, %v6122
        %v6143 = vmul.bf16 %v6015, %v6124
        %v6144 = vmul.bf16 %v6016, %v6126
        %v6145 = vmul.bf16 %v6017, %v6128
        %v6146 = vmul.bf16 %v6018, %v6130
        %s6147 = scalar_lea.vmem [#allocation2], 576
        %v6148 = vld [vmem:[%s6147] sm:$0xf]
        %v6149 = vld [vmem:[%s6147 + $0x4] sm:$0xf]
        %v6150 = vld [vmem:[%s6147 + $0x8] sm:$0xf]
        %v6151 = vld [vmem:[%s6147 + $0xc] sm:$0xf]
        %v6152 = vld [vmem:[%s6147 + $0x10] sm:$0xf]
        %v6153 = vld [vmem:[%s6147 + $0x14] sm:$0xf]
        %v6154 = vld [vmem:[%s6147 + $0x18] sm:$0xf]
        %v6155 = vld [vmem:[%s6147 + $0x1c] sm:$0xf]
        %v6156 = vld [vmem:[%s6147 + $0x20] sm:$0xf]
        %v6157 = vld [vmem:[%s6147 + $0x24] sm:$0xf]
        %v6158 = vld [vmem:[%s6147 + $0x28] sm:$0xf]
        %v6159 = vld [vmem:[%s6147 + $0x2c] sm:$0xf]
        %v6160 = vld [vmem:[%s6147 + $0x30] sm:$0xf]
        %v6161 = vld [vmem:[%s6147 + $0x34] sm:$0xf]
        %v6162 = vld [vmem:[%s6147 + $0x38] sm:$0xf]
        %v6163 = vld [vmem:[%s6147 + $0x3c] sm:$0xf]
        %v6164 = vld [vmem:[%s4 + $0x11] sm:$0x1]
        %v6165 = vlaneseq
        %v6166 = vshrl.u32 %v6165, 7
        %v6167 = vsub.s32 0, %v6166
        %v6168 = vrot.slane %v6164, %v6167
        %v6185 = vunpack.c.l.b16 %v6148
        %v6186 = vunpack.c.l.b16 %v6149
        %v6187 = vunpack.c.l.b16 %v6150
        %v6188 = vunpack.c.l.b16 %v6151
        %v6189 = vunpack.c.l.b16 %v6152
        %v6190 = vunpack.c.l.b16 %v6153
        %v6191 = vunpack.c.l.b16 %v6154
        %v6192 = vunpack.c.l.b16 %v6155
        %v6193 = vunpack.c.l.b16 %v6156
        %v6194 = vunpack.c.l.b16 %v6157
        %v6195 = vunpack.c.l.b16 %v6158
        %v6196 = vunpack.c.l.b16 %v6159
        %v6197 = vunpack.c.l.b16 %v6160
        %v6198 = vunpack.c.l.b16 %v6161
        %v6199 = vunpack.c.l.b16 %v6162
        %v6200 = vunpack.c.l.b16 %v6163
        %v6201 = vpack.c.b16 %v6186, %v6185
        %v6202 = vpack.c.b16 %v6188, %v6187
        %v6203 = vpack.c.b16 %v6190, %v6189
        %v6204 = vpack.c.b16 %v6192, %v6191
        %v6205 = vpack.c.b16 %v6194, %v6193
        %v6206 = vpack.c.b16 %v6196, %v6195
        %v6207 = vpack.c.b16 %v6198, %v6197
        %v6208 = vpack.c.b16 %v6200, %v6199
        %6217 = vmatprep.subr.bf16.mxu0 0
        %6218 = vmatpush1.bf16.msra.mxu0 %v6208
        %6219 = vmatprep.subr.bf16.mxu0 0
        %6220 = vmatpush1.bf16.msra.mxu0 %v6207
        %6221 = vmatprep.subr.bf16.mxu0 0
        %6222 = vmatpush1.bf16.msra.mxu0 %v6206
        %6223 = vmatprep.subr.bf16.mxu0 0
        %6224 = vmatpush1.bf16.msra.mxu0 %v6205
        %6225 = vmatprep.subr.bf16.mxu0 0
        %6226 = vmatpush1.bf16.msra.mxu0 %v6204
        %6227 = vmatprep.subr.bf16.mxu0 0
        %6228 = vmatpush1.bf16.msra.mxu0 %v6203
        %6229 = vmatprep.subr.bf16.mxu0 0
        %6230 = vmatpush1.bf16.msra.mxu0 %v6202
        %6231 = vmatprep.subr.bf16.mxu0 0
        %6232 = vmatpush1.bf16.msra.mxu0 %v6201
        %6233 = vmatprep.subr.bf16.mxu0 0
        %6234 = vmatpush2.bf16.msra.mxu0 0
        %6235 = vmatprep.subr.bf16.mxu0 0
        %6236 = vmatpush2.bf16.msra.mxu0 0
        %6237 = vmatprep.subr.bf16.mxu0 0
        %6238 = vmatpush2.bf16.msra.mxu0 0
        %6239 = vmatprep.subr.bf16.mxu0 0
        %6240 = vmatpush2.bf16.msra.mxu0 0
        %6241 = vmatprep.subr.bf16.mxu0 0
        %6242 = vmatpush2.bf16.msra.mxu0 0
        %6243 = vmatprep.subr.bf16.mxu0 0
        %6244 = vmatpush2.bf16.msra.mxu0 0
        %6245 = vmatprep.subr.bf16.mxu0 0
        %6246 = vmatpush2.bf16.msra.mxu0 0
        %6247 = vmatprep.subr.bf16.mxu0 0
        %6248 = vmatpush2.bf16.msra.mxu0 0
        %6249 = vmatprep.mubr.bf16.mxu0 0
        %6250 = vmatmul.mubr.bf16.gmra.mxu0 %v6131
        %v6251 = vpop.f32.mrf.mxu0
        %v6252 = vadd.f32 %v6168, %v6251
        %v6253 = vpop.f32.mrf.mxu0
        %v6254 = vpop.f32.mrf.mxu0
        %v6255 = vadd.f32 %v6168, %v6254
        %v6256 = vpop.f32.mrf.mxu0
        %6257 = vmatprep.mubr.bf16.mxu0 0
        %6258 = vmatmul.mubr.bf16.gmra.mxu0 %v6132
        %v6259 = vpop.f32.mrf.mxu0
        %v6260 = vadd.f32 %v6168, %v6259
        %v6261 = vpop.f32.mrf.mxu0
        %v6262 = vpop.f32.mrf.mxu0
        %v6263 = vadd.f32 %v6168, %v6262
        %v6264 = vpop.f32.mrf.mxu0
        %6265 = vmatprep.mubr.bf16.mxu0 0
        %6266 = vmatmul.mubr.bf16.gmra.mxu0 %v6133
        %v6267 = vpop.f32.mrf.mxu0
        %v6268 = vadd.f32 %v6168, %v6267
        %v6269 = vpop.f32.mrf.mxu0
        %v6270 = vpop.f32.mrf.mxu0
        %v6271 = vadd.f32 %v6168, %v6270
        %v6272 = vpop.f32.mrf.mxu0
        %6273 = vmatprep.mubr.bf16.mxu0 0
        %6274 = vmatmul.mubr.bf16.gmra.mxu0 %v6134
        %v6275 = vpop.f32.mrf.mxu0
        %v6276 = vadd.f32 %v6168, %v6275
        %v6277 = vpop.f32.mrf.mxu0
        %v6278 = vpop.f32.mrf.mxu0
        %v6279 = vadd.f32 %v6168, %v6278
        %v6280 = vpop.f32.mrf.mxu0
        %6281 = vmatprep.mubr.bf16.mxu0 0
        %6282 = vmatmul.mubr.bf16.gmra.mxu0 %v6135
        %v6283 = vpop.f32.mrf.mxu0
        %v6284 = vadd.f32 %v6168, %v6283
        %v6285 = vpop.f32.mrf.mxu0
        %v6286 = vpop.f32.mrf.mxu0
        %v6287 = vadd.f32 %v6168, %v6286
        %v6288 = vpop.f32.mrf.mxu0
        %6289 = vmatprep.mubr.bf16.mxu0 0
        %6290 = vmatmul.mubr.bf16.gmra.mxu0 %v6136
        %v6291 = vpop.f32.mrf.mxu0
        %v6292 = vadd.f32 %v6168, %v6291
        %v6293 = vpop.f32.mrf.mxu0
        %v6294 = vpop.f32.mrf.mxu0
        %v6295 = vadd.f32 %v6168, %v6294
        %v6296 = vpop.f32.mrf.mxu0
        %6297 = vmatprep.mubr.bf16.mxu0 0
        %6298 = vmatmul.mubr.bf16.gmra.mxu0 %v6137
        %v6299 = vpop.f32.mrf.mxu0
        %v6300 = vadd.f32 %v6168, %v6299
        %v6301 = vpop.f32.mrf.mxu0
        %v6302 = vpop.f32.mrf.mxu0
        %v6303 = vadd.f32 %v6168, %v6302
        %v6304 = vpop.f32.mrf.mxu0
        %6305 = vmatprep.mubr.bf16.mxu0 0
        %6306 = vmatmul.mubr.bf16.gmra.mxu0 %v6138
        %v6307 = vpop.f32.mrf.mxu0
        %v6308 = vadd.f32 %v6168, %v6307
        %v6309 = vpop.f32.mrf.mxu0
        %v6310 = vpop.f32.mrf.mxu0
        %v6311 = vadd.f32 %v6168, %v6310
        %v6312 = vpop.f32.mrf.mxu0
        %6313 = vmatprep.mubr.bf16.mxu0 0
        %6314 = vmatmul.mubr.bf16.gmra.mxu0 %v6139
        %v6315 = vpop.f32.mrf.mxu0
        %v6316 = vadd.f32 %v6168, %v6315
        %v6317 = vpop.f32.mrf.mxu0
        %v6318 = vpop.f32.mrf.mxu0
        %v6319 = vadd.f32 %v6168, %v6318
        %v6320 = vpop.f32.mrf.mxu0
        %6321 = vmatprep.mubr.bf16.mxu0 0
        %6322 = vmatmul.mubr.bf16.gmra.mxu0 %v6140
        %v6323 = vpop.f32.mrf.mxu0
        %v6324 = vadd.f32 %v6168, %v6323
        %v6325 = vpop.f32.mrf.mxu0
        %v6326 = vpop.f32.mrf.mxu0
        %v6327 = vadd.f32 %v6168, %v6326
        %v6328 = vpop.f32.mrf.mxu0
        %6329 = vmatprep.mubr.bf16.mxu0 0
        %6330 = vmatmul.mubr.bf16.gmra.mxu0 %v6141
        %v6331 = vpop.f32.mrf.mxu0
        %v6332 = vadd.f32 %v6168, %v6331
        %v6333 = vpop.f32.mrf.mxu0
        %v6334 = vpop.f32.mrf.mxu0
        %v6335 = vadd.f32 %v6168, %v6334
        %v6336 = vpop.f32.mrf.mxu0
        %6337 = vmatprep.mubr.bf16.mxu0 0
        %6338 = vmatmul.mubr.bf16.gmra.mxu0 %v6142
        %v6339 = vpop.f32.mrf.mxu0
        %v6340 = vadd.f32 %v6168, %v6339
        %v6341 = vpop.f32.mrf.mxu0
        %v6342 = vpop.f32.mrf.mxu0
        %v6343 = vadd.f32 %v6168, %v6342
        %v6344 = vpop.f32.mrf.mxu0
        %6345 = vmatprep.mubr.bf16.mxu0 0
        %6346 = vmatmul.mubr.bf16.gmra.mxu0 %v6143
        %v6347 = vpop.f32.mrf.mxu0
        %v6348 = vadd.f32 %v6168, %v6347
        %v6349 = vpop.f32.mrf.mxu0
        %v6350 = vpop.f32.mrf.mxu0
        %v6351 = vadd.f32 %v6168, %v6350
        %v6352 = vpop.f32.mrf.mxu0
        %6353 = vmatprep.mubr.bf16.mxu0 0
        %6354 = vmatmul.mubr.bf16.gmra.mxu0 %v6144
        %v6355 = vpop.f32.mrf.mxu0
        %v6356 = vadd.f32 %v6168, %v6355
        %v6357 = vpop.f32.mrf.mxu0
        %v6358 = vpop.f32.mrf.mxu0
        %v6359 = vadd.f32 %v6168, %v6358
        %v6360 = vpop.f32.mrf.mxu0
        %6361 = vmatprep.mubr.bf16.mxu0 0
        %6362 = vmatmul.mubr.bf16.gmra.mxu0 %v6145
        %v6363 = vpop.f32.mrf.mxu0
        %v6364 = vadd.f32 %v6168, %v6363
        %v6365 = vpop.f32.mrf.mxu0
        %v6366 = vpop.f32.mrf.mxu0
        %v6367 = vadd.f32 %v6168, %v6366
        %v6368 = vpop.f32.mrf.mxu0
        %6369 = vmatprep.mubr.bf16.mxu0 0
        %6370 = vmatmul.mubr.bf16.gmra.mxu0 %v6146
        %v6371 = vpop.f32.mrf.mxu0
        %v6372 = vadd.f32 %v6168, %v6371
        %v6373 = vpop.f32.mrf.mxu0
        %v6374 = vpop.f32.mrf.mxu0
        %v6375 = vadd.f32 %v6168, %v6374
        %v6376 = vpop.f32.mrf.mxu0
        %6377 = vdwg.mxu0
        %v6378 = vpack.c.bf16 %v6255, %v6252
        %v6379 = vpack.c.bf16 %v6263, %v6260
        %v6380 = vpack.c.bf16 %v6271, %v6268
        %v6381 = vpack.c.bf16 %v6279, %v6276
        %v6382 = vpack.c.bf16 %v6287, %v6284
        %v6383 = vpack.c.bf16 %v6295, %v6292
        %v6384 = vpack.c.bf16 %v6303, %v6300
        %v6385 = vpack.c.bf16 %v6311, %v6308
        %v6386 = vpack.c.bf16 %v6319, %v6316
        %v6387 = vpack.c.bf16 %v6327, %v6324
        %v6388 = vpack.c.bf16 %v6335, %v6332
        %v6389 = vpack.c.bf16 %v6343, %v6340
        %v6390 = vpack.c.bf16 %v6351, %v6348
        %v6391 = vpack.c.bf16 %v6359, %v6356
        %v6392 = vpack.c.bf16 %v6367, %v6364
        %v6393 = vpack.c.bf16 %v6375, %v6372
        %v6410 = vunpack.c.l.b16 %v6378
        %v6411 = vunpack.c.h.b16 %v6378
        %v6412 = vunpack.c.l.b16 %v6379
        %v6413 = vunpack.c.h.b16 %v6379
        %v6414 = vunpack.c.l.b16 %v6380
        %v6415 = vunpack.c.h.b16 %v6380
        %v6416 = vunpack.c.l.b16 %v6381
        %v6417 = vunpack.c.h.b16 %v6381
        %v6418 = vunpack.c.l.b16 %v6382
        %v6419 = vunpack.c.h.b16 %v6382
        %v6420 = vunpack.c.l.b16 %v6383
        %v6421 = vunpack.c.h.b16 %v6383
        %v6422 = vunpack.c.l.b16 %v6384
        %v6423 = vunpack.c.h.b16 %v6384
        %v6424 = vunpack.c.l.b16 %v6385
        %v6425 = vunpack.c.h.b16 %v6385
        %v6426 = vunpack.c.l.b16 %v6386
        %v6427 = vunpack.c.h.b16 %v6386
        %v6428 = vunpack.c.l.b16 %v6387
        %v6429 = vunpack.c.h.b16 %v6387
        %v6430 = vunpack.c.l.b16 %v6388
        %v6431 = vunpack.c.h.b16 %v6388
        %v6432 = vunpack.c.l.b16 %v6389
        %v6433 = vunpack.c.h.b16 %v6389
        %v6434 = vunpack.c.l.b16 %v6390
        %v6435 = vunpack.c.h.b16 %v6390
        %v6436 = vunpack.c.l.b16 %v6391
        %v6437 = vunpack.c.h.b16 %v6391
        %v6438 = vunpack.c.l.b16 %v6392
        %v6439 = vunpack.c.h.b16 %v6392
        %v6440 = vunpack.c.l.b16 %v6393
        %v6441 = vunpack.c.h.b16 %v6393
        %v6442 = vpack.c.b16 %v6410, %v6410
        %v6443 = vpack.c.b16 %v6411, %v6411
        %v6444 = vpack.c.b16 %v6412, %v6412
        %v6445 = vpack.c.b16 %v6413, %v6413
        %v6446 = vpack.c.b16 %v6414, %v6414
        %v6447 = vpack.c.b16 %v6415, %v6415
        %v6448 = vpack.c.b16 %v6416, %v6416
        %v6449 = vpack.c.b16 %v6417, %v6417
        %v6450 = vpack.c.b16 %v6418, %v6418
        %v6451 = vpack.c.b16 %v6419, %v6419
        %v6452 = vpack.c.b16 %v6420, %v6420
        %v6453 = vpack.c.b16 %v6421, %v6421
        %v6454 = vpack.c.b16 %v6422, %v6422
        %v6455 = vpack.c.b16 %v6423, %v6423
        %v6456 = vpack.c.b16 %v6424, %v6424
        %v6457 = vpack.c.b16 %v6425, %v6425
        %v6458 = vpack.c.b16 %v6426, %v6426
        %v6459 = vpack.c.b16 %v6427, %v6427
        %v6460 = vpack.c.b16 %v6428, %v6428
        %v6461 = vpack.c.b16 %v6429, %v6429
        %v6462 = vpack.c.b16 %v6430, %v6430
        %v6463 = vpack.c.b16 %v6431, %v6431
        %v6464 = vpack.c.b16 %v6432, %v6432
        %v6465 = vpack.c.b16 %v6433, %v6433
        %v6466 = vpack.c.b16 %v6434, %v6434
        %v6467 = vpack.c.b16 %v6435, %v6435
        %v6468 = vpack.c.b16 %v6436, %v6436
        %v6469 = vpack.c.b16 %v6437, %v6437
        %v6470 = vpack.c.b16 %v6438, %v6438
        %v6471 = vpack.c.b16 %v6439, %v6439
        %v6472 = vpack.c.b16 %v6440, %v6440
        %v6473 = vpack.c.b16 %v6441, %v6441
        %6506 = vst [vmem:[%s233] sm:$0xf] %v6442
        %6507 = vst [vmem:[%s233 + $0x4] sm:$0xf] %v6443
        %6508 = vst [vmem:[%s233 + $0x8] sm:$0xf] %v6444
        %6509 = vst [vmem:[%s233 + $0xc] sm:$0xf] %v6445
        %6510 = vst [vmem:[%s233 + $0x10] sm:$0xf] %v6446
        %6511 = vst [vmem:[%s233 + $0x14] sm:$0xf] %v6447
        %6512 = vst [vmem:[%s233 + $0x18] sm:$0xf] %v6448
        %6513 = vst [vmem:[%s233 + $0x1c] sm:$0xf] %v6449
        %6514 = vst [vmem:[%s233 + $0x20] sm:$0xf] %v6450
        %6515 = vst [vmem:[%s233 + $0x24] sm:$0xf] %v6451
        %6516 = vst [vmem:[%s233 + $0x28] sm:$0xf] %v6452
        %6517 = vst [vmem:[%s233 + $0x2c] sm:$0xf] %v6453
        %6518 = vst [vmem:[%s233 + $0x30] sm:$0xf] %v6454
        %6519 = vst [vmem:[%s233 + $0x34] sm:$0xf] %v6455
        %6520 = vst [vmem:[%s233 + $0x38] sm:$0xf] %v6456
        %6521 = vst [vmem:[%s233 + $0x3c] sm:$0xf] %v6457
        %6522 = vst [vmem:[%s233 + $0x40] sm:$0xf] %v6458
        %6523 = vst [vmem:[%s233 + $0x44] sm:$0xf] %v6459
        %6524 = vst [vmem:[%s233 + $0x48] sm:$0xf] %v6460
        %6525 = vst [vmem:[%s233 + $0x4c] sm:$0xf] %v6461
        %6526 = vst [vmem:[%s233 + $0x50] sm:$0xf] %v6462
        %6527 = vst [vmem:[%s233 + $0x54] sm:$0xf] %v6463
        %6528 = vst [vmem:[%s233 + $0x58] sm:$0xf] %v6464
        %6529 = vst [vmem:[%s233 + $0x5c] sm:$0xf] %v6465
        %6530 = vst [vmem:[%s233 + $0x60] sm:$0xf] %v6466
        %6531 = vst [vmem:[%s233 + $0x64] sm:$0xf] %v6467
        %6532 = vst [vmem:[%s233 + $0x68] sm:$0xf] %v6468
        %6533 = vst [vmem:[%s233 + $0x6c] sm:$0xf] %v6469
        %6534 = vst [vmem:[%s233 + $0x70] sm:$0xf] %v6470
        %6535 = vst [vmem:[%s233 + $0x74] sm:$0xf] %v6471
        %6536 = vst [vmem:[%s233 + $0x78] sm:$0xf] %v6472
        %6537 = vst [vmem:[%s233 + $0x7c] sm:$0xf] %v6473
        %s6538 = sand.u32 %s138, 1
        %s6539 = scalar_lea.sflag [#allocation4], %s6538
        %s6540 = sand.u32 %s138, 1
        %s6541 = smul.addr %s6540, 128
        %s6542 = scalar_lea.vmem [#allocation5], %s6541
        // Predicated region
        $region45: #{tpu_custom_call.1} parent=39 // pred_check
          %p6543 = pneg %p148
        $region46: #{tpu_custom_call.1} parent=39 // pred_check_branch
          %6545 = sbr.rel (%p6543) target = $region48
        $region47: #{tpu_custom_call.1} parent=39 // pred_region
          %s6546 = smul.u32 32, %s20
          %s6548 = ssub.s32 2048, 2048
          %6549 = vsyncadd %s6539, %s6548
          %s6550 = smul.addr %s6546, 64
          %s6551 = scalar_lea.hbm %s5, %s6550
          %s6552 = sshll.u32 %s6542, 4
          %s6553 = int_to_ptr.vmem [resolvable:$true] %s6552
          %6558 = dma.vmem_to_hbm [thread:$0]  %s6553, 2048, %s6551, %s6539, 64, 64, 4
        $region48: #{tpu_custom_call.1} parent=39 // pred_fallthru
          _
      $region40: #{tpu_custom_call.1} parent=5 // pred_fallthru
        _
      %p6559 = scmp.le.s32.totalorder 2, %s15
      // Predicated region
      $region49: #{tpu_custom_call.1} parent=5 // pred_check
        %p6560 = pneg %p6559
      $region50: #{tpu_custom_call.1} parent=5 // pred_check_branch
        %6562 = sbr.rel (%p6560) target = $region52
      $region51: #{tpu_custom_call.1} parent=5 // pred_region
        %s6563 = ssub.s32 %s15, 2
        // Predicated region
        $region53: #{tpu_custom_call.1} parent=51 // pred_check
          %p6564 = pneg %p154
        $region54: #{tpu_custom_call.1} parent=51 // pred_check_branch
          %6566 = sbr.rel (%p6564) target = $region56
        $region55: #{tpu_custom_call.1} parent=51 // pred_region
          %s6567 = sand.u32 %s139, 1
          %s6568 = scalar_lea.sflag [#allocation4], %s6567
          %s6569 = sand.u32 %s139, 1
          %s6570 = smul.addr %s6569, 128
          %s6571 = scalar_lea.vmem [#allocation5], %s6570
          %6572 = dma.done %s6568, 2048
        $region56: #{tpu_custom_call.1} parent=51 // pred_fallthru
          _
      $region52: #{tpu_custom_call.1} parent=5 // pred_fallthru
        _
    $region6: #{tpu_custom_call.1} parent=1 // loop_footer
      %s19 = sadd.s32 1, %s15
    $region7: #{tpu_custom_call.1} parent=1 // loop_footer_branch
      %14 = sbr.rel target = $region3
    $region8: #{tpu_custom_call.1} parent=1 // loop_exit
      _
    %6573 = vsyncpa [#allocation3], 1
    %s6574 = scalar_lea.sflag [#allocation3], 1
    %6575 = vsyncpa %s6574, 1
    %6576 = vsyncpa [#allocation4], 1
    %s6577 = scalar_lea.sflag [#allocation4], 1
    %6578 = vsyncpa %s6577, 1

</llo_original>
